<compile_context>
chip_gen: v6e
topology: v6e:2x2x1
jax: 0.10.0
libtpu: 0.0.40
codegen_flags: <defaults>
</compile_context>

<pallas_src>
import functools

import jax
import jax.numpy as jnp
from jax.experimental import pallas as pl
from jax.experimental.pallas import tpu as pltpu


_TM = 128          # GEMM / conv row tile (matches v5e MXU; fine on v6e/v7x)
_MAXPOOL_TM = 512  # maxpool row tile
_LN_TM = 8         # layernorm row tile


def _round_up(x, m):
    return (x + m - 1) // m * m


# ----------------------------------------------------------------------------
# Pallas kernels
# ----------------------------------------------------------------------------

def _mm_affine_kernel(a_ref, b_ref, s_ref, c_ref, o_ref, *, relu):
    """o = maybe_relu((a @ b) * scale + bias); bf16 inputs, f32 accumulate."""
    acc = jnp.dot(a_ref[...], b_ref[...], preferred_element_type=jnp.float32)
    y = acc * s_ref[...] + c_ref[...]
    if relu:
        y = jnp.maximum(y, 0.0)
    o_ref[...] = y.astype(o_ref.dtype)


def _conv3x3_s1_kernel(*refs, wp, relu, has_res):
    """Implicit-GEMM 3x3 / stride-1 / pad-1 conv + folded BN (+res) (+ReLU).

    The spatially padded NHWC input is flattened to rows [n*HP*WP + h*WP + w, C];
    tap (ki, kj) then contributes A[row + ki*WP + kj] @ W[ki, kj].  Each grid
    step sees two adjacent row tiles (a0, a1) so every shifted window of TM
    rows is available without materializing an im2col matrix in HBM.
    """
    if has_res:
        a0_ref, a1_ref, w_ref, s_ref, c_ref, r_ref, o_ref = refs
    else:
        a0_ref, a1_ref, w_ref, s_ref, c_ref, o_ref = refs
        r_ref = None
    tm, cout = o_ref.shape
    cin = a0_ref.shape[1]
    # Widen to f32 so the shifted-window slices are plain (unpacked) sublane shifts.
    a = jnp.concatenate([a0_ref[...], a1_ref[...]], axis=0).astype(jnp.float32)
    acc = jnp.zeros((tm, cout), jnp.float32)
    for ki in range(3):
        for kj in range(3):
            d = ki * wp + kj                                   # static offset
            win = jax.lax.slice(a, (d, 0), (d + tm, cin)).astype(jnp.bfloat16)
            acc = acc + jnp.dot(win, w_ref[ki * 3 + kj],
                                preferred_element_type=jnp.float32)
    y = acc * s_ref[...] + c_ref[...]
    if has_res:
        y = y + r_ref[...].astype(jnp.float32)
    if relu:
        y = jnp.maximum(y, 0.0)
    o_ref[...] = y.astype(o_ref.dtype)


def _max_reduce_kernel(x_ref, o_ref):
    """o = max over the leading (window-tap) axis."""
    o_ref[...] = jnp.max(x_ref[...].astype(jnp.float32), axis=0).astype(o_ref.dtype)


def _layernorm_kernel(x_ref, g_ref, b_ref, o_ref):
    x = x_ref[...].astype(jnp.float32)
    mu = jnp.mean(x, axis=-1, keepdims=True)
    xc = x - mu
    var = jnp.mean(xc * xc, axis=-1, keepdims=True)     # biased, like torch LayerNorm
    inv = jax.lax.rsqrt(var + 1e-5)
    o_ref[...] = (xc * inv * g_ref[...] + b_ref[...]).astype(o_ref.dtype)


# ----------------------------------------------------------------------------
# Pallas wrappers
# ----------------------------------------------------------------------------

def matmul_affine(a, b, scale, bias, *, relu, out_dtype=jnp.bfloat16, tm=_TM):
    """a: [M, K] bf16, b: [K, N] bf16 (N = 64 or 128 -> single output tile),
    scale/bias: [1, N] f32.  Output rows beyond M are garbage and sliced off."""
    M, K = a.shape
    N = b.shape[1]
    Mp = _round_up(M, tm)
    if Mp != M:
        a = jnp.pad(a, ((0, Mp - M), (0, 0)))
    out = pl.pallas_call(
        functools.partial(_mm_affine_kernel, relu=relu),
        out_shape=jax.ShapeDtypeStruct((Mp, N), out_dtype),
        grid=(Mp // tm,),
        in_specs=[
            pl.BlockSpec((tm, K), lambda i: (i, 0)),
            pl.BlockSpec((K, N), lambda i: (0, 0)),
            pl.BlockSpec((1, N), lambda i: (0, 0)),
            pl.BlockSpec((1, N), lambda i: (0, 0)),
        ],
        out_specs=pl.BlockSpec((tm, N), lambda i: (i, 0)),
        compiler_params=pltpu.CompilerParams(dimension_semantics=("parallel",)),
    )(a, b, scale, bias)
    return out[:M] if Mp != M else out


def _im2col(x, kh, kw, stride, pad):
    """x: NHWC (bf16) -> cols: [N*OH*OW, kh*kw*C], tap-major / channel-minor."""
    N, H, W, C = x.shape
    OH = (H + 2 * pad - kh) // stride + 1
    OW = (W + 2 * pad - kw) // stride + 1
    xp = jnp.pad(x, ((0, 0), (pad, pad), (pad, pad), (0, 0)))
    taps = []
    for i in range(kh):
        for j in range(kw):
            taps.append(xp[:, i:i + stride * (OH - 1) + 1:stride,
                           j:j + stride * (OW - 1) + 1:stride, :])
    cols = jnp.concatenate(taps, axis=-1)
    return cols.reshape(N * OH * OW, kh * kw * C), OH, OW


def conv_gemm(x, w2d, scale, bias, *, kh, kw, stride, pad, relu):
    """im2col + fused GEMM path (only used for the two stride-2 convs)."""
    N = x.shape[0]
    cout = w2d.shape[1]
    cols, OH, OW = _im2col(x, kh, kw, stride, pad)
    y = matmul_affine(cols, w2d, scale, bias, relu=relu)
    return y.reshape(N, OH, OW, cout)


def conv3x3_s1(x, w9, scale, bias, residual=None, relu=True, tm=_TM):
    """3x3 / stride-1 / pad-1 conv + folded BN (+ residual) (+ ReLU), implicit GEMM.

    x: [N, H, W, C] bf16, w9: [9, C, cout] bf16, scale/bias: [1, cout] f32,
    residual: [N, H, W, cout] bf16 or None.  Returns [N, H, W, cout] bf16.
    """
    N, H, W, C = x.shape
    cout = w9.shape[-1]
    HP, WP = H + 2, W + 2
    assert 2 * WP + 2 <= tm, "image row too wide for the two-tile shifted window"
    M = N * HP * WP
    Mt = _round_up(M, tm) // tm

    xp = jnp.pad(x, ((0, 0), (1, 1), (1, 1), (0, 0)))
    a = xp.reshape(M, C)
    a = jnp.pad(a, ((0, (Mt + 1) * tm - M), (0, 0)))   # extra tile for the shifted block

    in_specs = [
        pl.BlockSpec((tm, C), lambda i: (i, 0)),
        pl.BlockSpec((tm, C), lambda i: (i + 1, 0)),
        pl.BlockSpec((9, C, cout), lambda i: (0, 0, 0)),
        pl.BlockSpec((1, cout), lambda i: (0, 0)),
        pl.BlockSpec((1, cout), lambda i: (0, 0)),
    ]
    args = [a, a, w9, scale, bias]
    has_res = residual is not None
    if has_res:
        r = jnp.pad(residual, ((0, 0), (0, HP - H), (0, WP - W), (0, 0)))
        r = r.reshape(M, cout)
        r = jnp.pad(r, ((0, Mt * tm - M), (0, 0)))
        in_specs.append(pl.BlockSpec((tm, cout), lambda i: (i, 0)))
        args.append(r)

    out = pl.pallas_call(
        functools.partial(_conv3x3_s1_kernel, wp=WP, relu=relu, has_res=has_res),
        out_shape=jax.ShapeDtypeStruct((Mt * tm, cout), jnp.bfloat16),
        grid=(Mt,),
        in_specs=in_specs,
        out_specs=pl.BlockSpec((tm, cout), lambda i: (i, 0)),
        compiler_params=pltpu.CompilerParams(dimension_semantics=("parallel",)),
    )(*args)
    # keep only the valid (interior) output positions
    return out[:M].reshape(N, HP, WP, cout)[:, :H, :W, :]


def maxpool_3x3_s2_p1(x, tm=_MAXPOOL_TM):
    """MaxPool2d(kernel_size=3, stride=2, padding=1) on NHWC bf16 input, tiled."""
    N, H, W, C = x.shape
    k, s, p = 3, 2, 1
    OH = (H + 2 * p - k) // s + 1
    OW = (W + 2 * p - k) // s + 1
    neg = float(jnp.finfo(jnp.bfloat16).min)
    xp = jnp.pad(x, ((0, 0), (p, p), (p, p), (0, 0)), constant_values=neg)
    taps = [xp[:, i:i + s * (OH - 1) + 1:s, j:j + s * (OW - 1) + 1:s, :]
            for i in range(k) for j in range(k)]
    stacked = jnp.stack(taps, axis=0).reshape(k * k, N * OH * OW, C)

    M = N * OH * OW
    tm = min(tm, _round_up(M, 8))
    Mp = _round_up(M, tm)
    if Mp != M:
        stacked = jnp.pad(stacked, ((0, 0), (0, Mp - M), (0, 0)), constant_values=neg)

    out = pl.pallas_call(
        _max_reduce_kernel,
        out_shape=jax.ShapeDtypeStruct((Mp, C), x.dtype),
        grid=(Mp // tm,),
        in_specs=[pl.BlockSpec((k * k, tm, C), lambda i: (0, i, 0))],
        out_specs=pl.BlockSpec((tm, C), lambda i: (i, 0)),
        compiler_params=pltpu.CompilerParams(dimension_semantics=("parallel",)),
    )(stacked)
    return out[:M].reshape(N, OH, OW, C)


def layernorm(x, gamma, beta, tm=_LN_TM):
    """LayerNorm over last dim.  x: [B, D] bf16, gamma/beta: [1, D] f32 -> f32."""
    B, D = x.shape
    Bp = _round_up(B, tm)
    if Bp != B:
        x = jnp.pad(x, ((0, Bp - B), (0, 0)))
    out = pl.pallas_call(
        _layernorm_kernel,
        out_shape=jax.ShapeDtypeStruct((Bp, D), jnp.float32),
        grid=(Bp // tm,),
        in_specs=[
            pl.BlockSpec((tm, D), lambda i: (i, 0)),
            pl.BlockSpec((1, D), lambda i: (0, 0)),
            pl.BlockSpec((1, D), lambda i: (0, 0)),
        ],
        out_specs=pl.BlockSpec((tm, D), lambda i: (i, 0)),
        compiler_params=pltpu.CompilerParams(dimension_semantics=("parallel",)),
    )(x, gamma, beta)
    return out[:B]


# ----------------------------------------------------------------------------
# Model: parameters + forward
# ----------------------------------------------------------------------------

def downsample_1x1_s2(x, w, scale, bias):
    """1x1 conv, stride 2, pad 0, + folded BN (no ReLU).  w: [C, cout] bf16."""
    N = x.shape[0]
    xs = x[:, ::2, ::2, :]
    OH, OW, C = xs.shape[1], xs.shape[2], xs.shape[3]
    y = matmul_affine(xs.reshape(N * OH * OW, C), w, scale, bias, relu=False)
    return y.reshape(N, OH, OW, -1)


def basic_block(x, p):
    """ResNet BasicBlock (eval): relu(bn2(conv2(relu(bn1(conv1(x))))) + identity)."""
    if "wd" in p:                       # stride-2 block (layer2 block 0)
        identity = downsample_1x1_s2(x, p["wd"], p["sd"], p["bd"])
        out = conv_gemm(x, p["w1_2d"], p["s1"], p["b1"],
                        kh=3, kw=3, stride=2, pad=1, relu=True)
    else:
        identity = x
        out = conv3x3_s1(x, p["w1"], p["s1"], p["b1"], relu=True)
    return conv3x3_s1(out, p["w2"], p["s2"], p["b2"], residual=identity, relu=True)


def resnet_forward(x, kp):
    """x: [B, 12, H, W] float32 (NCHW, matching the torch module, location='concat')."""
    B, C, H, W = x.shape
    image_channel = 4
    T = C // image_channel

    # obs = cat(obs[:, :3] / 255 - 0.5, obs[:, 3:]) along channels (torch semantics)
    obs = jnp.concatenate([x[:, :3] / 255.0 - 0.5, x[:, 3:]], axis=1)
    obs = obs.reshape(B * T, image_channel, H, W)
    obs = jnp.transpose(obs, (0, 2, 3, 1)).astype(jnp.bfloat16)   # NCHW -> NHWC bf16

    # prompt_layers: conv1 -> bn1 -> relu -> maxpool
    y = conv_gemm(obs, kp["conv1_w"], kp["bn1_s"], kp["bn1_b"],
                  kh=7, kw=7, stride=2, pad=3, relu=True)
    y = maxpool_3x3_s2_p1(y)

    # frozen_layers: layer1 + layer2
    y = basic_block(y, kp["l1b0"])
    y = basic_block(y, kp["l1b1"])
    y = basic_block(y, kp["l2b0"])
    y = basic_block(y, kp["l2b1"])

    # back to NCHW, merge time into channels, flatten (torch ordering)
    y = jnp.transpose(y, (0, 3, 1, 2))               # [B*T, 128, H', W']
    NT, Cp, Hp, Wp = y.shape
    conv = y.reshape(B, T * Cp * Hp * Wp)

    # head: LayerNorm(repr_dim)
    return layernorm(conv, kp["ln_g"], kp["ln_b"])


def _conv_out(h, k, s, p):
    return (h + 2 * p - k) // s + 1


def init_params(key, crop_size):
    """Synthetic torch-like parameters (HWIO conv weights, eval-mode folded BN)."""
    keys = iter(jax.random.split(key, 64))

    def conv_w(k, kh, kw, cin, cout):
        fan_in = kh * kw * cin
        return (jax.random.normal(k, (kh, kw, cin, cout), jnp.float32)
                * (2.0 / fan_in) ** 0.5)

    def bn(k, c):
        k1, k2, k3, k4 = jax.random.split(k, 4)
        gamma = 1.0 + 0.1 * jax.random.normal(k1, (c,), jnp.float32)
        beta = 0.1 * jax.random.normal(k2, (c,), jnp.float32)
        mean = 0.1 * jax.random.normal(k3, (c,), jnp.float32)
        var = 1.0 + 0.1 * jnp.abs(jax.random.normal(k4, (c,), jnp.float32))
        eps = 1e-5
        scale = gamma / jnp.sqrt(var + eps)          # fold eval-mode BN into affine
        bias = beta - mean * scale
        return scale.reshape(1, c), bias.reshape(1, c)

    def block(cin, cout, downsample):
        p = {}
        p["w1"] = conv_w(next(keys), 3, 3, cin, cout)
        p["s1"], p["b1"] = bn(next(keys), cout)
        p["w2"] = conv_w(next(keys), 3, 3, cout, cout)
        p["s2"], p["b2"] = bn(next(keys), cout)
        if downsample:
            p["wd"] = conv_w(next(keys), 1, 1, cin, cout)
            p["sd"], p["bd"] = bn(next(keys), cout)
        return p

    params = {}
    # conv1 rebuilt with 4 input channels (prompt 'concat' setup); synthetic init.
    params["conv1_w"] = conv_w(next(keys), 7, 7, 4, 64)
    params["bn1_s"], params["bn1_b"] = bn(next(keys), 64)
    params["l1b0"] = block(64, 64, False)
    params["l1b1"] = block(64, 64, False)
    params["l2b0"] = block(64, 128, True)
    params["l2b1"] = block(128, 128, False)

    h1 = _conv_out(crop_size, 7, 2, 3)   # conv1
    h2 = _conv_out(h1, 3, 2, 1)          # maxpool
    h4 = _conv_out(h2, 3, 2, 1)          # layer2 stride-2
    repr_dim = 3 * 128 * h4 * h4
    params["ln_g"] = jnp.ones((1, repr_dim), jnp.float32)   # torch LayerNorm init
    params["ln_b"] = jnp.zeros((1, repr_dim), jnp.float32)
    return params, repr_dim


def prepare_kernel_params(p):
    """Reshape / cast the frozen params into kernel-ready layouts ONCE (outside jit)."""
    kp = {}
    kp["conv1_w"] = p["conv1_w"].reshape(7 * 7 * 4, 64).astype(jnp.bfloat16)
    kp["bn1_s"], kp["bn1_b"] = p["bn1_s"], p["bn1_b"]

    def prep_block(bp):
        q = {"s1": bp["s1"], "b1": bp["b1"], "s2": bp["s2"], "b2": bp["b2"]}
        kh, kw, cin, cout = bp["w1"].shape
        if "wd" in bp:   # stride-2 block: its conv1 goes through the im2col GEMM path
            q["w1_2d"] = bp["w1"].reshape(kh * kw * cin, cout).astype(jnp.bfloat16)
            q["wd"] = bp["wd"].reshape(bp["wd"].shape[2],
                                       bp["wd"].shape[3]).astype(jnp.bfloat16)
            q["sd"], q["bd"] = bp["sd"], bp["bd"]
        else:
            q["w1"] = bp["w1"].reshape(9, cin, cout).astype(jnp.bfloat16)
        c2, co2 = bp["w2"].shape[2], bp["w2"].shape[3]
        q["w2"] = bp["w2"].reshape(9, c2, co2).astype(jnp.bfloat16)
        return q

    for name in ("l1b0", "l1b1", "l2b0", "l2b1"):
        kp[name] = prep_block(p[name])
    kp["ln_g"], kp["ln_b"] = p["ln_g"], p["ln_b"]
    return kp


# TODO(synk): pretrained ImageNet weights / torchvision resnet18 checkpoint are
# not loaded; parameters are deterministic synthetic initializations.

if __name__ == "__main__":
    key = jax.random.PRNGKey(0)
    k_param, k_x = jax.random.split(key)

    crop_size = 16      # small spatial size; torch module would use obs_shape[-1]
    batch = 2
    params, repr_dim = init_params(k_param, crop_size)
    kp = prepare_kernel_params(params)     # frozen weights prepped once, outside jit

    # 3 stacked frames x (3 RGB + 1 prompt) channels = 12 channels, pixel-range floats
    x = jax.random.uniform(k_x, (batch, 12, crop_size, crop_size),
                           jnp.float32, 0.0, 255.0)

    fwd = jax.jit(resnet_forward)
    out = jax.block_until_ready(fwd(x, kp))

    assert out.shape == (batch, repr_dim), out.shape
    assert bool(jnp.all(jnp.isfinite(out)))
    print("KERNEL_OK")
</pallas_src>

<mosaic_0001>
module attributes {stable_mosaic.version = 11 : i64} {
  func.func @_mm_affine_kernel(%arg0: i32, %arg1: memref<128x196xbf16, #tpu.memory_space<vmem>>, %arg2: memref<196x64xbf16, #tpu.memory_space<vmem>>, %arg3: memref<1x64xf32, #tpu.memory_space<vmem>>, %arg4: memref<1x64xf32, #tpu.memory_space<vmem>>, %arg5: memref<128x64xbf16, #tpu.memory_space<vmem>>) attributes {dimension_semantics = [#tpu.dimension_semantics<parallel>], iteration_bounds = array<i64: 3>, scalar_prefetch = 0 : i64, scratch_operands = 0 : i64, tpu.core_type = #tpu.core_type<tc>, window_params = [{transform_indices = @transform_0, window_bounds = array<i64: 128, 196>}, {pipeline_mode = #tpu.pipeline_mode<synchronous>, transform_indices = @transform_1, window_bounds = array<i64: 196, 64>}, {pipeline_mode = #tpu.pipeline_mode<synchronous>, transform_indices = @transform_2, window_bounds = array<i64: 1, 64>}, {pipeline_mode = #tpu.pipeline_mode<synchronous>, transform_indices = @transform_3, window_bounds = array<i64: 1, 64>}, {transform_indices = @transform_4, window_bounds = array<i64: 128, 64>}]} {
    %c0 = arith.constant 0 : index
    %c0_0 = arith.constant 0 : index
    %0 = vector.load %arg1[%c0, %c0_0] : memref<128x196xbf16, #tpu.memory_space<vmem>>, vector<128x196xbf16>
    %c0_1 = arith.constant 0 : index
    %c0_2 = arith.constant 0 : index
    %1 = vector.load %arg2[%c0_1, %c0_2] : memref<196x64xbf16, #tpu.memory_space<vmem>>, vector<196x64xbf16>
    %cst = arith.constant dense<0.000000e+00> : vector<128x64xf32>
    %2 = tpu.matmul %0, %1, %cst {dimension_numbers = #tpu.dot_dimension_numbers<[1], [0], [0], [1], [0, 0, 1, 1], [], []>} : vector<128x196xbf16>, vector<196x64xbf16>, vector<128x64xf32> -> vector<128x64xf32>
    %c0_3 = arith.constant 0 : index
    %c0_4 = arith.constant 0 : index
    %3 = vector.load %arg3[%c0_3, %c0_4] : memref<1x64xf32, #tpu.memory_space<vmem>>, vector<1x64xf32>
    %4 = vector.broadcast %3 : vector<1x64xf32> to vector<128x64xf32>
    %5 = arith.mulf %2, %4 : vector<128x64xf32>
    %c0_5 = arith.constant 0 : index
    %c0_6 = arith.constant 0 : index
    %6 = vector.load %arg4[%c0_5, %c0_6] : memref<1x64xf32, #tpu.memory_space<vmem>>, vector<1x64xf32>
    %7 = vector.broadcast %6 : vector<1x64xf32> to vector<128x64xf32>
    %8 = arith.addf %5, %7 : vector<128x64xf32>
    %cst_7 = arith.constant 0.000000e+00 : f32
    %9 = vector.broadcast %cst_7 : f32 to vector<128x64xf32>
    %10 = arith.maximumf %8, %9 : vector<128x64xf32>
    %11 = arith.truncf %10 : vector<128x64xf32> to vector<128x64xbf16>
    %c0_8 = arith.constant 0 : index
    %c0_9 = arith.constant 0 : index
    %12 = vector.load %arg5[%c0_8, %c0_9] : memref<128x64xbf16, #tpu.memory_space<vmem>>, vector<128x64xbf16>
    tpu.vector_store %arg5[%c0_8, %c0_9], %11 {strides = array<i32>} : memref<128x64xbf16, #tpu.memory_space<vmem>>, vector<128x64xbf16>,
    return
  }
  func.func @transform_0(%arg0: i32) -> (i32, i32) {
    %c0_i32 = arith.constant 0 : i32
    %c0_i32_0 = arith.constant 0 : i32
    return %arg0, %c0_i32 : i32, i32
  }
  func.func @transform_1(%arg0: i32) -> (i32, i32) {
    %c0_i32 = arith.constant 0 : i32
    %c0_i32_0 = arith.constant 0 : i32
    %c0_i32_1 = arith.constant 0 : i32
    return %c0_i32, %c0_i32_0 : i32, i32
  }
  func.func @transform_2(%arg0: i32) -> (i32, i32) {
    %c0_i32 = arith.constant 0 : i32
    %c0_i32_0 = arith.constant 0 : i32
    %c0_i32_1 = arith.constant 0 : i32
    return %c0_i32, %c0_i32_0 : i32, i32
  }
  func.func @transform_3(%arg0: i32) -> (i32, i32) {
    %c0_i32 = arith.constant 0 : i32
    %c0_i32_0 = arith.constant 0 : i32
    %c0_i32_1 = arith.constant 0 : i32
    return %c0_i32, %c0_i32_0 : i32, i32
  }
  func.func @transform_4(%arg0: i32) -> (i32, i32) {
    %c0_i32 = arith.constant 0 : i32
    %c0_i32_0 = arith.constant 0 : i32
    return %arg0, %c0_i32 : i32, i32
  }
}

module attributes {stable_mosaic.version = 11 : i64} {
  func.func @_max_reduce_kernel(%arg0: i32, %arg1: memref<9x96x64xbf16, #tpu.memory_space<vmem>>, %arg2: memref<96x64xbf16, #tpu.memory_space<vmem>>) attributes {dimension_semantics = [#tpu.dimension_semantics<parallel>], iteration_bounds = array<i64: 1>, scalar_prefetch = 0 : i64, scratch_operands = 0 : i64, tpu.core_type = #tpu.core_type<tc>, window_params = [{transform_indices = @transform_0, window_bounds = array<i64: 9, 96, 64>}, {transform_indices = @transform_1, window_bounds = array<i64: 96, 64>}]} {
    %c0 = arith.constant 0 : index
    %c0_0 = arith.constant 0 : index
    %c0_1 = arith.constant 0 : index
    %0 = vector.load %arg1[%c0, %c0_0, %c0_1] : memref<9x96x64xbf16, #tpu.memory_space<vmem>>, vector<9x96x64xbf16>
    %1 = arith.extf %0 : vector<9x96x64xbf16> to vector<9x96x64xf32>
    %cst = arith.constant dense<0xFF800000> : vector<96x64xf32>
    %2 = vector.multi_reduction <maximumf>, %1, %cst [0] : vector<9x96x64xf32> to vector<96x64xf32>
    %3 = arith.truncf %2 : vector<96x64xf32> to vector<96x64xbf16>
    %c0_2 = arith.constant 0 : index
    %c0_3 = arith.constant 0 : index
    %4 = vector.load %arg2[%c0_2, %c0_3] : memref<96x64xbf16, #tpu.memory_space<vmem>>, vector<96x64xbf16>
    tpu.vector_store %arg2[%c0_2, %c0_3], %3 {strides = array<i32>} : memref<96x64xbf16, #tpu.memory_space<vmem>>, vector<96x64xbf16>,
    return
  }
  func.func @transform_0(%arg0: i32) -> (i32, i32, i32) {
    %c0_i32 = arith.constant 0 : i32
    %c0_i32_0 = arith.constant 0 : i32
    %c0_i32_1 = arith.constant 0 : i32
    return %c0_i32, %arg0, %c0_i32_0 : i32, i32, i32
  }
  func.func @transform_1(%arg0: i32) -> (i32, i32) {
    %c0_i32 = arith.constant 0 : i32
    %c0_i32_0 = arith.constant 0 : i32
    return %arg0, %c0_i32 : i32, i32
  }
}

module attributes {stable_mosaic.version = 11 : i64} {
  func.func @_conv3x3_s1_kernel(%arg0: i32, %arg1: memref<128x64xbf16, #tpu.memory_space<vmem>>, %arg2: memref<128x64xbf16, #tpu.memory_space<vmem>>, %arg3: memref<9x64x64xbf16, #tpu.memory_space<vmem>>, %arg4: memref<1x64xf32, #tpu.memory_space<vmem>>, %arg5: memref<1x64xf32, #tpu.memory_space<vmem>>, %arg6: memref<128x64xbf16, #tpu.memory_space<vmem>>) attributes {dimension_semantics = [#tpu.dimension_semantics<parallel>], iteration_bounds = array<i64: 2>, scalar_prefetch = 0 : i64, scratch_operands = 0 : i64, tpu.core_type = #tpu.core_type<tc>, window_params = [{transform_indices = @transform_0, window_bounds = array<i64: 128, 64>}, {transform_indices = @transform_1, window_bounds = array<i64: 128, 64>}, {pipeline_mode = #tpu.pipeline_mode<synchronous>, transform_indices = @transform_2, window_bounds = array<i64: 9, 64, 64>}, {pipeline_mode = #tpu.pipeline_mode<synchronous>, transform_indices = @transform_3, window_bounds = array<i64: 1, 64>}, {pipeline_mode = #tpu.pipeline_mode<synchronous>, transform_indices = @transform_4, window_bounds = array<i64: 1, 64>}, {transform_indices = @transform_5, window_bounds = array<i64: 128, 64>}]} {
    %c0 = arith.constant 0 : index
    %c0_0 = arith.constant 0 : index
    %0 = vector.load %arg1[%c0, %c0_0] : memref<128x64xbf16, #tpu.memory_space<vmem>>, vector<128x64xbf16>
    %c0_1 = arith.constant 0 : index
    %c0_2 = arith.constant 0 : index
    %1 = vector.load %arg2[%c0_1, %c0_2] : memref<128x64xbf16, #tpu.memory_space<vmem>>, vector<128x64xbf16>
    %2 = tpu.concatenate %0, %1 in 0 : vector<128x64xbf16>, vector<128x64xbf16> -> vector<256x64xbf16>
    %3 = arith.extf %2 : vector<256x64xbf16> to vector<256x64xf32>
    %cst = arith.constant 0.000000e+00 : f32
    %4 = vector.broadcast %cst : f32 to vector<128x64xf32>
    %5 = vector.extract_strided_slice %3 {offsets = [0, 0], sizes = [128, 64], strides = [1, 1]} : vector<256x64xf32> to vector<128x64xf32>
    %6 = arith.truncf %5 : vector<128x64xf32> to vector<128x64xbf16>
    %c0_3 = arith.constant 0 : index
    %c0_4 = arith.constant 0 : index
    %c0_5 = arith.constant 0 : index
    %7 = vector.load %arg3[%c0_3, %c0_4, %c0_5] : memref<9x64x64xbf16, #tpu.memory_space<vmem>>, vector<1x64x64xbf16>
    %8 = vector.shape_cast %7 : vector<1x64x64xbf16> to vector<64x64xbf16>
    %cst_6 = arith.constant dense<0.000000e+00> : vector<128x64xf32>
    %9 = tpu.matmul %6, %8, %cst_6 {dimension_numbers = #tpu.dot_dimension_numbers<[1], [0], [0], [1], [0, 0, 1, 1], [], []>} : vector<128x64xbf16>, vector<64x64xbf16>, vector<128x64xf32> -> vector<128x64xf32>
    %10 = arith.addf %4, %9 : vector<128x64xf32>
    %11 = vector.extract_strided_slice %3 {offsets = [1, 0], sizes = [128, 64], strides = [1, 1]} : vector<256x64xf32> to vector<128x64xf32>
    %12 = arith.truncf %11 : vector<128x64xf32> to vector<128x64xbf16>
    %c1 = arith.constant 1 : index
    %c0_7 = arith.constant 0 : index
    %c0_8 = arith.constant 0 : index
    %13 = vector.load %arg3[%c1, %c0_7, %c0_8] : memref<9x64x64xbf16, #tpu.memory_space<vmem>>, vector<1x64x64xbf16>
    %14 = vector.shape_cast %13 : vector<1x64x64xbf16> to vector<64x64xbf16>
    %cst_9 = arith.constant dense<0.000000e+00> : vector<128x64xf32>
    %15 = tpu.matmul %12, %14, %cst_9 {dimension_numbers = #tpu.dot_dimension_numbers<[1], [0], [0], [1], [0, 0, 1, 1], [], []>} : vector<128x64xbf16>, vector<64x64xbf16>, vector<128x64xf32> -> vector<128x64xf32>
    %16 = arith.addf %10, %15 : vector<128x64xf32>
    %17 = vector.extract_strided_slice %3 {offsets = [2, 0], sizes = [128, 64], strides = [1, 1]} : vector<256x64xf32> to vector<128x64xf32>
    %18 = arith.truncf %17 : vector<128x64xf32> to vector<128x64xbf16>
    %c2 = arith.constant 2 : index
    %c0_10 = arith.constant 0 : index
    %c0_11 = arith.constant 0 : index
    %19 = vector.load %arg3[%c2, %c0_10, %c0_11] : memref<9x64x64xbf16, #tpu.memory_space<vmem>>, vector<1x64x64xbf16>
    %20 = vector.shape_cast %19 : vector<1x64x64xbf16> to vector<64x64xbf16>
    %cst_12 = arith.constant dense<0.000000e+00> : vector<128x64xf32>
    %21 = tpu.matmul %18, %20, %cst_12 {dimension_numbers = #tpu.dot_dimension_numbers<[1], [0], [0], [1], [0, 0, 1, 1], [], []>} : vector<128x64xbf16>, vector<64x64xbf16>, vector<128x64xf32> -> vector<128x64xf32>
    %22 = arith.addf %16, %21 : vector<128x64xf32>
    %23 = vector.extract_strided_slice %3 {offsets = [6, 0], sizes = [128, 64], strides = [1, 1]} : vector<256x64xf32> to vector<128x64xf32>
    %24 = arith.truncf %23 : vector<128x64xf32> to vector<128x64xbf16>
    %c3 = arith.constant 3 : index
    %c0_13 = arith.constant 0 : index
    %c0_14 = arith.constant 0 : index
    %25 = vector.load %arg3[%c3, %c0_13, %c0_14] : memref<9x64x64xbf16, #tpu.memory_space<vmem>>, vector<1x64x64xbf16>
    %26 = vector.shape_cast %25 : vector<1x64x64xbf16> to vector<64x64xbf16>
    %cst_15 = arith.constant dense<0.000000e+00> : vector<128x64xf32>
    %27 = tpu.matmul %24, %26, %cst_15 {dimension_numbers = #tpu.dot_dimension_numbers<[1], [0], [0], [1], [0, 0, 1, 1], [], []>} : vector<128x64xbf16>, vector<64x64xbf16>, vector<128x64xf32> -> vector<128x64xf32>
    %28 = arith.addf %22, %27 : vector<128x64xf32>
    %29 = vector.extract_strided_slice %3 {offsets = [7, 0], sizes = [128, 64], strides = [1, 1]} : vector<256x64xf32> to vector<128x64xf32>
    %30 = arith.truncf %29 : vector<128x64xf32> to vector<128x64xbf16>
    %c4 = arith.constant 4 : index
    %c0_16 = arith.constant 0 : index
    %c0_17 = arith.constant 0 : index
    %31 = vector.load %arg3[%c4, %c0_16, %c0_17] : memref<9x64x64xbf16, #tpu.memory_space<vmem>>, vector<1x64x64xbf16>
    %32 = vector.shape_cast %31 : vector<1x64x64xbf16> to vector<64x64xbf16>
    %cst_18 = arith.constant dense<0.000000e+00> : vector<128x64xf32>
    %33 = tpu.matmul %30, %32, %cst_18 {dimension_numbers = #tpu.dot_dimension_numbers<[1], [0], [0], [1], [0, 0, 1, 1], [], []>} : vector<128x64xbf16>, vector<64x64xbf16>, vector<128x64xf32> -> vector<128x64xf32>
    %34 = arith.addf %28, %33 : vector<128x64xf32>
    %35 = vector.extract_strided_slice %3 {offsets = [8, 0], sizes = [128, 64], strides = [1, 1]} : vector<256x64xf32> to vector<128x64xf32>
    %36 = arith.truncf %35 : vector<128x64xf32> to vector<128x64xbf16>
    %c5 = arith.constant 5 : index
    %c0_19 = arith.constant 0 : index
    %c0_20 = arith.constant 0 : index
    %37 = vector.load %arg3[%c5, %c0_19, %c0_20] : memref<9x64x64xbf16, #tpu.memory_space<vmem>>, vector<1x64x64xbf16>
    %38 = vector.shape_cast %37 : vector<1x64x64xbf16> to vector<64x64xbf16>
    %cst_21 = arith.constant dense<0.000000e+00> : vector<128x64xf32>
    %39 = tpu.matmul %36, %38, %cst_21 {dimension_numbers = #tpu.dot_dimension_numbers<[1], [0], [0], [1], [0, 0, 1, 1], [], []>} : vector<128x64xbf16>, vector<64x64xbf16>, vector<128x64xf32> -> vector<128x64xf32>
    %40 = arith.addf %34, %39 : vector<128x64xf32>
    %41 = vector.extract_strided_slice %3 {offsets = [12, 0], sizes = [128, 64], strides = [1, 1]} : vector<256x64xf32> to vector<128x64xf32>
    %42 = arith.truncf %41 : vector<128x64xf32> to vector<128x64xbf16>
    %c6 = arith.constant 6 : index
    %c0_22 = arith.constant 0 : index
    %c0_23 = arith.constant 0 : index
    %43 = vector.load %arg3[%c6, %c0_22, %c0_23] : memref<9x64x64xbf16, #tpu.memory_space<vmem>>, vector<1x64x64xbf16>
    %44 = vector.shape_cast %43 : vector<1x64x64xbf16> to vector<64x64xbf16>
    %cst_24 = arith.constant dense<0.000000e+00> : vector<128x64xf32>
    %45 = tpu.matmul %42, %44, %cst_24 {dimension_numbers = #tpu.dot_dimension_numbers<[1], [0], [0], [1], [0, 0, 1, 1], [], []>} : vector<128x64xbf16>, vector<64x64xbf16>, vector<128x64xf32> -> vector<128x64xf32>
    %46 = arith.addf %40, %45 : vector<128x64xf32>
    %47 = vector.extract_strided_slice %3 {offsets = [13, 0], sizes = [128, 64], strides = [1, 1]} : vector<256x64xf32> to vector<128x64xf32>
    %48 = arith.truncf %47 : vector<128x64xf32> to vector<128x64xbf16>
    %c7 = arith.constant 7 : index
    %c0_25 = arith.constant 0 : index
    %c0_26 = arith.constant 0 : index
    %49 = vector.load %arg3[%c7, %c0_25, %c0_26] : memref<9x64x64xbf16, #tpu.memory_space<vmem>>, vector<1x64x64xbf16>
    %50 = vector.shape_cast %49 : vector<1x64x64xbf16> to vector<64x64xbf16>
    %cst_27 = arith.constant dense<0.000000e+00> : vector<128x64xf32>
    %51 = tpu.matmul %48, %50, %cst_27 {dimension_numbers = #tpu.dot_dimension_numbers<[1], [0], [0], [1], [0, 0, 1, 1], [], []>} : vector<128x64xbf16>, vector<64x64xbf16>, vector<128x64xf32> -> vector<128x64xf32>
    %52 = arith.addf %46, %51 : vector<128x64xf32>
    %53 = vector.extract_strided_slice %3 {offsets = [14, 0], sizes = [128, 64], strides = [1, 1]} : vector<256x64xf32> to vector<128x64xf32>
    %54 = arith.truncf %53 : vector<128x64xf32> to vector<128x64xbf16>
    %c8 = arith.constant 8 : index
    %c0_28 = arith.constant 0 : index
    %c0_29 = arith.constant 0 : index
    %55 = vector.load %arg3[%c8, %c0_28, %c0_29] : memref<9x64x64xbf16, #tpu.memory_space<vmem>>, vector<1x64x64xbf16>
    %56 = vector.shape_cast %55 : vector<1x64x64xbf16> to vector<64x64xbf16>
    %cst_30 = arith.constant dense<0.000000e+00> : vector<128x64xf32>
    %57 = tpu.matmul %54, %56, %cst_30 {dimension_numbers = #tpu.dot_dimension_numbers<[1], [0], [0], [1], [0, 0, 1, 1], [], []>} : vector<128x64xbf16>, vector<64x64xbf16>, vector<128x64xf32> -> vector<128x64xf32>
    %58 = arith.addf %52, %57 : vector<128x64xf32>
    %c0_31 = arith.constant 0 : index
    %c0_32 = arith.constant 0 : index
    %59 = vector.load %arg4[%c0_31, %c0_32] : memref<1x64xf32, #tpu.memory_space<vmem>>, vector<1x64xf32>
    %60 = vector.broadcast %59 : vector<1x64xf32> to vector<128x64xf32>
    %61 = arith.mulf %58, %60 : vector<128x64xf32>
    %c0_33 = arith.constant 0 : index
    %c0_34 = arith.constant 0 : index
    %62 = vector.load %arg5[%c0_33, %c0_34] : memref<1x64xf32, #tpu.memory_space<vmem>>, vector<1x64xf32>
    %63 = vector.broadcast %62 : vector<1x64xf32> to vector<128x64xf32>
    %64 = arith.addf %61, %63 : vector<128x64xf32>
    %cst_35 = arith.constant 0.000000e+00 : f32
    %65 = vector.broadcast %cst_35 : f32 to vector<128x64xf32>
    %66 = arith.maximumf %64, %65 : vector<128x64xf32>
    %67 = arith.truncf %66 : vector<128x64xf32> to vector<128x64xbf16>
    %c0_36 = arith.constant 0 : index
    %c0_37 = arith.constant 0 : index
    %68 = vector.load %arg6[%c0_36, %c0_37] : memref<128x64xbf16, #tpu.memory_space<vmem>>, vector<128x64xbf16>
    tpu.vector_store %arg6[%c0_36, %c0_37], %67 {strides = array<i32>} : memref<128x64xbf16, #tpu.memory_space<vmem>>, vector<128x64xbf16>,
    return
  }
  func.func @transform_0(%arg0: i32) -> (i32, i32) {
    %c0_i32 = arith.constant 0 : i32
    %c0_i32_0 = arith.constant 0 : i32
    return %arg0, %c0_i32 : i32, i32
  }
  func.func @transform_1(%arg0: i32) -> (i32, i32) {
    %c1_i32 = arith.constant 1 : i32
    %0 = arith.addi %arg0, %c1_i32 : i32
    %c0_i32 = arith.constant 0 : i32
    %c0_i32_0 = arith.constant 0 : i32
    return %0, %c0_i32 : i32, i32
  }
  func.func @transform_2(%arg0: i32) -> (i32, i32, i32) {
    %c0_i32 = arith.constant 0 : i32
    %c0_i32_0 = arith.constant 0 : i32
    %c0_i32_1 = arith.constant 0 : i32
    %c0_i32_2 = arith.constant 0 : i32
    return %c0_i32, %c0_i32_0, %c0_i32_1 : i32, i32, i32
  }
  func.func @transform_3(%arg0: i32) -> (i32, i32) {
    %c0_i32 = arith.constant 0 : i32
    %c0_i32_0 = arith.constant 0 : i32
    %c0_i32_1 = arith.constant 0 : i32
    return %c0_i32, %c0_i32_0 : i32, i32
  }
  func.func @transform_4(%arg0: i32) -> (i32, i32) {
    %c0_i32 = arith.constant 0 : i32
    %c0_i32_0 = arith.constant 0 : i32
    %c0_i32_1 = arith.constant 0 : i32
    return %c0_i32, %c0_i32_0 : i32, i32
  }
  func.func @transform_5(%arg0: i32) -> (i32, i32) {
    %c0_i32 = arith.constant 0 : i32
    %c0_i32_0 = arith.constant 0 : i32
    return %arg0, %c0_i32 : i32, i32
  }
}

module attributes {stable_mosaic.version = 11 : i64} {
  func.func @_conv3x3_s1_kernel(%arg0: i32, %arg1: memref<128x64xbf16, #tpu.memory_space<vmem>>, %arg2: memref<128x64xbf16, #tpu.memory_space<vmem>>, %arg3: memref<9x64x64xbf16, #tpu.memory_space<vmem>>, %arg4: memref<1x64xf32, #tpu.memory_space<vmem>>, %arg5: memref<1x64xf32, #tpu.memory_space<vmem>>, %arg6: memref<128x64xbf16, #tpu.memory_space<vmem>>, %arg7: memref<128x64xbf16, #tpu.memory_space<vmem>>) attributes {dimension_semantics = [#tpu.dimension_semantics<parallel>], iteration_bounds = array<i64: 2>, scalar_prefetch = 0 : i64, scratch_operands = 0 : i64, tpu.core_type = #tpu.core_type<tc>, window_params = [{transform_indices = @transform_0, window_bounds = array<i64: 128, 64>}, {transform_indices = @transform_1, window_bounds = array<i64: 128, 64>}, {pipeline_mode = #tpu.pipeline_mode<synchronous>, transform_indices = @transform_2, window_bounds = array<i64: 9, 64, 64>}, {pipeline_mode = #tpu.pipeline_mode<synchronous>, transform_indices = @transform_3, window_bounds = array<i64: 1, 64>}, {pipeline_mode = #tpu.pipeline_mode<synchronous>, transform_indices = @transform_4, window_bounds = array<i64: 1, 64>}, {transform_indices = @transform_5, window_bounds = array<i64: 128, 64>}, {transform_indices = @transform_6, window_bounds = array<i64: 128, 64>}]} {
    %c0 = arith.constant 0 : index
    %c0_0 = arith.constant 0 : index
    %0 = vector.load %arg1[%c0, %c0_0] : memref<128x64xbf16, #tpu.memory_space<vmem>>, vector<128x64xbf16>
    %c0_1 = arith.constant 0 : index
    %c0_2 = arith.constant 0 : index
    %1 = vector.load %arg2[%c0_1, %c0_2] : memref<128x64xbf16, #tpu.memory_space<vmem>>, vector<128x64xbf16>
    %2 = tpu.concatenate %0, %1 in 0 : vector<128x64xbf16>, vector<128x64xbf16> -> vector<256x64xbf16>
    %3 = arith.extf %2 : vector<256x64xbf16> to vector<256x64xf32>
    %cst = arith.constant 0.000000e+00 : f32
    %4 = vector.broadcast %cst : f32 to vector<128x64xf32>
    %5 = vector.extract_strided_slice %3 {offsets = [0, 0], sizes = [128, 64], strides = [1, 1]} : vector<256x64xf32> to vector<128x64xf32>
    %6 = arith.truncf %5 : vector<128x64xf32> to vector<128x64xbf16>
    %c0_3 = arith.constant 0 : index
    %c0_4 = arith.constant 0 : index
    %c0_5 = arith.constant 0 : index
    %7 = vector.load %arg3[%c0_3, %c0_4, %c0_5] : memref<9x64x64xbf16, #tpu.memory_space<vmem>>, vector<1x64x64xbf16>
    %8 = vector.shape_cast %7 : vector<1x64x64xbf16> to vector<64x64xbf16>
    %cst_6 = arith.constant dense<0.000000e+00> : vector<128x64xf32>
    %9 = tpu.matmul %6, %8, %cst_6 {dimension_numbers = #tpu.dot_dimension_numbers<[1], [0], [0], [1], [0, 0, 1, 1], [], []>} : vector<128x64xbf16>, vector<64x64xbf16>, vector<128x64xf32> -> vector<128x64xf32>
    %10 = arith.addf %4, %9 : vector<128x64xf32>
    %11 = vector.extract_strided_slice %3 {offsets = [1, 0], sizes = [128, 64], strides = [1, 1]} : vector<256x64xf32> to vector<128x64xf32>
    %12 = arith.truncf %11 : vector<128x64xf32> to vector<128x64xbf16>
    %c1 = arith.constant 1 : index
    %c0_7 = arith.constant 0 : index
    %c0_8 = arith.constant 0 : index
    %13 = vector.load %arg3[%c1, %c0_7, %c0_8] : memref<9x64x64xbf16, #tpu.memory_space<vmem>>, vector<1x64x64xbf16>
    %14 = vector.shape_cast %13 : vector<1x64x64xbf16> to vector<64x64xbf16>
    %cst_9 = arith.constant dense<0.000000e+00> : vector<128x64xf32>
    %15 = tpu.matmul %12, %14, %cst_9 {dimension_numbers = #tpu.dot_dimension_numbers<[1], [0], [0], [1], [0, 0, 1, 1], [], []>} : vector<128x64xbf16>, vector<64x64xbf16>, vector<128x64xf32> -> vector<128x64xf32>
    %16 = arith.addf %10, %15 : vector<128x64xf32>
    %17 = vector.extract_strided_slice %3 {offsets = [2, 0], sizes = [128, 64], strides = [1, 1]} : vector<256x64xf32> to vector<128x64xf32>
    %18 = arith.truncf %17 : vector<128x64xf32> to vector<128x64xbf16>
    %c2 = arith.constant 2 : index
    %c0_10 = arith.constant 0 : index
    %c0_11 = arith.constant 0 : index
    %19 = vector.load %arg3[%c2, %c0_10, %c0_11] : memref<9x64x64xbf16, #tpu.memory_space<vmem>>, vector<1x64x64xbf16>
    %20 = vector.shape_cast %19 : vector<1x64x64xbf16> to vector<64x64xbf16>
    %cst_12 = arith.constant dense<0.000000e+00> : vector<128x64xf32>
    %21 = tpu.matmul %18, %20, %cst_12 {dimension_numbers = #tpu.dot_dimension_numbers<[1], [0], [0], [1], [0, 0, 1, 1], [], []>} : vector<128x64xbf16>, vector<64x64xbf16>, vector<128x64xf32> -> vector<128x64xf32>
    %22 = arith.addf %16, %21 : vector<128x64xf32>
    %23 = vector.extract_strided_slice %3 {offsets = [6, 0], sizes = [128, 64], strides = [1, 1]} : vector<256x64xf32> to vector<128x64xf32>
    %24 = arith.truncf %23 : vector<128x64xf32> to vector<128x64xbf16>
    %c3 = arith.constant 3 : index
    %c0_13 = arith.constant 0 : index
    %c0_14 = arith.constant 0 : index
    %25 = vector.load %arg3[%c3, %c0_13, %c0_14] : memref<9x64x64xbf16, #tpu.memory_space<vmem>>, vector<1x64x64xbf16>
    %26 = vector.shape_cast %25 : vector<1x64x64xbf16> to vector<64x64xbf16>
    %cst_15 = arith.constant dense<0.000000e+00> : vector<128x64xf32>
    %27 = tpu.matmul %24, %26, %cst_15 {dimension_numbers = #tpu.dot_dimension_numbers<[1], [0], [0], [1], [0, 0, 1, 1], [], []>} : vector<128x64xbf16>, vector<64x64xbf16>, vector<128x64xf32> -> vector<128x64xf32>
    %28 = arith.addf %22, %27 : vector<128x64xf32>
    %29 = vector.extract_strided_slice %3 {offsets = [7, 0], sizes = [128, 64], strides = [1, 1]} : vector<256x64xf32> to vector<128x64xf32>
    %30 = arith.truncf %29 : vector<128x64xf32> to vector<128x64xbf16>
    %c4 = arith.constant 4 : index
    %c0_16 = arith.constant 0 : index
    %c0_17 = arith.constant 0 : index
    %31 = vector.load %arg3[%c4, %c0_16, %c0_17] : memref<9x64x64xbf16, #tpu.memory_space<vmem>>, vector<1x64x64xbf16>
    %32 = vector.shape_cast %31 : vector<1x64x64xbf16> to vector<64x64xbf16>
    %cst_18 = arith.constant dense<0.000000e+00> : vector<128x64xf32>
    %33 = tpu.matmul %30, %32, %cst_18 {dimension_numbers = #tpu.dot_dimension_numbers<[1], [0], [0], [1], [0, 0, 1, 1], [], []>} : vector<128x64xbf16>, vector<64x64xbf16>, vector<128x64xf32> -> vector<128x64xf32>
    %34 = arith.addf %28, %33 : vector<128x64xf32>
    %35 = vector.extract_strided_slice %3 {offsets = [8, 0], sizes = [128, 64], strides = [1, 1]} : vector<256x64xf32> to vector<128x64xf32>
    %36 = arith.truncf %35 : vector<128x64xf32> to vector<128x64xbf16>
    %c5 = arith.constant 5 : index
    %c0_19 = arith.constant 0 : index
    %c0_20 = arith.constant 0 : index
    %37 = vector.load %arg3[%c5, %c0_19, %c0_20] : memref<9x64x64xbf16, #tpu.memory_space<vmem>>, vector<1x64x64xbf16>
    %38 = vector.shape_cast %37 : vector<1x64x64xbf16> to vector<64x64xbf16>
    %cst_21 = arith.constant dense<0.000000e+00> : vector<128x64xf32>
    %39 = tpu.matmul %36, %38, %cst_21 {dimension_numbers = #tpu.dot_dimension_numbers<[1], [0], [0], [1], [0, 0, 1, 1], [], []>} : vector<128x64xbf16>, vector<64x64xbf16>, vector<128x64xf32> -> vector<128x64xf32>
    %40 = arith.addf %34, %39 : vector<128x64xf32>
    %41 = vector.extract_strided_slice %3 {offsets = [12, 0], sizes = [128, 64], strides = [1, 1]} : vector<256x64xf32> to vector<128x64xf32>
    %42 = arith.truncf %41 : vector<128x64xf32> to vector<128x64xbf16>
    %c6 = arith.constant 6 : index
    %c0_22 = arith.constant 0 : index
    %c0_23 = arith.constant 0 : index
    %43 = vector.load %arg3[%c6, %c0_22, %c0_23] : memref<9x64x64xbf16, #tpu.memory_space<vmem>>, vector<1x64x64xbf16>
    %44 = vector.shape_cast %43 : vector<1x64x64xbf16> to vector<64x64xbf16>
    %cst_24 = arith.constant dense<0.000000e+00> : vector<128x64xf32>
    %45 = tpu.matmul %42, %44, %cst_24 {dimension_numbers = #tpu.dot_dimension_numbers<[1], [0], [0], [1], [0, 0, 1, 1], [], []>} : vector<128x64xbf16>, vector<64x64xbf16>, vector<128x64xf32> -> vector<128x64xf32>
    %46 = arith.addf %40, %45 : vector<128x64xf32>
    %47 = vector.extract_strided_slice %3 {offsets = [13, 0], sizes = [128, 64], strides = [1, 1]} : vector<256x64xf32> to vector<128x64xf32>
    %48 = arith.truncf %47 : vector<128x64xf32> to vector<128x64xbf16>
    %c7 = arith.constant 7 : index
    %c0_25 = arith.constant 0 : index
    %c0_26 = arith.constant 0 : index
    %49 = vector.load %arg3[%c7, %c0_25, %c0_26] : memref<9x64x64xbf16, #tpu.memory_space<vmem>>, vector<1x64x64xbf16>
    %50 = vector.shape_cast %49 : vector<1x64x64xbf16> to vector<64x64xbf16>
    %cst_27 = arith.constant dense<0.000000e+00> : vector<128x64xf32>
    %51 = tpu.matmul %48, %50, %cst_27 {dimension_numbers = #tpu.dot_dimension_numbers<[1], [0], [0], [1], [0, 0, 1, 1], [], []>} : vector<128x64xbf16>, vector<64x64xbf16>, vector<128x64xf32> -> vector<128x64xf32>
    %52 = arith.addf %46, %51 : vector<128x64xf32>
    %53 = vector.extract_strided_slice %3 {offsets = [14, 0], sizes = [128, 64], strides = [1, 1]} : vector<256x64xf32> to vector<128x64xf32>
    %54 = arith.truncf %53 : vector<128x64xf32> to vector<128x64xbf16>
    %c8 = arith.constant 8 : index
    %c0_28 = arith.constant 0 : index
    %c0_29 = arith.constant 0 : index
    %55 = vector.load %arg3[%c8, %c0_28, %c0_29] : memref<9x64x64xbf16, #tpu.memory_space<vmem>>, vector<1x64x64xbf16>
    %56 = vector.shape_cast %55 : vector<1x64x64xbf16> to vector<64x64xbf16>
    %cst_30 = arith.constant dense<0.000000e+00> : vector<128x64xf32>
    %57 = tpu.matmul %54, %56, %cst_30 {dimension_numbers = #tpu.dot_dimension_numbers<[1], [0], [0], [1], [0, 0, 1, 1], [], []>} : vector<128x64xbf16>, vector<64x64xbf16>, vector<128x64xf32> -> vector<128x64xf32>
    %58 = arith.addf %52, %57 : vector<128x64xf32>
    %c0_31 = arith.constant 0 : index
    %c0_32 = arith.constant 0 : index
    %59 = vector.load %arg4[%c0_31, %c0_32] : memref<1x64xf32, #tpu.memory_space<vmem>>, vector<1x64xf32>
    %60 = vector.broadcast %59 : vector<1x64xf32> to vector<128x64xf32>
    %61 = arith.mulf %58, %60 : vector<128x64xf32>
    %c0_33 = arith.constant 0 : index
    %c0_34 = arith.constant 0 : index
    %62 = vector.load %arg5[%c0_33, %c0_34] : memref<1x64xf32, #tpu.memory_space<vmem>>, vector<1x64xf32>
    %63 = vector.broadcast %62 : vector<1x64xf32> to vector<128x64xf32>
    %64 = arith.addf %61, %63 : vector<128x64xf32>
    %c0_35 = arith.constant 0 : index
    %c0_36 = arith.constant 0 : index
    %65 = vector.load %arg6[%c0_35, %c0_36] : memref<128x64xbf16, #tpu.memory_space<vmem>>, vector<128x64xbf16>
    %66 = arith.extf %65 : vector<128x64xbf16> to vector<128x64xf32>
    %67 = arith.addf %64, %66 : vector<128x64xf32>
    %cst_37 = arith.constant 0.000000e+00 : f32
    %68 = vector.broadcast %cst_37 : f32 to vector<128x64xf32>
    %69 = arith.maximumf %67, %68 : vector<128x64xf32>
    %70 = arith.truncf %69 : vector<128x64xf32> to vector<128x64xbf16>
    %c0_38 = arith.constant 0 : index
    %c0_39 = arith.constant 0 : index
    %71 = vector.load %arg7[%c0_38, %c0_39] : memref<128x64xbf16, #tpu.memory_space<vmem>>, vector<128x64xbf16>
    tpu.vector_store %arg7[%c0_38, %c0_39], %70 {strides = array<i32>} : memref<128x64xbf16, #tpu.memory_space<vmem>>, vector<128x64xbf16>,
    return
  }
  func.func @transform_0(%arg0: i32) -> (i32, i32) {
    %c0_i32 = arith.constant 0 : i32
    %c0_i32_0 = arith.constant 0 : i32
    return %arg0, %c0_i32 : i32, i32
  }
  func.func @transform_1(%arg0: i32) -> (i32, i32) {
    %c1_i32 = arith.constant 1 : i32
    %0 = arith.addi %arg0, %c1_i32 : i32
    %c0_i32 = arith.constant 0 : i32
    %c0_i32_0 = arith.constant 0 : i32
    return %0, %c0_i32 : i32, i32
  }
  func.func @transform_2(%arg0: i32) -> (i32, i32, i32) {
    %c0_i32 = arith.constant 0 : i32
    %c0_i32_0 = arith.constant 0 : i32
    %c0_i32_1 = arith.constant 0 : i32
    %c0_i32_2 = arith.constant 0 : i32
    return %c0_i32, %c0_i32_0, %c0_i32_1 : i32, i32, i32
  }
  func.func @transform_3(%arg0: i32) -> (i32, i32) {
    %c0_i32 = arith.constant 0 : i32
    %c0_i32_0 = arith.constant 0 : i32
    %c0_i32_1 = arith.constant 0 : i32
    return %c0_i32, %c0_i32_0 : i32, i32
  }
  func.func @transform_4(%arg0: i32) -> (i32, i32) {
    %c0_i32 = arith.constant 0 : i32
    %c0_i32_0 = arith.constant 0 : i32
    %c0_i32_1 = arith.constant 0 : i32
    return %c0_i32, %c0_i32_0 : i32, i32
  }
  func.func @transform_5(%arg0: i32) -> (i32, i32) {
    %c0_i32 = arith.constant 0 : i32
    %c0_i32_0 = arith.constant 0 : i32
    return %arg0, %c0_i32 : i32, i32
  }
  func.func @transform_6(%arg0: i32) -> (i32, i32) {
    %c0_i32 = arith.constant 0 : i32
    %c0_i32_0 = arith.constant 0 : i32
    return %arg0, %c0_i32 : i32, i32
  }
}

module attributes {stable_mosaic.version = 11 : i64} {
  func.func @_mm_affine_kernel(%arg0: i32, %arg1: memref<128x576xbf16, #tpu.memory_space<vmem>>, %arg2: memref<576x128xbf16, #tpu.memory_space<vmem>>, %arg3: memref<1x128xf32, #tpu.memory_space<vmem>>, %arg4: memref<1x128xf32, #tpu.memory_space<vmem>>, %arg5: memref<128x128xbf16, #tpu.memory_space<vmem>>) attributes {dimension_semantics = [#tpu.dimension_semantics<parallel>], iteration_bounds = array<i64: 1>, scalar_prefetch = 0 : i64, scratch_operands = 0 : i64, tpu.core_type = #tpu.core_type<tc>, window_params = [{transform_indices = @transform_0, window_bounds = array<i64: 128, 576>}, {pipeline_mode = #tpu.pipeline_mode<synchronous>, transform_indices = @transform_1, window_bounds = array<i64: 576, 128>}, {pipeline_mode = #tpu.pipeline_mode<synchronous>, transform_indices = @transform_2, window_bounds = array<i64: 1, 128>}, {pipeline_mode = #tpu.pipeline_mode<synchronous>, transform_indices = @transform_3, window_bounds = array<i64: 1, 128>}, {transform_indices = @transform_4, window_bounds = array<i64: 128, 128>}]} {
    %c0 = arith.constant 0 : index
    %c0_0 = arith.constant 0 : index
    %0 = vector.load %arg1[%c0, %c0_0] : memref<128x576xbf16, #tpu.memory_space<vmem>>, vector<128x576xbf16>
    %c0_1 = arith.constant 0 : index
    %c0_2 = arith.constant 0 : index
    %1 = vector.load %arg2[%c0_1, %c0_2] : memref<576x128xbf16, #tpu.memory_space<vmem>>, vector<576x128xbf16>
    %cst = arith.constant dense<0.000000e+00> : vector<128x128xf32>
    %2 = tpu.matmul %0, %1, %cst {dimension_numbers = #tpu.dot_dimension_numbers<[1], [0], [0], [1], [0, 0, 1, 1], [], []>} : vector<128x576xbf16>, vector<576x128xbf16>, vector<128x128xf32> -> vector<128x128xf32>
    %c0_3 = arith.constant 0 : index
    %c0_4 = arith.constant 0 : index
    %3 = vector.load %arg3[%c0_3, %c0_4] : memref<1x128xf32, #tpu.memory_space<vmem>>, vector<1x128xf32>
    %4 = vector.broadcast %3 : vector<1x128xf32> to vector<128x128xf32>
    %5 = arith.mulf %2, %4 : vector<128x128xf32>
    %c0_5 = arith.constant 0 : index
    %c0_6 = arith.constant 0 : index
    %6 = vector.load %arg4[%c0_5, %c0_6] : memref<1x128xf32, #tpu.memory_space<vmem>>, vector<1x128xf32>
    %7 = vector.broadcast %6 : vector<1x128xf32> to vector<128x128xf32>
    %8 = arith.addf %5, %7 : vector<128x128xf32>
    %cst_7 = arith.constant 0.000000e+00 : f32
    %9 = vector.broadcast %cst_7 : f32 to vector<128x128xf32>
    %10 = arith.maximumf %8, %9 : vector<128x128xf32>
    %11 = arith.truncf %10 : vector<128x128xf32> to vector<128x128xbf16>
    %c0_8 = arith.constant 0 : index
    %c0_9 = arith.constant 0 : index
    %12 = vector.load %arg5[%c0_8, %c0_9] : memref<128x128xbf16, #tpu.memory_space<vmem>>, vector<128x128xbf16>
    tpu.vector_store %arg5[%c0_8, %c0_9], %11 {strides = array<i32>} : memref<128x128xbf16, #tpu.memory_space<vmem>>, vector<128x128xbf16>,
    return
  }
  func.func @transform_0(%arg0: i32) -> (i32, i32) {
    %c0_i32 = arith.constant 0 : i32
    %c0_i32_0 = arith.constant 0 : i32
    return %arg0, %c0_i32 : i32, i32
  }
  func.func @transform_1(%arg0: i32) -> (i32, i32) {
    %c0_i32 = arith.constant 0 : i32
    %c0_i32_0 = arith.constant 0 : i32
    %c0_i32_1 = arith.constant 0 : i32
    return %c0_i32, %c0_i32_0 : i32, i32
  }
  func.func @transform_2(%arg0: i32) -> (i32, i32) {
    %c0_i32 = arith.constant 0 : i32
    %c0_i32_0 = arith.constant 0 : i32
    %c0_i32_1 = arith.constant 0 : i32
    return %c0_i32, %c0_i32_0 : i32, i32
  }
  func.func @transform_3(%arg0: i32) -> (i32, i32) {
    %c0_i32 = arith.constant 0 : i32
    %c0_i32_0 = arith.constant 0 : i32
    %c0_i32_1 = arith.constant 0 : i32
    return %c0_i32, %c0_i32_0 : i32, i32
  }
  func.func @transform_4(%arg0: i32) -> (i32, i32) {
    %c0_i32 = arith.constant 0 : i32
    %c0_i32_0 = arith.constant 0 : i32
    return %arg0, %c0_i32 : i32, i32
  }
}

module attributes {stable_mosaic.version = 11 : i64} {
  func.func @_mm_affine_kernel(%arg0: i32, %arg1: memref<128x64xbf16, #tpu.memory_space<vmem>>, %arg2: memref<64x128xbf16, #tpu.memory_space<vmem>>, %arg3: memref<1x128xf32, #tpu.memory_space<vmem>>, %arg4: memref<1x128xf32, #tpu.memory_space<vmem>>, %arg5: memref<128x128xbf16, #tpu.memory_space<vmem>>) attributes {dimension_semantics = [#tpu.dimension_semantics<parallel>], iteration_bounds = array<i64: 1>, scalar_prefetch = 0 : i64, scratch_operands = 0 : i64, tpu.core_type = #tpu.core_type<tc>, window_params = [{transform_indices = @transform_0, window_bounds = array<i64: 128, 64>}, {pipeline_mode = #tpu.pipeline_mode<synchronous>, transform_indices = @transform_1, window_bounds = array<i64: 64, 128>}, {pipeline_mode = #tpu.pipeline_mode<synchronous>, transform_indices = @transform_2, window_bounds = array<i64: 1, 128>}, {pipeline_mode = #tpu.pipeline_mode<synchronous>, transform_indices = @transform_3, window_bounds = array<i64: 1, 128>}, {transform_indices = @transform_4, window_bounds = array<i64: 128, 128>}]} {
    %c0 = arith.constant 0 : index
    %c0_0 = arith.constant 0 : index
    %0 = vector.load %arg1[%c0, %c0_0] : memref<128x64xbf16, #tpu.memory_space<vmem>>, vector<128x64xbf16>
    %c0_1 = arith.constant 0 : index
    %c0_2 = arith.constant 0 : index
    %1 = vector.load %arg2[%c0_1, %c0_2] : memref<64x128xbf16, #tpu.memory_space<vmem>>, vector<64x128xbf16>
    %cst = arith.constant dense<0.000000e+00> : vector<128x128xf32>
    %2 = tpu.matmul %0, %1, %cst {dimension_numbers = #tpu.dot_dimension_numbers<[1], [0], [0], [1], [0, 0, 1, 1], [], []>} : vector<128x64xbf16>, vector<64x128xbf16>, vector<128x128xf32> -> vector<128x128xf32>
    %c0_3 = arith.constant 0 : index
    %c0_4 = arith.constant 0 : index
    %3 = vector.load %arg3[%c0_3, %c0_4] : memref<1x128xf32, #tpu.memory_space<vmem>>, vector<1x128xf32>
    %4 = vector.broadcast %3 : vector<1x128xf32> to vector<128x128xf32>
    %5 = arith.mulf %2, %4 : vector<128x128xf32>
    %c0_5 = arith.constant 0 : index
    %c0_6 = arith.constant 0 : index
    %6 = vector.load %arg4[%c0_5, %c0_6] : memref<1x128xf32, #tpu.memory_space<vmem>>, vector<1x128xf32>
    %7 = vector.broadcast %6 : vector<1x128xf32> to vector<128x128xf32>
    %8 = arith.addf %5, %7 : vector<128x128xf32>
    %9 = arith.truncf %8 : vector<128x128xf32> to vector<128x128xbf16>
    %c0_7 = arith.constant 0 : index
    %c0_8 = arith.constant 0 : index
    %10 = vector.load %arg5[%c0_7, %c0_8] : memref<128x128xbf16, #tpu.memory_space<vmem>>, vector<128x128xbf16>
    tpu.vector_store %arg5[%c0_7, %c0_8], %9 {strides = array<i32>} : memref<128x128xbf16, #tpu.memory_space<vmem>>, vector<128x128xbf16>,
    return
  }
  func.func @transform_0(%arg0: i32) -> (i32, i32) {
    %c0_i32 = arith.constant 0 : i32
    %c0_i32_0 = arith.constant 0 : i32
    return %arg0, %c0_i32 : i32, i32
  }
  func.func @transform_1(%arg0: i32) -> (i32, i32) {
    %c0_i32 = arith.constant 0 : i32
    %c0_i32_0 = arith.constant 0 : i32
    %c0_i32_1 = arith.constant 0 : i32
    return %c0_i32, %c0_i32_0 : i32, i32
  }
  func.func @transform_2(%arg0: i32) -> (i32, i32) {
    %c0_i32 = arith.constant 0 : i32
    %c0_i32_0 = arith.constant 0 : i32
    %c0_i32_1 = arith.constant 0 : i32
    return %c0_i32, %c0_i32_0 : i32, i32
  }
  func.func @transform_3(%arg0: i32) -> (i32, i32) {
    %c0_i32 = arith.constant 0 : i32
    %c0_i32_0 = arith.constant 0 : i32
    %c0_i32_1 = arith.constant 0 : i32
    return %c0_i32, %c0_i32_0 : i32, i32
  }
  func.func @transform_4(%arg0: i32) -> (i32, i32) {
    %c0_i32 = arith.constant 0 : i32
    %c0_i32_0 = arith.constant 0 : i32
    return %arg0, %c0_i32 : i32, i32
  }
}

module attributes {stable_mosaic.version = 11 : i64} {
  func.func @_conv3x3_s1_kernel(%arg0: i32, %arg1: memref<128x128xbf16, #tpu.memory_space<vmem>>, %arg2: memref<128x128xbf16, #tpu.memory_space<vmem>>, %arg3: memref<9x128x128xbf16, #tpu.memory_space<vmem>>, %arg4: memref<1x128xf32, #tpu.memory_space<vmem>>, %arg5: memref<1x128xf32, #tpu.memory_space<vmem>>, %arg6: memref<128x128xbf16, #tpu.memory_space<vmem>>, %arg7: memref<128x128xbf16, #tpu.memory_space<vmem>>) attributes {dimension_semantics = [#tpu.dimension_semantics<parallel>], iteration_bounds = array<i64: 1>, scalar_prefetch = 0 : i64, scratch_operands = 0 : i64, tpu.core_type = #tpu.core_type<tc>, window_params = [{transform_indices = @transform_0, window_bounds = array<i64: 128, 128>}, {transform_indices = @transform_1, window_bounds = array<i64: 128, 128>}, {pipeline_mode = #tpu.pipeline_mode<synchronous>, transform_indices = @transform_2, window_bounds = array<i64: 9, 128, 128>}, {pipeline_mode = #tpu.pipeline_mode<synchronous>, transform_indices = @transform_3, window_bounds = array<i64: 1, 128>}, {pipeline_mode = #tpu.pipeline_mode<synchronous>, transform_indices = @transform_4, window_bounds = array<i64: 1, 128>}, {transform_indices = @transform_5, window_bounds = array<i64: 128, 128>}, {transform_indices = @transform_6, window_bounds = array<i64: 128, 128>}]} {
    %c0 = arith.constant 0 : index
    %c0_0 = arith.constant 0 : index
    %0 = vector.load %arg1[%c0, %c0_0] : memref<128x128xbf16, #tpu.memory_space<vmem>>, vector<128x128xbf16>
    %c0_1 = arith.constant 0 : index
    %c0_2 = arith.constant 0 : index
    %1 = vector.load %arg2[%c0_1, %c0_2] : memref<128x128xbf16, #tpu.memory_space<vmem>>, vector<128x128xbf16>
    %2 = tpu.concatenate %0, %1 in 0 : vector<128x128xbf16>, vector<128x128xbf16> -> vector<256x128xbf16>
    %3 = arith.extf %2 : vector<256x128xbf16> to vector<256x128xf32>
    %cst = arith.constant 0.000000e+00 : f32
    %4 = vector.broadcast %cst : f32 to vector<128x128xf32>
    %5 = vector.extract_strided_slice %3 {offsets = [0, 0], sizes = [128, 128], strides = [1, 1]} : vector<256x128xf32> to vector<128x128xf32>
    %6 = arith.truncf %5 : vector<128x128xf32> to vector<128x128xbf16>
    %c0_3 = arith.constant 0 : index
    %c0_4 = arith.constant 0 : index
    %c0_5 = arith.constant 0 : index
    %7 = vector.load %arg3[%c0_3, %c0_4, %c0_5] : memref<9x128x128xbf16, #tpu.memory_space<vmem>>, vector<1x128x128xbf16>
    %8 = vector.shape_cast %7 : vector<1x128x128xbf16> to vector<128x128xbf16>
    %cst_6 = arith.constant dense<0.000000e+00> : vector<128x128xf32>
    %9 = tpu.matmul %6, %8, %cst_6 {dimension_numbers = #tpu.dot_dimension_numbers<[1], [0], [0], [1], [0, 0, 1, 1], [], []>} : vector<128x128xbf16>, vector<128x128xbf16>, vector<128x128xf32> -> vector<128x128xf32>
    %10 = arith.addf %4, %9 : vector<128x128xf32>
    %11 = vector.extract_strided_slice %3 {offsets = [1, 0], sizes = [128, 128], strides = [1, 1]} : vector<256x128xf32> to vector<128x128xf32>
    %12 = arith.truncf %11 : vector<128x128xf32> to vector<128x128xbf16>
    %c1 = arith.constant 1 : index
    %c0_7 = arith.constant 0 : index
    %c0_8 = arith.constant 0 : index
    %13 = vector.load %arg3[%c1, %c0_7, %c0_8] : memref<9x128x128xbf16, #tpu.memory_space<vmem>>, vector<1x128x128xbf16>
    %14 = vector.shape_cast %13 : vector<1x128x128xbf16> to vector<128x128xbf16>
    %cst_9 = arith.constant dense<0.000000e+00> : vector<128x128xf32>
    %15 = tpu.matmul %12, %14, %cst_9 {dimension_numbers = #tpu.dot_dimension_numbers<[1], [0], [0], [1], [0, 0, 1, 1], [], []>} : vector<128x128xbf16>, vector<128x128xbf16>, vector<128x128xf32> -> vector<128x128xf32>
    %16 = arith.addf %10, %15 : vector<128x128xf32>
    %17 = vector.extract_strided_slice %3 {offsets = [2, 0], sizes = [128, 128], strides = [1, 1]} : vector<256x128xf32> to vector<128x128xf32>
    %18 = arith.truncf %17 : vector<128x128xf32> to vector<128x128xbf16>
    %c2 = arith.constant 2 : index
    %c0_10 = arith.constant 0 : index
    %c0_11 = arith.constant 0 : index
    %19 = vector.load %arg3[%c2, %c0_10, %c0_11] : memref<9x128x128xbf16, #tpu.memory_space<vmem>>, vector<1x128x128xbf16>
    %20 = vector.shape_cast %19 : vector<1x128x128xbf16> to vector<128x128xbf16>
    %cst_12 = arith.constant dense<0.000000e+00> : vector<128x128xf32>
    %21 = tpu.matmul %18, %20, %cst_12 {dimension_numbers = #tpu.dot_dimension_numbers<[1], [0], [0], [1], [0, 0, 1, 1], [], []>} : vector<128x128xbf16>, vector<128x128xbf16>, vector<128x128xf32> -> vector<128x128xf32>
    %22 = arith.addf %16, %21 : vector<128x128xf32>
    %23 = vector.extract_strided_slice %3 {offsets = [4, 0], sizes = [128, 128], strides = [1, 1]} : vector<256x128xf32> to vector<128x128xf32>
    %24 = arith.truncf %23 : vector<128x128xf32> to vector<128x128xbf16>
    %c3 = arith.constant 3 : index
    %c0_13 = arith.constant 0 : index
    %c0_14 = arith.constant 0 : index
    %25 = vector.load %arg3[%c3, %c0_13, %c0_14] : memref<9x128x128xbf16, #tpu.memory_space<vmem>>, vector<1x128x128xbf16>
    %26 = vector.shape_cast %25 : vector<1x128x128xbf16> to vector<128x128xbf16>
    %cst_15 = arith.constant dense<0.000000e+00> : vector<128x128xf32>
    %27 = tpu.matmul %24, %26, %cst_15 {dimension_numbers = #tpu.dot_dimension_numbers<[1], [0], [0], [1], [0, 0, 1, 1], [], []>} : vector<128x128xbf16>, vector<128x128xbf16>, vector<128x128xf32> -> vector<128x128xf32>
    %28 = arith.addf %22, %27 : vector<128x128xf32>
    %29 = vector.extract_strided_slice %3 {offsets = [5, 0], sizes = [128, 128], strides = [1, 1]} : vector<256x128xf32> to vector<128x128xf32>
    %30 = arith.truncf %29 : vector<128x128xf32> to vector<128x128xbf16>
    %c4 = arith.constant 4 : index
    %c0_16 = arith.constant 0 : index
    %c0_17 = arith.constant 0 : index
    %31 = vector.load %arg3[%c4, %c0_16, %c0_17] : memref<9x128x128xbf16, #tpu.memory_space<vmem>>, vector<1x128x128xbf16>
    %32 = vector.shape_cast %31 : vector<1x128x128xbf16> to vector<128x128xbf16>
    %cst_18 = arith.constant dense<0.000000e+00> : vector<128x128xf32>
    %33 = tpu.matmul %30, %32, %cst_18 {dimension_numbers = #tpu.dot_dimension_numbers<[1], [0], [0], [1], [0, 0, 1, 1], [], []>} : vector<128x128xbf16>, vector<128x128xbf16>, vector<128x128xf32> -> vector<128x128xf32>
    %34 = arith.addf %28, %33 : vector<128x128xf32>
    %35 = vector.extract_strided_slice %3 {offsets = [6, 0], sizes = [128, 128], strides = [1, 1]} : vector<256x128xf32> to vector<128x128xf32>
    %36 = arith.truncf %35 : vector<128x128xf32> to vector<128x128xbf16>
    %c5 = arith.constant 5 : index
    %c0_19 = arith.constant 0 : index
    %c0_20 = arith.constant 0 : index
    %37 = vector.load %arg3[%c5, %c0_19, %c0_20] : memref<9x128x128xbf16, #tpu.memory_space<vmem>>, vector<1x128x128xbf16>
    %38 = vector.shape_cast %37 : vector<1x128x128xbf16> to vector<128x128xbf16>
    %cst_21 = arith.constant dense<0.000000e+00> : vector<128x128xf32>
    %39 = tpu.matmul %36, %38, %cst_21 {dimension_numbers = #tpu.dot_dimension_numbers<[1], [0], [0], [1], [0, 0, 1, 1], [], []>} : vector<128x128xbf16>, vector<128x128xbf16>, vector<128x128xf32> -> vector<128x128xf32>
    %40 = arith.addf %34, %39 : vector<128x128xf32>
    %41 = vector.extract_strided_slice %3 {offsets = [8, 0], sizes = [128, 128], strides = [1, 1]} : vector<256x128xf32> to vector<128x128xf32>
    %42 = arith.truncf %41 : vector<128x128xf32> to vector<128x128xbf16>
    %c6 = arith.constant 6 : index
    %c0_22 = arith.constant 0 : index
    %c0_23 = arith.constant 0 : index
    %43 = vector.load %arg3[%c6, %c0_22, %c0_23] : memref<9x128x128xbf16, #tpu.memory_space<vmem>>, vector<1x128x128xbf16>
    %44 = vector.shape_cast %43 : vector<1x128x128xbf16> to vector<128x128xbf16>
    %cst_24 = arith.constant dense<0.000000e+00> : vector<128x128xf32>
    %45 = tpu.matmul %42, %44, %cst_24 {dimension_numbers = #tpu.dot_dimension_numbers<[1], [0], [0], [1], [0, 0, 1, 1], [], []>} : vector<128x128xbf16>, vector<128x128xbf16>, vector<128x128xf32> -> vector<128x128xf32>
    %46 = arith.addf %40, %45 : vector<128x128xf32>
    %47 = vector.extract_strided_slice %3 {offsets = [9, 0], sizes = [128, 128], strides = [1, 1]} : vector<256x128xf32> to vector<128x128xf32>
    %48 = arith.truncf %47 : vector<128x128xf32> to vector<128x128xbf16>
    %c7 = arith.constant 7 : index
    %c0_25 = arith.constant 0 : index
    %c0_26 = arith.constant 0 : index
    %49 = vector.load %arg3[%c7, %c0_25, %c0_26] : memref<9x128x128xbf16, #tpu.memory_space<vmem>>, vector<1x128x128xbf16>
    %50 = vector.shape_cast %49 : vector<1x128x128xbf16> to vector<128x128xbf16>
    %cst_27 = arith.constant dense<0.000000e+00> : vector<128x128xf32>
    %51 = tpu.matmul %48, %50, %cst_27 {dimension_numbers = #tpu.dot_dimension_numbers<[1], [0], [0], [1], [0, 0, 1, 1], [], []>} : vector<128x128xbf16>, vector<128x128xbf16>, vector<128x128xf32> -> vector<128x128xf32>
    %52 = arith.addf %46, %51 : vector<128x128xf32>
    %53 = vector.extract_strided_slice %3 {offsets = [10, 0], sizes = [128, 128], strides = [1, 1]} : vector<256x128xf32> to vector<128x128xf32>
    %54 = arith.truncf %53 : vector<128x128xf32> to vector<128x128xbf16>
    %c8 = arith.constant 8 : index
    %c0_28 = arith.constant 0 : index
    %c0_29 = arith.constant 0 : index
    %55 = vector.load %arg3[%c8, %c0_28, %c0_29] : memref<9x128x128xbf16, #tpu.memory_space<vmem>>, vector<1x128x128xbf16>
    %56 = vector.shape_cast %55 : vector<1x128x128xbf16> to vector<128x128xbf16>
    %cst_30 = arith.constant dense<0.000000e+00> : vector<128x128xf32>
    %57 = tpu.matmul %54, %56, %cst_30 {dimension_numbers = #tpu.dot_dimension_numbers<[1], [0], [0], [1], [0, 0, 1, 1], [], []>} : vector<128x128xbf16>, vector<128x128xbf16>, vector<128x128xf32> -> vector<128x128xf32>
    %58 = arith.addf %52, %57 : vector<128x128xf32>
    %c0_31 = arith.constant 0 : index
    %c0_32 = arith.constant 0 : index
    %59 = vector.load %arg4[%c0_31, %c0_32] : memref<1x128xf32, #tpu.memory_space<vmem>>, vector<1x128xf32>
    %60 = vector.broadcast %59 : vector<1x128xf32> to vector<128x128xf32>
    %61 = arith.mulf %58, %60 : vector<128x128xf32>
    %c0_33 = arith.constant 0 : index
    %c0_34 = arith.constant 0 : index
    %62 = vector.load %arg5[%c0_33, %c0_34] : memref<1x128xf32, #tpu.memory_space<vmem>>, vector<1x128xf32>
    %63 = vector.broadcast %62 : vector<1x128xf32> to vector<128x128xf32>
    %64 = arith.addf %61, %63 : vector<128x128xf32>
    %c0_35 = arith.constant 0 : index
    %c0_36 = arith.constant 0 : index
    %65 = vector.load %arg6[%c0_35, %c0_36] : memref<128x128xbf16, #tpu.memory_space<vmem>>, vector<128x128xbf16>
    %66 = arith.extf %65 : vector<128x128xbf16> to vector<128x128xf32>
    %67 = arith.addf %64, %66 : vector<128x128xf32>
    %cst_37 = arith.constant 0.000000e+00 : f32
    %68 = vector.broadcast %cst_37 : f32 to vector<128x128xf32>
    %69 = arith.maximumf %67, %68 : vector<128x128xf32>
    %70 = arith.truncf %69 : vector<128x128xf32> to vector<128x128xbf16>
    %c0_38 = arith.constant 0 : index
    %c0_39 = arith.constant 0 : index
    %71 = vector.load %arg7[%c0_38, %c0_39] : memref<128x128xbf16, #tpu.memory_space<vmem>>, vector<128x128xbf16>
    tpu.vector_store %arg7[%c0_38, %c0_39], %70 {strides = array<i32>} : memref<128x128xbf16, #tpu.memory_space<vmem>>, vector<128x128xbf16>,
    return
  }
  func.func @transform_0(%arg0: i32) -> (i32, i32) {
    %c0_i32 = arith.constant 0 : i32
    %c0_i32_0 = arith.constant 0 : i32
    return %arg0, %c0_i32 : i32, i32
  }
  func.func @transform_1(%arg0: i32) -> (i32, i32) {
    %c1_i32 = arith.constant 1 : i32
    %0 = arith.addi %arg0, %c1_i32 : i32
    %c0_i32 = arith.constant 0 : i32
    %c0_i32_0 = arith.constant 0 : i32
    return %0, %c0_i32 : i32, i32
  }
  func.func @transform_2(%arg0: i32) -> (i32, i32, i32) {
    %c0_i32 = arith.constant 0 : i32
    %c0_i32_0 = arith.constant 0 : i32
    %c0_i32_1 = arith.constant 0 : i32
    %c0_i32_2 = arith.constant 0 : i32
    return %c0_i32, %c0_i32_0, %c0_i32_1 : i32, i32, i32
  }
  func.func @transform_3(%arg0: i32) -> (i32, i32) {
    %c0_i32 = arith.constant 0 : i32
    %c0_i32_0 = arith.constant 0 : i32
    %c0_i32_1 = arith.constant 0 : i32
    return %c0_i32, %c0_i32_0 : i32, i32
  }
  func.func @transform_4(%arg0: i32) -> (i32, i32) {
    %c0_i32 = arith.constant 0 : i32
    %c0_i32_0 = arith.constant 0 : i32
    %c0_i32_1 = arith.constant 0 : i32
    return %c0_i32, %c0_i32_0 : i32, i32
  }
  func.func @transform_5(%arg0: i32) -> (i32, i32) {
    %c0_i32 = arith.constant 0 : i32
    %c0_i32_0 = arith.constant 0 : i32
    return %arg0, %c0_i32 : i32, i32
  }
  func.func @transform_6(%arg0: i32) -> (i32, i32) {
    %c0_i32 = arith.constant 0 : i32
    %c0_i32_0 = arith.constant 0 : i32
    return %arg0, %c0_i32 : i32, i32
  }
}

module attributes {stable_mosaic.version = 11 : i64} {
  func.func @_conv3x3_s1_kernel(%arg0: i32, %arg1: memref<128x128xbf16, #tpu.memory_space<vmem>>, %arg2: memref<128x128xbf16, #tpu.memory_space<vmem>>, %arg3: memref<9x128x128xbf16, #tpu.memory_space<vmem>>, %arg4: memref<1x128xf32, #tpu.memory_space<vmem>>, %arg5: memref<1x128xf32, #tpu.memory_space<vmem>>, %arg6: memref<128x128xbf16, #tpu.memory_space<vmem>>) attributes {dimension_semantics = [#tpu.dimension_semantics<parallel>], iteration_bounds = array<i64: 1>, scalar_prefetch = 0 : i64, scratch_operands = 0 : i64, tpu.core_type = #tpu.core_type<tc>, window_params = [{transform_indices = @transform_0, window_bounds = array<i64: 128, 128>}, {transform_indices = @transform_1, window_bounds = array<i64: 128, 128>}, {pipeline_mode = #tpu.pipeline_mode<synchronous>, transform_indices = @transform_2, window_bounds = array<i64: 9, 128, 128>}, {pipeline_mode = #tpu.pipeline_mode<synchronous>, transform_indices = @transform_3, window_bounds = array<i64: 1, 128>}, {pipeline_mode = #tpu.pipeline_mode<synchronous>, transform_indices = @transform_4, window_bounds = array<i64: 1, 128>}, {transform_indices = @transform_5, window_bounds = array<i64: 128, 128>}]} {
    %c0 = arith.constant 0 : index
    %c0_0 = arith.constant 0 : index
    %0 = vector.load %arg1[%c0, %c0_0] : memref<128x128xbf16, #tpu.memory_space<vmem>>, vector<128x128xbf16>
    %c0_1 = arith.constant 0 : index
    %c0_2 = arith.constant 0 : index
    %1 = vector.load %arg2[%c0_1, %c0_2] : memref<128x128xbf16, #tpu.memory_space<vmem>>, vector<128x128xbf16>
    %2 = tpu.concatenate %0, %1 in 0 : vector<128x128xbf16>, vector<128x128xbf16> -> vector<256x128xbf16>
    %3 = arith.extf %2 : vector<256x128xbf16> to vector<256x128xf32>
    %cst = arith.constant 0.000000e+00 : f32
    %4 = vector.broadcast %cst : f32 to vector<128x128xf32>
    %5 = vector.extract_strided_slice %3 {offsets = [0, 0], sizes = [128, 128], strides = [1, 1]} : vector<256x128xf32> to vector<128x128xf32>
    %6 = arith.truncf %5 : vector<128x128xf32> to vector<128x128xbf16>
    %c0_3 = arith.constant 0 : index
    %c0_4 = arith.constant 0 : index
    %c0_5 = arith.constant 0 : index
    %7 = vector.load %arg3[%c0_3, %c0_4, %c0_5] : memref<9x128x128xbf16, #tpu.memory_space<vmem>>, vector<1x128x128xbf16>
    %8 = vector.shape_cast %7 : vector<1x128x128xbf16> to vector<128x128xbf16>
    %cst_6 = arith.constant dense<0.000000e+00> : vector<128x128xf32>
    %9 = tpu.matmul %6, %8, %cst_6 {dimension_numbers = #tpu.dot_dimension_numbers<[1], [0], [0], [1], [0, 0, 1, 1], [], []>} : vector<128x128xbf16>, vector<128x128xbf16>, vector<128x128xf32> -> vector<128x128xf32>
    %10 = arith.addf %4, %9 : vector<128x128xf32>
    %11 = vector.extract_strided_slice %3 {offsets = [1, 0], sizes = [128, 128], strides = [1, 1]} : vector<256x128xf32> to vector<128x128xf32>
    %12 = arith.truncf %11 : vector<128x128xf32> to vector<128x128xbf16>
    %c1 = arith.constant 1 : index
    %c0_7 = arith.constant 0 : index
    %c0_8 = arith.constant 0 : index
    %13 = vector.load %arg3[%c1, %c0_7, %c0_8] : memref<9x128x128xbf16, #tpu.memory_space<vmem>>, vector<1x128x128xbf16>
    %14 = vector.shape_cast %13 : vector<1x128x128xbf16> to vector<128x128xbf16>
    %cst_9 = arith.constant dense<0.000000e+00> : vector<128x128xf32>
    %15 = tpu.matmul %12, %14, %cst_9 {dimension_numbers = #tpu.dot_dimension_numbers<[1], [0], [0], [1], [0, 0, 1, 1], [], []>} : vector<128x128xbf16>, vector<128x128xbf16>, vector<128x128xf32> -> vector<128x128xf32>
    %16 = arith.addf %10, %15 : vector<128x128xf32>
    %17 = vector.extract_strided_slice %3 {offsets = [2, 0], sizes = [128, 128], strides = [1, 1]} : vector<256x128xf32> to vector<128x128xf32>
    %18 = arith.truncf %17 : vector<128x128xf32> to vector<128x128xbf16>
    %c2 = arith.constant 2 : index
    %c0_10 = arith.constant 0 : index
    %c0_11 = arith.constant 0 : index
    %19 = vector.load %arg3[%c2, %c0_10, %c0_11] : memref<9x128x128xbf16, #tpu.memory_space<vmem>>, vector<1x128x128xbf16>
    %20 = vector.shape_cast %19 : vector<1x128x128xbf16> to vector<128x128xbf16>
    %cst_12 = arith.constant dense<0.000000e+00> : vector<128x128xf32>
    %21 = tpu.matmul %18, %20, %cst_12 {dimension_numbers = #tpu.dot_dimension_numbers<[1], [0], [0], [1], [0, 0, 1, 1], [], []>} : vector<128x128xbf16>, vector<128x128xbf16>, vector<128x128xf32> -> vector<128x128xf32>
    %22 = arith.addf %16, %21 : vector<128x128xf32>
    %23 = vector.extract_strided_slice %3 {offsets = [4, 0], sizes = [128, 128], strides = [1, 1]} : vector<256x128xf32> to vector<128x128xf32>
    %24 = arith.truncf %23 : vector<128x128xf32> to vector<128x128xbf16>
    %c3 = arith.constant 3 : index
    %c0_13 = arith.constant 0 : index
    %c0_14 = arith.constant 0 : index
    %25 = vector.load %arg3[%c3, %c0_13, %c0_14] : memref<9x128x128xbf16, #tpu.memory_space<vmem>>, vector<1x128x128xbf16>
    %26 = vector.shape_cast %25 : vector<1x128x128xbf16> to vector<128x128xbf16>
    %cst_15 = arith.constant dense<0.000000e+00> : vector<128x128xf32>
    %27 = tpu.matmul %24, %26, %cst_15 {dimension_numbers = #tpu.dot_dimension_numbers<[1], [0], [0], [1], [0, 0, 1, 1], [], []>} : vector<128x128xbf16>, vector<128x128xbf16>, vector<128x128xf32> -> vector<128x128xf32>
    %28 = arith.addf %22, %27 : vector<128x128xf32>
    %29 = vector.extract_strided_slice %3 {offsets = [5, 0], sizes = [128, 128], strides = [1, 1]} : vector<256x128xf32> to vector<128x128xf32>
    %30 = arith.truncf %29 : vector<128x128xf32> to vector<128x128xbf16>
    %c4 = arith.constant 4 : index
    %c0_16 = arith.constant 0 : index
    %c0_17 = arith.constant 0 : index
    %31 = vector.load %arg3[%c4, %c0_16, %c0_17] : memref<9x128x128xbf16, #tpu.memory_space<vmem>>, vector<1x128x128xbf16>
    %32 = vector.shape_cast %31 : vector<1x128x128xbf16> to vector<128x128xbf16>
    %cst_18 = arith.constant dense<0.000000e+00> : vector<128x128xf32>
    %33 = tpu.matmul %30, %32, %cst_18 {dimension_numbers = #tpu.dot_dimension_numbers<[1], [0], [0], [1], [0, 0, 1, 1], [], []>} : vector<128x128xbf16>, vector<128x128xbf16>, vector<128x128xf32> -> vector<128x128xf32>
    %34 = arith.addf %28, %33 : vector<128x128xf32>
    %35 = vector.extract_strided_slice %3 {offsets = [6, 0], sizes = [128, 128], strides = [1, 1]} : vector<256x128xf32> to vector<128x128xf32>
    %36 = arith.truncf %35 : vector<128x128xf32> to vector<128x128xbf16>
    %c5 = arith.constant 5 : index
    %c0_19 = arith.constant 0 : index
    %c0_20 = arith.constant 0 : index
    %37 = vector.load %arg3[%c5, %c0_19, %c0_20] : memref<9x128x128xbf16, #tpu.memory_space<vmem>>, vector<1x128x128xbf16>
    %38 = vector.shape_cast %37 : vector<1x128x128xbf16> to vector<128x128xbf16>
    %cst_21 = arith.constant dense<0.000000e+00> : vector<128x128xf32>
    %39 = tpu.matmul %36, %38, %cst_21 {dimension_numbers = #tpu.dot_dimension_numbers<[1], [0], [0], [1], [0, 0, 1, 1], [], []>} : vector<128x128xbf16>, vector<128x128xbf16>, vector<128x128xf32> -> vector<128x128xf32>
    %40 = arith.addf %34, %39 : vector<128x128xf32>
    %41 = vector.extract_strided_slice %3 {offsets = [8, 0], sizes = [128, 128], strides = [1, 1]} : vector<256x128xf32> to vector<128x128xf32>
    %42 = arith.truncf %41 : vector<128x128xf32> to vector<128x128xbf16>
    %c6 = arith.constant 6 : index
    %c0_22 = arith.constant 0 : index
    %c0_23 = arith.constant 0 : index
    %43 = vector.load %arg3[%c6, %c0_22, %c0_23] : memref<9x128x128xbf16, #tpu.memory_space<vmem>>, vector<1x128x128xbf16>
    %44 = vector.shape_cast %43 : vector<1x128x128xbf16> to vector<128x128xbf16>
    %cst_24 = arith.constant dense<0.000000e+00> : vector<128x128xf32>
    %45 = tpu.matmul %42, %44, %cst_24 {dimension_numbers = #tpu.dot_dimension_numbers<[1], [0], [0], [1], [0, 0, 1, 1], [], []>} : vector<128x128xbf16>, vector<128x128xbf16>, vector<128x128xf32> -> vector<128x128xf32>
    %46 = arith.addf %40, %45 : vector<128x128xf32>
    %47 = vector.extract_strided_slice %3 {offsets = [9, 0], sizes = [128, 128], strides = [1, 1]} : vector<256x128xf32> to vector<128x128xf32>
    %48 = arith.truncf %47 : vector<128x128xf32> to vector<128x128xbf16>
    %c7 = arith.constant 7 : index
    %c0_25 = arith.constant 0 : index
    %c0_26 = arith.constant 0 : index
    %49 = vector.load %arg3[%c7, %c0_25, %c0_26] : memref<9x128x128xbf16, #tpu.memory_space<vmem>>, vector<1x128x128xbf16>
    %50 = vector.shape_cast %49 : vector<1x128x128xbf16> to vector<128x128xbf16>
    %cst_27 = arith.constant dense<0.000000e+00> : vector<128x128xf32>
    %51 = tpu.matmul %48, %50, %cst_27 {dimension_numbers = #tpu.dot_dimension_numbers<[1], [0], [0], [1], [0, 0, 1, 1], [], []>} : vector<128x128xbf16>, vector<128x128xbf16>, vector<128x128xf32> -> vector<128x128xf32>
    %52 = arith.addf %46, %51 : vector<128x128xf32>
    %53 = vector.extract_strided_slice %3 {offsets = [10, 0], sizes = [128, 128], strides = [1, 1]} : vector<256x128xf32> to vector<128x128xf32>
    %54 = arith.truncf %53 : vector<128x128xf32> to vector<128x128xbf16>
    %c8 = arith.constant 8 : index
    %c0_28 = arith.constant 0 : index
    %c0_29 = arith.constant 0 : index
    %55 = vector.load %arg3[%c8, %c0_28, %c0_29] : memref<9x128x128xbf16, #tpu.memory_space<vmem>>, vector<1x128x128xbf16>
    %56 = vector.shape_cast %55 : vector<1x128x128xbf16> to vector<128x128xbf16>
    %cst_30 = arith.constant dense<0.000000e+00> : vector<128x128xf32>
    %57 = tpu.matmul %54, %56, %cst_30 {dimension_numbers = #tpu.dot_dimension_numbers<[1], [0], [0], [1], [0, 0, 1, 1], [], []>} : vector<128x128xbf16>, vector<128x128xbf16>, vector<128x128xf32> -> vector<128x128xf32>
    %58 = arith.addf %52, %57 : vector<128x128xf32>
    %c0_31 = arith.constant 0 : index
    %c0_32 = arith.constant 0 : index
    %59 = vector.load %arg4[%c0_31, %c0_32] : memref<1x128xf32, #tpu.memory_space<vmem>>, vector<1x128xf32>
    %60 = vector.broadcast %59 : vector<1x128xf32> to vector<128x128xf32>
    %61 = arith.mulf %58, %60 : vector<128x128xf32>
    %c0_33 = arith.constant 0 : index
    %c0_34 = arith.constant 0 : index
    %62 = vector.load %arg5[%c0_33, %c0_34] : memref<1x128xf32, #tpu.memory_space<vmem>>, vector<1x128xf32>
    %63 = vector.broadcast %62 : vector<1x128xf32> to vector<128x128xf32>
    %64 = arith.addf %61, %63 : vector<128x128xf32>
    %cst_35 = arith.constant 0.000000e+00 : f32
    %65 = vector.broadcast %cst_35 : f32 to vector<128x128xf32>
    %66 = arith.maximumf %64, %65 : vector<128x128xf32>
    %67 = arith.truncf %66 : vector<128x128xf32> to vector<128x128xbf16>
    %c0_36 = arith.constant 0 : index
    %c0_37 = arith.constant 0 : index
    %68 = vector.load %arg6[%c0_36, %c0_37] : memref<128x128xbf16, #tpu.memory_space<vmem>>, vector<128x128xbf16>
    tpu.vector_store %arg6[%c0_36, %c0_37], %67 {strides = array<i32>} : memref<128x128xbf16, #tpu.memory_space<vmem>>, vector<128x128xbf16>,
    return
  }
  func.func @transform_0(%arg0: i32) -> (i32, i32) {
    %c0_i32 = arith.constant 0 : i32
    %c0_i32_0 = arith.constant 0 : i32
    return %arg0, %c0_i32 : i32, i32
  }
  func.func @transform_1(%arg0: i32) -> (i32, i32) {
    %c1_i32 = arith.constant 1 : i32
    %0 = arith.addi %arg0, %c1_i32 : i32
    %c0_i32 = arith.constant 0 : i32
    %c0_i32_0 = arith.constant 0 : i32
    return %0, %c0_i32 : i32, i32
  }
  func.func @transform_2(%arg0: i32) -> (i32, i32, i32) {
    %c0_i32 = arith.constant 0 : i32
    %c0_i32_0 = arith.constant 0 : i32
    %c0_i32_1 = arith.constant 0 : i32
    %c0_i32_2 = arith.constant 0 : i32
    return %c0_i32, %c0_i32_0, %c0_i32_1 : i32, i32, i32
  }
  func.func @transform_3(%arg0: i32) -> (i32, i32) {
    %c0_i32 = arith.constant 0 : i32
    %c0_i32_0 = arith.constant 0 : i32
    %c0_i32_1 = arith.constant 0 : i32
    return %c0_i32, %c0_i32_0 : i32, i32
  }
  func.func @transform_4(%arg0: i32) -> (i32, i32) {
    %c0_i32 = arith.constant 0 : i32
    %c0_i32_0 = arith.constant 0 : i32
    %c0_i32_1 = arith.constant 0 : i32
    return %c0_i32, %c0_i32_0 : i32, i32
  }
  func.func @transform_5(%arg0: i32) -> (i32, i32) {
    %c0_i32 = arith.constant 0 : i32
    %c0_i32_0 = arith.constant 0 : i32
    return %arg0, %c0_i32 : i32, i32
  }
}

module attributes {stable_mosaic.version = 11 : i64} {
  func.func @_layernorm_kernel(%arg0: i32, %arg1: memref<8x1536xbf16, #tpu.memory_space<vmem>>, %arg2: memref<1x1536xf32, #tpu.memory_space<vmem>>, %arg3: memref<1x1536xf32, #tpu.memory_space<vmem>>, %arg4: memref<8x1536xf32, #tpu.memory_space<vmem>>) attributes {dimension_semantics = [#tpu.dimension_semantics<parallel>], iteration_bounds = array<i64: 1>, scalar_prefetch = 0 : i64, scratch_operands = 0 : i64, tpu.core_type = #tpu.core_type<tc>, window_params = [{transform_indices = @transform_0, window_bounds = array<i64: 8, 1536>}, {pipeline_mode = #tpu.pipeline_mode<synchronous>, transform_indices = @transform_1, window_bounds = array<i64: 1, 1536>}, {pipeline_mode = #tpu.pipeline_mode<synchronous>, transform_indices = @transform_2, window_bounds = array<i64: 1, 1536>}, {transform_indices = @transform_3, window_bounds = array<i64: 8, 1536>}]} {
    %c0 = arith.constant 0 : index
    %c0_0 = arith.constant 0 : index
    %0 = vector.load %arg1[%c0, %c0_0] : memref<8x1536xbf16, #tpu.memory_space<vmem>>, vector<8x1536xbf16>
    %1 = arith.extf %0 : vector<8x1536xbf16> to vector<8x1536xf32>
    %cst = arith.constant dense<0.000000e+00> : vector<8xf32>
    %2 = vector.multi_reduction <add>, %1, %cst [1] : vector<8x1536xf32> to vector<8xf32>
    %3 = vector.shape_cast %2 : vector<8xf32> to vector<8x1xf32>
    %cst_1 = arith.constant 1.536000e+03 : f32
    %4 = vector.broadcast %cst_1 : f32 to vector<8x1xf32>
    %5 = arith.divf %3, %4 : vector<8x1xf32>
    %6 = vector.broadcast %5 : vector<8x1xf32> to vector<8x1536xf32>
    %7 = arith.subf %1, %6 : vector<8x1536xf32>
    %8 = arith.mulf %7, %7 : vector<8x1536xf32>
    %cst_2 = arith.constant dense<0.000000e+00> : vector<8xf32>
    %9 = vector.multi_reduction <add>, %8, %cst_2 [1] : vector<8x1536xf32> to vector<8xf32>
    %10 = vector.shape_cast %9 : vector<8xf32> to vector<8x1xf32>
    %cst_3 = arith.constant 1.536000e+03 : f32
    %11 = vector.broadcast %cst_3 : f32 to vector<8x1xf32>
    %12 = arith.divf %10, %11 : vector<8x1xf32>
    %cst_4 = arith.constant 9.99999974E-6 : f32
    %13 = vector.broadcast %cst_4 : f32 to vector<8x1xf32>
    %14 = arith.addf %12, %13 : vector<8x1xf32>
    %15 = math.rsqrt %14 : vector<8x1xf32>
    %16 = vector.broadcast %15 : vector<8x1xf32> to vector<8x1536xf32>
    %17 = arith.mulf %7, %16 : vector<8x1536xf32>
    %c0_5 = arith.constant 0 : index
    %c0_6 = arith.constant 0 : index
    %18 = vector.load %arg2[%c0_5, %c0_6] : memref<1x1536xf32, #tpu.memory_space<vmem>>, vector<1x1536xf32>
    %19 = vector.broadcast %18 : vector<1x1536xf32> to vector<8x1536xf32>
    %20 = arith.mulf %17, %19 : vector<8x1536xf32>
    %c0_7 = arith.constant 0 : index
    %c0_8 = arith.constant 0 : index
    %21 = vector.load %arg3[%c0_7, %c0_8] : memref<1x1536xf32, #tpu.memory_space<vmem>>, vector<1x1536xf32>
    %22 = vector.broadcast %21 : vector<1x1536xf32> to vector<8x1536xf32>
    %23 = arith.addf %20, %22 : vector<8x1536xf32>
    %c0_9 = arith.constant 0 : index
    %c0_10 = arith.constant 0 : index
    %24 = vector.load %arg4[%c0_9, %c0_10] : memref<8x1536xf32, #tpu.memory_space<vmem>>, vector<8x1536xf32>
    tpu.vector_store %arg4[%c0_9, %c0_10], %23 {strides = array<i32>} : memref<8x1536xf32, #tpu.memory_space<vmem>>, vector<8x1536xf32>,
    return
  }
  func.func @transform_0(%arg0: i32) -> (i32, i32) {
    %c0_i32 = arith.constant 0 : i32
    %c0_i32_0 = arith.constant 0 : i32
    return %arg0, %c0_i32 : i32, i32
  }
  func.func @transform_1(%arg0: i32) -> (i32, i32) {
    %c0_i32 = arith.constant 0 : i32
    %c0_i32_0 = arith.constant 0 : i32
    %c0_i32_1 = arith.constant 0 : i32
    return %c0_i32, %c0_i32_0 : i32, i32
  }
  func.func @transform_2(%arg0: i32) -> (i32, i32) {
    %c0_i32 = arith.constant 0 : i32
    %c0_i32_0 = arith.constant 0 : i32
    %c0_i32_1 = arith.constant 0 : i32
    return %c0_i32, %c0_i32_0 : i32, i32
  }
  func.func @transform_3(%arg0: i32) -> (i32, i32) {
    %c0_i32 = arith.constant 0 : i32
    %c0_i32_0 = arith.constant 0 : i32
    return %arg0, %c0_i32 : i32, i32
  }
}

</mosaic_0001>

<llo_original>
// kernel: resnet_forward.12
$region0: #{resnet_forward.12}
  #allocation0 [shape = 'u32[]', space=smem, size = 0x4, offset = 0x4, fixed_abs, tag = 'smem constant byte address 0x4 - core index']
  #allocation1 [shape = 'u32[144,128]{1,0:T(1,128)}', space=vmem, size = 0x12000, scoped, tag = 'internal scratch']
  %s0 = inlined_call_operand.vmem [shape: bf16[384,196], index: 0, kind: input, shape index: {}]
  %s1 = inlined_call_operand.vmem [shape: bf16[196,64], index: 1, kind: input, shape index: {}]
  %s2 = inlined_call_operand.vmem [shape: f32[1,64], index: 2, kind: input, shape index: {}]
  %s3 = inlined_call_operand.vmem [shape: f32[1,64], index: 3, kind: input, shape index: {}]
  %s4 = inlined_call_operand.vmem [shape: bf16[384,64], index: 4, kind: output, shape index: {}]
  %s5 = sld [smem:[#allocation0]]
  $region49: #{resnet_forward.12} parent=0
    _
  %s7 = ssub.s32 1, %s5
  %s8 = scalar_select 0, %s7, %s5
  loop: start=0, step=1, limit=5
  $region2: #{resnet_forward.12} parent=0 // loop_pre_header
    _
  $region3: #{resnet_forward.12} parent=0 // loop_header
    %s10 = sphi 0, %s14
    %p11 = scmp.ge.s32.totalorder %s10, 5
    %s20 = sphi 0, %s22
    %s23 = sphi 0, %s20
    %s24 = sphi 0, %s23
    %s40 = sphi 0, %s24
    %s44 = sphi 0, %s44
    %s46 = sphi 0, %s44
    %s47 = sphi 0, %s46
    %s61 = sphi 0, %s47
    %s65 = sphi 0, %s65
    %s67 = sphi 0, %s65
    %s68 = sphi 0, %s67
    %s82 = sphi 0, %s68
    %s86 = sphi 0, %s86
    %s88 = sphi 0, %s86
    %s89 = sphi 0, %s88
    %s103 = sphi 0, %s89
    %s109 = sphi 0, %s111
    %s112 = sphi 0, %s109
    %s113 = sphi 0, %s112
    %s129 = sphi 0, %s113
  $region4: #{resnet_forward.12} parent=0 // loop_header_branch
    %13 = sbr.rel (%p11) target = $region8
  $region5: #{resnet_forward.12} parent=0 // loop_body
    %s15 = ssub.s32 %s10, 1
    %s16 = ssub.s32 %s10, 2
    %s17 = sadd.s32 %s10, 1
    %s18 = ssub.s32 %s10, %s17
    %p19 = scmp.eq.s32.totalorder %s18, 0
    %s21 = sadd.s32 %s20, 1
    %s22 = scalar_select %p19, %s20, %s21
    %p25 = pneg %p19
    %p26 = scmp.eq.s32.totalorder %s10, 2
    %p27 = por %p25, %p26
    %p28 = scmp.ne.s32.totalorder %s20, %s23
    %p29 = scmp.eq.s32.totalorder %s10, 0
    %p30 = por %p28, %p29
    %p31 = scmp.ne.s32.totalorder %s20, %s23
    %p32 = scmp.eq.s32.totalorder %s15, 2
    %p33 = por %p31, %p32
    %p34 = scmp.ne.s32.totalorder %s23, %s24
    %p35 = scmp.eq.s32.totalorder %s15, 0
    %p36 = por %p34, %p35
    %p37 = scmp.ne.s32.totalorder %s23, %s24
    %p38 = scmp.eq.s32.totalorder %s16, 2
    %p39 = por %p37, %p38
    %p41 = scmp.ne.s32.totalorder %s24, %s40
    %p42 = scmp.eq.s32.totalorder %s16, 0
    %p43 = por %p41, %p42
    %s45 = sadd.s32 %s44, 1
    %p48 = scmp.eq.s32.totalorder %s10, 2
    %p49 = scmp.ne.s32.totalorder %s44, %s46
    %p50 = scmp.eq.s32.totalorder %s10, 0
    %p51 = por %p49, %p50
    %p52 = scmp.ne.s32.totalorder %s44, %s46
    %p53 = scmp.eq.s32.totalorder %s15, 2
    %p54 = por %p52, %p53
    %p55 = scmp.ne.s32.totalorder %s46, %s47
    %p56 = scmp.eq.s32.totalorder %s15, 0
    %p57 = por %p55, %p56
    %p58 = scmp.ne.s32.totalorder %s46, %s47
    %p59 = scmp.eq.s32.totalorder %s16, 2
    %p60 = por %p58, %p59
    %p62 = scmp.ne.s32.totalorder %s47, %s61
    %p63 = scmp.eq.s32.totalorder %s16, 0
    %p64 = por %p62, %p63
    %s66 = sadd.s32 %s65, 1
    %p69 = scmp.eq.s32.totalorder %s10, 2
    %p70 = scmp.ne.s32.totalorder %s65, %s67
    %p71 = scmp.eq.s32.totalorder %s10, 0
    %p72 = por %p70, %p71
    %p73 = scmp.ne.s32.totalorder %s65, %s67
    %p74 = scmp.eq.s32.totalorder %s15, 2
    %p75 = por %p73, %p74
    %p76 = scmp.ne.s32.totalorder %s67, %s68
    %p77 = scmp.eq.s32.totalorder %s15, 0
    %p78 = por %p76, %p77
    %p79 = scmp.ne.s32.totalorder %s67, %s68
    %p80 = scmp.eq.s32.totalorder %s16, 2
    %p81 = por %p79, %p80
    %p83 = scmp.ne.s32.totalorder %s68, %s82
    %p84 = scmp.eq.s32.totalorder %s16, 0
    %p85 = por %p83, %p84
    %s87 = sadd.s32 %s86, 1
    %p90 = scmp.eq.s32.totalorder %s10, 2
    %p91 = scmp.ne.s32.totalorder %s86, %s88
    %p92 = scmp.eq.s32.totalorder %s10, 0
    %p93 = por %p91, %p92
    %p94 = scmp.ne.s32.totalorder %s86, %s88
    %p95 = scmp.eq.s32.totalorder %s15, 2
    %p96 = por %p94, %p95
    %p97 = scmp.ne.s32.totalorder %s88, %s89
    %p98 = scmp.eq.s32.totalorder %s15, 0
    %p99 = por %p97, %p98
    %p100 = scmp.ne.s32.totalorder %s88, %s89
    %p101 = scmp.eq.s32.totalorder %s16, 2
    %p102 = por %p100, %p101
    %p104 = scmp.ne.s32.totalorder %s89, %s103
    %p105 = scmp.eq.s32.totalorder %s16, 0
    %p106 = por %p104, %p105
    %s107 = ssub.s32 %s10, %s17
    %p108 = scmp.eq.s32.totalorder %s107, 0
    %s110 = sadd.s32 %s109, 1
    %s111 = scalar_select %p108, %s109, %s110
    %p114 = pneg %p108
    %p115 = scmp.eq.s32.totalorder %s10, 2
    %p116 = por %p114, %p115
    %p117 = scmp.ne.s32.totalorder %s109, %s112
    %p118 = scmp.eq.s32.totalorder %s10, 0
    %p119 = por %p117, %p118
    %p120 = scmp.ne.s32.totalorder %s109, %s112
    %p121 = scmp.eq.s32.totalorder %s15, 2
    %p122 = por %p120, %p121
    %p123 = scmp.ne.s32.totalorder %s112, %s113
    %p124 = scmp.eq.s32.totalorder %s15, 0
    %p125 = por %p123, %p124
    %p126 = scmp.ne.s32.totalorder %s112, %s113
    %p127 = scmp.eq.s32.totalorder %s16, 2
    %p128 = por %p126, %p127
    %p130 = scmp.ne.s32.totalorder %s113, %s129
    %p131 = scmp.eq.s32.totalorder %s16, 0
    %p132 = por %p130, %p131
    %p133 = scmp.le.s32.totalorder 1, %s10
    %p134 = scmp.lt.s32.totalorder %s10, 4
    %p135 = pnand %p133, %p134
    %p136 = pneg %p135
    // Predicated region
    $region9: #{resnet_forward.12} parent=5 // pred_check
      _
    $region10: #{resnet_forward.12} parent=5 // pred_check_branch
      %138 = sbr.rel (%p135) target = $region12
    $region11: #{resnet_forward.12} parent=5 // pred_region
      %s139 = ssub.s32 %s10, 1
      // Predicated region
      $region13: #{resnet_forward.12} parent=11 // pred_check
        %p140 = pneg %p57
      $region14: #{resnet_forward.12} parent=11 // pred_check_branch
        %142 = sbr.rel (%p140) target = $region16
      $region15: #{resnet_forward.12} parent=11 // pred_region
        _
      $region16: #{resnet_forward.12} parent=11 // pred_fallthru
        _
      // Predicated region
      $region17: #{resnet_forward.12} parent=11 // pred_check
        %p143 = pneg %p78
      $region18: #{resnet_forward.12} parent=11 // pred_check_branch
        %145 = sbr.rel (%p143) target = $region20
      $region19: #{resnet_forward.12} parent=11 // pred_region
        _
      $region20: #{resnet_forward.12} parent=11 // pred_fallthru
        _
      // Predicated region
      $region21: #{resnet_forward.12} parent=11 // pred_check
        %p146 = pneg %p99
      $region22: #{resnet_forward.12} parent=11 // pred_check_branch
        %148 = sbr.rel (%p146) target = $region24
      $region23: #{resnet_forward.12} parent=11 // pred_region
        _
      $region24: #{resnet_forward.12} parent=11 // pred_fallthru
        _
    $region12: #{resnet_forward.12} parent=5 // pred_fallthru
      _
    %p149 = scmp.lt.s32.totalorder %s10, 3
    // Predicated region
    $region25: #{resnet_forward.12} parent=5 // pred_check
      %p150 = pneg %p149
    $region26: #{resnet_forward.12} parent=5 // pred_check_branch
      %152 = sbr.rel (%p150) target = $region28
    $region27: #{resnet_forward.12} parent=5 // pred_region
      // Predicated region
      $region29: #{resnet_forward.12} parent=27 // pred_check
        %p153 = pneg %p30
      $region30: #{resnet_forward.12} parent=27 // pred_check_branch
        %155 = sbr.rel (%p153) target = $region32
      $region31: #{resnet_forward.12} parent=27 // pred_region
        %s156 = smul.u32 16, %s10
        %p157 = scmp.lt.s32.totalorder %s156, 47
        %s158 = scalar_select %p157, %s156, 47
        %s159 = smul.addr %s158, 2
        %s160 = smul.addr %s159, 4
        %s161 = scalar_lea.vmem %s0, %s160
        %s162 = smul.u32 16, %s10
      $region32: #{resnet_forward.12} parent=27 // pred_fallthru
        _
    $region28: #{resnet_forward.12} parent=5 // pred_fallthru
      _
    %p163 = scmp.le.s32.totalorder 1, %s10
    %p164 = scmp.lt.s32.totalorder %s10, 4
    %p165 = pnand %p163, %p164
    %p166 = pneg %p165
    // Predicated region
    $region33: #{resnet_forward.12} parent=5 // pred_check
      _
    $region34: #{resnet_forward.12} parent=5 // pred_check_branch
      %168 = sbr.rel (%p165) target = $region36
    $region35: #{resnet_forward.12} parent=5 // pred_region
      %s169 = ssub.s32 %s10, 1
      %s170 = smul.u32 16, %s15
      %p171 = scmp.lt.s32.totalorder %s170, 47
      %s172 = scalar_select %p171, %s170, 47
      %s173 = smul.addr %s172, 2
      %s174 = smul.addr %s173, 4
      %s175 = scalar_lea.vmem %s0, %s174
      %p176 = pneg %p36
      %p177 = pneg %p33
      %p178 = pneg %p57
      %p179 = pneg %p54
      %p180 = pneg %p78
      %p181 = pneg %p75
      %p182 = pneg %p99
      %p183 = pneg %p96
      %p184 = pneg %p125
      %p185 = pneg %p122
      %s186 = smul.u32 16, %s15
      %p187 = scmp.lt.s32.totalorder %s186, 47
      %s188 = scalar_select %p187, %s186, 47
      %s189 = smul.addr %s188, 4
      %s190 = scalar_lea.vmem %s4, %s189
      %s191 = smul.u32 16, %s15
      %p192 = scmp.lt.s32.totalorder %s191, 47
      %s193 = scalar_select %p192, %s191, 47
      %s194 = smul.addr %s193, 2
      %s195 = smul.addr %s194, 4
      %s196 = scalar_lea.vmem %s0, %s195
      %s197 = smul.u32 16, %s15
      %s198 = smul.u32 16, %s15
      %p199 = scmp.lt.s32.totalorder %s198, 47
      %s200 = scalar_select %p199, %s198, 47
      %s201 = smul.addr %s200, 4
      %s202 = scalar_lea.vmem %s4, %s201
      %s203 = smul.u32 16, %s15
      %v205 = vld [vmem:[%s196] sm:$0xff]
      %v206 = vld [vmem:[%s196 + $0x8] sm:$0xff]
      %v207 = vld [vmem:[%s196 + $0x10] sm:$0xff]
      %v208 = vld [vmem:[%s196 + $0x18] sm:$0xff]
      %v209 = vld [vmem:[%s196 + $0x20] sm:$0xff]
      %v210 = vld [vmem:[%s196 + $0x28] sm:$0xff]
      %v211 = vld [vmem:[%s196 + $0x30] sm:$0xff]
      %v212 = vld [vmem:[%s196 + $0x38] sm:$0xff]
      %v213 = vld [vmem:[%s196 + $0x40] sm:$0xff]
      %v214 = vld [vmem:[%s196 + $0x48] sm:$0xff]
      %v215 = vld [vmem:[%s196 + $0x50] sm:$0xff]
      %v216 = vld [vmem:[%s196 + $0x58] sm:$0xff]
      %v217 = vld [vmem:[%s196 + $0x60] sm:$0xff]
      %v218 = vld [vmem:[%s196 + $0x68] sm:$0xff]
      %v219 = vld [vmem:[%s196 + $0x70] sm:$0xff]
      %v220 = vld [vmem:[%s196 + $0x78] sm:$0xff]
      %v221 = vld [vmem:[%s1] sm:$0xf]
      %v222 = vld [vmem:[%s1 + $0x4] sm:$0xf]
      %v223 = vld [vmem:[%s1 + $0x8] sm:$0xf]
      %v224 = vld [vmem:[%s1 + $0xc] sm:$0xf]
      %v225 = vld [vmem:[%s1 + $0x10] sm:$0xf]
      %v226 = vld [vmem:[%s1 + $0x14] sm:$0xf]
      %v227 = vld [vmem:[%s1 + $0x18] sm:$0xf]
      %v228 = vld [vmem:[%s1 + $0x1c] sm:$0xf]
      %v229 = vld [vmem:[%s1 + $0x20] sm:$0xf]
      %v230 = vld [vmem:[%s1 + $0x24] sm:$0xf]
      %v231 = vld [vmem:[%s1 + $0x28] sm:$0xf]
      %v232 = vld [vmem:[%s1 + $0x2c] sm:$0xf]
      %v233 = vld [vmem:[%s1 + $0x30] sm:$0xf]
      %v234 = vld [vmem:[%s1 + $0x34] sm:$0xf]
      %v235 = vld [vmem:[%s1 + $0x38] sm:$0xf]
      %v236 = vld [vmem:[%s1 + $0x3c] sm:$0xf]
      %v237 = vld [vmem:[%s1 + $0x40] sm:$0xf]
      %v238 = vld [vmem:[%s1 + $0x44] sm:$0xf]
      %v239 = vld [vmem:[%s1 + $0x48] sm:$0xf]
      %v240 = vld [vmem:[%s1 + $0x4c] sm:$0xf]
      %v241 = vld [vmem:[%s1 + $0x50] sm:$0xf]
      %v242 = vld [vmem:[%s1 + $0x54] sm:$0xf]
      %v243 = vld [vmem:[%s1 + $0x58] sm:$0xf]
      %v244 = vld [vmem:[%s1 + $0x5c] sm:$0xf]
      %v245 = vld [vmem:[%s1 + $0x60] sm:$0x3]
      %v262 = vunpack.c.l.b16 %v205
      %v263 = vunpack.c.h.b16 %v205
      %v264 = vunpack.c.l.b16 %v206
      %v265 = vunpack.c.h.b16 %v206
      %v266 = vunpack.c.l.b16 %v207
      %v267 = vunpack.c.h.b16 %v207
      %v268 = vunpack.c.l.b16 %v208
      %v269 = vunpack.c.h.b16 %v208
      %v270 = vunpack.c.l.b16 %v209
      %v271 = vunpack.c.h.b16 %v209
      %v272 = vunpack.c.l.b16 %v210
      %v273 = vunpack.c.h.b16 %v210
      %v274 = vunpack.c.l.b16 %v211
      %v275 = vunpack.c.h.b16 %v211
      %v276 = vunpack.c.l.b16 %v212
      %v277 = vunpack.c.h.b16 %v212
      %v278 = vunpack.c.l.b16 %v213
      %v279 = vunpack.c.h.b16 %v213
      %v280 = vunpack.c.l.b16 %v214
      %v281 = vunpack.c.h.b16 %v214
      %v282 = vunpack.c.l.b16 %v215
      %v283 = vunpack.c.h.b16 %v215
      %v284 = vunpack.c.l.b16 %v216
      %v285 = vunpack.c.h.b16 %v216
      %v286 = vunpack.c.l.b16 %v217
      %v287 = vunpack.c.h.b16 %v217
      %v288 = vunpack.c.l.b16 %v218
      %v289 = vunpack.c.h.b16 %v218
      %v290 = vunpack.c.l.b16 %v219
      %v291 = vunpack.c.h.b16 %v219
      %v292 = vunpack.c.l.b16 %v220
      %v293 = vunpack.c.h.b16 %v220
      %v294 = vpack.c.b16 %v264, %v262
      %v295 = vpack.c.b16 %v265, %v263
      %v296 = vpack.c.b16 %v268, %v266
      %v297 = vpack.c.b16 %v269, %v267
      %v298 = vpack.c.b16 %v272, %v270
      %v299 = vpack.c.b16 %v273, %v271
      %v300 = vpack.c.b16 %v276, %v274
      %v301 = vpack.c.b16 %v277, %v275
      %v302 = vpack.c.b16 %v280, %v278
      %v303 = vpack.c.b16 %v281, %v279
      %v304 = vpack.c.b16 %v284, %v282
      %v305 = vpack.c.b16 %v285, %v283
      %v306 = vpack.c.b16 %v288, %v286
      %v307 = vpack.c.b16 %v289, %v287
      %v308 = vpack.c.b16 %v292, %v290
      %v309 = vpack.c.b16 %v293, %v291
      %v343 = vunpack.c.l.b16 %v221
      %v344 = vunpack.c.l.b16 %v222
      %v345 = vunpack.c.l.b16 %v223
      %v346 = vunpack.c.l.b16 %v224
      %v347 = vunpack.c.l.b16 %v225
      %v348 = vunpack.c.l.b16 %v226
      %v349 = vunpack.c.l.b16 %v227
      %v350 = vunpack.c.l.b16 %v228
      %v351 = vunpack.c.l.b16 %v229
      %v352 = vunpack.c.l.b16 %v230
      %v353 = vunpack.c.l.b16 %v231
      %v354 = vunpack.c.l.b16 %v232
      %v355 = vunpack.c.l.b16 %v233
      %v356 = vunpack.c.l.b16 %v234
      %v357 = vunpack.c.l.b16 %v235
      %v358 = vunpack.c.l.b16 %v236
      %v359 = vunpack.c.l.b16 %v237
      %v360 = vunpack.c.l.b16 %v238
      %v361 = vunpack.c.l.b16 %v239
      %v362 = vunpack.c.l.b16 %v240
      %v363 = vunpack.c.l.b16 %v241
      %v364 = vunpack.c.l.b16 %v242
      %v365 = vunpack.c.l.b16 %v243
      %v366 = vunpack.c.l.b16 %v244
      %v367 = vunpack.c.l.b16 %v245
      %v368 = vpack.c.b16 %v344, %v343
      %v369 = vpack.c.b16 %v346, %v345
      %v370 = vpack.c.b16 %v348, %v347
      %v371 = vpack.c.b16 %v350, %v349
      %v372 = vpack.c.b16 %v352, %v351
      %v373 = vpack.c.b16 %v354, %v353
      %v374 = vpack.c.b16 %v356, %v355
      %v375 = vpack.c.b16 %v358, %v357
      %v376 = vpack.c.b16 %v360, %v359
      %v377 = vpack.c.b16 %v362, %v361
      %v378 = vpack.c.b16 %v364, %v363
      %v379 = vpack.c.b16 %v366, %v365
      %v380 = vpack.c.b16 %v367, %v367
      %vm393 = vcmask 556032
      %v395 = vsel %vm393, %v295, 0
      %v398 = vsel %vm393, %v297, 0
      %v401 = vsel %vm393, %v299, 0
      %v404 = vsel %vm393, %v301, 0
      %v407 = vsel %vm393, %v303, 0
      %v410 = vsel %vm393, %v305, 0
      %v413 = vsel %vm393, %v307, 0
      %v416 = vsel %vm393, %v309, 0
      %vm418 = vcmask 1041408
      %v420 = vsel %vm418, %v380, 0
      %422 = vmatprep.subr.bf16.mxu0 0
      %423 = vmatpush1.bf16.msra.mxu0 %v375
      %424 = vmatprep.subr.bf16.mxu0 0
      %425 = vmatpush1.bf16.msra.mxu0 %v374
      %426 = vmatprep.subr.bf16.mxu0 0
      %427 = vmatpush1.bf16.msra.mxu0 %v373
      %428 = vmatprep.subr.bf16.mxu0 0
      %429 = vmatpush1.bf16.msra.mxu0 %v372
      %430 = vmatprep.subr.bf16.mxu0 0
      %431 = vmatpush1.bf16.msra.mxu0 %v371
      %432 = vmatprep.subr.bf16.mxu0 0
      %433 = vmatpush1.bf16.msra.mxu0 %v370
      %434 = vmatprep.subr.bf16.mxu0 0
      %435 = vmatpush1.bf16.msra.mxu0 %v369
      %436 = vmatprep.subr.bf16.mxu0 0
      %437 = vmatpush1.bf16.msra.mxu0 %v368
      %438 = vmatprep.subr.bf16.mxu0 0
      %439 = vmatpush2.bf16.msra.mxu0 0
      %440 = vmatprep.subr.bf16.mxu0 0
      %441 = vmatpush2.bf16.msra.mxu0 0
      %442 = vmatprep.subr.bf16.mxu0 0
      %443 = vmatpush2.bf16.msra.mxu0 0
      %444 = vmatprep.subr.bf16.mxu0 0
      %445 = vmatpush2.bf16.msra.mxu0 %v420
      %446 = vmatprep.subr.bf16.mxu0 0
      %447 = vmatpush2.bf16.msra.mxu0 %v379
      %448 = vmatprep.subr.bf16.mxu0 0
      %449 = vmatpush2.bf16.msra.mxu0 %v378
      %450 = vmatprep.subr.bf16.mxu0 0
      %451 = vmatpush2.bf16.msra.mxu0 %v377
      %452 = vmatprep.subr.bf16.mxu0 0
      %453 = vmatpush2.bf16.msra.mxu0 %v376
      %454 = vmatprep.mubr.bf16.mxu0 %v395
      %455 = vmatmul.mubr.bf16.gmra.mxu0 %v294
      %v456 = vpop.f32.mrf.mxu0
      %v457 = vadd.f32 0.0, %v456
      %v458 = vpop.f32.mrf.mxu0
      %v459 = vpop.f32.mrf.mxu0
      %v460 = vadd.f32 0.0, %v459
      %v461 = vpop.f32.mrf.mxu0
      %462 = vmatprep.mubr.bf16.mxu0 %v398
      %463 = vmatmul.mubr.bf16.gmra.mxu0 %v296
      %v464 = vpop.f32.mrf.mxu0
      %v465 = vadd.f32 0.0, %v464
      %v466 = vpop.f32.mrf.mxu0
      %v467 = vpop.f32.mrf.mxu0
      %v468 = vadd.f32 0.0, %v467
      %v469 = vpop.f32.mrf.mxu0
      %470 = vmatprep.mubr.bf16.mxu0 %v401
      %471 = vmatmul.mubr.bf16.gmra.mxu0 %v298
      %v472 = vpop.f32.mrf.mxu0
      %v473 = vadd.f32 0.0, %v472
      %v474 = vpop.f32.mrf.mxu0
      %v475 = vpop.f32.mrf.mxu0
      %v476 = vadd.f32 0.0, %v475
      %v477 = vpop.f32.mrf.mxu0
      %478 = vmatprep.mubr.bf16.mxu0 %v404
      %479 = vmatmul.mubr.bf16.gmra.mxu0 %v300
      %v480 = vpop.f32.mrf.mxu0
      %v481 = vadd.f32 0.0, %v480
      %v482 = vpop.f32.mrf.mxu0
      %v483 = vpop.f32.mrf.mxu0
      %v484 = vadd.f32 0.0, %v483
      %v485 = vpop.f32.mrf.mxu0
      %486 = vmatprep.mubr.bf16.mxu0 %v407
      %487 = vmatmul.mubr.bf16.gmra.mxu0 %v302
      %v488 = vpop.f32.mrf.mxu0
      %v489 = vadd.f32 0.0, %v488
      %v490 = vpop.f32.mrf.mxu0
      %v491 = vpop.f32.mrf.mxu0
      %v492 = vadd.f32 0.0, %v491
      %v493 = vpop.f32.mrf.mxu0
      %494 = vmatprep.mubr.bf16.mxu0 %v410
      %495 = vmatmul.mubr.bf16.gmra.mxu0 %v304
      %v496 = vpop.f32.mrf.mxu0
      %v497 = vadd.f32 0.0, %v496
      %v498 = vpop.f32.mrf.mxu0
      %v499 = vpop.f32.mrf.mxu0
      %v500 = vadd.f32 0.0, %v499
      %v501 = vpop.f32.mrf.mxu0
      %502 = vmatprep.mubr.bf16.mxu0 %v413
      %503 = vmatmul.mubr.bf16.gmra.mxu0 %v306
      %v504 = vpop.f32.mrf.mxu0
      %v505 = vadd.f32 0.0, %v504
      %v506 = vpop.f32.mrf.mxu0
      %v507 = vpop.f32.mrf.mxu0
      %v508 = vadd.f32 0.0, %v507
      %v509 = vpop.f32.mrf.mxu0
      %510 = vmatprep.mubr.bf16.mxu0 %v416
      %511 = vmatmul.mubr.bf16.gmra.mxu0 %v308
      %v512 = vpop.f32.mrf.mxu0
      %v513 = vadd.f32 0.0, %v512
      %v514 = vpop.f32.mrf.mxu0
      %v515 = vpop.f32.mrf.mxu0
      %v516 = vadd.f32 0.0, %v515
      %v517 = vpop.f32.mrf.mxu0
      %518 = vdwg.mxu0
      %v519 = vld [vmem:[%s2] sm:$0x1]
      %v521 = vlaneseq
      %v522 = vshrl.u32 %v521, 7
      %v523 = vsub.s32 0, %v522
      %v524 = vrot.slane %v519, %v523
      %v526 = vmul.f32 %v457, %v524
      %v527 = vmul.f32 %v460, %v524
      %v528 = vmul.f32 %v465, %v524
      %v529 = vmul.f32 %v468, %v524
      %v530 = vmul.f32 %v473, %v524
      %v531 = vmul.f32 %v476, %v524
      %v532 = vmul.f32 %v481, %v524
      %v533 = vmul.f32 %v484, %v524
      %v534 = vmul.f32 %v489, %v524
      %v535 = vmul.f32 %v492, %v524
      %v536 = vmul.f32 %v497, %v524
      %v537 = vmul.f32 %v500, %v524
      %v538 = vmul.f32 %v505, %v524
      %v539 = vmul.f32 %v508, %v524
      %v540 = vmul.f32 %v513, %v524
      %v541 = vmul.f32 %v516, %v524
      %v542 = vld [vmem:[%s3] sm:$0x1]
      %v544 = vlaneseq
      %v545 = vshrl.u32 %v544, 7
      %v546 = vsub.s32 0, %v545
      %v547 = vrot.slane %v542, %v546
      %v549 = vadd.f32 %v526, %v547
      %v550 = vadd.f32 %v527, %v547
      %v551 = vadd.f32 %v528, %v547
      %v552 = vadd.f32 %v529, %v547
      %v553 = vadd.f32 %v530, %v547
      %v554 = vadd.f32 %v531, %v547
      %v555 = vadd.f32 %v532, %v547
      %v556 = vadd.f32 %v533, %v547
      %v557 = vadd.f32 %v534, %v547
      %v558 = vadd.f32 %v535, %v547
      %v559 = vadd.f32 %v536, %v547
      %v560 = vadd.f32 %v537, %v547
      %v561 = vadd.f32 %v538, %v547
      %v562 = vadd.f32 %v539, %v547
      %v563 = vadd.f32 %v540, %v547
      %v564 = vadd.f32 %v541, %v547
      %v565 = vmax.f32 %v549, 0.0
      %v566 = vmax.f32 %v550, 0.0
      %v567 = vmax.f32 %v551, 0.0
      %v568 = vmax.f32 %v552, 0.0
      %v569 = vmax.f32 %v553, 0.0
      %v570 = vmax.f32 %v554, 0.0
      %v571 = vmax.f32 %v555, 0.0
      %v572 = vmax.f32 %v556, 0.0
      %v573 = vmax.f32 %v557, 0.0
      %v574 = vmax.f32 %v558, 0.0
      %v575 = vmax.f32 %v559, 0.0
      %v576 = vmax.f32 %v560, 0.0
      %v577 = vmax.f32 %v561, 0.0
      %v578 = vmax.f32 %v562, 0.0
      %v579 = vmax.f32 %v563, 0.0
      %v580 = vmax.f32 %v564, 0.0
      %v581 = vpack.c.bf16 %v566, %v565
      %v582 = vpack.c.bf16 %v568, %v567
      %v583 = vpack.c.bf16 %v570, %v569
      %v584 = vpack.c.bf16 %v572, %v571
      %v585 = vpack.c.bf16 %v574, %v573
      %v586 = vpack.c.bf16 %v576, %v575
      %v587 = vpack.c.bf16 %v578, %v577
      %v588 = vpack.c.bf16 %v580, %v579
      %v597 = vunpack.c.l.b16 %v581
      %v598 = vunpack.c.h.b16 %v581
      %v599 = vunpack.c.l.b16 %v582
      %v600 = vunpack.c.h.b16 %v582
      %v601 = vunpack.c.l.b16 %v583
      %v602 = vunpack.c.h.b16 %v583
      %v603 = vunpack.c.l.b16 %v584
      %v604 = vunpack.c.h.b16 %v584
      %v605 = vunpack.c.l.b16 %v585
      %v606 = vunpack.c.h.b16 %v585
      %v607 = vunpack.c.l.b16 %v586
      %v608 = vunpack.c.h.b16 %v586
      %v609 = vunpack.c.l.b16 %v587
      %v610 = vunpack.c.h.b16 %v587
      %v611 = vunpack.c.l.b16 %v588
      %v612 = vunpack.c.h.b16 %v588
      %v613 = vpack.c.b16 %v597, %v597
      %v614 = vpack.c.b16 %v598, %v598
      %v615 = vpack.c.b16 %v599, %v599
      %v616 = vpack.c.b16 %v600, %v600
      %v617 = vpack.c.b16 %v601, %v601
      %v618 = vpack.c.b16 %v602, %v602
      %v619 = vpack.c.b16 %v603, %v603
      %v620 = vpack.c.b16 %v604, %v604
      %v621 = vpack.c.b16 %v605, %v605
      %v622 = vpack.c.b16 %v606, %v606
      %v623 = vpack.c.b16 %v607, %v607
      %v624 = vpack.c.b16 %v608, %v608
      %v625 = vpack.c.b16 %v609, %v609
      %v626 = vpack.c.b16 %v610, %v610
      %v627 = vpack.c.b16 %v611, %v611
      %v628 = vpack.c.b16 %v612, %v612
      %vm645 = vcmask 519168
      %646 = vst.msk [vmem:[%s202] sm:$0xf] %vm645, %v613
      %647 = vst.msk [vmem:[%s202 + $0x4] sm:$0xf] %vm645, %v614
      %648 = vst.msk [vmem:[%s202 + $0x8] sm:$0xf] %vm645, %v615
      %649 = vst.msk [vmem:[%s202 + $0xc] sm:$0xf] %vm645, %v616
      %650 = vst.msk [vmem:[%s202 + $0x10] sm:$0xf] %vm645, %v617
      %651 = vst.msk [vmem:[%s202 + $0x14] sm:$0xf] %vm645, %v618
      %652 = vst.msk [vmem:[%s202 + $0x18] sm:$0xf] %vm645, %v619
      %653 = vst.msk [vmem:[%s202 + $0x1c] sm:$0xf] %vm645, %v620
      %654 = vst.msk [vmem:[%s202 + $0x20] sm:$0xf] %vm645, %v621
      %655 = vst.msk [vmem:[%s202 + $0x24] sm:$0xf] %vm645, %v622
      %656 = vst.msk [vmem:[%s202 + $0x28] sm:$0xf] %vm645, %v623
      %657 = vst.msk [vmem:[%s202 + $0x2c] sm:$0xf] %vm645, %v624
      %658 = vst.msk [vmem:[%s202 + $0x30] sm:$0xf] %vm645, %v625
      %659 = vst.msk [vmem:[%s202 + $0x34] sm:$0xf] %vm645, %v626
      %660 = vst.msk [vmem:[%s202 + $0x38] sm:$0xf] %vm645, %v627
      %661 = vst.msk [vmem:[%s202 + $0x3c] sm:$0xf] %vm645, %v628
      %s662 = smul.u32 16, %s15
      %p663 = scmp.lt.s32.totalorder %s662, 47
      %s664 = scalar_select %p663, %s662, 47
      %s665 = smul.addr %s664, 4
      %s666 = scalar_lea.vmem %s4, %s665
      // Predicated region
      $region37: #{resnet_forward.12} parent=35 // pred_check
        %p667 = pneg %p122
      $region38: #{resnet_forward.12} parent=35 // pred_check_branch
        %669 = sbr.rel (%p667) target = $region40
      $region39: #{resnet_forward.12} parent=35 // pred_region
        %s670 = smul.u32 16, %s15
      $region40: #{resnet_forward.12} parent=35 // pred_fallthru
        _
    $region36: #{resnet_forward.12} parent=5 // pred_fallthru
      _
    %p671 = scmp.le.s32.totalorder 2, %s10
    // Predicated region
    $region41: #{resnet_forward.12} parent=5 // pred_check
      %p672 = pneg %p671
    $region42: #{resnet_forward.12} parent=5 // pred_check_branch
      %674 = sbr.rel (%p672) target = $region44
    $region43: #{resnet_forward.12} parent=5 // pred_region
      %s675 = ssub.s32 %s10, 2
      // Predicated region
      $region45: #{resnet_forward.12} parent=43 // pred_check
        %p676 = pneg %p128
      $region46: #{resnet_forward.12} parent=43 // pred_check_branch
        %678 = sbr.rel (%p676) target = $region48
      $region47: #{resnet_forward.12} parent=43 // pred_region
        %s679 = smul.u32 16, %s16
        %p680 = scmp.lt.s32.totalorder %s679, 47
        %s681 = scalar_select %p680, %s679, 47
        %s682 = smul.addr %s681, 4
        %s683 = scalar_lea.vmem %s4, %s682
      $region48: #{resnet_forward.12} parent=43 // pred_fallthru
        _
    $region44: #{resnet_forward.12} parent=5 // pred_fallthru
      _
  $region6: #{resnet_forward.12} parent=0 // loop_footer
    %s14 = sadd.s32 1, %s10
  $region7: #{resnet_forward.12} parent=0 // loop_footer_branch
    %9 = sbr.rel target = $region3
  $region8: #{resnet_forward.12} parent=0 // loop_exit
    _

// kernel: resnet_forward.13
$region0: #{resnet_forward.13}
  #allocation0 [shape = 'u32[]', space=smem, size = 0x4, offset = 0x4, fixed_abs, tag = 'smem constant byte address 0x4 - core index']
  #allocation1 [shape = 'u32[144,128]{1,0:T(1,128)}', space=vmem, size = 0x12000, scoped, tag = 'internal scratch']
  %s0 = inlined_call_operand.vmem [shape: bf16[9,96,64], index: 0, kind: input, shape index: {}]
  %s1 = inlined_call_operand.vmem [shape: bf16[96,64], index: 1, kind: output, shape index: {}]
  %s2 = sld [smem:[#allocation0]]
  $region14: #{resnet_forward.13} parent=0
    _
  %s4 = ssub.s32 1, %s2
  %s5 = scalar_select 0, %s4, %s2
  // Predicated region
  $region2: #{resnet_forward.13} parent=0 // pred_check
    _
  $region3: #{resnet_forward.13} parent=0 // pred_check_branch
    %7 = sbr.rel (0) target = $region5
  $region4: #{resnet_forward.13} parent=0 // pred_region
    _
  $region5: #{resnet_forward.13} parent=0 // pred_fallthru
    _
  %v8 = vld [vmem:[%s0] sm:$0xf]
  %v9 = vld [vmem:[%s0 + $0x4] sm:$0xf]
  %v10 = vld [vmem:[%s0 + $0x8] sm:$0xf]
  %v11 = vld [vmem:[%s0 + $0xc] sm:$0xf]
  %v12 = vld [vmem:[%s0 + $0x10] sm:$0xf]
  %v13 = vld [vmem:[%s0 + $0x14] sm:$0xf]
  %v14 = vld [vmem:[%s0 + $0x18] sm:$0xf]
  %v15 = vld [vmem:[%s0 + $0x1c] sm:$0xf]
  %v16 = vld [vmem:[%s0 + $0x20] sm:$0xf]
  %v17 = vld [vmem:[%s0 + $0x24] sm:$0xf]
  %v18 = vld [vmem:[%s0 + $0x28] sm:$0xf]
  %v19 = vld [vmem:[%s0 + $0x2c] sm:$0xf]
  %v20 = vld [vmem:[%s0 + $0x30] sm:$0xf]
  %v21 = vld [vmem:[%s0 + $0x34] sm:$0xf]
  %v22 = vld [vmem:[%s0 + $0x38] sm:$0xf]
  %v23 = vld [vmem:[%s0 + $0x3c] sm:$0xf]
  %v24 = vld [vmem:[%s0 + $0x40] sm:$0xf]
  %v25 = vld [vmem:[%s0 + $0x44] sm:$0xf]
  %v26 = vld [vmem:[%s0 + $0x48] sm:$0xf]
  %v27 = vld [vmem:[%s0 + $0x4c] sm:$0xf]
  %v28 = vld [vmem:[%s0 + $0x50] sm:$0xf]
  %v29 = vld [vmem:[%s0 + $0x54] sm:$0xf]
  %v30 = vld [vmem:[%s0 + $0x58] sm:$0xf]
  %v31 = vld [vmem:[%s0 + $0x5c] sm:$0xf]
  %v32 = vld [vmem:[%s0 + $0x60] sm:$0xf]
  %v33 = vld [vmem:[%s0 + $0x64] sm:$0xf]
  %v34 = vld [vmem:[%s0 + $0x68] sm:$0xf]
  %v35 = vld [vmem:[%s0 + $0x6c] sm:$0xf]
  %v36 = vld [vmem:[%s0 + $0x70] sm:$0xf]
  %v37 = vld [vmem:[%s0 + $0x74] sm:$0xf]
  %v38 = vld [vmem:[%s0 + $0x78] sm:$0xf]
  %v39 = vld [vmem:[%s0 + $0x7c] sm:$0xf]
  %v40 = vld [vmem:[%s0 + $0x80] sm:$0xf]
  %v41 = vld [vmem:[%s0 + $0x84] sm:$0xf]
  %v42 = vld [vmem:[%s0 + $0x88] sm:$0xf]
  %v43 = vld [vmem:[%s0 + $0x8c] sm:$0xf]
  %v44 = vld [vmem:[%s0 + $0x90] sm:$0xf]
  %v45 = vld [vmem:[%s0 + $0x94] sm:$0xf]
  %v46 = vld [vmem:[%s0 + $0x98] sm:$0xf]
  %v47 = vld [vmem:[%s0 + $0x9c] sm:$0xf]
  %v48 = vld [vmem:[%s0 + $0xa0] sm:$0xf]
  %v49 = vld [vmem:[%s0 + $0xa4] sm:$0xf]
  %v50 = vld [vmem:[%s0 + $0xa8] sm:$0xf]
  %v51 = vld [vmem:[%s0 + $0xac] sm:$0xf]
  %v52 = vld [vmem:[%s0 + $0xb0] sm:$0xf]
  %v53 = vld [vmem:[%s0 + $0xb4] sm:$0xf]
  %v54 = vld [vmem:[%s0 + $0xb8] sm:$0xf]
  %v55 = vld [vmem:[%s0 + $0xbc] sm:$0xf]
  %v56 = vld [vmem:[%s0 + $0xc0] sm:$0xf]
  %v57 = vld [vmem:[%s0 + $0xc4] sm:$0xf]
  %v58 = vld [vmem:[%s0 + $0xc8] sm:$0xf]
  %v59 = vld [vmem:[%s0 + $0xcc] sm:$0xf]
  %v60 = vld [vmem:[%s0 + $0xd0] sm:$0xf]
  %v61 = vld [vmem:[%s0 + $0xd4] sm:$0xf]
  %v62 = vld [vmem:[%s0 + $0xd8] sm:$0xf]
  %v63 = vld [vmem:[%s0 + $0xdc] sm:$0xf]
  %v64 = vld [vmem:[%s0 + $0xe0] sm:$0xf]
  %v65 = vld [vmem:[%s0 + $0xe4] sm:$0xf]
  %v66 = vld [vmem:[%s0 + $0xe8] sm:$0xf]
  %v67 = vld [vmem:[%s0 + $0xec] sm:$0xf]
  %v68 = vld [vmem:[%s0 + $0xf0] sm:$0xf]
  %v69 = vld [vmem:[%s0 + $0xf4] sm:$0xf]
  %v70 = vld [vmem:[%s0 + $0xf8] sm:$0xf]
  %v71 = vld [vmem:[%s0 + $0xfc] sm:$0xf]
  %v72 = vld [vmem:[%s0 + $0x100] sm:$0xf]
  %v73 = vld [vmem:[%s0 + $0x104] sm:$0xf]
  %v74 = vld [vmem:[%s0 + $0x108] sm:$0xf]
  %v75 = vld [vmem:[%s0 + $0x10c] sm:$0xf]
  %v76 = vld [vmem:[%s0 + $0x110] sm:$0xf]
  %v77 = vld [vmem:[%s0 + $0x114] sm:$0xf]
  %v78 = vld [vmem:[%s0 + $0x118] sm:$0xf]
  %v79 = vld [vmem:[%s0 + $0x11c] sm:$0xf]
  %v80 = vld [vmem:[%s0 + $0x120] sm:$0xf]
  %v81 = vld [vmem:[%s0 + $0x124] sm:$0xf]
  %v82 = vld [vmem:[%s0 + $0x128] sm:$0xf]
  %v83 = vld [vmem:[%s0 + $0x12c] sm:$0xf]
  %v84 = vld [vmem:[%s0 + $0x130] sm:$0xf]
  %v85 = vld [vmem:[%s0 + $0x134] sm:$0xf]
  %v86 = vld [vmem:[%s0 + $0x138] sm:$0xf]
  %v87 = vld [vmem:[%s0 + $0x13c] sm:$0xf]
  %v88 = vld [vmem:[%s0 + $0x140] sm:$0xf]
  %v89 = vld [vmem:[%s0 + $0x144] sm:$0xf]
  %v90 = vld [vmem:[%s0 + $0x148] sm:$0xf]
  %v91 = vld [vmem:[%s0 + $0x14c] sm:$0xf]
  %v92 = vld [vmem:[%s0 + $0x150] sm:$0xf]
  %v93 = vld [vmem:[%s0 + $0x154] sm:$0xf]
  %v94 = vld [vmem:[%s0 + $0x158] sm:$0xf]
  %v95 = vld [vmem:[%s0 + $0x15c] sm:$0xf]
  %v96 = vld [vmem:[%s0 + $0x160] sm:$0xf]
  %v97 = vld [vmem:[%s0 + $0x164] sm:$0xf]
  %v98 = vld [vmem:[%s0 + $0x168] sm:$0xf]
  %v99 = vld [vmem:[%s0 + $0x16c] sm:$0xf]
  %v100 = vld [vmem:[%s0 + $0x170] sm:$0xf]
  %v101 = vld [vmem:[%s0 + $0x174] sm:$0xf]
  %v102 = vld [vmem:[%s0 + $0x178] sm:$0xf]
  %v103 = vld [vmem:[%s0 + $0x17c] sm:$0xf]
  %v104 = vld [vmem:[%s0 + $0x180] sm:$0xf]
  %v105 = vld [vmem:[%s0 + $0x184] sm:$0xf]
  %v106 = vld [vmem:[%s0 + $0x188] sm:$0xf]
  %v107 = vld [vmem:[%s0 + $0x18c] sm:$0xf]
  %v108 = vld [vmem:[%s0 + $0x190] sm:$0xf]
  %v109 = vld [vmem:[%s0 + $0x194] sm:$0xf]
  %v110 = vld [vmem:[%s0 + $0x198] sm:$0xf]
  %v111 = vld [vmem:[%s0 + $0x19c] sm:$0xf]
  %v112 = vld [vmem:[%s0 + $0x1a0] sm:$0xf]
  %v113 = vld [vmem:[%s0 + $0x1a4] sm:$0xf]
  %v114 = vld [vmem:[%s0 + $0x1a8] sm:$0xf]
  %v115 = vld [vmem:[%s0 + $0x1ac] sm:$0xf]
  %v116 = vunpack.c.l.bf16 %v8
  %v117 = vunpack.c.l.bf16 %v9
  %v118 = vunpack.c.l.bf16 %v10
  %v119 = vunpack.c.l.bf16 %v11
  %v120 = vunpack.c.l.bf16 %v12
  %v121 = vunpack.c.l.bf16 %v13
  %v122 = vunpack.c.l.bf16 %v14
  %v123 = vunpack.c.l.bf16 %v15
  %v124 = vunpack.c.l.bf16 %v16
  %v125 = vunpack.c.l.bf16 %v17
  %v126 = vunpack.c.l.bf16 %v18
  %v127 = vunpack.c.l.bf16 %v19
  %v128 = vunpack.c.l.bf16 %v20
  %v129 = vunpack.c.l.bf16 %v21
  %v130 = vunpack.c.l.bf16 %v22
  %v131 = vunpack.c.l.bf16 %v23
  %v132 = vunpack.c.l.bf16 %v24
  %v133 = vunpack.c.l.bf16 %v25
  %v134 = vunpack.c.l.bf16 %v26
  %v135 = vunpack.c.l.bf16 %v27
  %v136 = vunpack.c.l.bf16 %v28
  %v137 = vunpack.c.l.bf16 %v29
  %v138 = vunpack.c.l.bf16 %v30
  %v139 = vunpack.c.l.bf16 %v31
  %v140 = vunpack.c.l.bf16 %v32
  %v141 = vunpack.c.l.bf16 %v33
  %v142 = vunpack.c.l.bf16 %v34
  %v143 = vunpack.c.l.bf16 %v35
  %v144 = vunpack.c.l.bf16 %v36
  %v145 = vunpack.c.l.bf16 %v37
  %v146 = vunpack.c.l.bf16 %v38
  %v147 = vunpack.c.l.bf16 %v39
  %v148 = vunpack.c.l.bf16 %v40
  %v149 = vunpack.c.l.bf16 %v41
  %v150 = vunpack.c.l.bf16 %v42
  %v151 = vunpack.c.l.bf16 %v43
  %v152 = vunpack.c.l.bf16 %v44
  %v153 = vunpack.c.l.bf16 %v45
  %v154 = vunpack.c.l.bf16 %v46
  %v155 = vunpack.c.l.bf16 %v47
  %v156 = vunpack.c.l.bf16 %v48
  %v157 = vunpack.c.l.bf16 %v49
  %v158 = vunpack.c.l.bf16 %v50
  %v159 = vunpack.c.l.bf16 %v51
  %v160 = vunpack.c.l.bf16 %v52
  %v161 = vunpack.c.l.bf16 %v53
  %v162 = vunpack.c.l.bf16 %v54
  %v163 = vunpack.c.l.bf16 %v55
  %v164 = vunpack.c.l.bf16 %v56
  %v165 = vunpack.c.l.bf16 %v57
  %v166 = vunpack.c.l.bf16 %v58
  %v167 = vunpack.c.l.bf16 %v59
  %v168 = vunpack.c.l.bf16 %v60
  %v169 = vunpack.c.l.bf16 %v61
  %v170 = vunpack.c.l.bf16 %v62
  %v171 = vunpack.c.l.bf16 %v63
  %v172 = vunpack.c.l.bf16 %v64
  %v173 = vunpack.c.l.bf16 %v65
  %v174 = vunpack.c.l.bf16 %v66
  %v175 = vunpack.c.l.bf16 %v67
  %v176 = vunpack.c.l.bf16 %v68
  %v177 = vunpack.c.l.bf16 %v69
  %v178 = vunpack.c.l.bf16 %v70
  %v179 = vunpack.c.l.bf16 %v71
  %v180 = vunpack.c.l.bf16 %v72
  %v181 = vunpack.c.l.bf16 %v73
  %v182 = vunpack.c.l.bf16 %v74
  %v183 = vunpack.c.l.bf16 %v75
  %v184 = vunpack.c.l.bf16 %v76
  %v185 = vunpack.c.l.bf16 %v77
  %v186 = vunpack.c.l.bf16 %v78
  %v187 = vunpack.c.l.bf16 %v79
  %v188 = vunpack.c.l.bf16 %v80
  %v189 = vunpack.c.l.bf16 %v81
  %v190 = vunpack.c.l.bf16 %v82
  %v191 = vunpack.c.l.bf16 %v83
  %v192 = vunpack.c.l.bf16 %v84
  %v193 = vunpack.c.l.bf16 %v85
  %v194 = vunpack.c.l.bf16 %v86
  %v195 = vunpack.c.l.bf16 %v87
  %v196 = vunpack.c.l.bf16 %v88
  %v197 = vunpack.c.l.bf16 %v89
  %v198 = vunpack.c.l.bf16 %v90
  %v199 = vunpack.c.l.bf16 %v91
  %v200 = vunpack.c.l.bf16 %v92
  %v201 = vunpack.c.l.bf16 %v93
  %v202 = vunpack.c.l.bf16 %v94
  %v203 = vunpack.c.l.bf16 %v95
  %v204 = vunpack.c.l.bf16 %v96
  %v205 = vunpack.c.l.bf16 %v97
  %v206 = vunpack.c.l.bf16 %v98
  %v207 = vunpack.c.l.bf16 %v99
  %v208 = vunpack.c.l.bf16 %v100
  %v209 = vunpack.c.l.bf16 %v101
  %v210 = vunpack.c.l.bf16 %v102
  %v211 = vunpack.c.l.bf16 %v103
  %v212 = vunpack.c.l.bf16 %v104
  %v213 = vunpack.c.l.bf16 %v105
  %v214 = vunpack.c.l.bf16 %v106
  %v215 = vunpack.c.l.bf16 %v107
  %v216 = vunpack.c.l.bf16 %v108
  %v217 = vunpack.c.l.bf16 %v109
  %v218 = vunpack.c.l.bf16 %v110
  %v219 = vunpack.c.l.bf16 %v111
  %v220 = vunpack.c.l.bf16 %v112
  %v221 = vunpack.c.l.bf16 %v113
  %v222 = vunpack.c.l.bf16 %v114
  %v223 = vunpack.c.l.bf16 %v115
  %vm224 = vcmask 523264
  %v225 = vsel %vm224, %v116, -inf
  %v226 = vsel %vm224, %v128, -inf
  %v227 = vmax.f32 %v225, %v226
  %v228 = vsel %vm224, %v140, -inf
  %v229 = vmax.f32 %v227, %v228
  %v230 = vsel %vm224, %v152, -inf
  %v231 = vmax.f32 %v229, %v230
  %v232 = vsel %vm224, %v164, -inf
  %v233 = vmax.f32 %v231, %v232
  %v234 = vsel %vm224, %v176, -inf
  %v235 = vmax.f32 %v233, %v234
  %v236 = vsel %vm224, %v188, -inf
  %v237 = vmax.f32 %v235, %v236
  %v238 = vsel %vm224, %v200, -inf
  %v239 = vmax.f32 %v237, %v238
  %v240 = vsel %vm224, %v212, -inf
  %v241 = vmax.f32 %v239, %v240
  %v242 = vsel %vm224, %v117, -inf
  %v243 = vsel %vm224, %v129, -inf
  %v244 = vmax.f32 %v242, %v243
  %v245 = vsel %vm224, %v141, -inf
  %v246 = vmax.f32 %v244, %v245
  %v247 = vsel %vm224, %v153, -inf
  %v248 = vmax.f32 %v246, %v247
  %v249 = vsel %vm224, %v165, -inf
  %v250 = vmax.f32 %v248, %v249
  %v251 = vsel %vm224, %v177, -inf
  %v252 = vmax.f32 %v250, %v251
  %v253 = vsel %vm224, %v189, -inf
  %v254 = vmax.f32 %v252, %v253
  %v255 = vsel %vm224, %v201, -inf
  %v256 = vmax.f32 %v254, %v255
  %v257 = vsel %vm224, %v213, -inf
  %v258 = vmax.f32 %v256, %v257
  %v259 = vsel %vm224, %v118, -inf
  %v260 = vsel %vm224, %v130, -inf
  %v261 = vmax.f32 %v259, %v260
  %v262 = vsel %vm224, %v142, -inf
  %v263 = vmax.f32 %v261, %v262
  %v264 = vsel %vm224, %v154, -inf
  %v265 = vmax.f32 %v263, %v264
  %v266 = vsel %vm224, %v166, -inf
  %v267 = vmax.f32 %v265, %v266
  %v268 = vsel %vm224, %v178, -inf
  %v269 = vmax.f32 %v267, %v268
  %v270 = vsel %vm224, %v190, -inf
  %v271 = vmax.f32 %v269, %v270
  %v272 = vsel %vm224, %v202, -inf
  %v273 = vmax.f32 %v271, %v272
  %v274 = vsel %vm224, %v214, -inf
  %v275 = vmax.f32 %v273, %v274
  %v276 = vsel %vm224, %v119, -inf
  %v277 = vsel %vm224, %v131, -inf
  %v278 = vmax.f32 %v276, %v277
  %v279 = vsel %vm224, %v143, -inf
  %v280 = vmax.f32 %v278, %v279
  %v281 = vsel %vm224, %v155, -inf
  %v282 = vmax.f32 %v280, %v281
  %v283 = vsel %vm224, %v167, -inf
  %v284 = vmax.f32 %v282, %v283
  %v285 = vsel %vm224, %v179, -inf
  %v286 = vmax.f32 %v284, %v285
  %v287 = vsel %vm224, %v191, -inf
  %v288 = vmax.f32 %v286, %v287
  %v289 = vsel %vm224, %v203, -inf
  %v290 = vmax.f32 %v288, %v289
  %v291 = vsel %vm224, %v215, -inf
  %v292 = vmax.f32 %v290, %v291
  %v293 = vsel %vm224, %v120, -inf
  %v294 = vsel %vm224, %v132, -inf
  %v295 = vmax.f32 %v293, %v294
  %v296 = vsel %vm224, %v144, -inf
  %v297 = vmax.f32 %v295, %v296
  %v298 = vsel %vm224, %v156, -inf
  %v299 = vmax.f32 %v297, %v298
  %v300 = vsel %vm224, %v168, -inf
  %v301 = vmax.f32 %v299, %v300
  %v302 = vsel %vm224, %v180, -inf
  %v303 = vmax.f32 %v301, %v302
  %v304 = vsel %vm224, %v192, -inf
  %v305 = vmax.f32 %v303, %v304
  %v306 = vsel %vm224, %v204, -inf
  %v307 = vmax.f32 %v305, %v306
  %v308 = vsel %vm224, %v216, -inf
  %v309 = vmax.f32 %v307, %v308
  %v310 = vsel %vm224, %v121, -inf
  %v311 = vsel %vm224, %v133, -inf
  %v312 = vmax.f32 %v310, %v311
  %v313 = vsel %vm224, %v145, -inf
  %v314 = vmax.f32 %v312, %v313
  %v315 = vsel %vm224, %v157, -inf
  %v316 = vmax.f32 %v314, %v315
  %v317 = vsel %vm224, %v169, -inf
  %v318 = vmax.f32 %v316, %v317
  %v319 = vsel %vm224, %v181, -inf
  %v320 = vmax.f32 %v318, %v319
  %v321 = vsel %vm224, %v193, -inf
  %v322 = vmax.f32 %v320, %v321
  %v323 = vsel %vm224, %v205, -inf
  %v324 = vmax.f32 %v322, %v323
  %v325 = vsel %vm224, %v217, -inf
  %v326 = vmax.f32 %v324, %v325
  %v327 = vsel %vm224, %v122, -inf
  %v328 = vsel %vm224, %v134, -inf
  %v329 = vmax.f32 %v327, %v328
  %v330 = vsel %vm224, %v146, -inf
  %v331 = vmax.f32 %v329, %v330
  %v332 = vsel %vm224, %v158, -inf
  %v333 = vmax.f32 %v331, %v332
  %v334 = vsel %vm224, %v170, -inf
  %v335 = vmax.f32 %v333, %v334
  %v336 = vsel %vm224, %v182, -inf
  %v337 = vmax.f32 %v335, %v336
  %v338 = vsel %vm224, %v194, -inf
  %v339 = vmax.f32 %v337, %v338
  %v340 = vsel %vm224, %v206, -inf
  %v341 = vmax.f32 %v339, %v340
  %v342 = vsel %vm224, %v218, -inf
  %v343 = vmax.f32 %v341, %v342
  %v344 = vsel %vm224, %v123, -inf
  %v345 = vsel %vm224, %v135, -inf
  %v346 = vmax.f32 %v344, %v345
  %v347 = vsel %vm224, %v147, -inf
  %v348 = vmax.f32 %v346, %v347
  %v349 = vsel %vm224, %v159, -inf
  %v350 = vmax.f32 %v348, %v349
  %v351 = vsel %vm224, %v171, -inf
  %v352 = vmax.f32 %v350, %v351
  %v353 = vsel %vm224, %v183, -inf
  %v354 = vmax.f32 %v352, %v353
  %v355 = vsel %vm224, %v195, -inf
  %v356 = vmax.f32 %v354, %v355
  %v357 = vsel %vm224, %v207, -inf
  %v358 = vmax.f32 %v356, %v357
  %v359 = vsel %vm224, %v219, -inf
  %v360 = vmax.f32 %v358, %v359
  %v361 = vsel %vm224, %v124, -inf
  %v362 = vsel %vm224, %v136, -inf
  %v363 = vmax.f32 %v361, %v362
  %v364 = vsel %vm224, %v148, -inf
  %v365 = vmax.f32 %v363, %v364
  %v366 = vsel %vm224, %v160, -inf
  %v367 = vmax.f32 %v365, %v366
  %v368 = vsel %vm224, %v172, -inf
  %v369 = vmax.f32 %v367, %v368
  %v370 = vsel %vm224, %v184, -inf
  %v371 = vmax.f32 %v369, %v370
  %v372 = vsel %vm224, %v196, -inf
  %v373 = vmax.f32 %v371, %v372
  %v374 = vsel %vm224, %v208, -inf
  %v375 = vmax.f32 %v373, %v374
  %v376 = vsel %vm224, %v220, -inf
  %v377 = vmax.f32 %v375, %v376
  %v378 = vsel %vm224, %v125, -inf
  %v379 = vsel %vm224, %v137, -inf
  %v380 = vmax.f32 %v378, %v379
  %v381 = vsel %vm224, %v149, -inf
  %v382 = vmax.f32 %v380, %v381
  %v383 = vsel %vm224, %v161, -inf
  %v384 = vmax.f32 %v382, %v383
  %v385 = vsel %vm224, %v173, -inf
  %v386 = vmax.f32 %v384, %v385
  %v387 = vsel %vm224, %v185, -inf
  %v388 = vmax.f32 %v386, %v387
  %v389 = vsel %vm224, %v197, -inf
  %v390 = vmax.f32 %v388, %v389
  %v391 = vsel %vm224, %v209, -inf
  %v392 = vmax.f32 %v390, %v391
  %v393 = vsel %vm224, %v221, -inf
  %v394 = vmax.f32 %v392, %v393
  %v395 = vsel %vm224, %v126, -inf
  %v396 = vsel %vm224, %v138, -inf
  %v397 = vmax.f32 %v395, %v396
  %v398 = vsel %vm224, %v150, -inf
  %v399 = vmax.f32 %v397, %v398
  %v400 = vsel %vm224, %v162, -inf
  %v401 = vmax.f32 %v399, %v400
  %v402 = vsel %vm224, %v174, -inf
  %v403 = vmax.f32 %v401, %v402
  %v404 = vsel %vm224, %v186, -inf
  %v405 = vmax.f32 %v403, %v404
  %v406 = vsel %vm224, %v198, -inf
  %v407 = vmax.f32 %v405, %v406
  %v408 = vsel %vm224, %v210, -inf
  %v409 = vmax.f32 %v407, %v408
  %v410 = vsel %vm224, %v222, -inf
  %v411 = vmax.f32 %v409, %v410
  %v412 = vsel %vm224, %v127, -inf
  %v413 = vsel %vm224, %v139, -inf
  %v414 = vmax.f32 %v412, %v413
  %v415 = vsel %vm224, %v151, -inf
  %v416 = vmax.f32 %v414, %v415
  %v417 = vsel %vm224, %v163, -inf
  %v418 = vmax.f32 %v416, %v417
  %v419 = vsel %vm224, %v175, -inf
  %v420 = vmax.f32 %v418, %v419
  %v421 = vsel %vm224, %v187, -inf
  %v422 = vmax.f32 %v420, %v421
  %v423 = vsel %vm224, %v199, -inf
  %v424 = vmax.f32 %v422, %v423
  %v425 = vsel %vm224, %v211, -inf
  %v426 = vmax.f32 %v424, %v425
  %v427 = vsel %vm224, %v223, -inf
  %v428 = vmax.f32 %v426, %v427
  %v429 = vpack.c.bf16 %v258, %v241
  %v430 = vpack.c.bf16 %v292, %v275
  %v431 = vpack.c.bf16 %v326, %v309
  %v432 = vpack.c.bf16 %v360, %v343
  %v433 = vpack.c.bf16 %v394, %v377
  %v434 = vpack.c.bf16 %v428, %v411
  %v441 = vunpack.c.l.b16 %v429
  %v442 = vunpack.c.h.b16 %v429
  %v443 = vunpack.c.l.b16 %v430
  %v444 = vunpack.c.h.b16 %v430
  %v445 = vunpack.c.l.b16 %v431
  %v446 = vunpack.c.h.b16 %v431
  %v447 = vunpack.c.l.b16 %v432
  %v448 = vunpack.c.h.b16 %v432
  %v449 = vunpack.c.l.b16 %v433
  %v450 = vunpack.c.h.b16 %v433
  %v451 = vunpack.c.l.b16 %v434
  %v452 = vunpack.c.h.b16 %v434
  %v453 = vpack.c.b16 %v441, %v441
  %v454 = vpack.c.b16 %v442, %v442
  %v455 = vpack.c.b16 %v443, %v443
  %v456 = vpack.c.b16 %v444, %v444
  %v457 = vpack.c.b16 %v445, %v445
  %v458 = vpack.c.b16 %v446, %v446
  %v459 = vpack.c.b16 %v447, %v447
  %v460 = vpack.c.b16 %v448, %v448
  %v461 = vpack.c.b16 %v449, %v449
  %v462 = vpack.c.b16 %v450, %v450
  %v463 = vpack.c.b16 %v451, %v451
  %v464 = vpack.c.b16 %v452, %v452
  %vm477 = vcmask 519168
  %478 = vst.msk [vmem:[%s1] sm:$0xf] %vm477, %v453
  %479 = vst.msk [vmem:[%s1 + $0x4] sm:$0xf] %vm477, %v454
  %480 = vst.msk [vmem:[%s1 + $0x8] sm:$0xf] %vm477, %v455
  %481 = vst.msk [vmem:[%s1 + $0xc] sm:$0xf] %vm477, %v456
  %482 = vst.msk [vmem:[%s1 + $0x10] sm:$0xf] %vm477, %v457
  %483 = vst.msk [vmem:[%s1 + $0x14] sm:$0xf] %vm477, %v458
  %484 = vst.msk [vmem:[%s1 + $0x18] sm:$0xf] %vm477, %v459
  %485 = vst.msk [vmem:[%s1 + $0x1c] sm:$0xf] %vm477, %v460
  %486 = vst.msk [vmem:[%s1 + $0x20] sm:$0xf] %vm477, %v461
  %487 = vst.msk [vmem:[%s1 + $0x24] sm:$0xf] %vm477, %v462
  %488 = vst.msk [vmem:[%s1 + $0x28] sm:$0xf] %vm477, %v463
  %489 = vst.msk [vmem:[%s1 + $0x2c] sm:$0xf] %vm477, %v464
  // Predicated region
  $region6: #{resnet_forward.13} parent=0 // pred_check
    _
  $region7: #{resnet_forward.13} parent=0 // pred_check_branch
    %491 = sbr.rel (0) target = $region9
  $region8: #{resnet_forward.13} parent=0 // pred_region
    _
  $region9: #{resnet_forward.13} parent=0 // pred_fallthru
    _
  // Predicated region
  $region10: #{resnet_forward.13} parent=0 // pred_check
    _
  $region11: #{resnet_forward.13} parent=0 // pred_check_branch
    %493 = sbr.rel (0) target = $region13
  $region12: #{resnet_forward.13} parent=0 // pred_region
    _
  $region13: #{resnet_forward.13} parent=0 // pred_fallthru
    _

// kernel: resnet_forward.14
$region0: #{resnet_forward.14}
  #allocation0 [shape = 'u32[]', space=smem, size = 0x4, offset = 0x4, fixed_abs, tag = 'smem constant byte address 0x4 - core index']
  #allocation1 [shape = 'u32[144,128]{1,0:T(1,128)}', space=vmem, size = 0x12000, scoped, tag = 'internal scratch']
  %s0 = inlined_call_operand.vmem [shape: bf16[384,64], index: 0, kind: input, shape index: {}, may-alias: {0,1}]
  %s1 = inlined_call_operand.vmem [shape: bf16[384,64], index: 1, kind: input, shape index: {}, may-alias: {0,1}]
  %s2 = inlined_call_operand.vmem [shape: bf16[9,64,64], index: 2, kind: input, shape index: {}]
  %s3 = inlined_call_operand.vmem [shape: f32[1,64], index: 3, kind: input, shape index: {}]
  %s4 = inlined_call_operand.vmem [shape: f32[1,64], index: 4, kind: input, shape index: {}]
  %s5 = inlined_call_operand.vmem [shape: bf16[256,64], index: 5, kind: output, shape index: {}]
  %s6 = sld [smem:[#allocation0]]
  $region53: #{resnet_forward.14} parent=0
    _
  %s8 = ssub.s32 1, %s6
  %s9 = scalar_select 0, %s8, %s6
  loop: start=0, step=1, limit=4
  $region2: #{resnet_forward.14} parent=0 // loop_pre_header
    _
  $region3: #{resnet_forward.14} parent=0 // loop_header
    %s11 = sphi 0, %s15
    %p12 = scmp.ge.s32.totalorder %s11, 4
    %s21 = sphi 0, %s23
    %s24 = sphi 0, %s21
    %s25 = sphi 0, %s24
    %s41 = sphi 0, %s25
    %s49 = sphi 0, %s51
    %s52 = sphi 0, %s49
    %s53 = sphi 0, %s52
    %s69 = sphi 0, %s53
    %s73 = sphi 0, %s73
    %s75 = sphi 0, %s73
    %s76 = sphi 0, %s75
    %s90 = sphi 0, %s76
    %s94 = sphi 0, %s94
    %s96 = sphi 0, %s94
    %s97 = sphi 0, %s96
    %s111 = sphi 0, %s97
    %s115 = sphi 0, %s115
    %s117 = sphi 0, %s115
    %s118 = sphi 0, %s117
    %s132 = sphi 0, %s118
    %s138 = sphi 0, %s140
    %s141 = sphi 0, %s138
    %s142 = sphi 0, %s141
    %s158 = sphi 0, %s142
  $region4: #{resnet_forward.14} parent=0 // loop_header_branch
    %14 = sbr.rel (%p12) target = $region8
  $region5: #{resnet_forward.14} parent=0 // loop_body
    %s16 = ssub.s32 %s11, 1
    %s17 = ssub.s32 %s11, 2
    %s18 = sadd.s32 %s11, 1
    %s19 = ssub.s32 %s11, %s18
    %p20 = scmp.eq.s32.totalorder %s19, 0
    %s22 = sadd.s32 %s21, 1
    %s23 = scalar_select %p20, %s21, %s22
    %p26 = pneg %p20
    %p27 = scmp.eq.s32.totalorder %s11, 1
    %p28 = por %p26, %p27
    %p29 = scmp.ne.s32.totalorder %s21, %s24
    %p30 = scmp.eq.s32.totalorder %s11, 0
    %p31 = por %p29, %p30
    %p32 = scmp.ne.s32.totalorder %s21, %s24
    %p33 = scmp.eq.s32.totalorder %s16, 1
    %p34 = por %p32, %p33
    %p35 = scmp.ne.s32.totalorder %s24, %s25
    %p36 = scmp.eq.s32.totalorder %s16, 0
    %p37 = por %p35, %p36
    %p38 = scmp.ne.s32.totalorder %s24, %s25
    %p39 = scmp.eq.s32.totalorder %s17, 1
    %p40 = por %p38, %p39
    %p42 = scmp.ne.s32.totalorder %s25, %s41
    %p43 = scmp.eq.s32.totalorder %s17, 0
    %p44 = por %p42, %p43
    %s45 = sadd.s32 %s11, 1
    %s46 = sadd.s32 %s18, 1
    %s47 = ssub.s32 %s45, %s46
    %p48 = scmp.eq.s32.totalorder %s47, 0
    %s50 = sadd.s32 %s49, 1
    %s51 = scalar_select %p48, %s49, %s50
    %p54 = pneg %p48
    %p55 = scmp.eq.s32.totalorder %s11, 1
    %p56 = por %p54, %p55
    %p57 = scmp.ne.s32.totalorder %s49, %s52
    %p58 = scmp.eq.s32.totalorder %s11, 0
    %p59 = por %p57, %p58
    %p60 = scmp.ne.s32.totalorder %s49, %s52
    %p61 = scmp.eq.s32.totalorder %s16, 1
    %p62 = por %p60, %p61
    %p63 = scmp.ne.s32.totalorder %s52, %s53
    %p64 = scmp.eq.s32.totalorder %s16, 0
    %p65 = por %p63, %p64
    %p66 = scmp.ne.s32.totalorder %s52, %s53
    %p67 = scmp.eq.s32.totalorder %s17, 1
    %p68 = por %p66, %p67
    %p70 = scmp.ne.s32.totalorder %s53, %s69
    %p71 = scmp.eq.s32.totalorder %s17, 0
    %p72 = por %p70, %p71
    %s74 = sadd.s32 %s73, 1
    %p77 = scmp.eq.s32.totalorder %s11, 1
    %p78 = scmp.ne.s32.totalorder %s73, %s75
    %p79 = scmp.eq.s32.totalorder %s11, 0
    %p80 = por %p78, %p79
    %p81 = scmp.ne.s32.totalorder %s73, %s75
    %p82 = scmp.eq.s32.totalorder %s16, 1
    %p83 = por %p81, %p82
    %p84 = scmp.ne.s32.totalorder %s75, %s76
    %p85 = scmp.eq.s32.totalorder %s16, 0
    %p86 = por %p84, %p85
    %p87 = scmp.ne.s32.totalorder %s75, %s76
    %p88 = scmp.eq.s32.totalorder %s17, 1
    %p89 = por %p87, %p88
    %p91 = scmp.ne.s32.totalorder %s76, %s90
    %p92 = scmp.eq.s32.totalorder %s17, 0
    %p93 = por %p91, %p92
    %s95 = sadd.s32 %s94, 1
    %p98 = scmp.eq.s32.totalorder %s11, 1
    %p99 = scmp.ne.s32.totalorder %s94, %s96
    %p100 = scmp.eq.s32.totalorder %s11, 0
    %p101 = por %p99, %p100
    %p102 = scmp.ne.s32.totalorder %s94, %s96
    %p103 = scmp.eq.s32.totalorder %s16, 1
    %p104 = por %p102, %p103
    %p105 = scmp.ne.s32.totalorder %s96, %s97
    %p106 = scmp.eq.s32.totalorder %s16, 0
    %p107 = por %p105, %p106
    %p108 = scmp.ne.s32.totalorder %s96, %s97
    %p109 = scmp.eq.s32.totalorder %s17, 1
    %p110 = por %p108, %p109
    %p112 = scmp.ne.s32.totalorder %s97, %s111
    %p113 = scmp.eq.s32.totalorder %s17, 0
    %p114 = por %p112, %p113
    %s116 = sadd.s32 %s115, 1
    %p119 = scmp.eq.s32.totalorder %s11, 1
    %p120 = scmp.ne.s32.totalorder %s115, %s117
    %p121 = scmp.eq.s32.totalorder %s11, 0
    %p122 = por %p120, %p121
    %p123 = scmp.ne.s32.totalorder %s115, %s117
    %p124 = scmp.eq.s32.totalorder %s16, 1
    %p125 = por %p123, %p124
    %p126 = scmp.ne.s32.totalorder %s117, %s118
    %p127 = scmp.eq.s32.totalorder %s16, 0
    %p128 = por %p126, %p127
    %p129 = scmp.ne.s32.totalorder %s117, %s118
    %p130 = scmp.eq.s32.totalorder %s17, 1
    %p131 = por %p129, %p130
    %p133 = scmp.ne.s32.totalorder %s118, %s132
    %p134 = scmp.eq.s32.totalorder %s17, 0
    %p135 = por %p133, %p134
    %s136 = ssub.s32 %s11, %s18
    %p137 = scmp.eq.s32.totalorder %s136, 0
    %s139 = sadd.s32 %s138, 1
    %s140 = scalar_select %p137, %s138, %s139
    %p143 = pneg %p137
    %p144 = scmp.eq.s32.totalorder %s11, 1
    %p145 = por %p143, %p144
    %p146 = scmp.ne.s32.totalorder %s138, %s141
    %p147 = scmp.eq.s32.totalorder %s11, 0
    %p148 = por %p146, %p147
    %p149 = scmp.ne.s32.totalorder %s138, %s141
    %p150 = scmp.eq.s32.totalorder %s16, 1
    %p151 = por %p149, %p150
    %p152 = scmp.ne.s32.totalorder %s141, %s142
    %p153 = scmp.eq.s32.totalorder %s16, 0
    %p154 = por %p152, %p153
    %p155 = scmp.ne.s32.totalorder %s141, %s142
    %p156 = scmp.eq.s32.totalorder %s17, 1
    %p157 = por %p155, %p156
    %p159 = scmp.ne.s32.totalorder %s142, %s158
    %p160 = scmp.eq.s32.totalorder %s17, 0
    %p161 = por %p159, %p160
    %p162 = scmp.le.s32.totalorder 1, %s11
    %p163 = scmp.lt.s32.totalorder %s11, 3
    %p164 = pnand %p162, %p163
    %p165 = pneg %p164
    // Predicated region
    $region9: #{resnet_forward.14} parent=5 // pred_check
      _
    $region10: #{resnet_forward.14} parent=5 // pred_check_branch
      %167 = sbr.rel (%p164) target = $region12
    $region11: #{resnet_forward.14} parent=5 // pred_region
      %s168 = ssub.s32 %s11, 1
      // Predicated region
      $region13: #{resnet_forward.14} parent=11 // pred_check
        %p169 = pneg %p86
      $region14: #{resnet_forward.14} parent=11 // pred_check_branch
        %171 = sbr.rel (%p169) target = $region16
      $region15: #{resnet_forward.14} parent=11 // pred_region
        _
      $region16: #{resnet_forward.14} parent=11 // pred_fallthru
        _
      // Predicated region
      $region17: #{resnet_forward.14} parent=11 // pred_check
        %p172 = pneg %p107
      $region18: #{resnet_forward.14} parent=11 // pred_check_branch
        %174 = sbr.rel (%p172) target = $region20
      $region19: #{resnet_forward.14} parent=11 // pred_region
        _
      $region20: #{resnet_forward.14} parent=11 // pred_fallthru
        _
      // Predicated region
      $region21: #{resnet_forward.14} parent=11 // pred_check
        %p175 = pneg %p128
      $region22: #{resnet_forward.14} parent=11 // pred_check_branch
        %177 = sbr.rel (%p175) target = $region24
      $region23: #{resnet_forward.14} parent=11 // pred_region
        _
      $region24: #{resnet_forward.14} parent=11 // pred_fallthru
        _
    $region12: #{resnet_forward.14} parent=5 // pred_fallthru
      _
    %p178 = scmp.lt.s32.totalorder %s11, 2
    // Predicated region
    $region25: #{resnet_forward.14} parent=5 // pred_check
      %p179 = pneg %p178
    $region26: #{resnet_forward.14} parent=5 // pred_check_branch
      %181 = sbr.rel (%p179) target = $region28
    $region27: #{resnet_forward.14} parent=5 // pred_region
      // Predicated region
      $region29: #{resnet_forward.14} parent=27 // pred_check
        %p182 = pneg %p31
      $region30: #{resnet_forward.14} parent=27 // pred_check_branch
        %184 = sbr.rel (%p182) target = $region32
      $region31: #{resnet_forward.14} parent=27 // pred_region
        %s185 = smul.u32 16, %s11
        %p186 = scmp.lt.s32.totalorder %s185, 47
        %s187 = scalar_select %p186, %s185, 47
        %s188 = smul.addr %s187, 4
        %s189 = scalar_lea.vmem %s0, %s188
        %s190 = smul.u32 16, %s11
      $region32: #{resnet_forward.14} parent=27 // pred_fallthru
        _
      // Predicated region
      $region33: #{resnet_forward.14} parent=27 // pred_check
        %p191 = pneg %p59
      $region34: #{resnet_forward.14} parent=27 // pred_check_branch
        %193 = sbr.rel (%p191) target = $region36
      $region35: #{resnet_forward.14} parent=27 // pred_region
        %s194 = sadd.s32 %s11, 1
        %s195 = smul.u32 16, %s194
        %p196 = scmp.lt.s32.totalorder %s195, 47
        %s197 = scalar_select %p196, %s195, 47
        %s198 = smul.addr %s197, 4
        %s199 = scalar_lea.vmem %s1, %s198
        %s200 = sadd.s32 %s11, 1
        %s201 = smul.u32 16, %s200
      $region36: #{resnet_forward.14} parent=27 // pred_fallthru
        _
    $region28: #{resnet_forward.14} parent=5 // pred_fallthru
      _
    %p202 = scmp.le.s32.totalorder 1, %s11
    %p203 = scmp.lt.s32.totalorder %s11, 3
    %p204 = pnand %p202, %p203
    %p205 = pneg %p204
    // Predicated region
    $region37: #{resnet_forward.14} parent=5 // pred_check
      _
    $region38: #{resnet_forward.14} parent=5 // pred_check_branch
      %207 = sbr.rel (%p204) target = $region40
    $region39: #{resnet_forward.14} parent=5 // pred_region
      %s208 = ssub.s32 %s11, 1
      %s209 = smul.u32 16, %s16
      %p210 = scmp.lt.s32.totalorder %s209, 47
      %s211 = scalar_select %p210, %s209, 47
      %s212 = smul.addr %s211, 4
      %s213 = scalar_lea.vmem %s0, %s212
      %p214 = pneg %p37
      %p215 = pneg %p34
      %s216 = sadd.s32 %s16, 1
      %s217 = smul.u32 16, %s216
      %p218 = scmp.lt.s32.totalorder %s217, 47
      %s219 = scalar_select %p218, %s217, 47
      %s220 = smul.addr %s219, 4
      %s221 = scalar_lea.vmem %s1, %s220
      %p222 = pneg %p65
      %p223 = pneg %p62
      %p224 = pneg %p86
      %p225 = pneg %p83
      %p226 = pneg %p107
      %p227 = pneg %p104
      %p228 = pneg %p128
      %p229 = pneg %p125
      %p230 = pneg %p154
      %p231 = pneg %p151
      %s232 = smul.u32 16, %s16
      %p233 = scmp.lt.s32.totalorder %s232, 31
      %s234 = scalar_select %p233, %s232, 31
      %s235 = smul.addr %s234, 4
      %s236 = scalar_lea.vmem %s5, %s235
      %s237 = smul.u32 16, %s16
      %p238 = scmp.lt.s32.totalorder %s237, 47
      %s239 = scalar_select %p238, %s237, 47
      %s240 = smul.addr %s239, 4
      %s241 = scalar_lea.vmem %s0, %s240
      %s242 = smul.u32 16, %s16
      %s243 = sadd.s32 %s16, 1
      %s244 = smul.u32 16, %s243
      %p245 = scmp.lt.s32.totalorder %s244, 47
      %s246 = scalar_select %p245, %s244, 47
      %s247 = smul.addr %s246, 4
      %s248 = scalar_lea.vmem %s1, %s247
      %s249 = sadd.s32 %s16, 1
      %s250 = smul.u32 16, %s249
      %s251 = smul.u32 16, %s16
      %p252 = scmp.lt.s32.totalorder %s251, 31
      %s253 = scalar_select %p252, %s251, 31
      %s254 = smul.addr %s253, 4
      %s255 = scalar_lea.vmem %s5, %s254
      %s256 = smul.u32 16, %s16
      %v258 = vld [vmem:[%s241] sm:$0xf]
      %v259 = vld [vmem:[%s241 + $0x4] sm:$0xf]
      %v260 = vld [vmem:[%s241 + $0x8] sm:$0xf]
      %v261 = vld [vmem:[%s241 + $0xc] sm:$0xf]
      %v262 = vld [vmem:[%s241 + $0x10] sm:$0xf]
      %v263 = vld [vmem:[%s241 + $0x14] sm:$0xf]
      %v264 = vld [vmem:[%s241 + $0x18] sm:$0xf]
      %v265 = vld [vmem:[%s241 + $0x1c] sm:$0xf]
      %v266 = vld [vmem:[%s241 + $0x20] sm:$0xf]
      %v267 = vld [vmem:[%s241 + $0x24] sm:$0xf]
      %v268 = vld [vmem:[%s241 + $0x28] sm:$0xf]
      %v269 = vld [vmem:[%s241 + $0x2c] sm:$0xf]
      %v270 = vld [vmem:[%s241 + $0x30] sm:$0xf]
      %v271 = vld [vmem:[%s241 + $0x34] sm:$0xf]
      %v272 = vld [vmem:[%s241 + $0x38] sm:$0xf]
      %v273 = vld [vmem:[%s241 + $0x3c] sm:$0xf]
      %v274 = vld [vmem:[%s248] sm:$0xf]
      %v275 = vld [vmem:[%s248 + $0x4] sm:$0xf]
      %v292 = vunpack.c.l.b16 %v258
      %v293 = vunpack.c.l.b16 %v259
      %v294 = vunpack.c.l.b16 %v260
      %v295 = vunpack.c.l.b16 %v261
      %v296 = vunpack.c.l.b16 %v262
      %v297 = vunpack.c.l.b16 %v263
      %v298 = vunpack.c.l.b16 %v264
      %v299 = vunpack.c.l.b16 %v265
      %v300 = vunpack.c.l.b16 %v266
      %v301 = vunpack.c.l.b16 %v267
      %v302 = vunpack.c.l.b16 %v268
      %v303 = vunpack.c.l.b16 %v269
      %v304 = vunpack.c.l.b16 %v270
      %v305 = vunpack.c.l.b16 %v271
      %v306 = vunpack.c.l.b16 %v272
      %v307 = vunpack.c.l.b16 %v273
      %v308 = vpack.c.b16 %v293, %v292
      %v309 = vpack.c.b16 %v295, %v294
      %v310 = vpack.c.b16 %v297, %v296
      %v311 = vpack.c.b16 %v299, %v298
      %v312 = vpack.c.b16 %v301, %v300
      %v313 = vpack.c.b16 %v303, %v302
      %v314 = vpack.c.b16 %v305, %v304
      %v315 = vpack.c.b16 %v307, %v306
      %v326 = vunpack.c.l.b16 %v274
      %v327 = vunpack.c.l.b16 %v275
      %v328 = vpack.c.b16 %v327, %v326
      %v330 = vunpack.c.l.bf16 %v308
      %v331 = vunpack.c.h.bf16 %v308
      %v332 = vunpack.c.l.bf16 %v309
      %v333 = vunpack.c.h.bf16 %v309
      %v334 = vunpack.c.l.bf16 %v310
      %v335 = vunpack.c.h.bf16 %v310
      %v336 = vunpack.c.l.bf16 %v311
      %v337 = vunpack.c.h.bf16 %v311
      %v338 = vunpack.c.l.bf16 %v312
      %v339 = vunpack.c.h.bf16 %v312
      %v340 = vunpack.c.l.bf16 %v313
      %v341 = vunpack.c.h.bf16 %v313
      %v342 = vunpack.c.l.bf16 %v314
      %v343 = vunpack.c.h.bf16 %v314
      %v344 = vunpack.c.l.bf16 %v315
      %v345 = vunpack.c.h.bf16 %v315
      %v346 = vunpack.c.l.bf16 %v328
      %v347 = vunpack.c.h.bf16 %v328
      %v348 = vpack.c.bf16 %v331, %v330
      %v349 = vpack.c.bf16 %v333, %v332
      %v350 = vpack.c.bf16 %v335, %v334
      %v351 = vpack.c.bf16 %v337, %v336
      %v352 = vpack.c.bf16 %v339, %v338
      %v353 = vpack.c.bf16 %v341, %v340
      %v354 = vpack.c.bf16 %v343, %v342
      %v355 = vpack.c.bf16 %v345, %v344
      %v356 = vld [vmem:[%s2] sm:$0xf]
      %v357 = vld [vmem:[%s2 + $0x4] sm:$0xf]
      %v358 = vld [vmem:[%s2 + $0x8] sm:$0xf]
      %v359 = vld [vmem:[%s2 + $0xc] sm:$0xf]
      %v360 = vld [vmem:[%s2 + $0x10] sm:$0xf]
      %v361 = vld [vmem:[%s2 + $0x14] sm:$0xf]
      %v362 = vld [vmem:[%s2 + $0x18] sm:$0xf]
      %v363 = vld [vmem:[%s2 + $0x1c] sm:$0xf]
      %v364 = vpack.c.bf16 %v346, %v346
      %s365 = scalar_lea.vmem %s2, 32
      %v366 = vld [vmem:[%s365] sm:$0xf]
      %v367 = vld [vmem:[%s365 + $0x4] sm:$0xf]
      %v368 = vld [vmem:[%s365 + $0x8] sm:$0xf]
      %v369 = vld [vmem:[%s365 + $0xc] sm:$0xf]
      %v370 = vld [vmem:[%s365 + $0x10] sm:$0xf]
      %v371 = vld [vmem:[%s365 + $0x14] sm:$0xf]
      %v372 = vld [vmem:[%s365 + $0x18] sm:$0xf]
      %v373 = vld [vmem:[%s365 + $0x1c] sm:$0xf]
      %vm374 = vsmask.f32 7424
      %v376 = vshrl.u32 %v348, 16
      %v378 = vshll.u32 %v348, 16
      %v380 = vrot.slane %v378, 1
      %v381 = vor.u32 %v376, %v380
      %v383 = vshll.u32 %v349, 16
      %v385 = vrot.slane %v383, 1
      %v386 = vsel %vm374, %v381, %v385
      %v387 = vshrl.u32 %v349, 16
      %v389 = vor.u32 %v387, %v385
      %v391 = vshll.u32 %v350, 16
      %v393 = vrot.slane %v391, 1
      %v394 = vsel %vm374, %v389, %v393
      %v395 = vshrl.u32 %v350, 16
      %v397 = vor.u32 %v395, %v393
      %v399 = vshll.u32 %v351, 16
      %v401 = vrot.slane %v399, 1
      %v402 = vsel %vm374, %v397, %v401
      %v403 = vshrl.u32 %v351, 16
      %v405 = vor.u32 %v403, %v401
      %v407 = vshll.u32 %v352, 16
      %v409 = vrot.slane %v407, 1
      %v410 = vsel %vm374, %v405, %v409
      %v411 = vshrl.u32 %v352, 16
      %v413 = vor.u32 %v411, %v409
      %v415 = vshll.u32 %v353, 16
      %v417 = vrot.slane %v415, 1
      %v418 = vsel %vm374, %v413, %v417
      %v419 = vshrl.u32 %v353, 16
      %v421 = vor.u32 %v419, %v417
      %v423 = vshll.u32 %v354, 16
      %v425 = vrot.slane %v423, 1
      %v426 = vsel %vm374, %v421, %v425
      %v427 = vshrl.u32 %v354, 16
      %v429 = vor.u32 %v427, %v425
      %v431 = vshll.u32 %v355, 16
      %v433 = vrot.slane %v431, 1
      %v434 = vsel %vm374, %v429, %v433
      %v435 = vshrl.u32 %v355, 16
      %v437 = vor.u32 %v435, %v433
      %v439 = vshll.u32 %v364, 16
      %v441 = vrot.slane %v439, 1
      %v442 = vsel %vm374, %v437, %v441
      %v451 = vunpack.c.l.b16 %v366
      %v452 = vunpack.c.l.b16 %v367
      %v453 = vunpack.c.l.b16 %v368
      %v454 = vunpack.c.l.b16 %v369
      %v455 = vunpack.c.l.b16 %v370
      %v456 = vunpack.c.l.b16 %v371
      %v457 = vunpack.c.l.b16 %v372
      %v458 = vunpack.c.l.b16 %v373
      %v459 = vpack.c.b16 %v452, %v451
      %v460 = vpack.c.b16 %v454, %v453
      %v461 = vpack.c.b16 %v456, %v455
      %v462 = vpack.c.b16 %v458, %v457
      %vm467 = vcmask 523264
      %v469 = vsel %vm467, %v386, 0
      %v472 = vsel %vm467, %v394, 0
      %v475 = vsel %vm467, %v402, 0
      %v478 = vsel %vm467, %v410, 0
      %v481 = vsel %vm467, %v418, 0
      %v484 = vsel %vm467, %v426, 0
      %v487 = vsel %vm467, %v434, 0
      %v490 = vsel %vm467, %v442, 0
      %492 = vmatprep.subr.bf16.mxu0 0
      %493 = vmatpush1.bf16.msra.mxu0 0
      %494 = vmatprep.subr.bf16.mxu0 0
      %495 = vmatpush1.bf16.msra.mxu0 0
      %496 = vmatprep.subr.bf16.mxu0 0
      %497 = vmatpush1.bf16.msra.mxu0 0
      %498 = vmatprep.subr.bf16.mxu0 0
      %499 = vmatpush1.bf16.msra.mxu0 0
      %500 = vmatprep.subr.bf16.mxu0 0
      %501 = vmatpush1.bf16.msra.mxu0 %v462
      %502 = vmatprep.subr.bf16.mxu0 0
      %503 = vmatpush1.bf16.msra.mxu0 %v461
      %504 = vmatprep.subr.bf16.mxu0 0
      %505 = vmatpush1.bf16.msra.mxu0 %v460
      %506 = vmatprep.subr.bf16.mxu0 0
      %507 = vmatpush1.bf16.msra.mxu0 %v459
      %508 = vmatprep.subr.bf16.mxu0 0
      %509 = vmatpush2.bf16.msra.mxu0 0
      %510 = vmatprep.subr.bf16.mxu0 0
      %511 = vmatpush2.bf16.msra.mxu0 0
      %512 = vmatprep.subr.bf16.mxu0 0
      %513 = vmatpush2.bf16.msra.mxu0 0
      %514 = vmatprep.subr.bf16.mxu0 0
      %515 = vmatpush2.bf16.msra.mxu0 0
      %516 = vmatprep.subr.bf16.mxu0 0
      %517 = vmatpush2.bf16.msra.mxu0 0
      %518 = vmatprep.subr.bf16.mxu0 0
      %519 = vmatpush2.bf16.msra.mxu0 0
      %520 = vmatprep.subr.bf16.mxu0 0
      %521 = vmatpush2.bf16.msra.mxu0 0
      %522 = vmatprep.subr.bf16.mxu0 0
      %523 = vmatpush2.bf16.msra.mxu0 0
      %524 = vmatprep.mubr.bf16.mxu0 0
      %525 = vmatmul.mubr.bf16.gmra.mxu0 %v469
      %v526 = vpop.f32.mrf.mxu0
      %v527 = vadd.f32 0.0, %v526
      %v528 = vpop.f32.mrf.mxu0
      %v529 = vpop.f32.mrf.mxu0
      %v530 = vadd.f32 0.0, %v529
      %v531 = vpop.f32.mrf.mxu0
      %532 = vmatprep.mubr.bf16.mxu0 0
      %533 = vmatmul.mubr.bf16.gmra.mxu0 %v472
      %v534 = vpop.f32.mrf.mxu0
      %v535 = vadd.f32 0.0, %v534
      %v536 = vpop.f32.mrf.mxu0
      %v537 = vpop.f32.mrf.mxu0
      %v538 = vadd.f32 0.0, %v537
      %v539 = vpop.f32.mrf.mxu0
      %540 = vmatprep.mubr.bf16.mxu0 0
      %541 = vmatmul.mubr.bf16.gmra.mxu0 %v475
      %v542 = vpop.f32.mrf.mxu0
      %v543 = vadd.f32 0.0, %v542
      %v544 = vpop.f32.mrf.mxu0
      %v545 = vpop.f32.mrf.mxu0
      %v546 = vadd.f32 0.0, %v545
      %v547 = vpop.f32.mrf.mxu0
      %548 = vmatprep.mubr.bf16.mxu0 0
      %549 = vmatmul.mubr.bf16.gmra.mxu0 %v478
      %v550 = vpop.f32.mrf.mxu0
      %v551 = vadd.f32 0.0, %v550
      %v552 = vpop.f32.mrf.mxu0
      %v553 = vpop.f32.mrf.mxu0
      %v554 = vadd.f32 0.0, %v553
      %v555 = vpop.f32.mrf.mxu0
      %556 = vmatprep.mubr.bf16.mxu0 0
      %557 = vmatmul.mubr.bf16.gmra.mxu0 %v481
      %v558 = vpop.f32.mrf.mxu0
      %v559 = vadd.f32 0.0, %v558
      %v560 = vpop.f32.mrf.mxu0
      %v561 = vpop.f32.mrf.mxu0
      %v562 = vadd.f32 0.0, %v561
      %v563 = vpop.f32.mrf.mxu0
      %564 = vmatprep.mubr.bf16.mxu0 0
      %565 = vmatmul.mubr.bf16.gmra.mxu0 %v484
      %v566 = vpop.f32.mrf.mxu0
      %v567 = vadd.f32 0.0, %v566
      %v568 = vpop.f32.mrf.mxu0
      %v569 = vpop.f32.mrf.mxu0
      %v570 = vadd.f32 0.0, %v569
      %v571 = vpop.f32.mrf.mxu0
      %572 = vmatprep.mubr.bf16.mxu0 0
      %573 = vmatmul.mubr.bf16.gmra.mxu0 %v487
      %v574 = vpop.f32.mrf.mxu0
      %v575 = vadd.f32 0.0, %v574
      %v576 = vpop.f32.mrf.mxu0
      %v577 = vpop.f32.mrf.mxu0
      %v578 = vadd.f32 0.0, %v577
      %v579 = vpop.f32.mrf.mxu0
      %580 = vmatprep.mubr.bf16.mxu0 0
      %581 = vmatmul.mubr.bf16.gmra.mxu0 %v490
      %v582 = vpop.f32.mrf.mxu0
      %v583 = vadd.f32 0.0, %v582
      %v584 = vpop.f32.mrf.mxu0
      %v585 = vpop.f32.mrf.mxu0
      %v586 = vadd.f32 0.0, %v585
      %v587 = vpop.f32.mrf.mxu0
      %588 = vdwg.mxu0
      %v597 = vunpack.c.l.b16 %v356
      %v598 = vunpack.c.l.b16 %v357
      %v599 = vunpack.c.l.b16 %v358
      %v600 = vunpack.c.l.b16 %v359
      %v601 = vunpack.c.l.b16 %v360
      %v602 = vunpack.c.l.b16 %v361
      %v603 = vunpack.c.l.b16 %v362
      %v604 = vunpack.c.l.b16 %v363
      %v605 = vpack.c.b16 %v598, %v597
      %v606 = vpack.c.b16 %v600, %v599
      %v607 = vpack.c.b16 %v602, %v601
      %v608 = vpack.c.b16 %v604, %v603
      %v613 = vsel %vm467, %v348, 0
      %v615 = vsel %vm467, %v349, 0
      %v617 = vsel %vm467, %v350, 0
      %v619 = vsel %vm467, %v351, 0
      %v621 = vsel %vm467, %v352, 0
      %v623 = vsel %vm467, %v353, 0
      %v625 = vsel %vm467, %v354, 0
      %v627 = vsel %vm467, %v355, 0
      %629 = vmatprep.subr.bf16.mxu0 0
      %630 = vmatpush1.bf16.msra.mxu0 0
      %631 = vmatprep.subr.bf16.mxu0 0
      %632 = vmatpush1.bf16.msra.mxu0 0
      %633 = vmatprep.subr.bf16.mxu0 0
      %634 = vmatpush1.bf16.msra.mxu0 0
      %635 = vmatprep.subr.bf16.mxu0 0
      %636 = vmatpush1.bf16.msra.mxu0 0
      %637 = vmatprep.subr.bf16.mxu0 0
      %638 = vmatpush1.bf16.msra.mxu0 %v608
      %639 = vmatprep.subr.bf16.mxu0 0
      %640 = vmatpush1.bf16.msra.mxu0 %v607
      %641 = vmatprep.subr.bf16.mxu0 0
      %642 = vmatpush1.bf16.msra.mxu0 %v606
      %643 = vmatprep.subr.bf16.mxu0 0
      %644 = vmatpush1.bf16.msra.mxu0 %v605
      %645 = vmatprep.subr.bf16.mxu0 0
      %646 = vmatpush2.bf16.msra.mxu0 0
      %647 = vmatprep.subr.bf16.mxu0 0
      %648 = vmatpush2.bf16.msra.mxu0 0
      %649 = vmatprep.subr.bf16.mxu0 0
      %650 = vmatpush2.bf16.msra.mxu0 0
      %651 = vmatprep.subr.bf16.mxu0 0
      %652 = vmatpush2.bf16.msra.mxu0 0
      %653 = vmatprep.subr.bf16.mxu0 0
      %654 = vmatpush2.bf16.msra.mxu0 0
      %655 = vmatprep.subr.bf16.mxu0 0
      %656 = vmatpush2.bf16.msra.mxu0 0
      %657 = vmatprep.subr.bf16.mxu0 0
      %658 = vmatpush2.bf16.msra.mxu0 0
      %659 = vmatprep.subr.bf16.mxu0 0
      %660 = vmatpush2.bf16.msra.mxu0 0
      %661 = vmatprep.mubr.bf16.mxu0 0
      %662 = vmatmul.mubr.bf16.gmra.mxu0 %v613
      %v663 = vpop.f32.mrf.mxu0
      %v664 = vadd.f32 %v527, %v663
      %v665 = vpop.f32.mrf.mxu0
      %v666 = vpop.f32.mrf.mxu0
      %v667 = vadd.f32 %v530, %v666
      %v668 = vpop.f32.mrf.mxu0
      %669 = vmatprep.mubr.bf16.mxu0 0
      %670 = vmatmul.mubr.bf16.gmra.mxu0 %v615
      %v671 = vpop.f32.mrf.mxu0
      %v672 = vadd.f32 %v535, %v671
      %v673 = vpop.f32.mrf.mxu0
      %v674 = vpop.f32.mrf.mxu0
      %v675 = vadd.f32 %v538, %v674
      %v676 = vpop.f32.mrf.mxu0
      %677 = vmatprep.mubr.bf16.mxu0 0
      %678 = vmatmul.mubr.bf16.gmra.mxu0 %v617
      %v679 = vpop.f32.mrf.mxu0
      %v680 = vadd.f32 %v543, %v679
      %v681 = vpop.f32.mrf.mxu0
      %v682 = vpop.f32.mrf.mxu0
      %v683 = vadd.f32 %v546, %v682
      %v684 = vpop.f32.mrf.mxu0
      %685 = vmatprep.mubr.bf16.mxu0 0
      %686 = vmatmul.mubr.bf16.gmra.mxu0 %v619
      %v687 = vpop.f32.mrf.mxu0
      %v688 = vadd.f32 %v551, %v687
      %v689 = vpop.f32.mrf.mxu0
      %v690 = vpop.f32.mrf.mxu0
      %v691 = vadd.f32 %v554, %v690
      %v692 = vpop.f32.mrf.mxu0
      %693 = vmatprep.mubr.bf16.mxu0 0
      %694 = vmatmul.mubr.bf16.gmra.mxu0 %v621
      %v695 = vpop.f32.mrf.mxu0
      %v696 = vadd.f32 %v559, %v695
      %v697 = vpop.f32.mrf.mxu0
      %v698 = vpop.f32.mrf.mxu0
      %v699 = vadd.f32 %v562, %v698
      %v700 = vpop.f32.mrf.mxu0
      %701 = vmatprep.mubr.bf16.mxu0 0
      %702 = vmatmul.mubr.bf16.gmra.mxu0 %v623
      %v703 = vpop.f32.mrf.mxu0
      %v704 = vadd.f32 %v567, %v703
      %v705 = vpop.f32.mrf.mxu0
      %v706 = vpop.f32.mrf.mxu0
      %v707 = vadd.f32 %v570, %v706
      %v708 = vpop.f32.mrf.mxu0
      %709 = vmatprep.mubr.bf16.mxu0 0
      %710 = vmatmul.mubr.bf16.gmra.mxu0 %v625
      %v711 = vpop.f32.mrf.mxu0
      %v712 = vadd.f32 %v575, %v711
      %v713 = vpop.f32.mrf.mxu0
      %v714 = vpop.f32.mrf.mxu0
      %v715 = vadd.f32 %v578, %v714
      %v716 = vpop.f32.mrf.mxu0
      %717 = vmatprep.mubr.bf16.mxu0 0
      %718 = vmatmul.mubr.bf16.gmra.mxu0 %v627
      %v719 = vpop.f32.mrf.mxu0
      %v720 = vadd.f32 %v583, %v719
      %v721 = vpop.f32.mrf.mxu0
      %v722 = vpop.f32.mrf.mxu0
      %v723 = vadd.f32 %v586, %v722
      %v724 = vpop.f32.mrf.mxu0
      %725 = vdwg.mxu0
      %s726 = scalar_lea.vmem %s2, 64
      %v727 = vld [vmem:[%s726] sm:$0xf]
      %v728 = vld [vmem:[%s726 + $0x4] sm:$0xf]
      %v729 = vld [vmem:[%s726 + $0x8] sm:$0xf]
      %v730 = vld [vmem:[%s726 + $0xc] sm:$0xf]
      %v731 = vld [vmem:[%s726 + $0x10] sm:$0xf]
      %v732 = vld [vmem:[%s726 + $0x14] sm:$0xf]
      %v733 = vld [vmem:[%s726 + $0x18] sm:$0xf]
      %v734 = vld [vmem:[%s726 + $0x1c] sm:$0xf]
      %vm744 = vcmask 1046528
      %v745 = vrot.slane %v348, 1
      %v746 = vrot.slane %v349, 1
      %v747 = vsel %vm744, %v745, %v746
      %v748 = vrot.slane %v350, 1
      %v749 = vsel %vm744, %v746, %v748
      %v750 = vrot.slane %v351, 1
      %v751 = vsel %vm744, %v748, %v750
      %v752 = vrot.slane %v352, 1
      %v753 = vsel %vm744, %v750, %v752
      %v754 = vrot.slane %v353, 1
      %v755 = vsel %vm744, %v752, %v754
      %v756 = vrot.slane %v354, 1
      %v757 = vsel %vm744, %v754, %v756
      %v758 = vrot.slane %v355, 1
      %v759 = vsel %vm744, %v756, %v758
      %v760 = vrot.slane %v364, 1
      %v761 = vsel %vm744, %v758, %v760
      %v770 = vunpack.c.l.b16 %v727
      %v771 = vunpack.c.l.b16 %v728
      %v772 = vunpack.c.l.b16 %v729
      %v773 = vunpack.c.l.b16 %v730
      %v774 = vunpack.c.l.b16 %v731
      %v775 = vunpack.c.l.b16 %v732
      %v776 = vunpack.c.l.b16 %v733
      %v777 = vunpack.c.l.b16 %v734
      %v778 = vpack.c.b16 %v771, %v770
      %v779 = vpack.c.b16 %v773, %v772
      %v780 = vpack.c.b16 %v775, %v774
      %v781 = vpack.c.b16 %v777, %v776
      %v787 = vsel %vm467, %v747, 0
      %v790 = vsel %vm467, %v749, 0
      %v793 = vsel %vm467, %v751, 0
      %v796 = vsel %vm467, %v753, 0
      %v799 = vsel %vm467, %v755, 0
      %v802 = vsel %vm467, %v757, 0
      %v805 = vsel %vm467, %v759, 0
      %v808 = vsel %vm467, %v761, 0
      %810 = vmatprep.subr.bf16.mxu0 0
      %811 = vmatpush1.bf16.msra.mxu0 0
      %812 = vmatprep.subr.bf16.mxu0 0
      %813 = vmatpush1.bf16.msra.mxu0 0
      %814 = vmatprep.subr.bf16.mxu0 0
      %815 = vmatpush1.bf16.msra.mxu0 0
      %816 = vmatprep.subr.bf16.mxu0 0
      %817 = vmatpush1.bf16.msra.mxu0 0
      %818 = vmatprep.subr.bf16.mxu0 0
      %819 = vmatpush1.bf16.msra.mxu0 %v781
      %820 = vmatprep.subr.bf16.mxu0 0
      %821 = vmatpush1.bf16.msra.mxu0 %v780
      %822 = vmatprep.subr.bf16.mxu0 0
      %823 = vmatpush1.bf16.msra.mxu0 %v779
      %824 = vmatprep.subr.bf16.mxu0 0
      %825 = vmatpush1.bf16.msra.mxu0 %v778
      %826 = vmatprep.subr.bf16.mxu0 0
      %827 = vmatpush2.bf16.msra.mxu0 0
      %828 = vmatprep.subr.bf16.mxu0 0
      %829 = vmatpush2.bf16.msra.mxu0 0
      %830 = vmatprep.subr.bf16.mxu0 0
      %831 = vmatpush2.bf16.msra.mxu0 0
      %832 = vmatprep.subr.bf16.mxu0 0
      %833 = vmatpush2.bf16.msra.mxu0 0
      %834 = vmatprep.subr.bf16.mxu0 0
      %835 = vmatpush2.bf16.msra.mxu0 0
      %836 = vmatprep.subr.bf16.mxu0 0
      %837 = vmatpush2.bf16.msra.mxu0 0
      %838 = vmatprep.subr.bf16.mxu0 0
      %839 = vmatpush2.bf16.msra.mxu0 0
      %840 = vmatprep.subr.bf16.mxu0 0
      %841 = vmatpush2.bf16.msra.mxu0 0
      %842 = vmatprep.mubr.bf16.mxu0 0
      %843 = vmatmul.mubr.bf16.gmra.mxu0 %v787
      %v844 = vpop.f32.mrf.mxu0
      %v845 = vadd.f32 0.0, %v844
      %v846 = vpop.f32.mrf.mxu0
      %v847 = vpop.f32.mrf.mxu0
      %v848 = vadd.f32 0.0, %v847
      %v849 = vpop.f32.mrf.mxu0
      %850 = vmatprep.mubr.bf16.mxu0 0
      %851 = vmatmul.mubr.bf16.gmra.mxu0 %v790
      %v852 = vpop.f32.mrf.mxu0
      %v853 = vadd.f32 0.0, %v852
      %v854 = vpop.f32.mrf.mxu0
      %v855 = vpop.f32.mrf.mxu0
      %v856 = vadd.f32 0.0, %v855
      %v857 = vpop.f32.mrf.mxu0
      %858 = vmatprep.mubr.bf16.mxu0 0
      %859 = vmatmul.mubr.bf16.gmra.mxu0 %v793
      %v860 = vpop.f32.mrf.mxu0
      %v861 = vadd.f32 0.0, %v860
      %v862 = vpop.f32.mrf.mxu0
      %v863 = vpop.f32.mrf.mxu0
      %v864 = vadd.f32 0.0, %v863
      %v865 = vpop.f32.mrf.mxu0
      %866 = vmatprep.mubr.bf16.mxu0 0
      %867 = vmatmul.mubr.bf16.gmra.mxu0 %v796
      %v868 = vpop.f32.mrf.mxu0
      %v869 = vadd.f32 0.0, %v868
      %v870 = vpop.f32.mrf.mxu0
      %v871 = vpop.f32.mrf.mxu0
      %v872 = vadd.f32 0.0, %v871
      %v873 = vpop.f32.mrf.mxu0
      %874 = vmatprep.mubr.bf16.mxu0 0
      %875 = vmatmul.mubr.bf16.gmra.mxu0 %v799
      %v876 = vpop.f32.mrf.mxu0
      %v877 = vadd.f32 0.0, %v876
      %v878 = vpop.f32.mrf.mxu0
      %v879 = vpop.f32.mrf.mxu0
      %v880 = vadd.f32 0.0, %v879
      %v881 = vpop.f32.mrf.mxu0
      %882 = vmatprep.mubr.bf16.mxu0 0
      %883 = vmatmul.mubr.bf16.gmra.mxu0 %v802
      %v884 = vpop.f32.mrf.mxu0
      %v885 = vadd.f32 0.0, %v884
      %v886 = vpop.f32.mrf.mxu0
      %v887 = vpop.f32.mrf.mxu0
      %v888 = vadd.f32 0.0, %v887
      %v889 = vpop.f32.mrf.mxu0
      %890 = vmatprep.mubr.bf16.mxu0 0
      %891 = vmatmul.mubr.bf16.gmra.mxu0 %v805
      %v892 = vpop.f32.mrf.mxu0
      %v893 = vadd.f32 0.0, %v892
      %v894 = vpop.f32.mrf.mxu0
      %v895 = vpop.f32.mrf.mxu0
      %v896 = vadd.f32 0.0, %v895
      %v897 = vpop.f32.mrf.mxu0
      %898 = vmatprep.mubr.bf16.mxu0 0
      %899 = vmatmul.mubr.bf16.gmra.mxu0 %v808
      %v900 = vpop.f32.mrf.mxu0
      %v901 = vadd.f32 0.0, %v900
      %v902 = vpop.f32.mrf.mxu0
      %v903 = vpop.f32.mrf.mxu0
      %v904 = vadd.f32 0.0, %v903
      %v905 = vpop.f32.mrf.mxu0
      %906 = vdwg.mxu0
      %v907 = vadd.f32 %v664, %v845
      %v908 = vadd.f32 %v667, %v848
      %v909 = vadd.f32 %v672, %v853
      %v910 = vadd.f32 %v675, %v856
      %v911 = vadd.f32 %v680, %v861
      %v912 = vadd.f32 %v683, %v864
      %v913 = vadd.f32 %v688, %v869
      %v914 = vadd.f32 %v691, %v872
      %v915 = vadd.f32 %v696, %v877
      %v916 = vadd.f32 %v699, %v880
      %v917 = vadd.f32 %v704, %v885
      %v918 = vadd.f32 %v707, %v888
      %v919 = vadd.f32 %v712, %v893
      %v920 = vadd.f32 %v715, %v896
      %v921 = vadd.f32 %v720, %v901
      %v922 = vadd.f32 %v723, %v904
      %s923 = scalar_lea.vmem %s2, 96
      %v924 = vld [vmem:[%s923] sm:$0xf]
      %v925 = vld [vmem:[%s923 + $0x4] sm:$0xf]
      %v926 = vld [vmem:[%s923 + $0x8] sm:$0xf]
      %v927 = vld [vmem:[%s923 + $0xc] sm:$0xf]
      %v928 = vld [vmem:[%s923 + $0x10] sm:$0xf]
      %v929 = vld [vmem:[%s923 + $0x14] sm:$0xf]
      %v930 = vld [vmem:[%s923 + $0x18] sm:$0xf]
      %v931 = vld [vmem:[%s923 + $0x1c] sm:$0xf]
      %vm932 = vcmask 1044480
      %v933 = vrot.slane %v348, 3
      %v934 = vrot.slane %v349, 3
      %v935 = vsel %vm932, %v933, %v934
      %v936 = vrot.slane %v350, 3
      %v937 = vsel %vm932, %v934, %v936
      %v938 = vrot.slane %v351, 3
      %v939 = vsel %vm932, %v936, %v938
      %v940 = vrot.slane %v352, 3
      %v941 = vsel %vm932, %v938, %v940
      %v942 = vrot.slane %v353, 3
      %v943 = vsel %vm932, %v940, %v942
      %v944 = vrot.slane %v354, 3
      %v945 = vsel %vm932, %v942, %v944
      %v946 = vrot.slane %v355, 3
      %v947 = vsel %vm932, %v944, %v946
      %v948 = vrot.slane %v364, 3
      %v949 = vsel %vm932, %v946, %v948
      %v958 = vunpack.c.l.b16 %v924
      %v959 = vunpack.c.l.b16 %v925
      %v960 = vunpack.c.l.b16 %v926
      %v961 = vunpack.c.l.b16 %v927
      %v962 = vunpack.c.l.b16 %v928
      %v963 = vunpack.c.l.b16 %v929
      %v964 = vunpack.c.l.b16 %v930
      %v965 = vunpack.c.l.b16 %v931
      %v966 = vpack.c.b16 %v959, %v958
      %v967 = vpack.c.b16 %v961, %v960
      %v968 = vpack.c.b16 %v963, %v962
      %v969 = vpack.c.b16 %v965, %v964
      %v975 = vsel %vm467, %v935, 0
      %v978 = vsel %vm467, %v937, 0
      %v981 = vsel %vm467, %v939, 0
      %v984 = vsel %vm467, %v941, 0
      %v987 = vsel %vm467, %v943, 0
      %v990 = vsel %vm467, %v945, 0
      %v993 = vsel %vm467, %v947, 0
      %v996 = vsel %vm467, %v949, 0
      %998 = vmatprep.subr.bf16.mxu0 0
      %999 = vmatpush1.bf16.msra.mxu0 0
      %1000 = vmatprep.subr.bf16.mxu0 0
      %1001 = vmatpush1.bf16.msra.mxu0 0
      %1002 = vmatprep.subr.bf16.mxu0 0
      %1003 = vmatpush1.bf16.msra.mxu0 0
      %1004 = vmatprep.subr.bf16.mxu0 0
      %1005 = vmatpush1.bf16.msra.mxu0 0
      %1006 = vmatprep.subr.bf16.mxu0 0
      %1007 = vmatpush1.bf16.msra.mxu0 %v969
      %1008 = vmatprep.subr.bf16.mxu0 0
      %1009 = vmatpush1.bf16.msra.mxu0 %v968
      %1010 = vmatprep.subr.bf16.mxu0 0
      %1011 = vmatpush1.bf16.msra.mxu0 %v967
      %1012 = vmatprep.subr.bf16.mxu0 0
      %1013 = vmatpush1.bf16.msra.mxu0 %v966
      %1014 = vmatprep.subr.bf16.mxu0 0
      %1015 = vmatpush2.bf16.msra.mxu0 0
      %1016 = vmatprep.subr.bf16.mxu0 0
      %1017 = vmatpush2.bf16.msra.mxu0 0
      %1018 = vmatprep.subr.bf16.mxu0 0
      %1019 = vmatpush2.bf16.msra.mxu0 0
      %1020 = vmatprep.subr.bf16.mxu0 0
      %1021 = vmatpush2.bf16.msra.mxu0 0
      %1022 = vmatprep.subr.bf16.mxu0 0
      %1023 = vmatpush2.bf16.msra.mxu0 0
      %1024 = vmatprep.subr.bf16.mxu0 0
      %1025 = vmatpush2.bf16.msra.mxu0 0
      %1026 = vmatprep.subr.bf16.mxu0 0
      %1027 = vmatpush2.bf16.msra.mxu0 0
      %1028 = vmatprep.subr.bf16.mxu0 0
      %1029 = vmatpush2.bf16.msra.mxu0 0
      %1030 = vmatprep.mubr.bf16.mxu0 0
      %1031 = vmatmul.mubr.bf16.gmra.mxu0 %v975
      %v1032 = vpop.f32.mrf.mxu0
      %v1033 = vadd.f32 0.0, %v1032
      %v1034 = vpop.f32.mrf.mxu0
      %v1035 = vpop.f32.mrf.mxu0
      %v1036 = vadd.f32 0.0, %v1035
      %v1037 = vpop.f32.mrf.mxu0
      %1038 = vmatprep.mubr.bf16.mxu0 0
      %1039 = vmatmul.mubr.bf16.gmra.mxu0 %v978
      %v1040 = vpop.f32.mrf.mxu0
      %v1041 = vadd.f32 0.0, %v1040
      %v1042 = vpop.f32.mrf.mxu0
      %v1043 = vpop.f32.mrf.mxu0
      %v1044 = vadd.f32 0.0, %v1043
      %v1045 = vpop.f32.mrf.mxu0
      %1046 = vmatprep.mubr.bf16.mxu0 0
      %1047 = vmatmul.mubr.bf16.gmra.mxu0 %v981
      %v1048 = vpop.f32.mrf.mxu0
      %v1049 = vadd.f32 0.0, %v1048
      %v1050 = vpop.f32.mrf.mxu0
      %v1051 = vpop.f32.mrf.mxu0
      %v1052 = vadd.f32 0.0, %v1051
      %v1053 = vpop.f32.mrf.mxu0
      %1054 = vmatprep.mubr.bf16.mxu0 0
      %1055 = vmatmul.mubr.bf16.gmra.mxu0 %v984
      %v1056 = vpop.f32.mrf.mxu0
      %v1057 = vadd.f32 0.0, %v1056
      %v1058 = vpop.f32.mrf.mxu0
      %v1059 = vpop.f32.mrf.mxu0
      %v1060 = vadd.f32 0.0, %v1059
      %v1061 = vpop.f32.mrf.mxu0
      %1062 = vmatprep.mubr.bf16.mxu0 0
      %1063 = vmatmul.mubr.bf16.gmra.mxu0 %v987
      %v1064 = vpop.f32.mrf.mxu0
      %v1065 = vadd.f32 0.0, %v1064
      %v1066 = vpop.f32.mrf.mxu0
      %v1067 = vpop.f32.mrf.mxu0
      %v1068 = vadd.f32 0.0, %v1067
      %v1069 = vpop.f32.mrf.mxu0
      %1070 = vmatprep.mubr.bf16.mxu0 0
      %1071 = vmatmul.mubr.bf16.gmra.mxu0 %v990
      %v1072 = vpop.f32.mrf.mxu0
      %v1073 = vadd.f32 0.0, %v1072
      %v1074 = vpop.f32.mrf.mxu0
      %v1075 = vpop.f32.mrf.mxu0
      %v1076 = vadd.f32 0.0, %v1075
      %v1077 = vpop.f32.mrf.mxu0
      %1078 = vmatprep.mubr.bf16.mxu0 0
      %1079 = vmatmul.mubr.bf16.gmra.mxu0 %v993
      %v1080 = vpop.f32.mrf.mxu0
      %v1081 = vadd.f32 0.0, %v1080
      %v1082 = vpop.f32.mrf.mxu0
      %v1083 = vpop.f32.mrf.mxu0
      %v1084 = vadd.f32 0.0, %v1083
      %v1085 = vpop.f32.mrf.mxu0
      %1086 = vmatprep.mubr.bf16.mxu0 0
      %1087 = vmatmul.mubr.bf16.gmra.mxu0 %v996
      %v1088 = vpop.f32.mrf.mxu0
      %v1089 = vadd.f32 0.0, %v1088
      %v1090 = vpop.f32.mrf.mxu0
      %v1091 = vpop.f32.mrf.mxu0
      %v1092 = vadd.f32 0.0, %v1091
      %v1093 = vpop.f32.mrf.mxu0
      %1094 = vdwg.mxu0
      %v1095 = vadd.f32 %v907, %v1033
      %v1096 = vadd.f32 %v908, %v1036
      %v1097 = vadd.f32 %v909, %v1041
      %v1098 = vadd.f32 %v910, %v1044
      %v1099 = vadd.f32 %v911, %v1049
      %v1100 = vadd.f32 %v912, %v1052
      %v1101 = vadd.f32 %v913, %v1057
      %v1102 = vadd.f32 %v914, %v1060
      %v1103 = vadd.f32 %v915, %v1065
      %v1104 = vadd.f32 %v916, %v1068
      %v1105 = vadd.f32 %v917, %v1073
      %v1106 = vadd.f32 %v918, %v1076
      %v1107 = vadd.f32 %v919, %v1081
      %v1108 = vadd.f32 %v920, %v1084
      %v1109 = vadd.f32 %v921, %v1089
      %v1110 = vadd.f32 %v922, %v1092
      %s1111 = scalar_lea.vmem %s2, 128
      %v1112 = vld [vmem:[%s1111] sm:$0xf]
      %v1113 = vld [vmem:[%s1111 + $0x4] sm:$0xf]
      %v1114 = vld [vmem:[%s1111 + $0x8] sm:$0xf]
      %v1115 = vld [vmem:[%s1111 + $0xc] sm:$0xf]
      %v1116 = vld [vmem:[%s1111 + $0x10] sm:$0xf]
      %v1117 = vld [vmem:[%s1111 + $0x14] sm:$0xf]
      %v1118 = vld [vmem:[%s1111 + $0x18] sm:$0xf]
      %v1119 = vld [vmem:[%s1111 + $0x1c] sm:$0xf]
      %vm1120 = vsmask.f32 4352
      %v1121 = vrot.slane %v376, 3
      %v1122 = vrot.slane %v378, 4
      %v1123 = vor.u32 %v1121, %v1122
      %v1124 = vrot.slane %v387, 3
      %v1125 = vrot.slane %v383, 4
      %v1126 = vor.u32 %v1124, %v1125
      %v1127 = vsel %vm1120, %v1123, %v1126
      %v1128 = vrot.slane %v395, 3
      %v1129 = vrot.slane %v391, 4
      %v1130 = vor.u32 %v1128, %v1129
      %v1131 = vsel %vm1120, %v1126, %v1130
      %v1132 = vrot.slane %v403, 3
      %v1133 = vrot.slane %v399, 4
      %v1134 = vor.u32 %v1132, %v1133
      %v1135 = vsel %vm1120, %v1130, %v1134
      %v1136 = vrot.slane %v411, 3
      %v1137 = vrot.slane %v407, 4
      %v1138 = vor.u32 %v1136, %v1137
      %v1139 = vsel %vm1120, %v1134, %v1138
      %v1140 = vrot.slane %v419, 3
      %v1141 = vrot.slane %v415, 4
      %v1142 = vor.u32 %v1140, %v1141
      %v1143 = vsel %vm1120, %v1138, %v1142
      %v1144 = vrot.slane %v427, 3
      %v1145 = vrot.slane %v423, 4
      %v1146 = vor.u32 %v1144, %v1145
      %v1147 = vsel %vm1120, %v1142, %v1146
      %v1148 = vrot.slane %v435, 3
      %v1149 = vrot.slane %v431, 4
      %v1150 = vor.u32 %v1148, %v1149
      %v1151 = vsel %vm1120, %v1146, %v1150
      %v1152 = vshrl.u32 %v364, 16
      %v1154 = vrot.slane %v1152, 3
      %v1155 = vrot.slane %v439, 4
      %v1156 = vor.u32 %v1154, %v1155
      %v1157 = vsel %vm1120, %v1150, %v1156
      %v1166 = vunpack.c.l.b16 %v1112
      %v1167 = vunpack.c.l.b16 %v1113
      %v1168 = vunpack.c.l.b16 %v1114
      %v1169 = vunpack.c.l.b16 %v1115
      %v1170 = vunpack.c.l.b16 %v1116
      %v1171 = vunpack.c.l.b16 %v1117
      %v1172 = vunpack.c.l.b16 %v1118
      %v1173 = vunpack.c.l.b16 %v1119
      %v1174 = vpack.c.b16 %v1167, %v1166
      %v1175 = vpack.c.b16 %v1169, %v1168
      %v1176 = vpack.c.b16 %v1171, %v1170
      %v1177 = vpack.c.b16 %v1173, %v1172
      %v1183 = vsel %vm467, %v1127, 0
      %v1186 = vsel %vm467, %v1131, 0
      %v1189 = vsel %vm467, %v1135, 0
      %v1192 = vsel %vm467, %v1139, 0
      %v1195 = vsel %vm467, %v1143, 0
      %v1198 = vsel %vm467, %v1147, 0
      %v1201 = vsel %vm467, %v1151, 0
      %v1204 = vsel %vm467, %v1157, 0
      %1206 = vmatprep.subr.bf16.mxu0 0
      %1207 = vmatpush1.bf16.msra.mxu0 0
      %1208 = vmatprep.subr.bf16.mxu0 0
      %1209 = vmatpush1.bf16.msra.mxu0 0
      %1210 = vmatprep.subr.bf16.mxu0 0
      %1211 = vmatpush1.bf16.msra.mxu0 0
      %1212 = vmatprep.subr.bf16.mxu0 0
      %1213 = vmatpush1.bf16.msra.mxu0 0
      %1214 = vmatprep.subr.bf16.mxu0 0
      %1215 = vmatpush1.bf16.msra.mxu0 %v1177
      %1216 = vmatprep.subr.bf16.mxu0 0
      %1217 = vmatpush1.bf16.msra.mxu0 %v1176
      %1218 = vmatprep.subr.bf16.mxu0 0
      %1219 = vmatpush1.bf16.msra.mxu0 %v1175
      %1220 = vmatprep.subr.bf16.mxu0 0
      %1221 = vmatpush1.bf16.msra.mxu0 %v1174
      %1222 = vmatprep.subr.bf16.mxu0 0
      %1223 = vmatpush2.bf16.msra.mxu0 0
      %1224 = vmatprep.subr.bf16.mxu0 0
      %1225 = vmatpush2.bf16.msra.mxu0 0
      %1226 = vmatprep.subr.bf16.mxu0 0
      %1227 = vmatpush2.bf16.msra.mxu0 0
      %1228 = vmatprep.subr.bf16.mxu0 0
      %1229 = vmatpush2.bf16.msra.mxu0 0
      %1230 = vmatprep.subr.bf16.mxu0 0
      %1231 = vmatpush2.bf16.msra.mxu0 0
      %1232 = vmatprep.subr.bf16.mxu0 0
      %1233 = vmatpush2.bf16.msra.mxu0 0
      %1234 = vmatprep.subr.bf16.mxu0 0
      %1235 = vmatpush2.bf16.msra.mxu0 0
      %1236 = vmatprep.subr.bf16.mxu0 0
      %1237 = vmatpush2.bf16.msra.mxu0 0
      %1238 = vmatprep.mubr.bf16.mxu0 0
      %1239 = vmatmul.mubr.bf16.gmra.mxu0 %v1183
      %v1240 = vpop.f32.mrf.mxu0
      %v1241 = vadd.f32 0.0, %v1240
      %v1242 = vpop.f32.mrf.mxu0
      %v1243 = vpop.f32.mrf.mxu0
      %v1244 = vadd.f32 0.0, %v1243
      %v1245 = vpop.f32.mrf.mxu0
      %1246 = vmatprep.mubr.bf16.mxu0 0
      %1247 = vmatmul.mubr.bf16.gmra.mxu0 %v1186
      %v1248 = vpop.f32.mrf.mxu0
      %v1249 = vadd.f32 0.0, %v1248
      %v1250 = vpop.f32.mrf.mxu0
      %v1251 = vpop.f32.mrf.mxu0
      %v1252 = vadd.f32 0.0, %v1251
      %v1253 = vpop.f32.mrf.mxu0
      %1254 = vmatprep.mubr.bf16.mxu0 0
      %1255 = vmatmul.mubr.bf16.gmra.mxu0 %v1189
      %v1256 = vpop.f32.mrf.mxu0
      %v1257 = vadd.f32 0.0, %v1256
      %v1258 = vpop.f32.mrf.mxu0
      %v1259 = vpop.f32.mrf.mxu0
      %v1260 = vadd.f32 0.0, %v1259
      %v1261 = vpop.f32.mrf.mxu0
      %1262 = vmatprep.mubr.bf16.mxu0 0
      %1263 = vmatmul.mubr.bf16.gmra.mxu0 %v1192
      %v1264 = vpop.f32.mrf.mxu0
      %v1265 = vadd.f32 0.0, %v1264
      %v1266 = vpop.f32.mrf.mxu0
      %v1267 = vpop.f32.mrf.mxu0
      %v1268 = vadd.f32 0.0, %v1267
      %v1269 = vpop.f32.mrf.mxu0
      %1270 = vmatprep.mubr.bf16.mxu0 0
      %1271 = vmatmul.mubr.bf16.gmra.mxu0 %v1195
      %v1272 = vpop.f32.mrf.mxu0
      %v1273 = vadd.f32 0.0, %v1272
      %v1274 = vpop.f32.mrf.mxu0
      %v1275 = vpop.f32.mrf.mxu0
      %v1276 = vadd.f32 0.0, %v1275
      %v1277 = vpop.f32.mrf.mxu0
      %1278 = vmatprep.mubr.bf16.mxu0 0
      %1279 = vmatmul.mubr.bf16.gmra.mxu0 %v1198
      %v1280 = vpop.f32.mrf.mxu0
      %v1281 = vadd.f32 0.0, %v1280
      %v1282 = vpop.f32.mrf.mxu0
      %v1283 = vpop.f32.mrf.mxu0
      %v1284 = vadd.f32 0.0, %v1283
      %v1285 = vpop.f32.mrf.mxu0
      %1286 = vmatprep.mubr.bf16.mxu0 0
      %1287 = vmatmul.mubr.bf16.gmra.mxu0 %v1201
      %v1288 = vpop.f32.mrf.mxu0
      %v1289 = vadd.f32 0.0, %v1288
      %v1290 = vpop.f32.mrf.mxu0
      %v1291 = vpop.f32.mrf.mxu0
      %v1292 = vadd.f32 0.0, %v1291
      %v1293 = vpop.f32.mrf.mxu0
      %1294 = vmatprep.mubr.bf16.mxu0 0
      %1295 = vmatmul.mubr.bf16.gmra.mxu0 %v1204
      %v1296 = vpop.f32.mrf.mxu0
      %v1297 = vadd.f32 0.0, %v1296
      %v1298 = vpop.f32.mrf.mxu0
      %v1299 = vpop.f32.mrf.mxu0
      %v1300 = vadd.f32 0.0, %v1299
      %v1301 = vpop.f32.mrf.mxu0
      %1302 = vdwg.mxu0
      %v1303 = vadd.f32 %v1095, %v1241
      %v1304 = vadd.f32 %v1096, %v1244
      %v1305 = vadd.f32 %v1097, %v1249
      %v1306 = vadd.f32 %v1098, %v1252
      %v1307 = vadd.f32 %v1099, %v1257
      %v1308 = vadd.f32 %v1100, %v1260
      %v1309 = vadd.f32 %v1101, %v1265
      %v1310 = vadd.f32 %v1102, %v1268
      %v1311 = vadd.f32 %v1103, %v1273
      %v1312 = vadd.f32 %v1104, %v1276
      %v1313 = vadd.f32 %v1105, %v1281
      %v1314 = vadd.f32 %v1106, %v1284
      %v1315 = vadd.f32 %v1107, %v1289
      %v1316 = vadd.f32 %v1108, %v1292
      %v1317 = vadd.f32 %v1109, %v1297
      %v1318 = vadd.f32 %v1110, %v1300
      %v1319 = vpack.c.bf16 %v332, %v331
      %v1320 = vpack.c.bf16 %v334, %v333
      %v1321 = vpack.c.bf16 %v336, %v335
      %v1322 = vpack.c.bf16 %v338, %v337
      %v1323 = vpack.c.bf16 %v340, %v339
      %v1324 = vpack.c.bf16 %v342, %v341
      %v1325 = vpack.c.bf16 %v344, %v343
      %v1326 = vpack.c.bf16 %v346, %v345
      %s1327 = scalar_lea.vmem %s2, 160
      %v1328 = vld [vmem:[%s1327] sm:$0xf]
      %v1329 = vld [vmem:[%s1327 + $0x4] sm:$0xf]
      %v1330 = vld [vmem:[%s1327 + $0x8] sm:$0xf]
      %v1331 = vld [vmem:[%s1327 + $0xc] sm:$0xf]
      %v1332 = vld [vmem:[%s1327 + $0x10] sm:$0xf]
      %v1333 = vld [vmem:[%s1327 + $0x14] sm:$0xf]
      %v1334 = vld [vmem:[%s1327 + $0x18] sm:$0xf]
      %v1335 = vld [vmem:[%s1327 + $0x1c] sm:$0xf]
      %v1344 = vunpack.c.l.b16 %v1328
      %v1345 = vunpack.c.l.b16 %v1329
      %v1346 = vunpack.c.l.b16 %v1330
      %v1347 = vunpack.c.l.b16 %v1331
      %v1348 = vunpack.c.l.b16 %v1332
      %v1349 = vunpack.c.l.b16 %v1333
      %v1350 = vunpack.c.l.b16 %v1334
      %v1351 = vunpack.c.l.b16 %v1335
      %v1352 = vpack.c.b16 %v1345, %v1344
      %v1353 = vpack.c.b16 %v1347, %v1346
      %v1354 = vpack.c.b16 %v1349, %v1348
      %v1355 = vpack.c.b16 %v1351, %v1350
      %v1361 = vsel %vm467, %v1319, 0
      %v1364 = vsel %vm467, %v1320, 0
      %v1367 = vsel %vm467, %v1321, 0
      %v1370 = vsel %vm467, %v1322, 0
      %v1373 = vsel %vm467, %v1323, 0
      %v1376 = vsel %vm467, %v1324, 0
      %v1379 = vsel %vm467, %v1325, 0
      %v1382 = vsel %vm467, %v1326, 0
      %1384 = vmatprep.subr.bf16.mxu0 0
      %1385 = vmatpush1.bf16.msra.mxu0 0
      %1386 = vmatprep.subr.bf16.mxu0 0
      %1387 = vmatpush1.bf16.msra.mxu0 0
      %1388 = vmatprep.subr.bf16.mxu0 0
      %1389 = vmatpush1.bf16.msra.mxu0 0
      %1390 = vmatprep.subr.bf16.mxu0 0
      %1391 = vmatpush1.bf16.msra.mxu0 0
      %1392 = vmatprep.subr.bf16.mxu0 0
      %1393 = vmatpush1.bf16.msra.mxu0 %v1355
      %1394 = vmatprep.subr.bf16.mxu0 0
      %1395 = vmatpush1.bf16.msra.mxu0 %v1354
      %1396 = vmatprep.subr.bf16.mxu0 0
      %1397 = vmatpush1.bf16.msra.mxu0 %v1353
      %1398 = vmatprep.subr.bf16.mxu0 0
      %1399 = vmatpush1.bf16.msra.mxu0 %v1352
      %1400 = vmatprep.subr.bf16.mxu0 0
      %1401 = vmatpush2.bf16.msra.mxu0 0
      %1402 = vmatprep.subr.bf16.mxu0 0
      %1403 = vmatpush2.bf16.msra.mxu0 0
      %1404 = vmatprep.subr.bf16.mxu0 0
      %1405 = vmatpush2.bf16.msra.mxu0 0
      %1406 = vmatprep.subr.bf16.mxu0 0
      %1407 = vmatpush2.bf16.msra.mxu0 0
      %1408 = vmatprep.subr.bf16.mxu0 0
      %1409 = vmatpush2.bf16.msra.mxu0 0
      %1410 = vmatprep.subr.bf16.mxu0 0
      %1411 = vmatpush2.bf16.msra.mxu0 0
      %1412 = vmatprep.subr.bf16.mxu0 0
      %1413 = vmatpush2.bf16.msra.mxu0 0
      %1414 = vmatprep.subr.bf16.mxu0 0
      %1415 = vmatpush2.bf16.msra.mxu0 0
      %1416 = vmatprep.mubr.bf16.mxu0 0
      %1417 = vmatmul.mubr.bf16.gmra.mxu0 %v1361
      %v1418 = vpop.f32.mrf.mxu0
      %v1419 = vadd.f32 0.0, %v1418
      %v1420 = vpop.f32.mrf.mxu0
      %v1421 = vpop.f32.mrf.mxu0
      %v1422 = vadd.f32 0.0, %v1421
      %v1423 = vpop.f32.mrf.mxu0
      %1424 = vmatprep.mubr.bf16.mxu0 0
      %1425 = vmatmul.mubr.bf16.gmra.mxu0 %v1364
      %v1426 = vpop.f32.mrf.mxu0
      %v1427 = vadd.f32 0.0, %v1426
      %v1428 = vpop.f32.mrf.mxu0
      %v1429 = vpop.f32.mrf.mxu0
      %v1430 = vadd.f32 0.0, %v1429
      %v1431 = vpop.f32.mrf.mxu0
      %1432 = vmatprep.mubr.bf16.mxu0 0
      %1433 = vmatmul.mubr.bf16.gmra.mxu0 %v1367
      %v1434 = vpop.f32.mrf.mxu0
      %v1435 = vadd.f32 0.0, %v1434
      %v1436 = vpop.f32.mrf.mxu0
      %v1437 = vpop.f32.mrf.mxu0
      %v1438 = vadd.f32 0.0, %v1437
      %v1439 = vpop.f32.mrf.mxu0
      %1440 = vmatprep.mubr.bf16.mxu0 0
      %1441 = vmatmul.mubr.bf16.gmra.mxu0 %v1370
      %v1442 = vpop.f32.mrf.mxu0
      %v1443 = vadd.f32 0.0, %v1442
      %v1444 = vpop.f32.mrf.mxu0
      %v1445 = vpop.f32.mrf.mxu0
      %v1446 = vadd.f32 0.0, %v1445
      %v1447 = vpop.f32.mrf.mxu0
      %1448 = vmatprep.mubr.bf16.mxu0 0
      %1449 = vmatmul.mubr.bf16.gmra.mxu0 %v1373
      %v1450 = vpop.f32.mrf.mxu0
      %v1451 = vadd.f32 0.0, %v1450
      %v1452 = vpop.f32.mrf.mxu0
      %v1453 = vpop.f32.mrf.mxu0
      %v1454 = vadd.f32 0.0, %v1453
      %v1455 = vpop.f32.mrf.mxu0
      %1456 = vmatprep.mubr.bf16.mxu0 0
      %1457 = vmatmul.mubr.bf16.gmra.mxu0 %v1376
      %v1458 = vpop.f32.mrf.mxu0
      %v1459 = vadd.f32 0.0, %v1458
      %v1460 = vpop.f32.mrf.mxu0
      %v1461 = vpop.f32.mrf.mxu0
      %v1462 = vadd.f32 0.0, %v1461
      %v1463 = vpop.f32.mrf.mxu0
      %1464 = vmatprep.mubr.bf16.mxu0 0
      %1465 = vmatmul.mubr.bf16.gmra.mxu0 %v1379
      %v1466 = vpop.f32.mrf.mxu0
      %v1467 = vadd.f32 0.0, %v1466
      %v1468 = vpop.f32.mrf.mxu0
      %v1469 = vpop.f32.mrf.mxu0
      %v1470 = vadd.f32 0.0, %v1469
      %v1471 = vpop.f32.mrf.mxu0
      %1472 = vmatprep.mubr.bf16.mxu0 0
      %1473 = vmatmul.mubr.bf16.gmra.mxu0 %v1382
      %v1474 = vpop.f32.mrf.mxu0
      %v1475 = vadd.f32 0.0, %v1474
      %v1476 = vpop.f32.mrf.mxu0
      %v1477 = vpop.f32.mrf.mxu0
      %v1478 = vadd.f32 0.0, %v1477
      %v1479 = vpop.f32.mrf.mxu0
      %1480 = vdwg.mxu0
      %v1481 = vadd.f32 %v1303, %v1419
      %v1482 = vadd.f32 %v1304, %v1422
      %v1483 = vadd.f32 %v1305, %v1427
      %v1484 = vadd.f32 %v1306, %v1430
      %v1485 = vadd.f32 %v1307, %v1435
      %v1486 = vadd.f32 %v1308, %v1438
      %v1487 = vadd.f32 %v1309, %v1443
      %v1488 = vadd.f32 %v1310, %v1446
      %v1489 = vadd.f32 %v1311, %v1451
      %v1490 = vadd.f32 %v1312, %v1454
      %v1491 = vadd.f32 %v1313, %v1459
      %v1492 = vadd.f32 %v1314, %v1462
      %v1493 = vadd.f32 %v1315, %v1467
      %v1494 = vadd.f32 %v1316, %v1470
      %v1495 = vadd.f32 %v1317, %v1475
      %v1496 = vadd.f32 %v1318, %v1478
      %v1497 = vpack.c.bf16 %v347, %v347
      %s1498 = scalar_lea.vmem %s2, 192
      %v1499 = vld [vmem:[%s1498] sm:$0xf]
      %v1500 = vld [vmem:[%s1498 + $0x4] sm:$0xf]
      %v1501 = vld [vmem:[%s1498 + $0x8] sm:$0xf]
      %v1502 = vld [vmem:[%s1498 + $0xc] sm:$0xf]
      %v1503 = vld [vmem:[%s1498 + $0x10] sm:$0xf]
      %v1504 = vld [vmem:[%s1498 + $0x14] sm:$0xf]
      %v1505 = vld [vmem:[%s1498 + $0x18] sm:$0xf]
      %v1506 = vld [vmem:[%s1498 + $0x1c] sm:$0xf]
      %vm1516 = vcmask 1045504
      %v1517 = vrot.slane %v1319, 2
      %v1518 = vrot.slane %v1320, 2
      %v1519 = vsel %vm1516, %v1517, %v1518
      %v1520 = vrot.slane %v1321, 2
      %v1521 = vsel %vm1516, %v1518, %v1520
      %v1522 = vrot.slane %v1322, 2
      %v1523 = vsel %vm1516, %v1520, %v1522
      %v1524 = vrot.slane %v1323, 2
      %v1525 = vsel %vm1516, %v1522, %v1524
      %v1526 = vrot.slane %v1324, 2
      %v1527 = vsel %vm1516, %v1524, %v1526
      %v1528 = vrot.slane %v1325, 2
      %v1529 = vsel %vm1516, %v1526, %v1528
      %v1530 = vrot.slane %v1326, 2
      %v1531 = vsel %vm1516, %v1528, %v1530
      %v1532 = vrot.slane %v1497, 2
      %v1533 = vsel %vm1516, %v1530, %v1532
      %v1542 = vunpack.c.l.b16 %v1499
      %v1543 = vunpack.c.l.b16 %v1500
      %v1544 = vunpack.c.l.b16 %v1501
      %v1545 = vunpack.c.l.b16 %v1502
      %v1546 = vunpack.c.l.b16 %v1503
      %v1547 = vunpack.c.l.b16 %v1504
      %v1548 = vunpack.c.l.b16 %v1505
      %v1549 = vunpack.c.l.b16 %v1506
      %v1550 = vpack.c.b16 %v1543, %v1542
      %v1551 = vpack.c.b16 %v1545, %v1544
      %v1552 = vpack.c.b16 %v1547, %v1546
      %v1553 = vpack.c.b16 %v1549, %v1548
      %v1559 = vsel %vm467, %v1519, 0
      %v1562 = vsel %vm467, %v1521, 0
      %v1565 = vsel %vm467, %v1523, 0
      %v1568 = vsel %vm467, %v1525, 0
      %v1571 = vsel %vm467, %v1527, 0
      %v1574 = vsel %vm467, %v1529, 0
      %v1577 = vsel %vm467, %v1531, 0
      %v1580 = vsel %vm467, %v1533, 0
      %1582 = vmatprep.subr.bf16.mxu0 0
      %1583 = vmatpush1.bf16.msra.mxu0 0
      %1584 = vmatprep.subr.bf16.mxu0 0
      %1585 = vmatpush1.bf16.msra.mxu0 0
      %1586 = vmatprep.subr.bf16.mxu0 0
      %1587 = vmatpush1.bf16.msra.mxu0 0
      %1588 = vmatprep.subr.bf16.mxu0 0
      %1589 = vmatpush1.bf16.msra.mxu0 0
      %1590 = vmatprep.subr.bf16.mxu0 0
      %1591 = vmatpush1.bf16.msra.mxu0 %v1553
      %1592 = vmatprep.subr.bf16.mxu0 0
      %1593 = vmatpush1.bf16.msra.mxu0 %v1552
      %1594 = vmatprep.subr.bf16.mxu0 0
      %1595 = vmatpush1.bf16.msra.mxu0 %v1551
      %1596 = vmatprep.subr.bf16.mxu0 0
      %1597 = vmatpush1.bf16.msra.mxu0 %v1550
      %1598 = vmatprep.subr.bf16.mxu0 0
      %1599 = vmatpush2.bf16.msra.mxu0 0
      %1600 = vmatprep.subr.bf16.mxu0 0
      %1601 = vmatpush2.bf16.msra.mxu0 0
      %1602 = vmatprep.subr.bf16.mxu0 0
      %1603 = vmatpush2.bf16.msra.mxu0 0
      %1604 = vmatprep.subr.bf16.mxu0 0
      %1605 = vmatpush2.bf16.msra.mxu0 0
      %1606 = vmatprep.subr.bf16.mxu0 0
      %1607 = vmatpush2.bf16.msra.mxu0 0
      %1608 = vmatprep.subr.bf16.mxu0 0
      %1609 = vmatpush2.bf16.msra.mxu0 0
      %1610 = vmatprep.subr.bf16.mxu0 0
      %1611 = vmatpush2.bf16.msra.mxu0 0
      %1612 = vmatprep.subr.bf16.mxu0 0
      %1613 = vmatpush2.bf16.msra.mxu0 0
      %1614 = vmatprep.mubr.bf16.mxu0 0
      %1615 = vmatmul.mubr.bf16.gmra.mxu0 %v1559
      %v1616 = vpop.f32.mrf.mxu0
      %v1617 = vadd.f32 0.0, %v1616
      %v1618 = vpop.f32.mrf.mxu0
      %v1619 = vpop.f32.mrf.mxu0
      %v1620 = vadd.f32 0.0, %v1619
      %v1621 = vpop.f32.mrf.mxu0
      %1622 = vmatprep.mubr.bf16.mxu0 0
      %1623 = vmatmul.mubr.bf16.gmra.mxu0 %v1562
      %v1624 = vpop.f32.mrf.mxu0
      %v1625 = vadd.f32 0.0, %v1624
      %v1626 = vpop.f32.mrf.mxu0
      %v1627 = vpop.f32.mrf.mxu0
      %v1628 = vadd.f32 0.0, %v1627
      %v1629 = vpop.f32.mrf.mxu0
      %1630 = vmatprep.mubr.bf16.mxu0 0
      %1631 = vmatmul.mubr.bf16.gmra.mxu0 %v1565
      %v1632 = vpop.f32.mrf.mxu0
      %v1633 = vadd.f32 0.0, %v1632
      %v1634 = vpop.f32.mrf.mxu0
      %v1635 = vpop.f32.mrf.mxu0
      %v1636 = vadd.f32 0.0, %v1635
      %v1637 = vpop.f32.mrf.mxu0
      %1638 = vmatprep.mubr.bf16.mxu0 0
      %1639 = vmatmul.mubr.bf16.gmra.mxu0 %v1568
      %v1640 = vpop.f32.mrf.mxu0
      %v1641 = vadd.f32 0.0, %v1640
      %v1642 = vpop.f32.mrf.mxu0
      %v1643 = vpop.f32.mrf.mxu0
      %v1644 = vadd.f32 0.0, %v1643
      %v1645 = vpop.f32.mrf.mxu0
      %1646 = vmatprep.mubr.bf16.mxu0 0
      %1647 = vmatmul.mubr.bf16.gmra.mxu0 %v1571
      %v1648 = vpop.f32.mrf.mxu0
      %v1649 = vadd.f32 0.0, %v1648
      %v1650 = vpop.f32.mrf.mxu0
      %v1651 = vpop.f32.mrf.mxu0
      %v1652 = vadd.f32 0.0, %v1651
      %v1653 = vpop.f32.mrf.mxu0
      %1654 = vmatprep.mubr.bf16.mxu0 0
      %1655 = vmatmul.mubr.bf16.gmra.mxu0 %v1574
      %v1656 = vpop.f32.mrf.mxu0
      %v1657 = vadd.f32 0.0, %v1656
      %v1658 = vpop.f32.mrf.mxu0
      %v1659 = vpop.f32.mrf.mxu0
      %v1660 = vadd.f32 0.0, %v1659
      %v1661 = vpop.f32.mrf.mxu0
      %1662 = vmatprep.mubr.bf16.mxu0 0
      %1663 = vmatmul.mubr.bf16.gmra.mxu0 %v1577
      %v1664 = vpop.f32.mrf.mxu0
      %v1665 = vadd.f32 0.0, %v1664
      %v1666 = vpop.f32.mrf.mxu0
      %v1667 = vpop.f32.mrf.mxu0
      %v1668 = vadd.f32 0.0, %v1667
      %v1669 = vpop.f32.mrf.mxu0
      %1670 = vmatprep.mubr.bf16.mxu0 0
      %1671 = vmatmul.mubr.bf16.gmra.mxu0 %v1580
      %v1672 = vpop.f32.mrf.mxu0
      %v1673 = vadd.f32 0.0, %v1672
      %v1674 = vpop.f32.mrf.mxu0
      %v1675 = vpop.f32.mrf.mxu0
      %v1676 = vadd.f32 0.0, %v1675
      %v1677 = vpop.f32.mrf.mxu0
      %1678 = vdwg.mxu0
      %v1679 = vadd.f32 %v1481, %v1617
      %v1680 = vadd.f32 %v1482, %v1620
      %v1681 = vadd.f32 %v1483, %v1625
      %v1682 = vadd.f32 %v1484, %v1628
      %v1683 = vadd.f32 %v1485, %v1633
      %v1684 = vadd.f32 %v1486, %v1636
      %v1685 = vadd.f32 %v1487, %v1641
      %v1686 = vadd.f32 %v1488, %v1644
      %v1687 = vadd.f32 %v1489, %v1649
      %v1688 = vadd.f32 %v1490, %v1652
      %v1689 = vadd.f32 %v1491, %v1657
      %v1690 = vadd.f32 %v1492, %v1660
      %v1691 = vadd.f32 %v1493, %v1665
      %v1692 = vadd.f32 %v1494, %v1668
      %v1693 = vadd.f32 %v1495, %v1673
      %v1694 = vadd.f32 %v1496, %v1676
      %s1695 = scalar_lea.vmem %s2, 224
      %v1696 = vld [vmem:[%s1695] sm:$0xf]
      %v1697 = vld [vmem:[%s1695 + $0x4] sm:$0xf]
      %v1698 = vld [vmem:[%s1695 + $0x8] sm:$0xf]
      %v1699 = vld [vmem:[%s1695 + $0xc] sm:$0xf]
      %v1700 = vld [vmem:[%s1695 + $0x10] sm:$0xf]
      %v1701 = vld [vmem:[%s1695 + $0x14] sm:$0xf]
      %v1702 = vld [vmem:[%s1695 + $0x18] sm:$0xf]
      %v1703 = vld [vmem:[%s1695 + $0x1c] sm:$0xf]
      %vm1704 = vsmask.f32 5376
      %v1705 = vshrl.u32 %v1319, 16
      %v1707 = vrot.slane %v1705, 2
      %v1708 = vshll.u32 %v1319, 16
      %v1710 = vrot.slane %v1708, 3
      %v1711 = vor.u32 %v1707, %v1710
      %v1712 = vshrl.u32 %v1320, 16
      %v1714 = vrot.slane %v1712, 2
      %v1715 = vshll.u32 %v1320, 16
      %v1717 = vrot.slane %v1715, 3
      %v1718 = vor.u32 %v1714, %v1717
      %v1719 = vsel %vm1704, %v1711, %v1718
      %v1720 = vshrl.u32 %v1321, 16
      %v1722 = vrot.slane %v1720, 2
      %v1723 = vshll.u32 %v1321, 16
      %v1725 = vrot.slane %v1723, 3
      %v1726 = vor.u32 %v1722, %v1725
      %v1727 = vsel %vm1704, %v1718, %v1726
      %v1728 = vshrl.u32 %v1322, 16
      %v1730 = vrot.slane %v1728, 2
      %v1731 = vshll.u32 %v1322, 16
      %v1733 = vrot.slane %v1731, 3
      %v1734 = vor.u32 %v1730, %v1733
      %v1735 = vsel %vm1704, %v1726, %v1734
      %v1736 = vshrl.u32 %v1323, 16
      %v1738 = vrot.slane %v1736, 2
      %v1739 = vshll.u32 %v1323, 16
      %v1741 = vrot.slane %v1739, 3
      %v1742 = vor.u32 %v1738, %v1741
      %v1743 = vsel %vm1704, %v1734, %v1742
      %v1744 = vshrl.u32 %v1324, 16
      %v1746 = vrot.slane %v1744, 2
      %v1747 = vshll.u32 %v1324, 16
      %v1749 = vrot.slane %v1747, 3
      %v1750 = vor.u32 %v1746, %v1749
      %v1751 = vsel %vm1704, %v1742, %v1750
      %v1752 = vshrl.u32 %v1325, 16
      %v1754 = vrot.slane %v1752, 2
      %v1755 = vshll.u32 %v1325, 16
      %v1757 = vrot.slane %v1755, 3
      %v1758 = vor.u32 %v1754, %v1757
      %v1759 = vsel %vm1704, %v1750, %v1758
      %v1760 = vshrl.u32 %v1326, 16
      %v1762 = vrot.slane %v1760, 2
      %v1763 = vshll.u32 %v1326, 16
      %v1765 = vrot.slane %v1763, 3
      %v1766 = vor.u32 %v1762, %v1765
      %v1767 = vsel %vm1704, %v1758, %v1766
      %v1769 = vshrl.u32 %v1497, 16
      %v1771 = vrot.slane %v1769, 2
      %v1772 = vshll.u32 %v1497, 16
      %v1774 = vrot.slane %v1772, 3
      %v1775 = vor.u32 %v1771, %v1774
      %v1776 = vsel %vm1704, %v1766, %v1775
      %v1785 = vunpack.c.l.b16 %v1696
      %v1786 = vunpack.c.l.b16 %v1697
      %v1787 = vunpack.c.l.b16 %v1698
      %v1788 = vunpack.c.l.b16 %v1699
      %v1789 = vunpack.c.l.b16 %v1700
      %v1790 = vunpack.c.l.b16 %v1701
      %v1791 = vunpack.c.l.b16 %v1702
      %v1792 = vunpack.c.l.b16 %v1703
      %v1793 = vpack.c.b16 %v1786, %v1785
      %v1794 = vpack.c.b16 %v1788, %v1787
      %v1795 = vpack.c.b16 %v1790, %v1789
      %v1796 = vpack.c.b16 %v1792, %v1791
      %v1802 = vsel %vm467, %v1719, 0
      %v1805 = vsel %vm467, %v1727, 0
      %v1808 = vsel %vm467, %v1735, 0
      %v1811 = vsel %vm467, %v1743, 0
      %v1814 = vsel %vm467, %v1751, 0
      %v1817 = vsel %vm467, %v1759, 0
      %v1820 = vsel %vm467, %v1767, 0
      %v1823 = vsel %vm467, %v1776, 0
      %1825 = vmatprep.subr.bf16.mxu0 0
      %1826 = vmatpush1.bf16.msra.mxu0 0
      %1827 = vmatprep.subr.bf16.mxu0 0
      %1828 = vmatpush1.bf16.msra.mxu0 0
      %1829 = vmatprep.subr.bf16.mxu0 0
      %1830 = vmatpush1.bf16.msra.mxu0 0
      %1831 = vmatprep.subr.bf16.mxu0 0
      %1832 = vmatpush1.bf16.msra.mxu0 0
      %1833 = vmatprep.subr.bf16.mxu0 0
      %1834 = vmatpush1.bf16.msra.mxu0 %v1796
      %1835 = vmatprep.subr.bf16.mxu0 0
      %1836 = vmatpush1.bf16.msra.mxu0 %v1795
      %1837 = vmatprep.subr.bf16.mxu0 0
      %1838 = vmatpush1.bf16.msra.mxu0 %v1794
      %1839 = vmatprep.subr.bf16.mxu0 0
      %1840 = vmatpush1.bf16.msra.mxu0 %v1793
      %1841 = vmatprep.subr.bf16.mxu0 0
      %1842 = vmatpush2.bf16.msra.mxu0 0
      %1843 = vmatprep.subr.bf16.mxu0 0
      %1844 = vmatpush2.bf16.msra.mxu0 0
      %1845 = vmatprep.subr.bf16.mxu0 0
      %1846 = vmatpush2.bf16.msra.mxu0 0
      %1847 = vmatprep.subr.bf16.mxu0 0
      %1848 = vmatpush2.bf16.msra.mxu0 0
      %1849 = vmatprep.subr.bf16.mxu0 0
      %1850 = vmatpush2.bf16.msra.mxu0 0
      %1851 = vmatprep.subr.bf16.mxu0 0
      %1852 = vmatpush2.bf16.msra.mxu0 0
      %1853 = vmatprep.subr.bf16.mxu0 0
      %1854 = vmatpush2.bf16.msra.mxu0 0
      %1855 = vmatprep.subr.bf16.mxu0 0
      %1856 = vmatpush2.bf16.msra.mxu0 0
      %1857 = vmatprep.mubr.bf16.mxu0 0
      %1858 = vmatmul.mubr.bf16.gmra.mxu0 %v1802
      %v1859 = vpop.f32.mrf.mxu0
      %v1860 = vadd.f32 0.0, %v1859
      %v1861 = vpop.f32.mrf.mxu0
      %v1862 = vpop.f32.mrf.mxu0
      %v1863 = vadd.f32 0.0, %v1862
      %v1864 = vpop.f32.mrf.mxu0
      %1865 = vmatprep.mubr.bf16.mxu0 0
      %1866 = vmatmul.mubr.bf16.gmra.mxu0 %v1805
      %v1867 = vpop.f32.mrf.mxu0
      %v1868 = vadd.f32 0.0, %v1867
      %v1869 = vpop.f32.mrf.mxu0
      %v1870 = vpop.f32.mrf.mxu0
      %v1871 = vadd.f32 0.0, %v1870
      %v1872 = vpop.f32.mrf.mxu0
      %1873 = vmatprep.mubr.bf16.mxu0 0
      %1874 = vmatmul.mubr.bf16.gmra.mxu0 %v1808
      %v1875 = vpop.f32.mrf.mxu0
      %v1876 = vadd.f32 0.0, %v1875
      %v1877 = vpop.f32.mrf.mxu0
      %v1878 = vpop.f32.mrf.mxu0
      %v1879 = vadd.f32 0.0, %v1878
      %v1880 = vpop.f32.mrf.mxu0
      %1881 = vmatprep.mubr.bf16.mxu0 0
      %1882 = vmatmul.mubr.bf16.gmra.mxu0 %v1811
      %v1883 = vpop.f32.mrf.mxu0
      %v1884 = vadd.f32 0.0, %v1883
      %v1885 = vpop.f32.mrf.mxu0
      %v1886 = vpop.f32.mrf.mxu0
      %v1887 = vadd.f32 0.0, %v1886
      %v1888 = vpop.f32.mrf.mxu0
      %1889 = vmatprep.mubr.bf16.mxu0 0
      %1890 = vmatmul.mubr.bf16.gmra.mxu0 %v1814
      %v1891 = vpop.f32.mrf.mxu0
      %v1892 = vadd.f32 0.0, %v1891
      %v1893 = vpop.f32.mrf.mxu0
      %v1894 = vpop.f32.mrf.mxu0
      %v1895 = vadd.f32 0.0, %v1894
      %v1896 = vpop.f32.mrf.mxu0
      %1897 = vmatprep.mubr.bf16.mxu0 0
      %1898 = vmatmul.mubr.bf16.gmra.mxu0 %v1817
      %v1899 = vpop.f32.mrf.mxu0
      %v1900 = vadd.f32 0.0, %v1899
      %v1901 = vpop.f32.mrf.mxu0
      %v1902 = vpop.f32.mrf.mxu0
      %v1903 = vadd.f32 0.0, %v1902
      %v1904 = vpop.f32.mrf.mxu0
      %1905 = vmatprep.mubr.bf16.mxu0 0
      %1906 = vmatmul.mubr.bf16.gmra.mxu0 %v1820
      %v1907 = vpop.f32.mrf.mxu0
      %v1908 = vadd.f32 0.0, %v1907
      %v1909 = vpop.f32.mrf.mxu0
      %v1910 = vpop.f32.mrf.mxu0
      %v1911 = vadd.f32 0.0, %v1910
      %v1912 = vpop.f32.mrf.mxu0
      %1913 = vmatprep.mubr.bf16.mxu0 0
      %1914 = vmatmul.mubr.bf16.gmra.mxu0 %v1823
      %v1915 = vpop.f32.mrf.mxu0
      %v1916 = vadd.f32 0.0, %v1915
      %v1917 = vpop.f32.mrf.mxu0
      %v1918 = vpop.f32.mrf.mxu0
      %v1919 = vadd.f32 0.0, %v1918
      %v1920 = vpop.f32.mrf.mxu0
      %1921 = vdwg.mxu0
      %v1922 = vadd.f32 %v1679, %v1860
      %v1923 = vadd.f32 %v1680, %v1863
      %v1924 = vadd.f32 %v1681, %v1868
      %v1925 = vadd.f32 %v1682, %v1871
      %v1926 = vadd.f32 %v1683, %v1876
      %v1927 = vadd.f32 %v1684, %v1879
      %v1928 = vadd.f32 %v1685, %v1884
      %v1929 = vadd.f32 %v1686, %v1887
      %v1930 = vadd.f32 %v1687, %v1892
      %v1931 = vadd.f32 %v1688, %v1895
      %v1932 = vadd.f32 %v1689, %v1900
      %v1933 = vadd.f32 %v1690, %v1903
      %v1934 = vadd.f32 %v1691, %v1908
      %v1935 = vadd.f32 %v1692, %v1911
      %v1936 = vadd.f32 %v1693, %v1916
      %v1937 = vadd.f32 %v1694, %v1919
      %s1938 = scalar_lea.vmem %s2, 256
      %v1939 = vld [vmem:[%s1938] sm:$0xf]
      %v1940 = vld [vmem:[%s1938 + $0x4] sm:$0xf]
      %v1941 = vld [vmem:[%s1938 + $0x8] sm:$0xf]
      %v1942 = vld [vmem:[%s1938 + $0xc] sm:$0xf]
      %v1943 = vld [vmem:[%s1938 + $0x10] sm:$0xf]
      %v1944 = vld [vmem:[%s1938 + $0x14] sm:$0xf]
      %v1945 = vld [vmem:[%s1938 + $0x18] sm:$0xf]
      %v1946 = vld [vmem:[%s1938 + $0x1c] sm:$0xf]
      %v1947 = vrot.slane %v1319, 3
      %v1948 = vrot.slane %v1320, 3
      %v1949 = vsel %vm932, %v1947, %v1948
      %v1950 = vrot.slane %v1321, 3
      %v1951 = vsel %vm932, %v1948, %v1950
      %v1952 = vrot.slane %v1322, 3
      %v1953 = vsel %vm932, %v1950, %v1952
      %v1954 = vrot.slane %v1323, 3
      %v1955 = vsel %vm932, %v1952, %v1954
      %v1956 = vrot.slane %v1324, 3
      %v1957 = vsel %vm932, %v1954, %v1956
      %v1958 = vrot.slane %v1325, 3
      %v1959 = vsel %vm932, %v1956, %v1958
      %v1960 = vrot.slane %v1326, 3
      %v1961 = vsel %vm932, %v1958, %v1960
      %v1962 = vrot.slane %v1497, 3
      %v1963 = vsel %vm932, %v1960, %v1962
      %v1972 = vunpack.c.l.b16 %v1939
      %v1973 = vunpack.c.l.b16 %v1940
      %v1974 = vunpack.c.l.b16 %v1941
      %v1975 = vunpack.c.l.b16 %v1942
      %v1976 = vunpack.c.l.b16 %v1943
      %v1977 = vunpack.c.l.b16 %v1944
      %v1978 = vunpack.c.l.b16 %v1945
      %v1979 = vunpack.c.l.b16 %v1946
      %v1980 = vpack.c.b16 %v1973, %v1972
      %v1981 = vpack.c.b16 %v1975, %v1974
      %v1982 = vpack.c.b16 %v1977, %v1976
      %v1983 = vpack.c.b16 %v1979, %v1978
      %v1989 = vsel %vm467, %v1949, 0
      %v1992 = vsel %vm467, %v1951, 0
      %v1995 = vsel %vm467, %v1953, 0
      %v1998 = vsel %vm467, %v1955, 0
      %v2001 = vsel %vm467, %v1957, 0
      %v2004 = vsel %vm467, %v1959, 0
      %v2007 = vsel %vm467, %v1961, 0
      %v2010 = vsel %vm467, %v1963, 0
      %2012 = vmatprep.subr.bf16.mxu0 0
      %2013 = vmatpush1.bf16.msra.mxu0 0
      %2014 = vmatprep.subr.bf16.mxu0 0
      %2015 = vmatpush1.bf16.msra.mxu0 0
      %2016 = vmatprep.subr.bf16.mxu0 0
      %2017 = vmatpush1.bf16.msra.mxu0 0
      %2018 = vmatprep.subr.bf16.mxu0 0
      %2019 = vmatpush1.bf16.msra.mxu0 0
      %2020 = vmatprep.subr.bf16.mxu0 0
      %2021 = vmatpush1.bf16.msra.mxu0 %v1983
      %2022 = vmatprep.subr.bf16.mxu0 0
      %2023 = vmatpush1.bf16.msra.mxu0 %v1982
      %2024 = vmatprep.subr.bf16.mxu0 0
      %2025 = vmatpush1.bf16.msra.mxu0 %v1981
      %2026 = vmatprep.subr.bf16.mxu0 0
      %2027 = vmatpush1.bf16.msra.mxu0 %v1980
      %2028 = vmatprep.subr.bf16.mxu0 0
      %2029 = vmatpush2.bf16.msra.mxu0 0
      %2030 = vmatprep.subr.bf16.mxu0 0
      %2031 = vmatpush2.bf16.msra.mxu0 0
      %2032 = vmatprep.subr.bf16.mxu0 0
      %2033 = vmatpush2.bf16.msra.mxu0 0
      %2034 = vmatprep.subr.bf16.mxu0 0
      %2035 = vmatpush2.bf16.msra.mxu0 0
      %2036 = vmatprep.subr.bf16.mxu0 0
      %2037 = vmatpush2.bf16.msra.mxu0 0
      %2038 = vmatprep.subr.bf16.mxu0 0
      %2039 = vmatpush2.bf16.msra.mxu0 0
      %2040 = vmatprep.subr.bf16.mxu0 0
      %2041 = vmatpush2.bf16.msra.mxu0 0
      %2042 = vmatprep.subr.bf16.mxu0 0
      %2043 = vmatpush2.bf16.msra.mxu0 0
      %2044 = vmatprep.mubr.bf16.mxu0 0
      %2045 = vmatmul.mubr.bf16.gmra.mxu0 %v1989
      %v2046 = vpop.f32.mrf.mxu0
      %v2047 = vadd.f32 0.0, %v2046
      %v2048 = vpop.f32.mrf.mxu0
      %v2049 = vpop.f32.mrf.mxu0
      %v2050 = vadd.f32 0.0, %v2049
      %v2051 = vpop.f32.mrf.mxu0
      %2052 = vmatprep.mubr.bf16.mxu0 0
      %2053 = vmatmul.mubr.bf16.gmra.mxu0 %v1992
      %v2054 = vpop.f32.mrf.mxu0
      %v2055 = vadd.f32 0.0, %v2054
      %v2056 = vpop.f32.mrf.mxu0
      %v2057 = vpop.f32.mrf.mxu0
      %v2058 = vadd.f32 0.0, %v2057
      %v2059 = vpop.f32.mrf.mxu0
      %2060 = vmatprep.mubr.bf16.mxu0 0
      %2061 = vmatmul.mubr.bf16.gmra.mxu0 %v1995
      %v2062 = vpop.f32.mrf.mxu0
      %v2063 = vadd.f32 0.0, %v2062
      %v2064 = vpop.f32.mrf.mxu0
      %v2065 = vpop.f32.mrf.mxu0
      %v2066 = vadd.f32 0.0, %v2065
      %v2067 = vpop.f32.mrf.mxu0
      %2068 = vmatprep.mubr.bf16.mxu0 0
      %2069 = vmatmul.mubr.bf16.gmra.mxu0 %v1998
      %v2070 = vpop.f32.mrf.mxu0
      %v2071 = vadd.f32 0.0, %v2070
      %v2072 = vpop.f32.mrf.mxu0
      %v2073 = vpop.f32.mrf.mxu0
      %v2074 = vadd.f32 0.0, %v2073
      %v2075 = vpop.f32.mrf.mxu0
      %2076 = vmatprep.mubr.bf16.mxu0 0
      %2077 = vmatmul.mubr.bf16.gmra.mxu0 %v2001
      %v2078 = vpop.f32.mrf.mxu0
      %v2079 = vadd.f32 0.0, %v2078
      %v2080 = vpop.f32.mrf.mxu0
      %v2081 = vpop.f32.mrf.mxu0
      %v2082 = vadd.f32 0.0, %v2081
      %v2083 = vpop.f32.mrf.mxu0
      %2084 = vmatprep.mubr.bf16.mxu0 0
      %2085 = vmatmul.mubr.bf16.gmra.mxu0 %v2004
      %v2086 = vpop.f32.mrf.mxu0
      %v2087 = vadd.f32 0.0, %v2086
      %v2088 = vpop.f32.mrf.mxu0
      %v2089 = vpop.f32.mrf.mxu0
      %v2090 = vadd.f32 0.0, %v2089
      %v2091 = vpop.f32.mrf.mxu0
      %2092 = vmatprep.mubr.bf16.mxu0 0
      %2093 = vmatmul.mubr.bf16.gmra.mxu0 %v2007
      %v2094 = vpop.f32.mrf.mxu0
      %v2095 = vadd.f32 0.0, %v2094
      %v2096 = vpop.f32.mrf.mxu0
      %v2097 = vpop.f32.mrf.mxu0
      %v2098 = vadd.f32 0.0, %v2097
      %v2099 = vpop.f32.mrf.mxu0
      %2100 = vmatprep.mubr.bf16.mxu0 0
      %2101 = vmatmul.mubr.bf16.gmra.mxu0 %v2010
      %v2102 = vpop.f32.mrf.mxu0
      %v2103 = vadd.f32 0.0, %v2102
      %v2104 = vpop.f32.mrf.mxu0
      %v2105 = vpop.f32.mrf.mxu0
      %v2106 = vadd.f32 0.0, %v2105
      %v2107 = vpop.f32.mrf.mxu0
      %2108 = vdwg.mxu0
      %v2109 = vadd.f32 %v1922, %v2047
      %v2110 = vadd.f32 %v1923, %v2050
      %v2111 = vadd.f32 %v1924, %v2055
      %v2112 = vadd.f32 %v1925, %v2058
      %v2113 = vadd.f32 %v1926, %v2063
      %v2114 = vadd.f32 %v1927, %v2066
      %v2115 = vadd.f32 %v1928, %v2071
      %v2116 = vadd.f32 %v1929, %v2074
      %v2117 = vadd.f32 %v1930, %v2079
      %v2118 = vadd.f32 %v1931, %v2082
      %v2119 = vadd.f32 %v1932, %v2087
      %v2120 = vadd.f32 %v1933, %v2090
      %v2121 = vadd.f32 %v1934, %v2095
      %v2122 = vadd.f32 %v1935, %v2098
      %v2123 = vadd.f32 %v1936, %v2103
      %v2124 = vadd.f32 %v1937, %v2106
      %v2125 = vld [vmem:[%s3] sm:$0x1]
      %v2127 = vlaneseq
      %v2128 = vshrl.u32 %v2127, 7
      %v2129 = vsub.s32 0, %v2128
      %v2130 = vrot.slane %v2125, %v2129
      %v2132 = vmul.f32 %v2109, %v2130
      %v2133 = vmul.f32 %v2110, %v2130
      %v2134 = vmul.f32 %v2111, %v2130
      %v2135 = vmul.f32 %v2112, %v2130
      %v2136 = vmul.f32 %v2113, %v2130
      %v2137 = vmul.f32 %v2114, %v2130
      %v2138 = vmul.f32 %v2115, %v2130
      %v2139 = vmul.f32 %v2116, %v2130
      %v2140 = vmul.f32 %v2117, %v2130
      %v2141 = vmul.f32 %v2118, %v2130
      %v2142 = vmul.f32 %v2119, %v2130
      %v2143 = vmul.f32 %v2120, %v2130
      %v2144 = vmul.f32 %v2121, %v2130
      %v2145 = vmul.f32 %v2122, %v2130
      %v2146 = vmul.f32 %v2123, %v2130
      %v2147 = vmul.f32 %v2124, %v2130
      %v2148 = vld [vmem:[%s4] sm:$0x1]
      %v2150 = vlaneseq
      %v2151 = vshrl.u32 %v2150, 7
      %v2152 = vsub.s32 0, %v2151
      %v2153 = vrot.slane %v2148, %v2152
      %v2155 = vadd.f32 %v2132, %v2153
      %v2156 = vadd.f32 %v2133, %v2153
      %v2157 = vadd.f32 %v2134, %v2153
      %v2158 = vadd.f32 %v2135, %v2153
      %v2159 = vadd.f32 %v2136, %v2153
      %v2160 = vadd.f32 %v2137, %v2153
      %v2161 = vadd.f32 %v2138, %v2153
      %v2162 = vadd.f32 %v2139, %v2153
      %v2163 = vadd.f32 %v2140, %v2153
      %v2164 = vadd.f32 %v2141, %v2153
      %v2165 = vadd.f32 %v2142, %v2153
      %v2166 = vadd.f32 %v2143, %v2153
      %v2167 = vadd.f32 %v2144, %v2153
      %v2168 = vadd.f32 %v2145, %v2153
      %v2169 = vadd.f32 %v2146, %v2153
      %v2170 = vadd.f32 %v2147, %v2153
      %v2171 = vmax.f32 %v2155, 0.0
      %v2172 = vmax.f32 %v2156, 0.0
      %v2173 = vmax.f32 %v2157, 0.0
      %v2174 = vmax.f32 %v2158, 0.0
      %v2175 = vmax.f32 %v2159, 0.0
      %v2176 = vmax.f32 %v2160, 0.0
      %v2177 = vmax.f32 %v2161, 0.0
      %v2178 = vmax.f32 %v2162, 0.0
      %v2179 = vmax.f32 %v2163, 0.0
      %v2180 = vmax.f32 %v2164, 0.0
      %v2181 = vmax.f32 %v2165, 0.0
      %v2182 = vmax.f32 %v2166, 0.0
      %v2183 = vmax.f32 %v2167, 0.0
      %v2184 = vmax.f32 %v2168, 0.0
      %v2185 = vmax.f32 %v2169, 0.0
      %v2186 = vmax.f32 %v2170, 0.0
      %v2187 = vpack.c.bf16 %v2172, %v2171
      %v2188 = vpack.c.bf16 %v2174, %v2173
      %v2189 = vpack.c.bf16 %v2176, %v2175
      %v2190 = vpack.c.bf16 %v2178, %v2177
      %v2191 = vpack.c.bf16 %v2180, %v2179
      %v2192 = vpack.c.bf16 %v2182, %v2181
      %v2193 = vpack.c.bf16 %v2184, %v2183
      %v2194 = vpack.c.bf16 %v2186, %v2185
      %v2203 = vunpack.c.l.b16 %v2187
      %v2204 = vunpack.c.h.b16 %v2187
      %v2205 = vunpack.c.l.b16 %v2188
      %v2206 = vunpack.c.h.b16 %v2188
      %v2207 = vunpack.c.l.b16 %v2189
      %v2208 = vunpack.c.h.b16 %v2189
      %v2209 = vunpack.c.l.b16 %v2190
      %v2210 = vunpack.c.h.b16 %v2190
      %v2211 = vunpack.c.l.b16 %v2191
      %v2212 = vunpack.c.h.b16 %v2191
      %v2213 = vunpack.c.l.b16 %v2192
      %v2214 = vunpack.c.h.b16 %v2192
      %v2215 = vunpack.c.l.b16 %v2193
      %v2216 = vunpack.c.h.b16 %v2193
      %v2217 = vunpack.c.l.b16 %v2194
      %v2218 = vunpack.c.h.b16 %v2194
      %v2219 = vpack.c.b16 %v2203, %v2203
      %v2220 = vpack.c.b16 %v2204, %v2204
      %v2221 = vpack.c.b16 %v2205, %v2205
      %v2222 = vpack.c.b16 %v2206, %v2206
      %v2223 = vpack.c.b16 %v2207, %v2207
      %v2224 = vpack.c.b16 %v2208, %v2208
      %v2225 = vpack.c.b16 %v2209, %v2209
      %v2226 = vpack.c.b16 %v2210, %v2210
      %v2227 = vpack.c.b16 %v2211, %v2211
      %v2228 = vpack.c.b16 %v2212, %v2212
      %v2229 = vpack.c.b16 %v2213, %v2213
      %v2230 = vpack.c.b16 %v2214, %v2214
      %v2231 = vpack.c.b16 %v2215, %v2215
      %v2232 = vpack.c.b16 %v2216, %v2216
      %v2233 = vpack.c.b16 %v2217, %v2217
      %v2234 = vpack.c.b16 %v2218, %v2218
      %vm2251 = vcmask 519168
      %2252 = vst.msk [vmem:[%s255] sm:$0xf] %vm2251, %v2219
      %2253 = vst.msk [vmem:[%s255 + $0x4] sm:$0xf] %vm2251, %v2220
      %2254 = vst.msk [vmem:[%s255 + $0x8] sm:$0xf] %vm2251, %v2221
      %2255 = vst.msk [vmem:[%s255 + $0xc] sm:$0xf] %vm2251, %v2222
      %2256 = vst.msk [vmem:[%s255 + $0x10] sm:$0xf] %vm2251, %v2223
      %2257 = vst.msk [vmem:[%s255 + $0x14] sm:$0xf] %vm2251, %v2224
      %2258 = vst.msk [vmem:[%s255 + $0x18] sm:$0xf] %vm2251, %v2225
      %2259 = vst.msk [vmem:[%s255 + $0x1c] sm:$0xf] %vm2251, %v2226
      %2260 = vst.msk [vmem:[%s255 + $0x20] sm:$0xf] %vm2251, %v2227
      %2261 = vst.msk [vmem:[%s255 + $0x24] sm:$0xf] %vm2251, %v2228
      %2262 = vst.msk [vmem:[%s255 + $0x28] sm:$0xf] %vm2251, %v2229
      %2263 = vst.msk [vmem:[%s255 + $0x2c] sm:$0xf] %vm2251, %v2230
      %2264 = vst.msk [vmem:[%s255 + $0x30] sm:$0xf] %vm2251, %v2231
      %2265 = vst.msk [vmem:[%s255 + $0x34] sm:$0xf] %vm2251, %v2232
      %2266 = vst.msk [vmem:[%s255 + $0x38] sm:$0xf] %vm2251, %v2233
      %2267 = vst.msk [vmem:[%s255 + $0x3c] sm:$0xf] %vm2251, %v2234
      %s2268 = smul.u32 16, %s16
      %p2269 = scmp.lt.s32.totalorder %s2268, 31
      %s2270 = scalar_select %p2269, %s2268, 31
      %s2271 = smul.addr %s2270, 4
      %s2272 = scalar_lea.vmem %s5, %s2271
      // Predicated region
      $region41: #{resnet_forward.14} parent=39 // pred_check
        %p2273 = pneg %p151
      $region42: #{resnet_forward.14} parent=39 // pred_check_branch
        %2275 = sbr.rel (%p2273) target = $region44
      $region43: #{resnet_forward.14} parent=39 // pred_region
        %s2276 = smul.u32 16, %s16
      $region44: #{resnet_forward.14} parent=39 // pred_fallthru
        _
    $region40: #{resnet_forward.14} parent=5 // pred_fallthru
      _
    %p2277 = scmp.le.s32.totalorder 2, %s11
    // Predicated region
    $region45: #{resnet_forward.14} parent=5 // pred_check
      %p2278 = pneg %p2277
    $region46: #{resnet_forward.14} parent=5 // pred_check_branch
      %2280 = sbr.rel (%p2278) target = $region48
    $region47: #{resnet_forward.14} parent=5 // pred_region
      %s2281 = ssub.s32 %s11, 2
      // Predicated region
      $region49: #{resnet_forward.14} parent=47 // pred_check
        %p2282 = pneg %p157
      $region50: #{resnet_forward.14} parent=47 // pred_check_branch
        %2284 = sbr.rel (%p2282) target = $region52
      $region51: #{resnet_forward.14} parent=47 // pred_region
        %s2285 = smul.u32 16, %s17
        %p2286 = scmp.lt.s32.totalorder %s2285, 31
        %s2287 = scalar_select %p2286, %s2285, 31
        %s2288 = smul.addr %s2287, 4
        %s2289 = scalar_lea.vmem %s5, %s2288
      $region52: #{resnet_forward.14} parent=47 // pred_fallthru
        _
    $region48: #{resnet_forward.14} parent=5 // pred_fallthru
      _
  $region6: #{resnet_forward.14} parent=0 // loop_footer
    %s15 = sadd.s32 1, %s11
  $region7: #{resnet_forward.14} parent=0 // loop_footer_branch
    %10 = sbr.rel target = $region3
  $region8: #{resnet_forward.14} parent=0 // loop_exit
    _

// kernel: resnet_forward.15
$region0: #{resnet_forward.15}
  #allocation0 [shape = 'u32[]', space=smem, size = 0x4, offset = 0x4, fixed_abs, tag = 'smem constant byte address 0x4 - core index']
  #allocation1 [shape = 'u32[144,128]{1,0:T(1,128)}', space=vmem, size = 0x12000, scoped, tag = 'internal scratch']
  %s0 = inlined_call_operand.vmem [shape: bf16[384,64], index: 0, kind: input, shape index: {}, may-alias: {0,1}]
  %s1 = inlined_call_operand.vmem [shape: bf16[384,64], index: 1, kind: input, shape index: {}, may-alias: {0,1}]
  %s2 = inlined_call_operand.vmem [shape: bf16[9,64,64], index: 2, kind: input, shape index: {}]
  %s3 = inlined_call_operand.vmem [shape: f32[1,64], index: 3, kind: input, shape index: {}]
  %s4 = inlined_call_operand.vmem [shape: f32[1,64], index: 4, kind: input, shape index: {}]
  %s5 = inlined_call_operand.vmem [shape: bf16[256,64], index: 5, kind: input, shape index: {}]
  %s6 = inlined_call_operand.vmem [shape: bf16[256,64], index: 6, kind: output, shape index: {}]
  %s7 = sld [smem:[#allocation0]]
  $region57: #{resnet_forward.15} parent=0
    _
  %s9 = ssub.s32 1, %s7
  %s10 = scalar_select 0, %s9, %s7
  loop: start=0, step=1, limit=4
  $region2: #{resnet_forward.15} parent=0 // loop_pre_header
    _
  $region3: #{resnet_forward.15} parent=0 // loop_header
    %s12 = sphi 0, %s16
    %p13 = scmp.ge.s32.totalorder %s12, 4
    %s22 = sphi 0, %s24
    %s25 = sphi 0, %s22
    %s26 = sphi 0, %s25
    %s42 = sphi 0, %s26
    %s50 = sphi 0, %s52
    %s53 = sphi 0, %s50
    %s54 = sphi 0, %s53
    %s70 = sphi 0, %s54
    %s74 = sphi 0, %s74
    %s76 = sphi 0, %s74
    %s77 = sphi 0, %s76
    %s91 = sphi 0, %s77
    %s95 = sphi 0, %s95
    %s97 = sphi 0, %s95
    %s98 = sphi 0, %s97
    %s112 = sphi 0, %s98
    %s116 = sphi 0, %s116
    %s118 = sphi 0, %s116
    %s119 = sphi 0, %s118
    %s133 = sphi 0, %s119
    %s139 = sphi 0, %s141
    %s142 = sphi 0, %s139
    %s143 = sphi 0, %s142
    %s159 = sphi 0, %s143
    %s165 = sphi 0, %s167
    %s168 = sphi 0, %s165
    %s169 = sphi 0, %s168
    %s185 = sphi 0, %s169
  $region4: #{resnet_forward.15} parent=0 // loop_header_branch
    %15 = sbr.rel (%p13) target = $region8
  $region5: #{resnet_forward.15} parent=0 // loop_body
    %s17 = ssub.s32 %s12, 1
    %s18 = ssub.s32 %s12, 2
    %s19 = sadd.s32 %s12, 1
    %s20 = ssub.s32 %s12, %s19
    %p21 = scmp.eq.s32.totalorder %s20, 0
    %s23 = sadd.s32 %s22, 1
    %s24 = scalar_select %p21, %s22, %s23
    %p27 = pneg %p21
    %p28 = scmp.eq.s32.totalorder %s12, 1
    %p29 = por %p27, %p28
    %p30 = scmp.ne.s32.totalorder %s22, %s25
    %p31 = scmp.eq.s32.totalorder %s12, 0
    %p32 = por %p30, %p31
    %p33 = scmp.ne.s32.totalorder %s22, %s25
    %p34 = scmp.eq.s32.totalorder %s17, 1
    %p35 = por %p33, %p34
    %p36 = scmp.ne.s32.totalorder %s25, %s26
    %p37 = scmp.eq.s32.totalorder %s17, 0
    %p38 = por %p36, %p37
    %p39 = scmp.ne.s32.totalorder %s25, %s26
    %p40 = scmp.eq.s32.totalorder %s18, 1
    %p41 = por %p39, %p40
    %p43 = scmp.ne.s32.totalorder %s26, %s42
    %p44 = scmp.eq.s32.totalorder %s18, 0
    %p45 = por %p43, %p44
    %s46 = sadd.s32 %s12, 1
    %s47 = sadd.s32 %s19, 1
    %s48 = ssub.s32 %s46, %s47
    %p49 = scmp.eq.s32.totalorder %s48, 0
    %s51 = sadd.s32 %s50, 1
    %s52 = scalar_select %p49, %s50, %s51
    %p55 = pneg %p49
    %p56 = scmp.eq.s32.totalorder %s12, 1
    %p57 = por %p55, %p56
    %p58 = scmp.ne.s32.totalorder %s50, %s53
    %p59 = scmp.eq.s32.totalorder %s12, 0
    %p60 = por %p58, %p59
    %p61 = scmp.ne.s32.totalorder %s50, %s53
    %p62 = scmp.eq.s32.totalorder %s17, 1
    %p63 = por %p61, %p62
    %p64 = scmp.ne.s32.totalorder %s53, %s54
    %p65 = scmp.eq.s32.totalorder %s17, 0
    %p66 = por %p64, %p65
    %p67 = scmp.ne.s32.totalorder %s53, %s54
    %p68 = scmp.eq.s32.totalorder %s18, 1
    %p69 = por %p67, %p68
    %p71 = scmp.ne.s32.totalorder %s54, %s70
    %p72 = scmp.eq.s32.totalorder %s18, 0
    %p73 = por %p71, %p72
    %s75 = sadd.s32 %s74, 1
    %p78 = scmp.eq.s32.totalorder %s12, 1
    %p79 = scmp.ne.s32.totalorder %s74, %s76
    %p80 = scmp.eq.s32.totalorder %s12, 0
    %p81 = por %p79, %p80
    %p82 = scmp.ne.s32.totalorder %s74, %s76
    %p83 = scmp.eq.s32.totalorder %s17, 1
    %p84 = por %p82, %p83
    %p85 = scmp.ne.s32.totalorder %s76, %s77
    %p86 = scmp.eq.s32.totalorder %s17, 0
    %p87 = por %p85, %p86
    %p88 = scmp.ne.s32.totalorder %s76, %s77
    %p89 = scmp.eq.s32.totalorder %s18, 1
    %p90 = por %p88, %p89
    %p92 = scmp.ne.s32.totalorder %s77, %s91
    %p93 = scmp.eq.s32.totalorder %s18, 0
    %p94 = por %p92, %p93
    %s96 = sadd.s32 %s95, 1
    %p99 = scmp.eq.s32.totalorder %s12, 1
    %p100 = scmp.ne.s32.totalorder %s95, %s97
    %p101 = scmp.eq.s32.totalorder %s12, 0
    %p102 = por %p100, %p101
    %p103 = scmp.ne.s32.totalorder %s95, %s97
    %p104 = scmp.eq.s32.totalorder %s17, 1
    %p105 = por %p103, %p104
    %p106 = scmp.ne.s32.totalorder %s97, %s98
    %p107 = scmp.eq.s32.totalorder %s17, 0
    %p108 = por %p106, %p107
    %p109 = scmp.ne.s32.totalorder %s97, %s98
    %p110 = scmp.eq.s32.totalorder %s18, 1
    %p111 = por %p109, %p110
    %p113 = scmp.ne.s32.totalorder %s98, %s112
    %p114 = scmp.eq.s32.totalorder %s18, 0
    %p115 = por %p113, %p114
    %s117 = sadd.s32 %s116, 1
    %p120 = scmp.eq.s32.totalorder %s12, 1
    %p121 = scmp.ne.s32.totalorder %s116, %s118
    %p122 = scmp.eq.s32.totalorder %s12, 0
    %p123 = por %p121, %p122
    %p124 = scmp.ne.s32.totalorder %s116, %s118
    %p125 = scmp.eq.s32.totalorder %s17, 1
    %p126 = por %p124, %p125
    %p127 = scmp.ne.s32.totalorder %s118, %s119
    %p128 = scmp.eq.s32.totalorder %s17, 0
    %p129 = por %p127, %p128
    %p130 = scmp.ne.s32.totalorder %s118, %s119
    %p131 = scmp.eq.s32.totalorder %s18, 1
    %p132 = por %p130, %p131
    %p134 = scmp.ne.s32.totalorder %s119, %s133
    %p135 = scmp.eq.s32.totalorder %s18, 0
    %p136 = por %p134, %p135
    %s137 = ssub.s32 %s12, %s19
    %p138 = scmp.eq.s32.totalorder %s137, 0
    %s140 = sadd.s32 %s139, 1
    %s141 = scalar_select %p138, %s139, %s140
    %p144 = pneg %p138
    %p145 = scmp.eq.s32.totalorder %s12, 1
    %p146 = por %p144, %p145
    %p147 = scmp.ne.s32.totalorder %s139, %s142
    %p148 = scmp.eq.s32.totalorder %s12, 0
    %p149 = por %p147, %p148
    %p150 = scmp.ne.s32.totalorder %s139, %s142
    %p151 = scmp.eq.s32.totalorder %s17, 1
    %p152 = por %p150, %p151
    %p153 = scmp.ne.s32.totalorder %s142, %s143
    %p154 = scmp.eq.s32.totalorder %s17, 0
    %p155 = por %p153, %p154
    %p156 = scmp.ne.s32.totalorder %s142, %s143
    %p157 = scmp.eq.s32.totalorder %s18, 1
    %p158 = por %p156, %p157
    %p160 = scmp.ne.s32.totalorder %s143, %s159
    %p161 = scmp.eq.s32.totalorder %s18, 0
    %p162 = por %p160, %p161
    %s163 = ssub.s32 %s12, %s19
    %p164 = scmp.eq.s32.totalorder %s163, 0
    %s166 = sadd.s32 %s165, 1
    %s167 = scalar_select %p164, %s165, %s166
    %p170 = pneg %p164
    %p171 = scmp.eq.s32.totalorder %s12, 1
    %p172 = por %p170, %p171
    %p173 = scmp.ne.s32.totalorder %s165, %s168
    %p174 = scmp.eq.s32.totalorder %s12, 0
    %p175 = por %p173, %p174
    %p176 = scmp.ne.s32.totalorder %s165, %s168
    %p177 = scmp.eq.s32.totalorder %s17, 1
    %p178 = por %p176, %p177
    %p179 = scmp.ne.s32.totalorder %s168, %s169
    %p180 = scmp.eq.s32.totalorder %s17, 0
    %p181 = por %p179, %p180
    %p182 = scmp.ne.s32.totalorder %s168, %s169
    %p183 = scmp.eq.s32.totalorder %s18, 1
    %p184 = por %p182, %p183
    %p186 = scmp.ne.s32.totalorder %s169, %s185
    %p187 = scmp.eq.s32.totalorder %s18, 0
    %p188 = por %p186, %p187
    %p189 = scmp.le.s32.totalorder 1, %s12
    %p190 = scmp.lt.s32.totalorder %s12, 3
    %p191 = pnand %p189, %p190
    %p192 = pneg %p191
    // Predicated region
    $region9: #{resnet_forward.15} parent=5 // pred_check
      _
    $region10: #{resnet_forward.15} parent=5 // pred_check_branch
      %194 = sbr.rel (%p191) target = $region12
    $region11: #{resnet_forward.15} parent=5 // pred_region
      %s195 = ssub.s32 %s12, 1
      // Predicated region
      $region13: #{resnet_forward.15} parent=11 // pred_check
        %p196 = pneg %p87
      $region14: #{resnet_forward.15} parent=11 // pred_check_branch
        %198 = sbr.rel (%p196) target = $region16
      $region15: #{resnet_forward.15} parent=11 // pred_region
        _
      $region16: #{resnet_forward.15} parent=11 // pred_fallthru
        _
      // Predicated region
      $region17: #{resnet_forward.15} parent=11 // pred_check
        %p199 = pneg %p108
      $region18: #{resnet_forward.15} parent=11 // pred_check_branch
        %201 = sbr.rel (%p199) target = $region20
      $region19: #{resnet_forward.15} parent=11 // pred_region
        _
      $region20: #{resnet_forward.15} parent=11 // pred_fallthru
        _
      // Predicated region
      $region21: #{resnet_forward.15} parent=11 // pred_check
        %p202 = pneg %p129
      $region22: #{resnet_forward.15} parent=11 // pred_check_branch
        %204 = sbr.rel (%p202) target = $region24
      $region23: #{resnet_forward.15} parent=11 // pred_region
        _
      $region24: #{resnet_forward.15} parent=11 // pred_fallthru
        _
    $region12: #{resnet_forward.15} parent=5 // pred_fallthru
      _
    %p205 = scmp.lt.s32.totalorder %s12, 2
    // Predicated region
    $region25: #{resnet_forward.15} parent=5 // pred_check
      %p206 = pneg %p205
    $region26: #{resnet_forward.15} parent=5 // pred_check_branch
      %208 = sbr.rel (%p206) target = $region28
    $region27: #{resnet_forward.15} parent=5 // pred_region
      // Predicated region
      $region29: #{resnet_forward.15} parent=27 // pred_check
        %p209 = pneg %p32
      $region30: #{resnet_forward.15} parent=27 // pred_check_branch
        %211 = sbr.rel (%p209) target = $region32
      $region31: #{resnet_forward.15} parent=27 // pred_region
        %s212 = smul.u32 16, %s12
        %p213 = scmp.lt.s32.totalorder %s212, 47
        %s214 = scalar_select %p213, %s212, 47
        %s215 = smul.addr %s214, 4
        %s216 = scalar_lea.vmem %s0, %s215
        %s217 = smul.u32 16, %s12
      $region32: #{resnet_forward.15} parent=27 // pred_fallthru
        _
      // Predicated region
      $region33: #{resnet_forward.15} parent=27 // pred_check
        %p218 = pneg %p60
      $region34: #{resnet_forward.15} parent=27 // pred_check_branch
        %220 = sbr.rel (%p218) target = $region36
      $region35: #{resnet_forward.15} parent=27 // pred_region
        %s221 = sadd.s32 %s12, 1
        %s222 = smul.u32 16, %s221
        %p223 = scmp.lt.s32.totalorder %s222, 47
        %s224 = scalar_select %p223, %s222, 47
        %s225 = smul.addr %s224, 4
        %s226 = scalar_lea.vmem %s1, %s225
        %s227 = sadd.s32 %s12, 1
        %s228 = smul.u32 16, %s227
      $region36: #{resnet_forward.15} parent=27 // pred_fallthru
        _
      // Predicated region
      $region37: #{resnet_forward.15} parent=27 // pred_check
        %p229 = pneg %p149
      $region38: #{resnet_forward.15} parent=27 // pred_check_branch
        %231 = sbr.rel (%p229) target = $region40
      $region39: #{resnet_forward.15} parent=27 // pred_region
        %s232 = smul.u32 16, %s12
        %p233 = scmp.lt.s32.totalorder %s232, 31
        %s234 = scalar_select %p233, %s232, 31
        %s235 = smul.addr %s234, 4
        %s236 = scalar_lea.vmem %s5, %s235
        %s237 = smul.u32 16, %s12
      $region40: #{resnet_forward.15} parent=27 // pred_fallthru
        _
    $region28: #{resnet_forward.15} parent=5 // pred_fallthru
      _
    %p238 = scmp.le.s32.totalorder 1, %s12
    %p239 = scmp.lt.s32.totalorder %s12, 3
    %p240 = pnand %p238, %p239
    %p241 = pneg %p240
    // Predicated region
    $region41: #{resnet_forward.15} parent=5 // pred_check
      _
    $region42: #{resnet_forward.15} parent=5 // pred_check_branch
      %243 = sbr.rel (%p240) target = $region44
    $region43: #{resnet_forward.15} parent=5 // pred_region
      %s244 = ssub.s32 %s12, 1
      %s245 = smul.u32 16, %s17
      %p246 = scmp.lt.s32.totalorder %s245, 47
      %s247 = scalar_select %p246, %s245, 47
      %s248 = smul.addr %s247, 4
      %s249 = scalar_lea.vmem %s0, %s248
      %p250 = pneg %p38
      %p251 = pneg %p35
      %s252 = sadd.s32 %s17, 1
      %s253 = smul.u32 16, %s252
      %p254 = scmp.lt.s32.totalorder %s253, 47
      %s255 = scalar_select %p254, %s253, 47
      %s256 = smul.addr %s255, 4
      %s257 = scalar_lea.vmem %s1, %s256
      %p258 = pneg %p66
      %p259 = pneg %p63
      %p260 = pneg %p87
      %p261 = pneg %p84
      %p262 = pneg %p108
      %p263 = pneg %p105
      %p264 = pneg %p129
      %p265 = pneg %p126
      %s266 = smul.u32 16, %s17
      %p267 = scmp.lt.s32.totalorder %s266, 31
      %s268 = scalar_select %p267, %s266, 31
      %s269 = smul.addr %s268, 4
      %s270 = scalar_lea.vmem %s5, %s269
      %p271 = pneg %p155
      %p272 = pneg %p152
      %p273 = pneg %p181
      %p274 = pneg %p178
      %s275 = smul.u32 16, %s17
      %p276 = scmp.lt.s32.totalorder %s275, 31
      %s277 = scalar_select %p276, %s275, 31
      %s278 = smul.addr %s277, 4
      %s279 = scalar_lea.vmem %s6, %s278
      %s280 = smul.u32 16, %s17
      %p281 = scmp.lt.s32.totalorder %s280, 47
      %s282 = scalar_select %p281, %s280, 47
      %s283 = smul.addr %s282, 4
      %s284 = scalar_lea.vmem %s0, %s283
      %s285 = smul.u32 16, %s17
      %s286 = sadd.s32 %s17, 1
      %s287 = smul.u32 16, %s286
      %p288 = scmp.lt.s32.totalorder %s287, 47
      %s289 = scalar_select %p288, %s287, 47
      %s290 = smul.addr %s289, 4
      %s291 = scalar_lea.vmem %s1, %s290
      %s292 = sadd.s32 %s17, 1
      %s293 = smul.u32 16, %s292
      %s294 = smul.u32 16, %s17
      %p295 = scmp.lt.s32.totalorder %s294, 31
      %s296 = scalar_select %p295, %s294, 31
      %s297 = smul.addr %s296, 4
      %s298 = scalar_lea.vmem %s5, %s297
      %s299 = smul.u32 16, %s17
      %s300 = smul.u32 16, %s17
      %p301 = scmp.lt.s32.totalorder %s300, 31
      %s302 = scalar_select %p301, %s300, 31
      %s303 = smul.addr %s302, 4
      %s304 = scalar_lea.vmem %s6, %s303
      %s305 = smul.u32 16, %s17
      %v307 = vld [vmem:[%s284] sm:$0xf]
      %v308 = vld [vmem:[%s284 + $0x4] sm:$0xf]
      %v309 = vld [vmem:[%s284 + $0x8] sm:$0xf]
      %v310 = vld [vmem:[%s284 + $0xc] sm:$0xf]
      %v311 = vld [vmem:[%s284 + $0x10] sm:$0xf]
      %v312 = vld [vmem:[%s284 + $0x14] sm:$0xf]
      %v313 = vld [vmem:[%s284 + $0x18] sm:$0xf]
      %v314 = vld [vmem:[%s284 + $0x1c] sm:$0xf]
      %v315 = vld [vmem:[%s284 + $0x20] sm:$0xf]
      %v316 = vld [vmem:[%s284 + $0x24] sm:$0xf]
      %v317 = vld [vmem:[%s284 + $0x28] sm:$0xf]
      %v318 = vld [vmem:[%s284 + $0x2c] sm:$0xf]
      %v319 = vld [vmem:[%s284 + $0x30] sm:$0xf]
      %v320 = vld [vmem:[%s284 + $0x34] sm:$0xf]
      %v321 = vld [vmem:[%s284 + $0x38] sm:$0xf]
      %v322 = vld [vmem:[%s284 + $0x3c] sm:$0xf]
      %v323 = vld [vmem:[%s291] sm:$0xf]
      %v324 = vld [vmem:[%s291 + $0x4] sm:$0xf]
      %v341 = vunpack.c.l.b16 %v307
      %v342 = vunpack.c.l.b16 %v308
      %v343 = vunpack.c.l.b16 %v309
      %v344 = vunpack.c.l.b16 %v310
      %v345 = vunpack.c.l.b16 %v311
      %v346 = vunpack.c.l.b16 %v312
      %v347 = vunpack.c.l.b16 %v313
      %v348 = vunpack.c.l.b16 %v314
      %v349 = vunpack.c.l.b16 %v315
      %v350 = vunpack.c.l.b16 %v316
      %v351 = vunpack.c.l.b16 %v317
      %v352 = vunpack.c.l.b16 %v318
      %v353 = vunpack.c.l.b16 %v319
      %v354 = vunpack.c.l.b16 %v320
      %v355 = vunpack.c.l.b16 %v321
      %v356 = vunpack.c.l.b16 %v322
      %v357 = vpack.c.b16 %v342, %v341
      %v358 = vpack.c.b16 %v344, %v343
      %v359 = vpack.c.b16 %v346, %v345
      %v360 = vpack.c.b16 %v348, %v347
      %v361 = vpack.c.b16 %v350, %v349
      %v362 = vpack.c.b16 %v352, %v351
      %v363 = vpack.c.b16 %v354, %v353
      %v364 = vpack.c.b16 %v356, %v355
      %v375 = vunpack.c.l.b16 %v323
      %v376 = vunpack.c.l.b16 %v324
      %v377 = vpack.c.b16 %v376, %v375
      %v379 = vunpack.c.l.bf16 %v357
      %v380 = vunpack.c.h.bf16 %v357
      %v381 = vunpack.c.l.bf16 %v358
      %v382 = vunpack.c.h.bf16 %v358
      %v383 = vunpack.c.l.bf16 %v359
      %v384 = vunpack.c.h.bf16 %v359
      %v385 = vunpack.c.l.bf16 %v360
      %v386 = vunpack.c.h.bf16 %v360
      %v387 = vunpack.c.l.bf16 %v361
      %v388 = vunpack.c.h.bf16 %v361
      %v389 = vunpack.c.l.bf16 %v362
      %v390 = vunpack.c.h.bf16 %v362
      %v391 = vunpack.c.l.bf16 %v363
      %v392 = vunpack.c.h.bf16 %v363
      %v393 = vunpack.c.l.bf16 %v364
      %v394 = vunpack.c.h.bf16 %v364
      %v395 = vunpack.c.l.bf16 %v377
      %v396 = vunpack.c.h.bf16 %v377
      %v397 = vpack.c.bf16 %v380, %v379
      %v398 = vpack.c.bf16 %v382, %v381
      %v399 = vpack.c.bf16 %v384, %v383
      %v400 = vpack.c.bf16 %v386, %v385
      %v401 = vpack.c.bf16 %v388, %v387
      %v402 = vpack.c.bf16 %v390, %v389
      %v403 = vpack.c.bf16 %v392, %v391
      %v404 = vpack.c.bf16 %v394, %v393
      %v405 = vld [vmem:[%s2] sm:$0xf]
      %v406 = vld [vmem:[%s2 + $0x4] sm:$0xf]
      %v407 = vld [vmem:[%s2 + $0x8] sm:$0xf]
      %v408 = vld [vmem:[%s2 + $0xc] sm:$0xf]
      %v409 = vld [vmem:[%s2 + $0x10] sm:$0xf]
      %v410 = vld [vmem:[%s2 + $0x14] sm:$0xf]
      %v411 = vld [vmem:[%s2 + $0x18] sm:$0xf]
      %v412 = vld [vmem:[%s2 + $0x1c] sm:$0xf]
      %v413 = vpack.c.bf16 %v395, %v395
      %s414 = scalar_lea.vmem %s2, 32
      %v415 = vld [vmem:[%s414] sm:$0xf]
      %v416 = vld [vmem:[%s414 + $0x4] sm:$0xf]
      %v417 = vld [vmem:[%s414 + $0x8] sm:$0xf]
      %v418 = vld [vmem:[%s414 + $0xc] sm:$0xf]
      %v419 = vld [vmem:[%s414 + $0x10] sm:$0xf]
      %v420 = vld [vmem:[%s414 + $0x14] sm:$0xf]
      %v421 = vld [vmem:[%s414 + $0x18] sm:$0xf]
      %v422 = vld [vmem:[%s414 + $0x1c] sm:$0xf]
      %vm423 = vsmask.f32 7424
      %v425 = vshrl.u32 %v397, 16
      %v427 = vshll.u32 %v397, 16
      %v429 = vrot.slane %v427, 1
      %v430 = vor.u32 %v425, %v429
      %v432 = vshll.u32 %v398, 16
      %v434 = vrot.slane %v432, 1
      %v435 = vsel %vm423, %v430, %v434
      %v436 = vshrl.u32 %v398, 16
      %v438 = vor.u32 %v436, %v434
      %v440 = vshll.u32 %v399, 16
      %v442 = vrot.slane %v440, 1
      %v443 = vsel %vm423, %v438, %v442
      %v444 = vshrl.u32 %v399, 16
      %v446 = vor.u32 %v444, %v442
      %v448 = vshll.u32 %v400, 16
      %v450 = vrot.slane %v448, 1
      %v451 = vsel %vm423, %v446, %v450
      %v452 = vshrl.u32 %v400, 16
      %v454 = vor.u32 %v452, %v450
      %v456 = vshll.u32 %v401, 16
      %v458 = vrot.slane %v456, 1
      %v459 = vsel %vm423, %v454, %v458
      %v460 = vshrl.u32 %v401, 16
      %v462 = vor.u32 %v460, %v458
      %v464 = vshll.u32 %v402, 16
      %v466 = vrot.slane %v464, 1
      %v467 = vsel %vm423, %v462, %v466
      %v468 = vshrl.u32 %v402, 16
      %v470 = vor.u32 %v468, %v466
      %v472 = vshll.u32 %v403, 16
      %v474 = vrot.slane %v472, 1
      %v475 = vsel %vm423, %v470, %v474
      %v476 = vshrl.u32 %v403, 16
      %v478 = vor.u32 %v476, %v474
      %v480 = vshll.u32 %v404, 16
      %v482 = vrot.slane %v480, 1
      %v483 = vsel %vm423, %v478, %v482
      %v484 = vshrl.u32 %v404, 16
      %v486 = vor.u32 %v484, %v482
      %v488 = vshll.u32 %v413, 16
      %v490 = vrot.slane %v488, 1
      %v491 = vsel %vm423, %v486, %v490
      %v500 = vunpack.c.l.b16 %v415
      %v501 = vunpack.c.l.b16 %v416
      %v502 = vunpack.c.l.b16 %v417
      %v503 = vunpack.c.l.b16 %v418
      %v504 = vunpack.c.l.b16 %v419
      %v505 = vunpack.c.l.b16 %v420
      %v506 = vunpack.c.l.b16 %v421
      %v507 = vunpack.c.l.b16 %v422
      %v508 = vpack.c.b16 %v501, %v500
      %v509 = vpack.c.b16 %v503, %v502
      %v510 = vpack.c.b16 %v505, %v504
      %v511 = vpack.c.b16 %v507, %v506
      %vm516 = vcmask 523264
      %v518 = vsel %vm516, %v435, 0
      %v521 = vsel %vm516, %v443, 0
      %v524 = vsel %vm516, %v451, 0
      %v527 = vsel %vm516, %v459, 0
      %v530 = vsel %vm516, %v467, 0
      %v533 = vsel %vm516, %v475, 0
      %v536 = vsel %vm516, %v483, 0
      %v539 = vsel %vm516, %v491, 0
      %541 = vmatprep.subr.bf16.mxu0 0
      %542 = vmatpush1.bf16.msra.mxu0 0
      %543 = vmatprep.subr.bf16.mxu0 0
      %544 = vmatpush1.bf16.msra.mxu0 0
      %545 = vmatprep.subr.bf16.mxu0 0
      %546 = vmatpush1.bf16.msra.mxu0 0
      %547 = vmatprep.subr.bf16.mxu0 0
      %548 = vmatpush1.bf16.msra.mxu0 0
      %549 = vmatprep.subr.bf16.mxu0 0
      %550 = vmatpush1.bf16.msra.mxu0 %v511
      %551 = vmatprep.subr.bf16.mxu0 0
      %552 = vmatpush1.bf16.msra.mxu0 %v510
      %553 = vmatprep.subr.bf16.mxu0 0
      %554 = vmatpush1.bf16.msra.mxu0 %v509
      %555 = vmatprep.subr.bf16.mxu0 0
      %556 = vmatpush1.bf16.msra.mxu0 %v508
      %557 = vmatprep.subr.bf16.mxu0 0
      %558 = vmatpush2.bf16.msra.mxu0 0
      %559 = vmatprep.subr.bf16.mxu0 0
      %560 = vmatpush2.bf16.msra.mxu0 0
      %561 = vmatprep.subr.bf16.mxu0 0
      %562 = vmatpush2.bf16.msra.mxu0 0
      %563 = vmatprep.subr.bf16.mxu0 0
      %564 = vmatpush2.bf16.msra.mxu0 0
      %565 = vmatprep.subr.bf16.mxu0 0
      %566 = vmatpush2.bf16.msra.mxu0 0
      %567 = vmatprep.subr.bf16.mxu0 0
      %568 = vmatpush2.bf16.msra.mxu0 0
      %569 = vmatprep.subr.bf16.mxu0 0
      %570 = vmatpush2.bf16.msra.mxu0 0
      %571 = vmatprep.subr.bf16.mxu0 0
      %572 = vmatpush2.bf16.msra.mxu0 0
      %573 = vmatprep.mubr.bf16.mxu0 0
      %574 = vmatmul.mubr.bf16.gmra.mxu0 %v518
      %v575 = vpop.f32.mrf.mxu0
      %v576 = vadd.f32 0.0, %v575
      %v577 = vpop.f32.mrf.mxu0
      %v578 = vpop.f32.mrf.mxu0
      %v579 = vadd.f32 0.0, %v578
      %v580 = vpop.f32.mrf.mxu0
      %581 = vmatprep.mubr.bf16.mxu0 0
      %582 = vmatmul.mubr.bf16.gmra.mxu0 %v521
      %v583 = vpop.f32.mrf.mxu0
      %v584 = vadd.f32 0.0, %v583
      %v585 = vpop.f32.mrf.mxu0
      %v586 = vpop.f32.mrf.mxu0
      %v587 = vadd.f32 0.0, %v586
      %v588 = vpop.f32.mrf.mxu0
      %589 = vmatprep.mubr.bf16.mxu0 0
      %590 = vmatmul.mubr.bf16.gmra.mxu0 %v524
      %v591 = vpop.f32.mrf.mxu0
      %v592 = vadd.f32 0.0, %v591
      %v593 = vpop.f32.mrf.mxu0
      %v594 = vpop.f32.mrf.mxu0
      %v595 = vadd.f32 0.0, %v594
      %v596 = vpop.f32.mrf.mxu0
      %597 = vmatprep.mubr.bf16.mxu0 0
      %598 = vmatmul.mubr.bf16.gmra.mxu0 %v527
      %v599 = vpop.f32.mrf.mxu0
      %v600 = vadd.f32 0.0, %v599
      %v601 = vpop.f32.mrf.mxu0
      %v602 = vpop.f32.mrf.mxu0
      %v603 = vadd.f32 0.0, %v602
      %v604 = vpop.f32.mrf.mxu0
      %605 = vmatprep.mubr.bf16.mxu0 0
      %606 = vmatmul.mubr.bf16.gmra.mxu0 %v530
      %v607 = vpop.f32.mrf.mxu0
      %v608 = vadd.f32 0.0, %v607
      %v609 = vpop.f32.mrf.mxu0
      %v610 = vpop.f32.mrf.mxu0
      %v611 = vadd.f32 0.0, %v610
      %v612 = vpop.f32.mrf.mxu0
      %613 = vmatprep.mubr.bf16.mxu0 0
      %614 = vmatmul.mubr.bf16.gmra.mxu0 %v533
      %v615 = vpop.f32.mrf.mxu0
      %v616 = vadd.f32 0.0, %v615
      %v617 = vpop.f32.mrf.mxu0
      %v618 = vpop.f32.mrf.mxu0
      %v619 = vadd.f32 0.0, %v618
      %v620 = vpop.f32.mrf.mxu0
      %621 = vmatprep.mubr.bf16.mxu0 0
      %622 = vmatmul.mubr.bf16.gmra.mxu0 %v536
      %v623 = vpop.f32.mrf.mxu0
      %v624 = vadd.f32 0.0, %v623
      %v625 = vpop.f32.mrf.mxu0
      %v626 = vpop.f32.mrf.mxu0
      %v627 = vadd.f32 0.0, %v626
      %v628 = vpop.f32.mrf.mxu0
      %629 = vmatprep.mubr.bf16.mxu0 0
      %630 = vmatmul.mubr.bf16.gmra.mxu0 %v539
      %v631 = vpop.f32.mrf.mxu0
      %v632 = vadd.f32 0.0, %v631
      %v633 = vpop.f32.mrf.mxu0
      %v634 = vpop.f32.mrf.mxu0
      %v635 = vadd.f32 0.0, %v634
      %v636 = vpop.f32.mrf.mxu0
      %637 = vdwg.mxu0
      %v646 = vunpack.c.l.b16 %v405
      %v647 = vunpack.c.l.b16 %v406
      %v648 = vunpack.c.l.b16 %v407
      %v649 = vunpack.c.l.b16 %v408
      %v650 = vunpack.c.l.b16 %v409
      %v651 = vunpack.c.l.b16 %v410
      %v652 = vunpack.c.l.b16 %v411
      %v653 = vunpack.c.l.b16 %v412
      %v654 = vpack.c.b16 %v647, %v646
      %v655 = vpack.c.b16 %v649, %v648
      %v656 = vpack.c.b16 %v651, %v650
      %v657 = vpack.c.b16 %v653, %v652
      %v662 = vsel %vm516, %v397, 0
      %v664 = vsel %vm516, %v398, 0
      %v666 = vsel %vm516, %v399, 0
      %v668 = vsel %vm516, %v400, 0
      %v670 = vsel %vm516, %v401, 0
      %v672 = vsel %vm516, %v402, 0
      %v674 = vsel %vm516, %v403, 0
      %v676 = vsel %vm516, %v404, 0
      %678 = vmatprep.subr.bf16.mxu0 0
      %679 = vmatpush1.bf16.msra.mxu0 0
      %680 = vmatprep.subr.bf16.mxu0 0
      %681 = vmatpush1.bf16.msra.mxu0 0
      %682 = vmatprep.subr.bf16.mxu0 0
      %683 = vmatpush1.bf16.msra.mxu0 0
      %684 = vmatprep.subr.bf16.mxu0 0
      %685 = vmatpush1.bf16.msra.mxu0 0
      %686 = vmatprep.subr.bf16.mxu0 0
      %687 = vmatpush1.bf16.msra.mxu0 %v657
      %688 = vmatprep.subr.bf16.mxu0 0
      %689 = vmatpush1.bf16.msra.mxu0 %v656
      %690 = vmatprep.subr.bf16.mxu0 0
      %691 = vmatpush1.bf16.msra.mxu0 %v655
      %692 = vmatprep.subr.bf16.mxu0 0
      %693 = vmatpush1.bf16.msra.mxu0 %v654
      %694 = vmatprep.subr.bf16.mxu0 0
      %695 = vmatpush2.bf16.msra.mxu0 0
      %696 = vmatprep.subr.bf16.mxu0 0
      %697 = vmatpush2.bf16.msra.mxu0 0
      %698 = vmatprep.subr.bf16.mxu0 0
      %699 = vmatpush2.bf16.msra.mxu0 0
      %700 = vmatprep.subr.bf16.mxu0 0
      %701 = vmatpush2.bf16.msra.mxu0 0
      %702 = vmatprep.subr.bf16.mxu0 0
      %703 = vmatpush2.bf16.msra.mxu0 0
      %704 = vmatprep.subr.bf16.mxu0 0
      %705 = vmatpush2.bf16.msra.mxu0 0
      %706 = vmatprep.subr.bf16.mxu0 0
      %707 = vmatpush2.bf16.msra.mxu0 0
      %708 = vmatprep.subr.bf16.mxu0 0
      %709 = vmatpush2.bf16.msra.mxu0 0
      %710 = vmatprep.mubr.bf16.mxu0 0
      %711 = vmatmul.mubr.bf16.gmra.mxu0 %v662
      %v712 = vpop.f32.mrf.mxu0
      %v713 = vadd.f32 %v576, %v712
      %v714 = vpop.f32.mrf.mxu0
      %v715 = vpop.f32.mrf.mxu0
      %v716 = vadd.f32 %v579, %v715
      %v717 = vpop.f32.mrf.mxu0
      %718 = vmatprep.mubr.bf16.mxu0 0
      %719 = vmatmul.mubr.bf16.gmra.mxu0 %v664
      %v720 = vpop.f32.mrf.mxu0
      %v721 = vadd.f32 %v584, %v720
      %v722 = vpop.f32.mrf.mxu0
      %v723 = vpop.f32.mrf.mxu0
      %v724 = vadd.f32 %v587, %v723
      %v725 = vpop.f32.mrf.mxu0
      %726 = vmatprep.mubr.bf16.mxu0 0
      %727 = vmatmul.mubr.bf16.gmra.mxu0 %v666
      %v728 = vpop.f32.mrf.mxu0
      %v729 = vadd.f32 %v592, %v728
      %v730 = vpop.f32.mrf.mxu0
      %v731 = vpop.f32.mrf.mxu0
      %v732 = vadd.f32 %v595, %v731
      %v733 = vpop.f32.mrf.mxu0
      %734 = vmatprep.mubr.bf16.mxu0 0
      %735 = vmatmul.mubr.bf16.gmra.mxu0 %v668
      %v736 = vpop.f32.mrf.mxu0
      %v737 = vadd.f32 %v600, %v736
      %v738 = vpop.f32.mrf.mxu0
      %v739 = vpop.f32.mrf.mxu0
      %v740 = vadd.f32 %v603, %v739
      %v741 = vpop.f32.mrf.mxu0
      %742 = vmatprep.mubr.bf16.mxu0 0
      %743 = vmatmul.mubr.bf16.gmra.mxu0 %v670
      %v744 = vpop.f32.mrf.mxu0
      %v745 = vadd.f32 %v608, %v744
      %v746 = vpop.f32.mrf.mxu0
      %v747 = vpop.f32.mrf.mxu0
      %v748 = vadd.f32 %v611, %v747
      %v749 = vpop.f32.mrf.mxu0
      %750 = vmatprep.mubr.bf16.mxu0 0
      %751 = vmatmul.mubr.bf16.gmra.mxu0 %v672
      %v752 = vpop.f32.mrf.mxu0
      %v753 = vadd.f32 %v616, %v752
      %v754 = vpop.f32.mrf.mxu0
      %v755 = vpop.f32.mrf.mxu0
      %v756 = vadd.f32 %v619, %v755
      %v757 = vpop.f32.mrf.mxu0
      %758 = vmatprep.mubr.bf16.mxu0 0
      %759 = vmatmul.mubr.bf16.gmra.mxu0 %v674
      %v760 = vpop.f32.mrf.mxu0
      %v761 = vadd.f32 %v624, %v760
      %v762 = vpop.f32.mrf.mxu0
      %v763 = vpop.f32.mrf.mxu0
      %v764 = vadd.f32 %v627, %v763
      %v765 = vpop.f32.mrf.mxu0
      %766 = vmatprep.mubr.bf16.mxu0 0
      %767 = vmatmul.mubr.bf16.gmra.mxu0 %v676
      %v768 = vpop.f32.mrf.mxu0
      %v769 = vadd.f32 %v632, %v768
      %v770 = vpop.f32.mrf.mxu0
      %v771 = vpop.f32.mrf.mxu0
      %v772 = vadd.f32 %v635, %v771
      %v773 = vpop.f32.mrf.mxu0
      %774 = vdwg.mxu0
      %s775 = scalar_lea.vmem %s2, 64
      %v776 = vld [vmem:[%s775] sm:$0xf]
      %v777 = vld [vmem:[%s775 + $0x4] sm:$0xf]
      %v778 = vld [vmem:[%s775 + $0x8] sm:$0xf]
      %v779 = vld [vmem:[%s775 + $0xc] sm:$0xf]
      %v780 = vld [vmem:[%s775 + $0x10] sm:$0xf]
      %v781 = vld [vmem:[%s775 + $0x14] sm:$0xf]
      %v782 = vld [vmem:[%s775 + $0x18] sm:$0xf]
      %v783 = vld [vmem:[%s775 + $0x1c] sm:$0xf]
      %vm793 = vcmask 1046528
      %v794 = vrot.slane %v397, 1
      %v795 = vrot.slane %v398, 1
      %v796 = vsel %vm793, %v794, %v795
      %v797 = vrot.slane %v399, 1
      %v798 = vsel %vm793, %v795, %v797
      %v799 = vrot.slane %v400, 1
      %v800 = vsel %vm793, %v797, %v799
      %v801 = vrot.slane %v401, 1
      %v802 = vsel %vm793, %v799, %v801
      %v803 = vrot.slane %v402, 1
      %v804 = vsel %vm793, %v801, %v803
      %v805 = vrot.slane %v403, 1
      %v806 = vsel %vm793, %v803, %v805
      %v807 = vrot.slane %v404, 1
      %v808 = vsel %vm793, %v805, %v807
      %v809 = vrot.slane %v413, 1
      %v810 = vsel %vm793, %v807, %v809
      %v819 = vunpack.c.l.b16 %v776
      %v820 = vunpack.c.l.b16 %v777
      %v821 = vunpack.c.l.b16 %v778
      %v822 = vunpack.c.l.b16 %v779
      %v823 = vunpack.c.l.b16 %v780
      %v824 = vunpack.c.l.b16 %v781
      %v825 = vunpack.c.l.b16 %v782
      %v826 = vunpack.c.l.b16 %v783
      %v827 = vpack.c.b16 %v820, %v819
      %v828 = vpack.c.b16 %v822, %v821
      %v829 = vpack.c.b16 %v824, %v823
      %v830 = vpack.c.b16 %v826, %v825
      %v836 = vsel %vm516, %v796, 0
      %v839 = vsel %vm516, %v798, 0
      %v842 = vsel %vm516, %v800, 0
      %v845 = vsel %vm516, %v802, 0
      %v848 = vsel %vm516, %v804, 0
      %v851 = vsel %vm516, %v806, 0
      %v854 = vsel %vm516, %v808, 0
      %v857 = vsel %vm516, %v810, 0
      %859 = vmatprep.subr.bf16.mxu0 0
      %860 = vmatpush1.bf16.msra.mxu0 0
      %861 = vmatprep.subr.bf16.mxu0 0
      %862 = vmatpush1.bf16.msra.mxu0 0
      %863 = vmatprep.subr.bf16.mxu0 0
      %864 = vmatpush1.bf16.msra.mxu0 0
      %865 = vmatprep.subr.bf16.mxu0 0
      %866 = vmatpush1.bf16.msra.mxu0 0
      %867 = vmatprep.subr.bf16.mxu0 0
      %868 = vmatpush1.bf16.msra.mxu0 %v830
      %869 = vmatprep.subr.bf16.mxu0 0
      %870 = vmatpush1.bf16.msra.mxu0 %v829
      %871 = vmatprep.subr.bf16.mxu0 0
      %872 = vmatpush1.bf16.msra.mxu0 %v828
      %873 = vmatprep.subr.bf16.mxu0 0
      %874 = vmatpush1.bf16.msra.mxu0 %v827
      %875 = vmatprep.subr.bf16.mxu0 0
      %876 = vmatpush2.bf16.msra.mxu0 0
      %877 = vmatprep.subr.bf16.mxu0 0
      %878 = vmatpush2.bf16.msra.mxu0 0
      %879 = vmatprep.subr.bf16.mxu0 0
      %880 = vmatpush2.bf16.msra.mxu0 0
      %881 = vmatprep.subr.bf16.mxu0 0
      %882 = vmatpush2.bf16.msra.mxu0 0
      %883 = vmatprep.subr.bf16.mxu0 0
      %884 = vmatpush2.bf16.msra.mxu0 0
      %885 = vmatprep.subr.bf16.mxu0 0
      %886 = vmatpush2.bf16.msra.mxu0 0
      %887 = vmatprep.subr.bf16.mxu0 0
      %888 = vmatpush2.bf16.msra.mxu0 0
      %889 = vmatprep.subr.bf16.mxu0 0
      %890 = vmatpush2.bf16.msra.mxu0 0
      %891 = vmatprep.mubr.bf16.mxu0 0
      %892 = vmatmul.mubr.bf16.gmra.mxu0 %v836
      %v893 = vpop.f32.mrf.mxu0
      %v894 = vadd.f32 0.0, %v893
      %v895 = vpop.f32.mrf.mxu0
      %v896 = vpop.f32.mrf.mxu0
      %v897 = vadd.f32 0.0, %v896
      %v898 = vpop.f32.mrf.mxu0
      %899 = vmatprep.mubr.bf16.mxu0 0
      %900 = vmatmul.mubr.bf16.gmra.mxu0 %v839
      %v901 = vpop.f32.mrf.mxu0
      %v902 = vadd.f32 0.0, %v901
      %v903 = vpop.f32.mrf.mxu0
      %v904 = vpop.f32.mrf.mxu0
      %v905 = vadd.f32 0.0, %v904
      %v906 = vpop.f32.mrf.mxu0
      %907 = vmatprep.mubr.bf16.mxu0 0
      %908 = vmatmul.mubr.bf16.gmra.mxu0 %v842
      %v909 = vpop.f32.mrf.mxu0
      %v910 = vadd.f32 0.0, %v909
      %v911 = vpop.f32.mrf.mxu0
      %v912 = vpop.f32.mrf.mxu0
      %v913 = vadd.f32 0.0, %v912
      %v914 = vpop.f32.mrf.mxu0
      %915 = vmatprep.mubr.bf16.mxu0 0
      %916 = vmatmul.mubr.bf16.gmra.mxu0 %v845
      %v917 = vpop.f32.mrf.mxu0
      %v918 = vadd.f32 0.0, %v917
      %v919 = vpop.f32.mrf.mxu0
      %v920 = vpop.f32.mrf.mxu0
      %v921 = vadd.f32 0.0, %v920
      %v922 = vpop.f32.mrf.mxu0
      %923 = vmatprep.mubr.bf16.mxu0 0
      %924 = vmatmul.mubr.bf16.gmra.mxu0 %v848
      %v925 = vpop.f32.mrf.mxu0
      %v926 = vadd.f32 0.0, %v925
      %v927 = vpop.f32.mrf.mxu0
      %v928 = vpop.f32.mrf.mxu0
      %v929 = vadd.f32 0.0, %v928
      %v930 = vpop.f32.mrf.mxu0
      %931 = vmatprep.mubr.bf16.mxu0 0
      %932 = vmatmul.mubr.bf16.gmra.mxu0 %v851
      %v933 = vpop.f32.mrf.mxu0
      %v934 = vadd.f32 0.0, %v933
      %v935 = vpop.f32.mrf.mxu0
      %v936 = vpop.f32.mrf.mxu0
      %v937 = vadd.f32 0.0, %v936
      %v938 = vpop.f32.mrf.mxu0
      %939 = vmatprep.mubr.bf16.mxu0 0
      %940 = vmatmul.mubr.bf16.gmra.mxu0 %v854
      %v941 = vpop.f32.mrf.mxu0
      %v942 = vadd.f32 0.0, %v941
      %v943 = vpop.f32.mrf.mxu0
      %v944 = vpop.f32.mrf.mxu0
      %v945 = vadd.f32 0.0, %v944
      %v946 = vpop.f32.mrf.mxu0
      %947 = vmatprep.mubr.bf16.mxu0 0
      %948 = vmatmul.mubr.bf16.gmra.mxu0 %v857
      %v949 = vpop.f32.mrf.mxu0
      %v950 = vadd.f32 0.0, %v949
      %v951 = vpop.f32.mrf.mxu0
      %v952 = vpop.f32.mrf.mxu0
      %v953 = vadd.f32 0.0, %v952
      %v954 = vpop.f32.mrf.mxu0
      %955 = vdwg.mxu0
      %v956 = vadd.f32 %v713, %v894
      %v957 = vadd.f32 %v716, %v897
      %v958 = vadd.f32 %v721, %v902
      %v959 = vadd.f32 %v724, %v905
      %v960 = vadd.f32 %v729, %v910
      %v961 = vadd.f32 %v732, %v913
      %v962 = vadd.f32 %v737, %v918
      %v963 = vadd.f32 %v740, %v921
      %v964 = vadd.f32 %v745, %v926
      %v965 = vadd.f32 %v748, %v929
      %v966 = vadd.f32 %v753, %v934
      %v967 = vadd.f32 %v756, %v937
      %v968 = vadd.f32 %v761, %v942
      %v969 = vadd.f32 %v764, %v945
      %v970 = vadd.f32 %v769, %v950
      %v971 = vadd.f32 %v772, %v953
      %s972 = scalar_lea.vmem %s2, 96
      %v973 = vld [vmem:[%s972] sm:$0xf]
      %v974 = vld [vmem:[%s972 + $0x4] sm:$0xf]
      %v975 = vld [vmem:[%s972 + $0x8] sm:$0xf]
      %v976 = vld [vmem:[%s972 + $0xc] sm:$0xf]
      %v977 = vld [vmem:[%s972 + $0x10] sm:$0xf]
      %v978 = vld [vmem:[%s972 + $0x14] sm:$0xf]
      %v979 = vld [vmem:[%s972 + $0x18] sm:$0xf]
      %v980 = vld [vmem:[%s972 + $0x1c] sm:$0xf]
      %vm981 = vcmask 1044480
      %v982 = vrot.slane %v397, 3
      %v983 = vrot.slane %v398, 3
      %v984 = vsel %vm981, %v982, %v983
      %v985 = vrot.slane %v399, 3
      %v986 = vsel %vm981, %v983, %v985
      %v987 = vrot.slane %v400, 3
      %v988 = vsel %vm981, %v985, %v987
      %v989 = vrot.slane %v401, 3
      %v990 = vsel %vm981, %v987, %v989
      %v991 = vrot.slane %v402, 3
      %v992 = vsel %vm981, %v989, %v991
      %v993 = vrot.slane %v403, 3
      %v994 = vsel %vm981, %v991, %v993
      %v995 = vrot.slane %v404, 3
      %v996 = vsel %vm981, %v993, %v995
      %v997 = vrot.slane %v413, 3
      %v998 = vsel %vm981, %v995, %v997
      %v1007 = vunpack.c.l.b16 %v973
      %v1008 = vunpack.c.l.b16 %v974
      %v1009 = vunpack.c.l.b16 %v975
      %v1010 = vunpack.c.l.b16 %v976
      %v1011 = vunpack.c.l.b16 %v977
      %v1012 = vunpack.c.l.b16 %v978
      %v1013 = vunpack.c.l.b16 %v979
      %v1014 = vunpack.c.l.b16 %v980
      %v1015 = vpack.c.b16 %v1008, %v1007
      %v1016 = vpack.c.b16 %v1010, %v1009
      %v1017 = vpack.c.b16 %v1012, %v1011
      %v1018 = vpack.c.b16 %v1014, %v1013
      %v1024 = vsel %vm516, %v984, 0
      %v1027 = vsel %vm516, %v986, 0
      %v1030 = vsel %vm516, %v988, 0
      %v1033 = vsel %vm516, %v990, 0
      %v1036 = vsel %vm516, %v992, 0
      %v1039 = vsel %vm516, %v994, 0
      %v1042 = vsel %vm516, %v996, 0
      %v1045 = vsel %vm516, %v998, 0
      %1047 = vmatprep.subr.bf16.mxu0 0
      %1048 = vmatpush1.bf16.msra.mxu0 0
      %1049 = vmatprep.subr.bf16.mxu0 0
      %1050 = vmatpush1.bf16.msra.mxu0 0
      %1051 = vmatprep.subr.bf16.mxu0 0
      %1052 = vmatpush1.bf16.msra.mxu0 0
      %1053 = vmatprep.subr.bf16.mxu0 0
      %1054 = vmatpush1.bf16.msra.mxu0 0
      %1055 = vmatprep.subr.bf16.mxu0 0
      %1056 = vmatpush1.bf16.msra.mxu0 %v1018
      %1057 = vmatprep.subr.bf16.mxu0 0
      %1058 = vmatpush1.bf16.msra.mxu0 %v1017
      %1059 = vmatprep.subr.bf16.mxu0 0
      %1060 = vmatpush1.bf16.msra.mxu0 %v1016
      %1061 = vmatprep.subr.bf16.mxu0 0
      %1062 = vmatpush1.bf16.msra.mxu0 %v1015
      %1063 = vmatprep.subr.bf16.mxu0 0
      %1064 = vmatpush2.bf16.msra.mxu0 0
      %1065 = vmatprep.subr.bf16.mxu0 0
      %1066 = vmatpush2.bf16.msra.mxu0 0
      %1067 = vmatprep.subr.bf16.mxu0 0
      %1068 = vmatpush2.bf16.msra.mxu0 0
      %1069 = vmatprep.subr.bf16.mxu0 0
      %1070 = vmatpush2.bf16.msra.mxu0 0
      %1071 = vmatprep.subr.bf16.mxu0 0
      %1072 = vmatpush2.bf16.msra.mxu0 0
      %1073 = vmatprep.subr.bf16.mxu0 0
      %1074 = vmatpush2.bf16.msra.mxu0 0
      %1075 = vmatprep.subr.bf16.mxu0 0
      %1076 = vmatpush2.bf16.msra.mxu0 0
      %1077 = vmatprep.subr.bf16.mxu0 0
      %1078 = vmatpush2.bf16.msra.mxu0 0
      %1079 = vmatprep.mubr.bf16.mxu0 0
      %1080 = vmatmul.mubr.bf16.gmra.mxu0 %v1024
      %v1081 = vpop.f32.mrf.mxu0
      %v1082 = vadd.f32 0.0, %v1081
      %v1083 = vpop.f32.mrf.mxu0
      %v1084 = vpop.f32.mrf.mxu0
      %v1085 = vadd.f32 0.0, %v1084
      %v1086 = vpop.f32.mrf.mxu0
      %1087 = vmatprep.mubr.bf16.mxu0 0
      %1088 = vmatmul.mubr.bf16.gmra.mxu0 %v1027
      %v1089 = vpop.f32.mrf.mxu0
      %v1090 = vadd.f32 0.0, %v1089
      %v1091 = vpop.f32.mrf.mxu0
      %v1092 = vpop.f32.mrf.mxu0
      %v1093 = vadd.f32 0.0, %v1092
      %v1094 = vpop.f32.mrf.mxu0
      %1095 = vmatprep.mubr.bf16.mxu0 0
      %1096 = vmatmul.mubr.bf16.gmra.mxu0 %v1030
      %v1097 = vpop.f32.mrf.mxu0
      %v1098 = vadd.f32 0.0, %v1097
      %v1099 = vpop.f32.mrf.mxu0
      %v1100 = vpop.f32.mrf.mxu0
      %v1101 = vadd.f32 0.0, %v1100
      %v1102 = vpop.f32.mrf.mxu0
      %1103 = vmatprep.mubr.bf16.mxu0 0
      %1104 = vmatmul.mubr.bf16.gmra.mxu0 %v1033
      %v1105 = vpop.f32.mrf.mxu0
      %v1106 = vadd.f32 0.0, %v1105
      %v1107 = vpop.f32.mrf.mxu0
      %v1108 = vpop.f32.mrf.mxu0
      %v1109 = vadd.f32 0.0, %v1108
      %v1110 = vpop.f32.mrf.mxu0
      %1111 = vmatprep.mubr.bf16.mxu0 0
      %1112 = vmatmul.mubr.bf16.gmra.mxu0 %v1036
      %v1113 = vpop.f32.mrf.mxu0
      %v1114 = vadd.f32 0.0, %v1113
      %v1115 = vpop.f32.mrf.mxu0
      %v1116 = vpop.f32.mrf.mxu0
      %v1117 = vadd.f32 0.0, %v1116
      %v1118 = vpop.f32.mrf.mxu0
      %1119 = vmatprep.mubr.bf16.mxu0 0
      %1120 = vmatmul.mubr.bf16.gmra.mxu0 %v1039
      %v1121 = vpop.f32.mrf.mxu0
      %v1122 = vadd.f32 0.0, %v1121
      %v1123 = vpop.f32.mrf.mxu0
      %v1124 = vpop.f32.mrf.mxu0
      %v1125 = vadd.f32 0.0, %v1124
      %v1126 = vpop.f32.mrf.mxu0
      %1127 = vmatprep.mubr.bf16.mxu0 0
      %1128 = vmatmul.mubr.bf16.gmra.mxu0 %v1042
      %v1129 = vpop.f32.mrf.mxu0
      %v1130 = vadd.f32 0.0, %v1129
      %v1131 = vpop.f32.mrf.mxu0
      %v1132 = vpop.f32.mrf.mxu0
      %v1133 = vadd.f32 0.0, %v1132
      %v1134 = vpop.f32.mrf.mxu0
      %1135 = vmatprep.mubr.bf16.mxu0 0
      %1136 = vmatmul.mubr.bf16.gmra.mxu0 %v1045
      %v1137 = vpop.f32.mrf.mxu0
      %v1138 = vadd.f32 0.0, %v1137
      %v1139 = vpop.f32.mrf.mxu0
      %v1140 = vpop.f32.mrf.mxu0
      %v1141 = vadd.f32 0.0, %v1140
      %v1142 = vpop.f32.mrf.mxu0
      %1143 = vdwg.mxu0
      %v1144 = vadd.f32 %v956, %v1082
      %v1145 = vadd.f32 %v957, %v1085
      %v1146 = vadd.f32 %v958, %v1090
      %v1147 = vadd.f32 %v959, %v1093
      %v1148 = vadd.f32 %v960, %v1098
      %v1149 = vadd.f32 %v961, %v1101
      %v1150 = vadd.f32 %v962, %v1106
      %v1151 = vadd.f32 %v963, %v1109
      %v1152 = vadd.f32 %v964, %v1114
      %v1153 = vadd.f32 %v965, %v1117
      %v1154 = vadd.f32 %v966, %v1122
      %v1155 = vadd.f32 %v967, %v1125
      %v1156 = vadd.f32 %v968, %v1130
      %v1157 = vadd.f32 %v969, %v1133
      %v1158 = vadd.f32 %v970, %v1138
      %v1159 = vadd.f32 %v971, %v1141
      %s1160 = scalar_lea.vmem %s2, 128
      %v1161 = vld [vmem:[%s1160] sm:$0xf]
      %v1162 = vld [vmem:[%s1160 + $0x4] sm:$0xf]
      %v1163 = vld [vmem:[%s1160 + $0x8] sm:$0xf]
      %v1164 = vld [vmem:[%s1160 + $0xc] sm:$0xf]
      %v1165 = vld [vmem:[%s1160 + $0x10] sm:$0xf]
      %v1166 = vld [vmem:[%s1160 + $0x14] sm:$0xf]
      %v1167 = vld [vmem:[%s1160 + $0x18] sm:$0xf]
      %v1168 = vld [vmem:[%s1160 + $0x1c] sm:$0xf]
      %vm1169 = vsmask.f32 4352
      %v1170 = vrot.slane %v425, 3
      %v1171 = vrot.slane %v427, 4
      %v1172 = vor.u32 %v1170, %v1171
      %v1173 = vrot.slane %v436, 3
      %v1174 = vrot.slane %v432, 4
      %v1175 = vor.u32 %v1173, %v1174
      %v1176 = vsel %vm1169, %v1172, %v1175
      %v1177 = vrot.slane %v444, 3
      %v1178 = vrot.slane %v440, 4
      %v1179 = vor.u32 %v1177, %v1178
      %v1180 = vsel %vm1169, %v1175, %v1179
      %v1181 = vrot.slane %v452, 3
      %v1182 = vrot.slane %v448, 4
      %v1183 = vor.u32 %v1181, %v1182
      %v1184 = vsel %vm1169, %v1179, %v1183
      %v1185 = vrot.slane %v460, 3
      %v1186 = vrot.slane %v456, 4
      %v1187 = vor.u32 %v1185, %v1186
      %v1188 = vsel %vm1169, %v1183, %v1187
      %v1189 = vrot.slane %v468, 3
      %v1190 = vrot.slane %v464, 4
      %v1191 = vor.u32 %v1189, %v1190
      %v1192 = vsel %vm1169, %v1187, %v1191
      %v1193 = vrot.slane %v476, 3
      %v1194 = vrot.slane %v472, 4
      %v1195 = vor.u32 %v1193, %v1194
      %v1196 = vsel %vm1169, %v1191, %v1195
      %v1197 = vrot.slane %v484, 3
      %v1198 = vrot.slane %v480, 4
      %v1199 = vor.u32 %v1197, %v1198
      %v1200 = vsel %vm1169, %v1195, %v1199
      %v1201 = vshrl.u32 %v413, 16
      %v1203 = vrot.slane %v1201, 3
      %v1204 = vrot.slane %v488, 4
      %v1205 = vor.u32 %v1203, %v1204
      %v1206 = vsel %vm1169, %v1199, %v1205
      %v1215 = vunpack.c.l.b16 %v1161
      %v1216 = vunpack.c.l.b16 %v1162
      %v1217 = vunpack.c.l.b16 %v1163
      %v1218 = vunpack.c.l.b16 %v1164
      %v1219 = vunpack.c.l.b16 %v1165
      %v1220 = vunpack.c.l.b16 %v1166
      %v1221 = vunpack.c.l.b16 %v1167
      %v1222 = vunpack.c.l.b16 %v1168
      %v1223 = vpack.c.b16 %v1216, %v1215
      %v1224 = vpack.c.b16 %v1218, %v1217
      %v1225 = vpack.c.b16 %v1220, %v1219
      %v1226 = vpack.c.b16 %v1222, %v1221
      %v1232 = vsel %vm516, %v1176, 0
      %v1235 = vsel %vm516, %v1180, 0
      %v1238 = vsel %vm516, %v1184, 0
      %v1241 = vsel %vm516, %v1188, 0
      %v1244 = vsel %vm516, %v1192, 0
      %v1247 = vsel %vm516, %v1196, 0
      %v1250 = vsel %vm516, %v1200, 0
      %v1253 = vsel %vm516, %v1206, 0
      %1255 = vmatprep.subr.bf16.mxu0 0
      %1256 = vmatpush1.bf16.msra.mxu0 0
      %1257 = vmatprep.subr.bf16.mxu0 0
      %1258 = vmatpush1.bf16.msra.mxu0 0
      %1259 = vmatprep.subr.bf16.mxu0 0
      %1260 = vmatpush1.bf16.msra.mxu0 0
      %1261 = vmatprep.subr.bf16.mxu0 0
      %1262 = vmatpush1.bf16.msra.mxu0 0
      %1263 = vmatprep.subr.bf16.mxu0 0
      %1264 = vmatpush1.bf16.msra.mxu0 %v1226
      %1265 = vmatprep.subr.bf16.mxu0 0
      %1266 = vmatpush1.bf16.msra.mxu0 %v1225
      %1267 = vmatprep.subr.bf16.mxu0 0
      %1268 = vmatpush1.bf16.msra.mxu0 %v1224
      %1269 = vmatprep.subr.bf16.mxu0 0
      %1270 = vmatpush1.bf16.msra.mxu0 %v1223
      %1271 = vmatprep.subr.bf16.mxu0 0
      %1272 = vmatpush2.bf16.msra.mxu0 0
      %1273 = vmatprep.subr.bf16.mxu0 0
      %1274 = vmatpush2.bf16.msra.mxu0 0
      %1275 = vmatprep.subr.bf16.mxu0 0
      %1276 = vmatpush2.bf16.msra.mxu0 0
      %1277 = vmatprep.subr.bf16.mxu0 0
      %1278 = vmatpush2.bf16.msra.mxu0 0
      %1279 = vmatprep.subr.bf16.mxu0 0
      %1280 = vmatpush2.bf16.msra.mxu0 0
      %1281 = vmatprep.subr.bf16.mxu0 0
      %1282 = vmatpush2.bf16.msra.mxu0 0
      %1283 = vmatprep.subr.bf16.mxu0 0
      %1284 = vmatpush2.bf16.msra.mxu0 0
      %1285 = vmatprep.subr.bf16.mxu0 0
      %1286 = vmatpush2.bf16.msra.mxu0 0
      %1287 = vmatprep.mubr.bf16.mxu0 0
      %1288 = vmatmul.mubr.bf16.gmra.mxu0 %v1232
      %v1289 = vpop.f32.mrf.mxu0
      %v1290 = vadd.f32 0.0, %v1289
      %v1291 = vpop.f32.mrf.mxu0
      %v1292 = vpop.f32.mrf.mxu0
      %v1293 = vadd.f32 0.0, %v1292
      %v1294 = vpop.f32.mrf.mxu0
      %1295 = vmatprep.mubr.bf16.mxu0 0
      %1296 = vmatmul.mubr.bf16.gmra.mxu0 %v1235
      %v1297 = vpop.f32.mrf.mxu0
      %v1298 = vadd.f32 0.0, %v1297
      %v1299 = vpop.f32.mrf.mxu0
      %v1300 = vpop.f32.mrf.mxu0
      %v1301 = vadd.f32 0.0, %v1300
      %v1302 = vpop.f32.mrf.mxu0
      %1303 = vmatprep.mubr.bf16.mxu0 0
      %1304 = vmatmul.mubr.bf16.gmra.mxu0 %v1238
      %v1305 = vpop.f32.mrf.mxu0
      %v1306 = vadd.f32 0.0, %v1305
      %v1307 = vpop.f32.mrf.mxu0
      %v1308 = vpop.f32.mrf.mxu0
      %v1309 = vadd.f32 0.0, %v1308
      %v1310 = vpop.f32.mrf.mxu0
      %1311 = vmatprep.mubr.bf16.mxu0 0
      %1312 = vmatmul.mubr.bf16.gmra.mxu0 %v1241
      %v1313 = vpop.f32.mrf.mxu0
      %v1314 = vadd.f32 0.0, %v1313
      %v1315 = vpop.f32.mrf.mxu0
      %v1316 = vpop.f32.mrf.mxu0
      %v1317 = vadd.f32 0.0, %v1316
      %v1318 = vpop.f32.mrf.mxu0
      %1319 = vmatprep.mubr.bf16.mxu0 0
      %1320 = vmatmul.mubr.bf16.gmra.mxu0 %v1244
      %v1321 = vpop.f32.mrf.mxu0
      %v1322 = vadd.f32 0.0, %v1321
      %v1323 = vpop.f32.mrf.mxu0
      %v1324 = vpop.f32.mrf.mxu0
      %v1325 = vadd.f32 0.0, %v1324
      %v1326 = vpop.f32.mrf.mxu0
      %1327 = vmatprep.mubr.bf16.mxu0 0
      %1328 = vmatmul.mubr.bf16.gmra.mxu0 %v1247
      %v1329 = vpop.f32.mrf.mxu0
      %v1330 = vadd.f32 0.0, %v1329
      %v1331 = vpop.f32.mrf.mxu0
      %v1332 = vpop.f32.mrf.mxu0
      %v1333 = vadd.f32 0.0, %v1332
      %v1334 = vpop.f32.mrf.mxu0
      %1335 = vmatprep.mubr.bf16.mxu0 0
      %1336 = vmatmul.mubr.bf16.gmra.mxu0 %v1250
      %v1337 = vpop.f32.mrf.mxu0
      %v1338 = vadd.f32 0.0, %v1337
      %v1339 = vpop.f32.mrf.mxu0
      %v1340 = vpop.f32.mrf.mxu0
      %v1341 = vadd.f32 0.0, %v1340
      %v1342 = vpop.f32.mrf.mxu0
      %1343 = vmatprep.mubr.bf16.mxu0 0
      %1344 = vmatmul.mubr.bf16.gmra.mxu0 %v1253
      %v1345 = vpop.f32.mrf.mxu0
      %v1346 = vadd.f32 0.0, %v1345
      %v1347 = vpop.f32.mrf.mxu0
      %v1348 = vpop.f32.mrf.mxu0
      %v1349 = vadd.f32 0.0, %v1348
      %v1350 = vpop.f32.mrf.mxu0
      %1351 = vdwg.mxu0
      %v1352 = vadd.f32 %v1144, %v1290
      %v1353 = vadd.f32 %v1145, %v1293
      %v1354 = vadd.f32 %v1146, %v1298
      %v1355 = vadd.f32 %v1147, %v1301
      %v1356 = vadd.f32 %v1148, %v1306
      %v1357 = vadd.f32 %v1149, %v1309
      %v1358 = vadd.f32 %v1150, %v1314
      %v1359 = vadd.f32 %v1151, %v1317
      %v1360 = vadd.f32 %v1152, %v1322
      %v1361 = vadd.f32 %v1153, %v1325
      %v1362 = vadd.f32 %v1154, %v1330
      %v1363 = vadd.f32 %v1155, %v1333
      %v1364 = vadd.f32 %v1156, %v1338
      %v1365 = vadd.f32 %v1157, %v1341
      %v1366 = vadd.f32 %v1158, %v1346
      %v1367 = vadd.f32 %v1159, %v1349
      %v1368 = vpack.c.bf16 %v381, %v380
      %v1369 = vpack.c.bf16 %v383, %v382
      %v1370 = vpack.c.bf16 %v385, %v384
      %v1371 = vpack.c.bf16 %v387, %v386
      %v1372 = vpack.c.bf16 %v389, %v388
      %v1373 = vpack.c.bf16 %v391, %v390
      %v1374 = vpack.c.bf16 %v393, %v392
      %v1375 = vpack.c.bf16 %v395, %v394
      %s1376 = scalar_lea.vmem %s2, 160
      %v1377 = vld [vmem:[%s1376] sm:$0xf]
      %v1378 = vld [vmem:[%s1376 + $0x4] sm:$0xf]
      %v1379 = vld [vmem:[%s1376 + $0x8] sm:$0xf]
      %v1380 = vld [vmem:[%s1376 + $0xc] sm:$0xf]
      %v1381 = vld [vmem:[%s1376 + $0x10] sm:$0xf]
      %v1382 = vld [vmem:[%s1376 + $0x14] sm:$0xf]
      %v1383 = vld [vmem:[%s1376 + $0x18] sm:$0xf]
      %v1384 = vld [vmem:[%s1376 + $0x1c] sm:$0xf]
      %v1393 = vunpack.c.l.b16 %v1377
      %v1394 = vunpack.c.l.b16 %v1378
      %v1395 = vunpack.c.l.b16 %v1379
      %v1396 = vunpack.c.l.b16 %v1380
      %v1397 = vunpack.c.l.b16 %v1381
      %v1398 = vunpack.c.l.b16 %v1382
      %v1399 = vunpack.c.l.b16 %v1383
      %v1400 = vunpack.c.l.b16 %v1384
      %v1401 = vpack.c.b16 %v1394, %v1393
      %v1402 = vpack.c.b16 %v1396, %v1395
      %v1403 = vpack.c.b16 %v1398, %v1397
      %v1404 = vpack.c.b16 %v1400, %v1399
      %v1410 = vsel %vm516, %v1368, 0
      %v1413 = vsel %vm516, %v1369, 0
      %v1416 = vsel %vm516, %v1370, 0
      %v1419 = vsel %vm516, %v1371, 0
      %v1422 = vsel %vm516, %v1372, 0
      %v1425 = vsel %vm516, %v1373, 0
      %v1428 = vsel %vm516, %v1374, 0
      %v1431 = vsel %vm516, %v1375, 0
      %1433 = vmatprep.subr.bf16.mxu0 0
      %1434 = vmatpush1.bf16.msra.mxu0 0
      %1435 = vmatprep.subr.bf16.mxu0 0
      %1436 = vmatpush1.bf16.msra.mxu0 0
      %1437 = vmatprep.subr.bf16.mxu0 0
      %1438 = vmatpush1.bf16.msra.mxu0 0
      %1439 = vmatprep.subr.bf16.mxu0 0
      %1440 = vmatpush1.bf16.msra.mxu0 0
      %1441 = vmatprep.subr.bf16.mxu0 0
      %1442 = vmatpush1.bf16.msra.mxu0 %v1404
      %1443 = vmatprep.subr.bf16.mxu0 0
      %1444 = vmatpush1.bf16.msra.mxu0 %v1403
      %1445 = vmatprep.subr.bf16.mxu0 0
      %1446 = vmatpush1.bf16.msra.mxu0 %v1402
      %1447 = vmatprep.subr.bf16.mxu0 0
      %1448 = vmatpush1.bf16.msra.mxu0 %v1401
      %1449 = vmatprep.subr.bf16.mxu0 0
      %1450 = vmatpush2.bf16.msra.mxu0 0
      %1451 = vmatprep.subr.bf16.mxu0 0
      %1452 = vmatpush2.bf16.msra.mxu0 0
      %1453 = vmatprep.subr.bf16.mxu0 0
      %1454 = vmatpush2.bf16.msra.mxu0 0
      %1455 = vmatprep.subr.bf16.mxu0 0
      %1456 = vmatpush2.bf16.msra.mxu0 0
      %1457 = vmatprep.subr.bf16.mxu0 0
      %1458 = vmatpush2.bf16.msra.mxu0 0
      %1459 = vmatprep.subr.bf16.mxu0 0
      %1460 = vmatpush2.bf16.msra.mxu0 0
      %1461 = vmatprep.subr.bf16.mxu0 0
      %1462 = vmatpush2.bf16.msra.mxu0 0
      %1463 = vmatprep.subr.bf16.mxu0 0
      %1464 = vmatpush2.bf16.msra.mxu0 0
      %1465 = vmatprep.mubr.bf16.mxu0 0
      %1466 = vmatmul.mubr.bf16.gmra.mxu0 %v1410
      %v1467 = vpop.f32.mrf.mxu0
      %v1468 = vadd.f32 0.0, %v1467
      %v1469 = vpop.f32.mrf.mxu0
      %v1470 = vpop.f32.mrf.mxu0
      %v1471 = vadd.f32 0.0, %v1470
      %v1472 = vpop.f32.mrf.mxu0
      %1473 = vmatprep.mubr.bf16.mxu0 0
      %1474 = vmatmul.mubr.bf16.gmra.mxu0 %v1413
      %v1475 = vpop.f32.mrf.mxu0
      %v1476 = vadd.f32 0.0, %v1475
      %v1477 = vpop.f32.mrf.mxu0
      %v1478 = vpop.f32.mrf.mxu0
      %v1479 = vadd.f32 0.0, %v1478
      %v1480 = vpop.f32.mrf.mxu0
      %1481 = vmatprep.mubr.bf16.mxu0 0
      %1482 = vmatmul.mubr.bf16.gmra.mxu0 %v1416
      %v1483 = vpop.f32.mrf.mxu0
      %v1484 = vadd.f32 0.0, %v1483
      %v1485 = vpop.f32.mrf.mxu0
      %v1486 = vpop.f32.mrf.mxu0
      %v1487 = vadd.f32 0.0, %v1486
      %v1488 = vpop.f32.mrf.mxu0
      %1489 = vmatprep.mubr.bf16.mxu0 0
      %1490 = vmatmul.mubr.bf16.gmra.mxu0 %v1419
      %v1491 = vpop.f32.mrf.mxu0
      %v1492 = vadd.f32 0.0, %v1491
      %v1493 = vpop.f32.mrf.mxu0
      %v1494 = vpop.f32.mrf.mxu0
      %v1495 = vadd.f32 0.0, %v1494
      %v1496 = vpop.f32.mrf.mxu0
      %1497 = vmatprep.mubr.bf16.mxu0 0
      %1498 = vmatmul.mubr.bf16.gmra.mxu0 %v1422
      %v1499 = vpop.f32.mrf.mxu0
      %v1500 = vadd.f32 0.0, %v1499
      %v1501 = vpop.f32.mrf.mxu0
      %v1502 = vpop.f32.mrf.mxu0
      %v1503 = vadd.f32 0.0, %v1502
      %v1504 = vpop.f32.mrf.mxu0
      %1505 = vmatprep.mubr.bf16.mxu0 0
      %1506 = vmatmul.mubr.bf16.gmra.mxu0 %v1425
      %v1507 = vpop.f32.mrf.mxu0
      %v1508 = vadd.f32 0.0, %v1507
      %v1509 = vpop.f32.mrf.mxu0
      %v1510 = vpop.f32.mrf.mxu0
      %v1511 = vadd.f32 0.0, %v1510
      %v1512 = vpop.f32.mrf.mxu0
      %1513 = vmatprep.mubr.bf16.mxu0 0
      %1514 = vmatmul.mubr.bf16.gmra.mxu0 %v1428
      %v1515 = vpop.f32.mrf.mxu0
      %v1516 = vadd.f32 0.0, %v1515
      %v1517 = vpop.f32.mrf.mxu0
      %v1518 = vpop.f32.mrf.mxu0
      %v1519 = vadd.f32 0.0, %v1518
      %v1520 = vpop.f32.mrf.mxu0
      %1521 = vmatprep.mubr.bf16.mxu0 0
      %1522 = vmatmul.mubr.bf16.gmra.mxu0 %v1431
      %v1523 = vpop.f32.mrf.mxu0
      %v1524 = vadd.f32 0.0, %v1523
      %v1525 = vpop.f32.mrf.mxu0
      %v1526 = vpop.f32.mrf.mxu0
      %v1527 = vadd.f32 0.0, %v1526
      %v1528 = vpop.f32.mrf.mxu0
      %1529 = vdwg.mxu0
      %v1530 = vadd.f32 %v1352, %v1468
      %v1531 = vadd.f32 %v1353, %v1471
      %v1532 = vadd.f32 %v1354, %v1476
      %v1533 = vadd.f32 %v1355, %v1479
      %v1534 = vadd.f32 %v1356, %v1484
      %v1535 = vadd.f32 %v1357, %v1487
      %v1536 = vadd.f32 %v1358, %v1492
      %v1537 = vadd.f32 %v1359, %v1495
      %v1538 = vadd.f32 %v1360, %v1500
      %v1539 = vadd.f32 %v1361, %v1503
      %v1540 = vadd.f32 %v1362, %v1508
      %v1541 = vadd.f32 %v1363, %v1511
      %v1542 = vadd.f32 %v1364, %v1516
      %v1543 = vadd.f32 %v1365, %v1519
      %v1544 = vadd.f32 %v1366, %v1524
      %v1545 = vadd.f32 %v1367, %v1527
      %v1546 = vpack.c.bf16 %v396, %v396
      %s1547 = scalar_lea.vmem %s2, 192
      %v1548 = vld [vmem:[%s1547] sm:$0xf]
      %v1549 = vld [vmem:[%s1547 + $0x4] sm:$0xf]
      %v1550 = vld [vmem:[%s1547 + $0x8] sm:$0xf]
      %v1551 = vld [vmem:[%s1547 + $0xc] sm:$0xf]
      %v1552 = vld [vmem:[%s1547 + $0x10] sm:$0xf]
      %v1553 = vld [vmem:[%s1547 + $0x14] sm:$0xf]
      %v1554 = vld [vmem:[%s1547 + $0x18] sm:$0xf]
      %v1555 = vld [vmem:[%s1547 + $0x1c] sm:$0xf]
      %vm1565 = vcmask 1045504
      %v1566 = vrot.slane %v1368, 2
      %v1567 = vrot.slane %v1369, 2
      %v1568 = vsel %vm1565, %v1566, %v1567
      %v1569 = vrot.slane %v1370, 2
      %v1570 = vsel %vm1565, %v1567, %v1569
      %v1571 = vrot.slane %v1371, 2
      %v1572 = vsel %vm1565, %v1569, %v1571
      %v1573 = vrot.slane %v1372, 2
      %v1574 = vsel %vm1565, %v1571, %v1573
      %v1575 = vrot.slane %v1373, 2
      %v1576 = vsel %vm1565, %v1573, %v1575
      %v1577 = vrot.slane %v1374, 2
      %v1578 = vsel %vm1565, %v1575, %v1577
      %v1579 = vrot.slane %v1375, 2
      %v1580 = vsel %vm1565, %v1577, %v1579
      %v1581 = vrot.slane %v1546, 2
      %v1582 = vsel %vm1565, %v1579, %v1581
      %v1591 = vunpack.c.l.b16 %v1548
      %v1592 = vunpack.c.l.b16 %v1549
      %v1593 = vunpack.c.l.b16 %v1550
      %v1594 = vunpack.c.l.b16 %v1551
      %v1595 = vunpack.c.l.b16 %v1552
      %v1596 = vunpack.c.l.b16 %v1553
      %v1597 = vunpack.c.l.b16 %v1554
      %v1598 = vunpack.c.l.b16 %v1555
      %v1599 = vpack.c.b16 %v1592, %v1591
      %v1600 = vpack.c.b16 %v1594, %v1593
      %v1601 = vpack.c.b16 %v1596, %v1595
      %v1602 = vpack.c.b16 %v1598, %v1597
      %v1608 = vsel %vm516, %v1568, 0
      %v1611 = vsel %vm516, %v1570, 0
      %v1614 = vsel %vm516, %v1572, 0
      %v1617 = vsel %vm516, %v1574, 0
      %v1620 = vsel %vm516, %v1576, 0
      %v1623 = vsel %vm516, %v1578, 0
      %v1626 = vsel %vm516, %v1580, 0
      %v1629 = vsel %vm516, %v1582, 0
      %1631 = vmatprep.subr.bf16.mxu0 0
      %1632 = vmatpush1.bf16.msra.mxu0 0
      %1633 = vmatprep.subr.bf16.mxu0 0
      %1634 = vmatpush1.bf16.msra.mxu0 0
      %1635 = vmatprep.subr.bf16.mxu0 0
      %1636 = vmatpush1.bf16.msra.mxu0 0
      %1637 = vmatprep.subr.bf16.mxu0 0
      %1638 = vmatpush1.bf16.msra.mxu0 0
      %1639 = vmatprep.subr.bf16.mxu0 0
      %1640 = vmatpush1.bf16.msra.mxu0 %v1602
      %1641 = vmatprep.subr.bf16.mxu0 0
      %1642 = vmatpush1.bf16.msra.mxu0 %v1601
      %1643 = vmatprep.subr.bf16.mxu0 0
      %1644 = vmatpush1.bf16.msra.mxu0 %v1600
      %1645 = vmatprep.subr.bf16.mxu0 0
      %1646 = vmatpush1.bf16.msra.mxu0 %v1599
      %1647 = vmatprep.subr.bf16.mxu0 0
      %1648 = vmatpush2.bf16.msra.mxu0 0
      %1649 = vmatprep.subr.bf16.mxu0 0
      %1650 = vmatpush2.bf16.msra.mxu0 0
      %1651 = vmatprep.subr.bf16.mxu0 0
      %1652 = vmatpush2.bf16.msra.mxu0 0
      %1653 = vmatprep.subr.bf16.mxu0 0
      %1654 = vmatpush2.bf16.msra.mxu0 0
      %1655 = vmatprep.subr.bf16.mxu0 0
      %1656 = vmatpush2.bf16.msra.mxu0 0
      %1657 = vmatprep.subr.bf16.mxu0 0
      %1658 = vmatpush2.bf16.msra.mxu0 0
      %1659 = vmatprep.subr.bf16.mxu0 0
      %1660 = vmatpush2.bf16.msra.mxu0 0
      %1661 = vmatprep.subr.bf16.mxu0 0
      %1662 = vmatpush2.bf16.msra.mxu0 0
      %1663 = vmatprep.mubr.bf16.mxu0 0
      %1664 = vmatmul.mubr.bf16.gmra.mxu0 %v1608
      %v1665 = vpop.f32.mrf.mxu0
      %v1666 = vadd.f32 0.0, %v1665
      %v1667 = vpop.f32.mrf.mxu0
      %v1668 = vpop.f32.mrf.mxu0
      %v1669 = vadd.f32 0.0, %v1668
      %v1670 = vpop.f32.mrf.mxu0
      %1671 = vmatprep.mubr.bf16.mxu0 0
      %1672 = vmatmul.mubr.bf16.gmra.mxu0 %v1611
      %v1673 = vpop.f32.mrf.mxu0
      %v1674 = vadd.f32 0.0, %v1673
      %v1675 = vpop.f32.mrf.mxu0
      %v1676 = vpop.f32.mrf.mxu0
      %v1677 = vadd.f32 0.0, %v1676
      %v1678 = vpop.f32.mrf.mxu0
      %1679 = vmatprep.mubr.bf16.mxu0 0
      %1680 = vmatmul.mubr.bf16.gmra.mxu0 %v1614
      %v1681 = vpop.f32.mrf.mxu0
      %v1682 = vadd.f32 0.0, %v1681
      %v1683 = vpop.f32.mrf.mxu0
      %v1684 = vpop.f32.mrf.mxu0
      %v1685 = vadd.f32 0.0, %v1684
      %v1686 = vpop.f32.mrf.mxu0
      %1687 = vmatprep.mubr.bf16.mxu0 0
      %1688 = vmatmul.mubr.bf16.gmra.mxu0 %v1617
      %v1689 = vpop.f32.mrf.mxu0
      %v1690 = vadd.f32 0.0, %v1689
      %v1691 = vpop.f32.mrf.mxu0
      %v1692 = vpop.f32.mrf.mxu0
      %v1693 = vadd.f32 0.0, %v1692
      %v1694 = vpop.f32.mrf.mxu0
      %1695 = vmatprep.mubr.bf16.mxu0 0
      %1696 = vmatmul.mubr.bf16.gmra.mxu0 %v1620
      %v1697 = vpop.f32.mrf.mxu0
      %v1698 = vadd.f32 0.0, %v1697
      %v1699 = vpop.f32.mrf.mxu0
      %v1700 = vpop.f32.mrf.mxu0
      %v1701 = vadd.f32 0.0, %v1700
      %v1702 = vpop.f32.mrf.mxu0
      %1703 = vmatprep.mubr.bf16.mxu0 0
      %1704 = vmatmul.mubr.bf16.gmra.mxu0 %v1623
      %v1705 = vpop.f32.mrf.mxu0
      %v1706 = vadd.f32 0.0, %v1705
      %v1707 = vpop.f32.mrf.mxu0
      %v1708 = vpop.f32.mrf.mxu0
      %v1709 = vadd.f32 0.0, %v1708
      %v1710 = vpop.f32.mrf.mxu0
      %1711 = vmatprep.mubr.bf16.mxu0 0
      %1712 = vmatmul.mubr.bf16.gmra.mxu0 %v1626
      %v1713 = vpop.f32.mrf.mxu0
      %v1714 = vadd.f32 0.0, %v1713
      %v1715 = vpop.f32.mrf.mxu0
      %v1716 = vpop.f32.mrf.mxu0
      %v1717 = vadd.f32 0.0, %v1716
      %v1718 = vpop.f32.mrf.mxu0
      %1719 = vmatprep.mubr.bf16.mxu0 0
      %1720 = vmatmul.mubr.bf16.gmra.mxu0 %v1629
      %v1721 = vpop.f32.mrf.mxu0
      %v1722 = vadd.f32 0.0, %v1721
      %v1723 = vpop.f32.mrf.mxu0
      %v1724 = vpop.f32.mrf.mxu0
      %v1725 = vadd.f32 0.0, %v1724
      %v1726 = vpop.f32.mrf.mxu0
      %1727 = vdwg.mxu0
      %v1728 = vadd.f32 %v1530, %v1666
      %v1729 = vadd.f32 %v1531, %v1669
      %v1730 = vadd.f32 %v1532, %v1674
      %v1731 = vadd.f32 %v1533, %v1677
      %v1732 = vadd.f32 %v1534, %v1682
      %v1733 = vadd.f32 %v1535, %v1685
      %v1734 = vadd.f32 %v1536, %v1690
      %v1735 = vadd.f32 %v1537, %v1693
      %v1736 = vadd.f32 %v1538, %v1698
      %v1737 = vadd.f32 %v1539, %v1701
      %v1738 = vadd.f32 %v1540, %v1706
      %v1739 = vadd.f32 %v1541, %v1709
      %v1740 = vadd.f32 %v1542, %v1714
      %v1741 = vadd.f32 %v1543, %v1717
      %v1742 = vadd.f32 %v1544, %v1722
      %v1743 = vadd.f32 %v1545, %v1725
      %s1744 = scalar_lea.vmem %s2, 224
      %v1745 = vld [vmem:[%s1744] sm:$0xf]
      %v1746 = vld [vmem:[%s1744 + $0x4] sm:$0xf]
      %v1747 = vld [vmem:[%s1744 + $0x8] sm:$0xf]
      %v1748 = vld [vmem:[%s1744 + $0xc] sm:$0xf]
      %v1749 = vld [vmem:[%s1744 + $0x10] sm:$0xf]
      %v1750 = vld [vmem:[%s1744 + $0x14] sm:$0xf]
      %v1751 = vld [vmem:[%s1744 + $0x18] sm:$0xf]
      %v1752 = vld [vmem:[%s1744 + $0x1c] sm:$0xf]
      %vm1753 = vsmask.f32 5376
      %v1754 = vshrl.u32 %v1368, 16
      %v1756 = vrot.slane %v1754, 2
      %v1757 = vshll.u32 %v1368, 16
      %v1759 = vrot.slane %v1757, 3
      %v1760 = vor.u32 %v1756, %v1759
      %v1761 = vshrl.u32 %v1369, 16
      %v1763 = vrot.slane %v1761, 2
      %v1764 = vshll.u32 %v1369, 16
      %v1766 = vrot.slane %v1764, 3
      %v1767 = vor.u32 %v1763, %v1766
      %v1768 = vsel %vm1753, %v1760, %v1767
      %v1769 = vshrl.u32 %v1370, 16
      %v1771 = vrot.slane %v1769, 2
      %v1772 = vshll.u32 %v1370, 16
      %v1774 = vrot.slane %v1772, 3
      %v1775 = vor.u32 %v1771, %v1774
      %v1776 = vsel %vm1753, %v1767, %v1775
      %v1777 = vshrl.u32 %v1371, 16
      %v1779 = vrot.slane %v1777, 2
      %v1780 = vshll.u32 %v1371, 16
      %v1782 = vrot.slane %v1780, 3
      %v1783 = vor.u32 %v1779, %v1782
      %v1784 = vsel %vm1753, %v1775, %v1783
      %v1785 = vshrl.u32 %v1372, 16
      %v1787 = vrot.slane %v1785, 2
      %v1788 = vshll.u32 %v1372, 16
      %v1790 = vrot.slane %v1788, 3
      %v1791 = vor.u32 %v1787, %v1790
      %v1792 = vsel %vm1753, %v1783, %v1791
      %v1793 = vshrl.u32 %v1373, 16
      %v1795 = vrot.slane %v1793, 2
      %v1796 = vshll.u32 %v1373, 16
      %v1798 = vrot.slane %v1796, 3
      %v1799 = vor.u32 %v1795, %v1798
      %v1800 = vsel %vm1753, %v1791, %v1799
      %v1801 = vshrl.u32 %v1374, 16
      %v1803 = vrot.slane %v1801, 2
      %v1804 = vshll.u32 %v1374, 16
      %v1806 = vrot.slane %v1804, 3
      %v1807 = vor.u32 %v1803, %v1806
      %v1808 = vsel %vm1753, %v1799, %v1807
      %v1809 = vshrl.u32 %v1375, 16
      %v1811 = vrot.slane %v1809, 2
      %v1812 = vshll.u32 %v1375, 16
      %v1814 = vrot.slane %v1812, 3
      %v1815 = vor.u32 %v1811, %v1814
      %v1816 = vsel %vm1753, %v1807, %v1815
      %v1818 = vshrl.u32 %v1546, 16
      %v1820 = vrot.slane %v1818, 2
      %v1821 = vshll.u32 %v1546, 16
      %v1823 = vrot.slane %v1821, 3
      %v1824 = vor.u32 %v1820, %v1823
      %v1825 = vsel %vm1753, %v1815, %v1824
      %v1834 = vunpack.c.l.b16 %v1745
      %v1835 = vunpack.c.l.b16 %v1746
      %v1836 = vunpack.c.l.b16 %v1747
      %v1837 = vunpack.c.l.b16 %v1748
      %v1838 = vunpack.c.l.b16 %v1749
      %v1839 = vunpack.c.l.b16 %v1750
      %v1840 = vunpack.c.l.b16 %v1751
      %v1841 = vunpack.c.l.b16 %v1752
      %v1842 = vpack.c.b16 %v1835, %v1834
      %v1843 = vpack.c.b16 %v1837, %v1836
      %v1844 = vpack.c.b16 %v1839, %v1838
      %v1845 = vpack.c.b16 %v1841, %v1840
      %v1851 = vsel %vm516, %v1768, 0
      %v1854 = vsel %vm516, %v1776, 0
      %v1857 = vsel %vm516, %v1784, 0
      %v1860 = vsel %vm516, %v1792, 0
      %v1863 = vsel %vm516, %v1800, 0
      %v1866 = vsel %vm516, %v1808, 0
      %v1869 = vsel %vm516, %v1816, 0
      %v1872 = vsel %vm516, %v1825, 0
      %1874 = vmatprep.subr.bf16.mxu0 0
      %1875 = vmatpush1.bf16.msra.mxu0 0
      %1876 = vmatprep.subr.bf16.mxu0 0
      %1877 = vmatpush1.bf16.msra.mxu0 0
      %1878 = vmatprep.subr.bf16.mxu0 0
      %1879 = vmatpush1.bf16.msra.mxu0 0
      %1880 = vmatprep.subr.bf16.mxu0 0
      %1881 = vmatpush1.bf16.msra.mxu0 0
      %1882 = vmatprep.subr.bf16.mxu0 0
      %1883 = vmatpush1.bf16.msra.mxu0 %v1845
      %1884 = vmatprep.subr.bf16.mxu0 0
      %1885 = vmatpush1.bf16.msra.mxu0 %v1844
      %1886 = vmatprep.subr.bf16.mxu0 0
      %1887 = vmatpush1.bf16.msra.mxu0 %v1843
      %1888 = vmatprep.subr.bf16.mxu0 0
      %1889 = vmatpush1.bf16.msra.mxu0 %v1842
      %1890 = vmatprep.subr.bf16.mxu0 0
      %1891 = vmatpush2.bf16.msra.mxu0 0
      %1892 = vmatprep.subr.bf16.mxu0 0
      %1893 = vmatpush2.bf16.msra.mxu0 0
      %1894 = vmatprep.subr.bf16.mxu0 0
      %1895 = vmatpush2.bf16.msra.mxu0 0
      %1896 = vmatprep.subr.bf16.mxu0 0
      %1897 = vmatpush2.bf16.msra.mxu0 0
      %1898 = vmatprep.subr.bf16.mxu0 0
      %1899 = vmatpush2.bf16.msra.mxu0 0
      %1900 = vmatprep.subr.bf16.mxu0 0
      %1901 = vmatpush2.bf16.msra.mxu0 0
      %1902 = vmatprep.subr.bf16.mxu0 0
      %1903 = vmatpush2.bf16.msra.mxu0 0
      %1904 = vmatprep.subr.bf16.mxu0 0
      %1905 = vmatpush2.bf16.msra.mxu0 0
      %1906 = vmatprep.mubr.bf16.mxu0 0
      %1907 = vmatmul.mubr.bf16.gmra.mxu0 %v1851
      %v1908 = vpop.f32.mrf.mxu0
      %v1909 = vadd.f32 0.0, %v1908
      %v1910 = vpop.f32.mrf.mxu0
      %v1911 = vpop.f32.mrf.mxu0
      %v1912 = vadd.f32 0.0, %v1911
      %v1913 = vpop.f32.mrf.mxu0
      %1914 = vmatprep.mubr.bf16.mxu0 0
      %1915 = vmatmul.mubr.bf16.gmra.mxu0 %v1854
      %v1916 = vpop.f32.mrf.mxu0
      %v1917 = vadd.f32 0.0, %v1916
      %v1918 = vpop.f32.mrf.mxu0
      %v1919 = vpop.f32.mrf.mxu0
      %v1920 = vadd.f32 0.0, %v1919
      %v1921 = vpop.f32.mrf.mxu0
      %1922 = vmatprep.mubr.bf16.mxu0 0
      %1923 = vmatmul.mubr.bf16.gmra.mxu0 %v1857
      %v1924 = vpop.f32.mrf.mxu0
      %v1925 = vadd.f32 0.0, %v1924
      %v1926 = vpop.f32.mrf.mxu0
      %v1927 = vpop.f32.mrf.mxu0
      %v1928 = vadd.f32 0.0, %v1927
      %v1929 = vpop.f32.mrf.mxu0
      %1930 = vmatprep.mubr.bf16.mxu0 0
      %1931 = vmatmul.mubr.bf16.gmra.mxu0 %v1860
      %v1932 = vpop.f32.mrf.mxu0
      %v1933 = vadd.f32 0.0, %v1932
      %v1934 = vpop.f32.mrf.mxu0
      %v1935 = vpop.f32.mrf.mxu0
      %v1936 = vadd.f32 0.0, %v1935
      %v1937 = vpop.f32.mrf.mxu0
      %1938 = vmatprep.mubr.bf16.mxu0 0
      %1939 = vmatmul.mubr.bf16.gmra.mxu0 %v1863
      %v1940 = vpop.f32.mrf.mxu0
      %v1941 = vadd.f32 0.0, %v1940
      %v1942 = vpop.f32.mrf.mxu0
      %v1943 = vpop.f32.mrf.mxu0
      %v1944 = vadd.f32 0.0, %v1943
      %v1945 = vpop.f32.mrf.mxu0
      %1946 = vmatprep.mubr.bf16.mxu0 0
      %1947 = vmatmul.mubr.bf16.gmra.mxu0 %v1866
      %v1948 = vpop.f32.mrf.mxu0
      %v1949 = vadd.f32 0.0, %v1948
      %v1950 = vpop.f32.mrf.mxu0
      %v1951 = vpop.f32.mrf.mxu0
      %v1952 = vadd.f32 0.0, %v1951
      %v1953 = vpop.f32.mrf.mxu0
      %1954 = vmatprep.mubr.bf16.mxu0 0
      %1955 = vmatmul.mubr.bf16.gmra.mxu0 %v1869
      %v1956 = vpop.f32.mrf.mxu0
      %v1957 = vadd.f32 0.0, %v1956
      %v1958 = vpop.f32.mrf.mxu0
      %v1959 = vpop.f32.mrf.mxu0
      %v1960 = vadd.f32 0.0, %v1959
      %v1961 = vpop.f32.mrf.mxu0
      %1962 = vmatprep.mubr.bf16.mxu0 0
      %1963 = vmatmul.mubr.bf16.gmra.mxu0 %v1872
      %v1964 = vpop.f32.mrf.mxu0
      %v1965 = vadd.f32 0.0, %v1964
      %v1966 = vpop.f32.mrf.mxu0
      %v1967 = vpop.f32.mrf.mxu0
      %v1968 = vadd.f32 0.0, %v1967
      %v1969 = vpop.f32.mrf.mxu0
      %1970 = vdwg.mxu0
      %v1971 = vadd.f32 %v1728, %v1909
      %v1972 = vadd.f32 %v1729, %v1912
      %v1973 = vadd.f32 %v1730, %v1917
      %v1974 = vadd.f32 %v1731, %v1920
      %v1975 = vadd.f32 %v1732, %v1925
      %v1976 = vadd.f32 %v1733, %v1928
      %v1977 = vadd.f32 %v1734, %v1933
      %v1978 = vadd.f32 %v1735, %v1936
      %v1979 = vadd.f32 %v1736, %v1941
      %v1980 = vadd.f32 %v1737, %v1944
      %v1981 = vadd.f32 %v1738, %v1949
      %v1982 = vadd.f32 %v1739, %v1952
      %v1983 = vadd.f32 %v1740, %v1957
      %v1984 = vadd.f32 %v1741, %v1960
      %v1985 = vadd.f32 %v1742, %v1965
      %v1986 = vadd.f32 %v1743, %v1968
      %s1987 = scalar_lea.vmem %s2, 256
      %v1988 = vld [vmem:[%s1987] sm:$0xf]
      %v1989 = vld [vmem:[%s1987 + $0x4] sm:$0xf]
      %v1990 = vld [vmem:[%s1987 + $0x8] sm:$0xf]
      %v1991 = vld [vmem:[%s1987 + $0xc] sm:$0xf]
      %v1992 = vld [vmem:[%s1987 + $0x10] sm:$0xf]
      %v1993 = vld [vmem:[%s1987 + $0x14] sm:$0xf]
      %v1994 = vld [vmem:[%s1987 + $0x18] sm:$0xf]
      %v1995 = vld [vmem:[%s1987 + $0x1c] sm:$0xf]
      %v1996 = vrot.slane %v1368, 3
      %v1997 = vrot.slane %v1369, 3
      %v1998 = vsel %vm981, %v1996, %v1997
      %v1999 = vrot.slane %v1370, 3
      %v2000 = vsel %vm981, %v1997, %v1999
      %v2001 = vrot.slane %v1371, 3
      %v2002 = vsel %vm981, %v1999, %v2001
      %v2003 = vrot.slane %v1372, 3
      %v2004 = vsel %vm981, %v2001, %v2003
      %v2005 = vrot.slane %v1373, 3
      %v2006 = vsel %vm981, %v2003, %v2005
      %v2007 = vrot.slane %v1374, 3
      %v2008 = vsel %vm981, %v2005, %v2007
      %v2009 = vrot.slane %v1375, 3
      %v2010 = vsel %vm981, %v2007, %v2009
      %v2011 = vrot.slane %v1546, 3
      %v2012 = vsel %vm981, %v2009, %v2011
      %v2021 = vunpack.c.l.b16 %v1988
      %v2022 = vunpack.c.l.b16 %v1989
      %v2023 = vunpack.c.l.b16 %v1990
      %v2024 = vunpack.c.l.b16 %v1991
      %v2025 = vunpack.c.l.b16 %v1992
      %v2026 = vunpack.c.l.b16 %v1993
      %v2027 = vunpack.c.l.b16 %v1994
      %v2028 = vunpack.c.l.b16 %v1995
      %v2029 = vpack.c.b16 %v2022, %v2021
      %v2030 = vpack.c.b16 %v2024, %v2023
      %v2031 = vpack.c.b16 %v2026, %v2025
      %v2032 = vpack.c.b16 %v2028, %v2027
      %v2038 = vsel %vm516, %v1998, 0
      %v2041 = vsel %vm516, %v2000, 0
      %v2044 = vsel %vm516, %v2002, 0
      %v2047 = vsel %vm516, %v2004, 0
      %v2050 = vsel %vm516, %v2006, 0
      %v2053 = vsel %vm516, %v2008, 0
      %v2056 = vsel %vm516, %v2010, 0
      %v2059 = vsel %vm516, %v2012, 0
      %2061 = vmatprep.subr.bf16.mxu0 0
      %2062 = vmatpush1.bf16.msra.mxu0 0
      %2063 = vmatprep.subr.bf16.mxu0 0
      %2064 = vmatpush1.bf16.msra.mxu0 0
      %2065 = vmatprep.subr.bf16.mxu0 0
      %2066 = vmatpush1.bf16.msra.mxu0 0
      %2067 = vmatprep.subr.bf16.mxu0 0
      %2068 = vmatpush1.bf16.msra.mxu0 0
      %2069 = vmatprep.subr.bf16.mxu0 0
      %2070 = vmatpush1.bf16.msra.mxu0 %v2032
      %2071 = vmatprep.subr.bf16.mxu0 0
      %2072 = vmatpush1.bf16.msra.mxu0 %v2031
      %2073 = vmatprep.subr.bf16.mxu0 0
      %2074 = vmatpush1.bf16.msra.mxu0 %v2030
      %2075 = vmatprep.subr.bf16.mxu0 0
      %2076 = vmatpush1.bf16.msra.mxu0 %v2029
      %2077 = vmatprep.subr.bf16.mxu0 0
      %2078 = vmatpush2.bf16.msra.mxu0 0
      %2079 = vmatprep.subr.bf16.mxu0 0
      %2080 = vmatpush2.bf16.msra.mxu0 0
      %2081 = vmatprep.subr.bf16.mxu0 0
      %2082 = vmatpush2.bf16.msra.mxu0 0
      %2083 = vmatprep.subr.bf16.mxu0 0
      %2084 = vmatpush2.bf16.msra.mxu0 0
      %2085 = vmatprep.subr.bf16.mxu0 0
      %2086 = vmatpush2.bf16.msra.mxu0 0
      %2087 = vmatprep.subr.bf16.mxu0 0
      %2088 = vmatpush2.bf16.msra.mxu0 0
      %2089 = vmatprep.subr.bf16.mxu0 0
      %2090 = vmatpush2.bf16.msra.mxu0 0
      %2091 = vmatprep.subr.bf16.mxu0 0
      %2092 = vmatpush2.bf16.msra.mxu0 0
      %2093 = vmatprep.mubr.bf16.mxu0 0
      %2094 = vmatmul.mubr.bf16.gmra.mxu0 %v2038
      %v2095 = vpop.f32.mrf.mxu0
      %v2096 = vadd.f32 0.0, %v2095
      %v2097 = vpop.f32.mrf.mxu0
      %v2098 = vpop.f32.mrf.mxu0
      %v2099 = vadd.f32 0.0, %v2098
      %v2100 = vpop.f32.mrf.mxu0
      %2101 = vmatprep.mubr.bf16.mxu0 0
      %2102 = vmatmul.mubr.bf16.gmra.mxu0 %v2041
      %v2103 = vpop.f32.mrf.mxu0
      %v2104 = vadd.f32 0.0, %v2103
      %v2105 = vpop.f32.mrf.mxu0
      %v2106 = vpop.f32.mrf.mxu0
      %v2107 = vadd.f32 0.0, %v2106
      %v2108 = vpop.f32.mrf.mxu0
      %2109 = vmatprep.mubr.bf16.mxu0 0
      %2110 = vmatmul.mubr.bf16.gmra.mxu0 %v2044
      %v2111 = vpop.f32.mrf.mxu0
      %v2112 = vadd.f32 0.0, %v2111
      %v2113 = vpop.f32.mrf.mxu0
      %v2114 = vpop.f32.mrf.mxu0
      %v2115 = vadd.f32 0.0, %v2114
      %v2116 = vpop.f32.mrf.mxu0
      %2117 = vmatprep.mubr.bf16.mxu0 0
      %2118 = vmatmul.mubr.bf16.gmra.mxu0 %v2047
      %v2119 = vpop.f32.mrf.mxu0
      %v2120 = vadd.f32 0.0, %v2119
      %v2121 = vpop.f32.mrf.mxu0
      %v2122 = vpop.f32.mrf.mxu0
      %v2123 = vadd.f32 0.0, %v2122
      %v2124 = vpop.f32.mrf.mxu0
      %2125 = vmatprep.mubr.bf16.mxu0 0
      %2126 = vmatmul.mubr.bf16.gmra.mxu0 %v2050
      %v2127 = vpop.f32.mrf.mxu0
      %v2128 = vadd.f32 0.0, %v2127
      %v2129 = vpop.f32.mrf.mxu0
      %v2130 = vpop.f32.mrf.mxu0
      %v2131 = vadd.f32 0.0, %v2130
      %v2132 = vpop.f32.mrf.mxu0
      %2133 = vmatprep.mubr.bf16.mxu0 0
      %2134 = vmatmul.mubr.bf16.gmra.mxu0 %v2053
      %v2135 = vpop.f32.mrf.mxu0
      %v2136 = vadd.f32 0.0, %v2135
      %v2137 = vpop.f32.mrf.mxu0
      %v2138 = vpop.f32.mrf.mxu0
      %v2139 = vadd.f32 0.0, %v2138
      %v2140 = vpop.f32.mrf.mxu0
      %2141 = vmatprep.mubr.bf16.mxu0 0
      %2142 = vmatmul.mubr.bf16.gmra.mxu0 %v2056
      %v2143 = vpop.f32.mrf.mxu0
      %v2144 = vadd.f32 0.0, %v2143
      %v2145 = vpop.f32.mrf.mxu0
      %v2146 = vpop.f32.mrf.mxu0
      %v2147 = vadd.f32 0.0, %v2146
      %v2148 = vpop.f32.mrf.mxu0
      %2149 = vmatprep.mubr.bf16.mxu0 0
      %2150 = vmatmul.mubr.bf16.gmra.mxu0 %v2059
      %v2151 = vpop.f32.mrf.mxu0
      %v2152 = vadd.f32 0.0, %v2151
      %v2153 = vpop.f32.mrf.mxu0
      %v2154 = vpop.f32.mrf.mxu0
      %v2155 = vadd.f32 0.0, %v2154
      %v2156 = vpop.f32.mrf.mxu0
      %2157 = vdwg.mxu0
      %v2158 = vadd.f32 %v1971, %v2096
      %v2159 = vadd.f32 %v1972, %v2099
      %v2160 = vadd.f32 %v1973, %v2104
      %v2161 = vadd.f32 %v1974, %v2107
      %v2162 = vadd.f32 %v1975, %v2112
      %v2163 = vadd.f32 %v1976, %v2115
      %v2164 = vadd.f32 %v1977, %v2120
      %v2165 = vadd.f32 %v1978, %v2123
      %v2166 = vadd.f32 %v1979, %v2128
      %v2167 = vadd.f32 %v1980, %v2131
      %v2168 = vadd.f32 %v1981, %v2136
      %v2169 = vadd.f32 %v1982, %v2139
      %v2170 = vadd.f32 %v1983, %v2144
      %v2171 = vadd.f32 %v1984, %v2147
      %v2172 = vadd.f32 %v1985, %v2152
      %v2173 = vadd.f32 %v1986, %v2155
      %v2174 = vld [vmem:[%s3] sm:$0x1]
      %v2176 = vlaneseq
      %v2177 = vshrl.u32 %v2176, 7
      %v2178 = vsub.s32 0, %v2177
      %v2179 = vrot.slane %v2174, %v2178
      %v2181 = vmul.f32 %v2158, %v2179
      %v2182 = vmul.f32 %v2159, %v2179
      %v2183 = vmul.f32 %v2160, %v2179
      %v2184 = vmul.f32 %v2161, %v2179
      %v2185 = vmul.f32 %v2162, %v2179
      %v2186 = vmul.f32 %v2163, %v2179
      %v2187 = vmul.f32 %v2164, %v2179
      %v2188 = vmul.f32 %v2165, %v2179
      %v2189 = vmul.f32 %v2166, %v2179
      %v2190 = vmul.f32 %v2167, %v2179
      %v2191 = vmul.f32 %v2168, %v2179
      %v2192 = vmul.f32 %v2169, %v2179
      %v2193 = vmul.f32 %v2170, %v2179
      %v2194 = vmul.f32 %v2171, %v2179
      %v2195 = vmul.f32 %v2172, %v2179
      %v2196 = vmul.f32 %v2173, %v2179
      %v2197 = vld [vmem:[%s4] sm:$0x1]
      %v2199 = vlaneseq
      %v2200 = vshrl.u32 %v2199, 7
      %v2201 = vsub.s32 0, %v2200
      %v2202 = vrot.slane %v2197, %v2201
      %v2204 = vadd.f32 %v2181, %v2202
      %v2205 = vadd.f32 %v2182, %v2202
      %v2206 = vadd.f32 %v2183, %v2202
      %v2207 = vadd.f32 %v2184, %v2202
      %v2208 = vadd.f32 %v2185, %v2202
      %v2209 = vadd.f32 %v2186, %v2202
      %v2210 = vadd.f32 %v2187, %v2202
      %v2211 = vadd.f32 %v2188, %v2202
      %v2212 = vadd.f32 %v2189, %v2202
      %v2213 = vadd.f32 %v2190, %v2202
      %v2214 = vadd.f32 %v2191, %v2202
      %v2215 = vadd.f32 %v2192, %v2202
      %v2216 = vadd.f32 %v2193, %v2202
      %v2217 = vadd.f32 %v2194, %v2202
      %v2218 = vadd.f32 %v2195, %v2202
      %v2219 = vadd.f32 %v2196, %v2202
      %v2220 = vld [vmem:[%s298] sm:$0xf]
      %v2221 = vld [vmem:[%s298 + $0x4] sm:$0xf]
      %v2222 = vld [vmem:[%s298 + $0x8] sm:$0xf]
      %v2223 = vld [vmem:[%s298 + $0xc] sm:$0xf]
      %v2224 = vld [vmem:[%s298 + $0x10] sm:$0xf]
      %v2225 = vld [vmem:[%s298 + $0x14] sm:$0xf]
      %v2226 = vld [vmem:[%s298 + $0x18] sm:$0xf]
      %v2227 = vld [vmem:[%s298 + $0x1c] sm:$0xf]
      %v2228 = vld [vmem:[%s298 + $0x20] sm:$0xf]
      %v2229 = vld [vmem:[%s298 + $0x24] sm:$0xf]
      %v2230 = vld [vmem:[%s298 + $0x28] sm:$0xf]
      %v2231 = vld [vmem:[%s298 + $0x2c] sm:$0xf]
      %v2232 = vld [vmem:[%s298 + $0x30] sm:$0xf]
      %v2233 = vld [vmem:[%s298 + $0x34] sm:$0xf]
      %v2234 = vld [vmem:[%s298 + $0x38] sm:$0xf]
      %v2235 = vld [vmem:[%s298 + $0x3c] sm:$0xf]
      %v2236 = vunpack.c.l.bf16 %v2220
      %v2237 = vunpack.c.l.bf16 %v2221
      %v2238 = vunpack.c.l.bf16 %v2222
      %v2239 = vunpack.c.l.bf16 %v2223
      %v2240 = vunpack.c.l.bf16 %v2224
      %v2241 = vunpack.c.l.bf16 %v2225
      %v2242 = vunpack.c.l.bf16 %v2226
      %v2243 = vunpack.c.l.bf16 %v2227
      %v2244 = vunpack.c.l.bf16 %v2228
      %v2245 = vunpack.c.l.bf16 %v2229
      %v2246 = vunpack.c.l.bf16 %v2230
      %v2247 = vunpack.c.l.bf16 %v2231
      %v2248 = vunpack.c.l.bf16 %v2232
      %v2249 = vunpack.c.l.bf16 %v2233
      %v2250 = vunpack.c.l.bf16 %v2234
      %v2251 = vunpack.c.l.bf16 %v2235
      %v2252 = vadd.f32 %v2204, %v2236
      %v2253 = vadd.f32 %v2205, %v2237
      %v2254 = vadd.f32 %v2206, %v2238
      %v2255 = vadd.f32 %v2207, %v2239
      %v2256 = vadd.f32 %v2208, %v2240
      %v2257 = vadd.f32 %v2209, %v2241
      %v2258 = vadd.f32 %v2210, %v2242
      %v2259 = vadd.f32 %v2211, %v2243
      %v2260 = vadd.f32 %v2212, %v2244
      %v2261 = vadd.f32 %v2213, %v2245
      %v2262 = vadd.f32 %v2214, %v2246
      %v2263 = vadd.f32 %v2215, %v2247
      %v2264 = vadd.f32 %v2216, %v2248
      %v2265 = vadd.f32 %v2217, %v2249
      %v2266 = vadd.f32 %v2218, %v2250
      %v2267 = vadd.f32 %v2219, %v2251
      %v2268 = vmax.f32 %v2252, 0.0
      %v2269 = vmax.f32 %v2253, 0.0
      %v2270 = vmax.f32 %v2254, 0.0
      %v2271 = vmax.f32 %v2255, 0.0
      %v2272 = vmax.f32 %v2256, 0.0
      %v2273 = vmax.f32 %v2257, 0.0
      %v2274 = vmax.f32 %v2258, 0.0
      %v2275 = vmax.f32 %v2259, 0.0
      %v2276 = vmax.f32 %v2260, 0.0
      %v2277 = vmax.f32 %v2261, 0.0
      %v2278 = vmax.f32 %v2262, 0.0
      %v2279 = vmax.f32 %v2263, 0.0
      %v2280 = vmax.f32 %v2264, 0.0
      %v2281 = vmax.f32 %v2265, 0.0
      %v2282 = vmax.f32 %v2266, 0.0
      %v2283 = vmax.f32 %v2267, 0.0
      %v2284 = vpack.c.bf16 %v2269, %v2268
      %v2285 = vpack.c.bf16 %v2271, %v2270
      %v2286 = vpack.c.bf16 %v2273, %v2272
      %v2287 = vpack.c.bf16 %v2275, %v2274
      %v2288 = vpack.c.bf16 %v2277, %v2276
      %v2289 = vpack.c.bf16 %v2279, %v2278
      %v2290 = vpack.c.bf16 %v2281, %v2280
      %v2291 = vpack.c.bf16 %v2283, %v2282
      %v2300 = vunpack.c.l.b16 %v2284
      %v2301 = vunpack.c.h.b16 %v2284
      %v2302 = vunpack.c.l.b16 %v2285
      %v2303 = vunpack.c.h.b16 %v2285
      %v2304 = vunpack.c.l.b16 %v2286
      %v2305 = vunpack.c.h.b16 %v2286
      %v2306 = vunpack.c.l.b16 %v2287
      %v2307 = vunpack.c.h.b16 %v2287
      %v2308 = vunpack.c.l.b16 %v2288
      %v2309 = vunpack.c.h.b16 %v2288
      %v2310 = vunpack.c.l.b16 %v2289
      %v2311 = vunpack.c.h.b16 %v2289
      %v2312 = vunpack.c.l.b16 %v2290
      %v2313 = vunpack.c.h.b16 %v2290
      %v2314 = vunpack.c.l.b16 %v2291
      %v2315 = vunpack.c.h.b16 %v2291
      %v2316 = vpack.c.b16 %v2300, %v2300
      %v2317 = vpack.c.b16 %v2301, %v2301
      %v2318 = vpack.c.b16 %v2302, %v2302
      %v2319 = vpack.c.b16 %v2303, %v2303
      %v2320 = vpack.c.b16 %v2304, %v2304
      %v2321 = vpack.c.b16 %v2305, %v2305
      %v2322 = vpack.c.b16 %v2306, %v2306
      %v2323 = vpack.c.b16 %v2307, %v2307
      %v2324 = vpack.c.b16 %v2308, %v2308
      %v2325 = vpack.c.b16 %v2309, %v2309
      %v2326 = vpack.c.b16 %v2310, %v2310
      %v2327 = vpack.c.b16 %v2311, %v2311
      %v2328 = vpack.c.b16 %v2312, %v2312
      %v2329 = vpack.c.b16 %v2313, %v2313
      %v2330 = vpack.c.b16 %v2314, %v2314
      %v2331 = vpack.c.b16 %v2315, %v2315
      %vm2348 = vcmask 519168
      %2349 = vst.msk [vmem:[%s304] sm:$0xf] %vm2348, %v2316
      %2350 = vst.msk [vmem:[%s304 + $0x4] sm:$0xf] %vm2348, %v2317
      %2351 = vst.msk [vmem:[%s304 + $0x8] sm:$0xf] %vm2348, %v2318
      %2352 = vst.msk [vmem:[%s304 + $0xc] sm:$0xf] %vm2348, %v2319
      %2353 = vst.msk [vmem:[%s304 + $0x10] sm:$0xf] %vm2348, %v2320
      %2354 = vst.msk [vmem:[%s304 + $0x14] sm:$0xf] %vm2348, %v2321
      %2355 = vst.msk [vmem:[%s304 + $0x18] sm:$0xf] %vm2348, %v2322
      %2356 = vst.msk [vmem:[%s304 + $0x1c] sm:$0xf] %vm2348, %v2323
      %2357 = vst.msk [vmem:[%s304 + $0x20] sm:$0xf] %vm2348, %v2324
      %2358 = vst.msk [vmem:[%s304 + $0x24] sm:$0xf] %vm2348, %v2325
      %2359 = vst.msk [vmem:[%s304 + $0x28] sm:$0xf] %vm2348, %v2326
      %2360 = vst.msk [vmem:[%s304 + $0x2c] sm:$0xf] %vm2348, %v2327
      %2361 = vst.msk [vmem:[%s304 + $0x30] sm:$0xf] %vm2348, %v2328
      %2362 = vst.msk [vmem:[%s304 + $0x34] sm:$0xf] %vm2348, %v2329
      %2363 = vst.msk [vmem:[%s304 + $0x38] sm:$0xf] %vm2348, %v2330
      %2364 = vst.msk [vmem:[%s304 + $0x3c] sm:$0xf] %vm2348, %v2331
      %s2365 = smul.u32 16, %s17
      %p2366 = scmp.lt.s32.totalorder %s2365, 31
      %s2367 = scalar_select %p2366, %s2365, 31
      %s2368 = smul.addr %s2367, 4
      %s2369 = scalar_lea.vmem %s6, %s2368
      // Predicated region
      $region45: #{resnet_forward.15} parent=43 // pred_check
        %p2370 = pneg %p178
      $region46: #{resnet_forward.15} parent=43 // pred_check_branch
        %2372 = sbr.rel (%p2370) target = $region48
      $region47: #{resnet_forward.15} parent=43 // pred_region
        %s2373 = smul.u32 16, %s17
      $region48: #{resnet_forward.15} parent=43 // pred_fallthru
        _
    $region44: #{resnet_forward.15} parent=5 // pred_fallthru
      _
    %p2374 = scmp.le.s32.totalorder 2, %s12
    // Predicated region
    $region49: #{resnet_forward.15} parent=5 // pred_check
      %p2375 = pneg %p2374
    $region50: #{resnet_forward.15} parent=5 // pred_check_branch
      %2377 = sbr.rel (%p2375) target = $region52
    $region51: #{resnet_forward.15} parent=5 // pred_region
      %s2378 = ssub.s32 %s12, 2
      // Predicated region
      $region53: #{resnet_forward.15} parent=51 // pred_check
        %p2379 = pneg %p184
      $region54: #{resnet_forward.15} parent=51 // pred_check_branch
        %2381 = sbr.rel (%p2379) target = $region56
      $region55: #{resnet_forward.15} parent=51 // pred_region
        %s2382 = smul.u32 16, %s18
        %p2383 = scmp.lt.s32.totalorder %s2382, 31
        %s2384 = scalar_select %p2383, %s2382, 31
        %s2385 = smul.addr %s2384, 4
        %s2386 = scalar_lea.vmem %s6, %s2385
      $region56: #{resnet_forward.15} parent=51 // pred_fallthru
        _
    $region52: #{resnet_forward.15} parent=5 // pred_fallthru
      _
  $region6: #{resnet_forward.15} parent=0 // loop_footer
    %s16 = sadd.s32 1, %s12
  $region7: #{resnet_forward.15} parent=0 // loop_footer_branch
    %11 = sbr.rel target = $region3
  $region8: #{resnet_forward.15} parent=0 // loop_exit
    _

// kernel: resnet_forward.19
$region0: #{resnet_forward.19}
  #allocation0 [shape = 'u32[]', space=smem, size = 0x4, offset = 0x4, fixed_abs, tag = 'smem constant byte address 0x4 - core index']
  #allocation1 [shape = 'u32[144,128]{1,0:T(1,128)}', space=vmem, size = 0x12000, scoped, tag = 'internal scratch']
  %s0 = inlined_call_operand.vmem [shape: bf16[128,576], index: 0, kind: input, shape index: {}]
  %s1 = inlined_call_operand.vmem [shape: bf16[576,128], index: 1, kind: input, shape index: {}]
  %s2 = inlined_call_operand.vmem [shape: f32[1,128], index: 2, kind: input, shape index: {}]
  %s3 = inlined_call_operand.vmem [shape: f32[1,128], index: 3, kind: input, shape index: {}]
  %s4 = inlined_call_operand.vmem [shape: bf16[128,128], index: 4, kind: output, shape index: {}]
  %s5 = sld [smem:[#allocation0]]
  $region26: #{resnet_forward.19} parent=0
    _
  %s7 = ssub.s32 1, %s5
  %s8 = scalar_select 0, %s7, %s5
  // Predicated region
  $region2: #{resnet_forward.19} parent=0 // pred_check
    _
  $region3: #{resnet_forward.19} parent=0 // pred_check_branch
    %10 = sbr.rel (0) target = $region5
  $region4: #{resnet_forward.19} parent=0 // pred_region
    _
  $region5: #{resnet_forward.19} parent=0 // pred_fallthru
    _
  // Predicated region
  $region6: #{resnet_forward.19} parent=0 // pred_check
    _
  $region7: #{resnet_forward.19} parent=0 // pred_check_branch
    %12 = sbr.rel (0) target = $region9
  $region8: #{resnet_forward.19} parent=0 // pred_region
    _
  $region9: #{resnet_forward.19} parent=0 // pred_fallthru
    _
  // Predicated region
  $region10: #{resnet_forward.19} parent=0 // pred_check
    _
  $region11: #{resnet_forward.19} parent=0 // pred_check_branch
    %14 = sbr.rel (0) target = $region13
  $region12: #{resnet_forward.19} parent=0 // pred_region
    _
  $region13: #{resnet_forward.19} parent=0 // pred_fallthru
    _
  // Predicated region
  $region14: #{resnet_forward.19} parent=0 // pred_check
    _
  $region15: #{resnet_forward.19} parent=0 // pred_check_branch
    %16 = sbr.rel (0) target = $region17
  $region16: #{resnet_forward.19} parent=0 // pred_region
    _
  $region17: #{resnet_forward.19} parent=0 // pred_fallthru
    _
  %v18 = vld [vmem:[%s0] sm:$0xff]
  %v19 = vld [vmem:[%s0 + $0x8] sm:$0xff]
  %v20 = vld [vmem:[%s0 + $0x10] sm:$0xf]
  %v21 = vld [vmem:[%s0 + $0x14] sm:$0xff]
  %v22 = vld [vmem:[%s0 + $0x1c] sm:$0xff]
  %v23 = vld [vmem:[%s0 + $0x24] sm:$0xf]
  %v24 = vld [vmem:[%s0 + $0x28] sm:$0xff]
  %v25 = vld [vmem:[%s0 + $0x30] sm:$0xff]
  %v26 = vld [vmem:[%s0 + $0x38] sm:$0xf]
  %v27 = vld [vmem:[%s0 + $0x3c] sm:$0xff]
  %v28 = vld [vmem:[%s0 + $0x44] sm:$0xff]
  %v29 = vld [vmem:[%s0 + $0x4c] sm:$0xf]
  %v30 = vld [vmem:[%s0 + $0x50] sm:$0xff]
  %v31 = vld [vmem:[%s0 + $0x58] sm:$0xff]
  %v32 = vld [vmem:[%s0 + $0x60] sm:$0xf]
  %v33 = vld [vmem:[%s0 + $0x64] sm:$0xff]
  %v34 = vld [vmem:[%s0 + $0x6c] sm:$0xff]
  %v35 = vld [vmem:[%s0 + $0x74] sm:$0xf]
  %v36 = vld [vmem:[%s0 + $0x78] sm:$0xff]
  %v37 = vld [vmem:[%s0 + $0x80] sm:$0xff]
  %v38 = vld [vmem:[%s0 + $0x88] sm:$0xf]
  %v39 = vld [vmem:[%s0 + $0x8c] sm:$0xff]
  %v40 = vld [vmem:[%s0 + $0x94] sm:$0xff]
  %v41 = vld [vmem:[%s0 + $0x9c] sm:$0xf]
  %v42 = vld [vmem:[%s0 + $0xa0] sm:$0xff]
  %v43 = vld [vmem:[%s0 + $0xa8] sm:$0xff]
  %v44 = vld [vmem:[%s0 + $0xb0] sm:$0xf]
  %v45 = vld [vmem:[%s0 + $0xb4] sm:$0xff]
  %v46 = vld [vmem:[%s0 + $0xbc] sm:$0xff]
  %v47 = vld [vmem:[%s0 + $0xc4] sm:$0xf]
  %v48 = vld [vmem:[%s0 + $0xc8] sm:$0xff]
  %v49 = vld [vmem:[%s0 + $0xd0] sm:$0xff]
  %v50 = vld [vmem:[%s0 + $0xd8] sm:$0xf]
  %v51 = vld [vmem:[%s0 + $0xdc] sm:$0xff]
  %v52 = vld [vmem:[%s0 + $0xe4] sm:$0xff]
  %v53 = vld [vmem:[%s0 + $0xec] sm:$0xf]
  %v54 = vld [vmem:[%s0 + $0xf0] sm:$0xff]
  %v55 = vld [vmem:[%s0 + $0xf8] sm:$0xff]
  %v56 = vld [vmem:[%s0 + $0x100] sm:$0xf]
  %v57 = vld [vmem:[%s0 + $0x104] sm:$0xff]
  %v58 = vld [vmem:[%s0 + $0x10c] sm:$0xff]
  %v59 = vld [vmem:[%s0 + $0x114] sm:$0xf]
  %v60 = vld [vmem:[%s0 + $0x118] sm:$0xff]
  %v61 = vld [vmem:[%s0 + $0x120] sm:$0xff]
  %v62 = vld [vmem:[%s0 + $0x128] sm:$0xf]
  %v63 = vld [vmem:[%s0 + $0x12c] sm:$0xff]
  %v64 = vld [vmem:[%s0 + $0x134] sm:$0xff]
  %v65 = vld [vmem:[%s0 + $0x13c] sm:$0xf]
  %v66 = vld [vmem:[%s1] sm:$0xf]
  %v67 = vld [vmem:[%s1 + $0x4] sm:$0xf]
  %v68 = vld [vmem:[%s1 + $0x8] sm:$0xf]
  %v69 = vld [vmem:[%s1 + $0xc] sm:$0xf]
  %v70 = vld [vmem:[%s1 + $0x10] sm:$0xf]
  %v71 = vld [vmem:[%s1 + $0x14] sm:$0xf]
  %v72 = vld [vmem:[%s1 + $0x18] sm:$0xf]
  %v73 = vld [vmem:[%s1 + $0x1c] sm:$0xf]
  %v74 = vld [vmem:[%s1 + $0x20] sm:$0xf]
  %v75 = vld [vmem:[%s1 + $0x24] sm:$0xf]
  %v76 = vld [vmem:[%s1 + $0x28] sm:$0xf]
  %v77 = vld [vmem:[%s1 + $0x2c] sm:$0xf]
  %v78 = vld [vmem:[%s1 + $0x30] sm:$0xf]
  %v79 = vld [vmem:[%s1 + $0x34] sm:$0xf]
  %v80 = vld [vmem:[%s1 + $0x38] sm:$0xf]
  %v81 = vld [vmem:[%s1 + $0x3c] sm:$0xf]
  %v82 = vld [vmem:[%s1 + $0x40] sm:$0xf]
  %v83 = vld [vmem:[%s1 + $0x44] sm:$0xf]
  %v84 = vld [vmem:[%s1 + $0x48] sm:$0xf]
  %v85 = vld [vmem:[%s1 + $0x4c] sm:$0xf]
  %v86 = vld [vmem:[%s1 + $0x50] sm:$0xf]
  %v87 = vld [vmem:[%s1 + $0x54] sm:$0xf]
  %v88 = vld [vmem:[%s1 + $0x58] sm:$0xf]
  %v89 = vld [vmem:[%s1 + $0x5c] sm:$0xf]
  %v90 = vld [vmem:[%s1 + $0x60] sm:$0xf]
  %v91 = vld [vmem:[%s1 + $0x64] sm:$0xf]
  %v92 = vld [vmem:[%s1 + $0x68] sm:$0xf]
  %v93 = vld [vmem:[%s1 + $0x6c] sm:$0xf]
  %v94 = vld [vmem:[%s1 + $0x70] sm:$0xf]
  %v95 = vld [vmem:[%s1 + $0x74] sm:$0xf]
  %v96 = vld [vmem:[%s1 + $0x78] sm:$0xf]
  %v97 = vld [vmem:[%s1 + $0x7c] sm:$0xf]
  %v98 = vld [vmem:[%s1 + $0x80] sm:$0xf]
  %v99 = vld [vmem:[%s1 + $0x84] sm:$0xf]
  %v100 = vld [vmem:[%s1 + $0x88] sm:$0xf]
  %v101 = vld [vmem:[%s1 + $0x8c] sm:$0xf]
  %v102 = vld [vmem:[%s1 + $0x90] sm:$0xf]
  %v103 = vld [vmem:[%s1 + $0x94] sm:$0xf]
  %v104 = vld [vmem:[%s1 + $0x98] sm:$0xf]
  %v105 = vld [vmem:[%s1 + $0x9c] sm:$0xf]
  %v106 = vld [vmem:[%s1 + $0xa0] sm:$0xf]
  %v107 = vld [vmem:[%s1 + $0xa4] sm:$0xf]
  %v108 = vld [vmem:[%s1 + $0xa8] sm:$0xf]
  %v109 = vld [vmem:[%s1 + $0xac] sm:$0xf]
  %v110 = vld [vmem:[%s1 + $0xb0] sm:$0xf]
  %v111 = vld [vmem:[%s1 + $0xb4] sm:$0xf]
  %v112 = vld [vmem:[%s1 + $0xb8] sm:$0xf]
  %v113 = vld [vmem:[%s1 + $0xbc] sm:$0xf]
  %v114 = vld [vmem:[%s1 + $0xc0] sm:$0xf]
  %v115 = vld [vmem:[%s1 + $0xc4] sm:$0xf]
  %v116 = vld [vmem:[%s1 + $0xc8] sm:$0xf]
  %v117 = vld [vmem:[%s1 + $0xcc] sm:$0xf]
  %v118 = vld [vmem:[%s1 + $0xd0] sm:$0xf]
  %v119 = vld [vmem:[%s1 + $0xd4] sm:$0xf]
  %v120 = vld [vmem:[%s1 + $0xd8] sm:$0xf]
  %v121 = vld [vmem:[%s1 + $0xdc] sm:$0xf]
  %v122 = vld [vmem:[%s1 + $0xe0] sm:$0xf]
  %v123 = vld [vmem:[%s1 + $0xe4] sm:$0xf]
  %v124 = vld [vmem:[%s1 + $0xe8] sm:$0xf]
  %v125 = vld [vmem:[%s1 + $0xec] sm:$0xf]
  %v126 = vld [vmem:[%s1 + $0xf0] sm:$0xf]
  %v127 = vld [vmem:[%s1 + $0xf4] sm:$0xf]
  %v128 = vld [vmem:[%s1 + $0xf8] sm:$0xf]
  %v129 = vld [vmem:[%s1 + $0xfc] sm:$0xf]
  %v130 = vld [vmem:[%s1 + $0x100] sm:$0xf]
  %v131 = vld [vmem:[%s1 + $0x104] sm:$0xf]
  %v132 = vld [vmem:[%s1 + $0x108] sm:$0xf]
  %v133 = vld [vmem:[%s1 + $0x10c] sm:$0xf]
  %v134 = vld [vmem:[%s1 + $0x110] sm:$0xf]
  %v135 = vld [vmem:[%s1 + $0x114] sm:$0xf]
  %v136 = vld [vmem:[%s1 + $0x118] sm:$0xf]
  %v137 = vld [vmem:[%s1 + $0x11c] sm:$0xf]
  %v186 = vunpack.c.l.b16 %v18
  %v187 = vunpack.c.h.b16 %v18
  %v188 = vunpack.c.l.b16 %v19
  %v189 = vunpack.c.h.b16 %v19
  %v190 = vunpack.c.l.b16 %v20
  %v191 = vunpack.c.l.b16 %v21
  %v192 = vunpack.c.h.b16 %v21
  %v193 = vunpack.c.l.b16 %v22
  %v194 = vunpack.c.h.b16 %v22
  %v195 = vunpack.c.l.b16 %v23
  %v196 = vunpack.c.l.b16 %v24
  %v197 = vunpack.c.h.b16 %v24
  %v198 = vunpack.c.l.b16 %v25
  %v199 = vunpack.c.h.b16 %v25
  %v200 = vunpack.c.l.b16 %v26
  %v201 = vunpack.c.l.b16 %v27
  %v202 = vunpack.c.h.b16 %v27
  %v203 = vunpack.c.l.b16 %v28
  %v204 = vunpack.c.h.b16 %v28
  %v205 = vunpack.c.l.b16 %v29
  %v206 = vunpack.c.l.b16 %v30
  %v207 = vunpack.c.h.b16 %v30
  %v208 = vunpack.c.l.b16 %v31
  %v209 = vunpack.c.h.b16 %v31
  %v210 = vunpack.c.l.b16 %v32
  %v211 = vunpack.c.l.b16 %v33
  %v212 = vunpack.c.h.b16 %v33
  %v213 = vunpack.c.l.b16 %v34
  %v214 = vunpack.c.h.b16 %v34
  %v215 = vunpack.c.l.b16 %v35
  %v216 = vunpack.c.l.b16 %v36
  %v217 = vunpack.c.h.b16 %v36
  %v218 = vunpack.c.l.b16 %v37
  %v219 = vunpack.c.h.b16 %v37
  %v220 = vunpack.c.l.b16 %v38
  %v221 = vunpack.c.l.b16 %v39
  %v222 = vunpack.c.h.b16 %v39
  %v223 = vunpack.c.l.b16 %v40
  %v224 = vunpack.c.h.b16 %v40
  %v225 = vunpack.c.l.b16 %v41
  %v226 = vunpack.c.l.b16 %v42
  %v227 = vunpack.c.h.b16 %v42
  %v228 = vunpack.c.l.b16 %v43
  %v229 = vunpack.c.h.b16 %v43
  %v230 = vunpack.c.l.b16 %v44
  %v231 = vunpack.c.l.b16 %v45
  %v232 = vunpack.c.h.b16 %v45
  %v233 = vunpack.c.l.b16 %v46
  %v234 = vunpack.c.h.b16 %v46
  %v235 = vunpack.c.l.b16 %v47
  %v236 = vunpack.c.l.b16 %v48
  %v237 = vunpack.c.h.b16 %v48
  %v238 = vunpack.c.l.b16 %v49
  %v239 = vunpack.c.h.b16 %v49
  %v240 = vunpack.c.l.b16 %v50
  %v241 = vunpack.c.l.b16 %v51
  %v242 = vunpack.c.h.b16 %v51
  %v243 = vunpack.c.l.b16 %v52
  %v244 = vunpack.c.h.b16 %v52
  %v245 = vunpack.c.l.b16 %v53
  %v246 = vunpack.c.l.b16 %v54
  %v247 = vunpack.c.h.b16 %v54
  %v248 = vunpack.c.l.b16 %v55
  %v249 = vunpack.c.h.b16 %v55
  %v250 = vunpack.c.l.b16 %v56
  %v251 = vunpack.c.l.b16 %v57
  %v252 = vunpack.c.h.b16 %v57
  %v253 = vunpack.c.l.b16 %v58
  %v254 = vunpack.c.h.b16 %v58
  %v255 = vunpack.c.l.b16 %v59
  %v256 = vunpack.c.l.b16 %v60
  %v257 = vunpack.c.h.b16 %v60
  %v258 = vunpack.c.l.b16 %v61
  %v259 = vunpack.c.h.b16 %v61
  %v260 = vunpack.c.l.b16 %v62
  %v261 = vunpack.c.l.b16 %v63
  %v262 = vunpack.c.h.b16 %v63
  %v263 = vunpack.c.l.b16 %v64
  %v264 = vunpack.c.h.b16 %v64
  %v265 = vunpack.c.l.b16 %v65
  %v266 = vpack.c.b16 %v191, %v186
  %v267 = vpack.c.b16 %v192, %v187
  %v268 = vpack.c.b16 %v193, %v188
  %v269 = vpack.c.b16 %v194, %v189
  %v270 = vpack.c.b16 %v195, %v190
  %v271 = vpack.c.b16 %v201, %v196
  %v272 = vpack.c.b16 %v202, %v197
  %v273 = vpack.c.b16 %v203, %v198
  %v274 = vpack.c.b16 %v204, %v199
  %v275 = vpack.c.b16 %v205, %v200
  %v276 = vpack.c.b16 %v211, %v206
  %v277 = vpack.c.b16 %v212, %v207
  %v278 = vpack.c.b16 %v213, %v208
  %v279 = vpack.c.b16 %v214, %v209
  %v280 = vpack.c.b16 %v215, %v210
  %v281 = vpack.c.b16 %v221, %v216
  %v282 = vpack.c.b16 %v222, %v217
  %v283 = vpack.c.b16 %v223, %v218
  %v284 = vpack.c.b16 %v224, %v219
  %v285 = vpack.c.b16 %v225, %v220
  %v286 = vpack.c.b16 %v231, %v226
  %v287 = vpack.c.b16 %v232, %v227
  %v288 = vpack.c.b16 %v233, %v228
  %v289 = vpack.c.b16 %v234, %v229
  %v290 = vpack.c.b16 %v235, %v230
  %v291 = vpack.c.b16 %v241, %v236
  %v292 = vpack.c.b16 %v242, %v237
  %v293 = vpack.c.b16 %v243, %v238
  %v294 = vpack.c.b16 %v244, %v239
  %v295 = vpack.c.b16 %v245, %v240
  %v296 = vpack.c.b16 %v251, %v246
  %v297 = vpack.c.b16 %v252, %v247
  %v298 = vpack.c.b16 %v253, %v248
  %v299 = vpack.c.b16 %v254, %v249
  %v300 = vpack.c.b16 %v255, %v250
  %v301 = vpack.c.b16 %v261, %v256
  %v302 = vpack.c.b16 %v262, %v257
  %v303 = vpack.c.b16 %v263, %v258
  %v304 = vpack.c.b16 %v264, %v259
  %v305 = vpack.c.b16 %v265, %v260
  %v410 = vunpack.c.l.b16 %v66
  %v411 = vunpack.c.l.b16 %v67
  %v412 = vunpack.c.l.b16 %v68
  %v413 = vunpack.c.l.b16 %v69
  %v414 = vunpack.c.l.b16 %v70
  %v415 = vunpack.c.l.b16 %v71
  %v416 = vunpack.c.l.b16 %v72
  %v417 = vunpack.c.l.b16 %v73
  %v418 = vunpack.c.l.b16 %v74
  %v419 = vunpack.c.l.b16 %v75
  %v420 = vunpack.c.l.b16 %v76
  %v421 = vunpack.c.l.b16 %v77
  %v422 = vunpack.c.l.b16 %v78
  %v423 = vunpack.c.l.b16 %v79
  %v424 = vunpack.c.l.b16 %v80
  %v425 = vunpack.c.l.b16 %v81
  %v426 = vunpack.c.l.b16 %v82
  %v427 = vunpack.c.l.b16 %v83
  %v428 = vunpack.c.l.b16 %v84
  %v429 = vunpack.c.l.b16 %v85
  %v430 = vunpack.c.l.b16 %v86
  %v431 = vunpack.c.l.b16 %v87
  %v432 = vunpack.c.l.b16 %v88
  %v433 = vunpack.c.l.b16 %v89
  %v434 = vunpack.c.l.b16 %v90
  %v435 = vunpack.c.l.b16 %v91
  %v436 = vunpack.c.l.b16 %v92
  %v437 = vunpack.c.l.b16 %v93
  %v438 = vunpack.c.l.b16 %v94
  %v439 = vunpack.c.l.b16 %v95
  %v440 = vunpack.c.l.b16 %v96
  %v441 = vunpack.c.l.b16 %v97
  %v442 = vunpack.c.l.b16 %v98
  %v443 = vunpack.c.l.b16 %v99
  %v444 = vunpack.c.l.b16 %v100
  %v445 = vunpack.c.l.b16 %v101
  %v446 = vunpack.c.l.b16 %v102
  %v447 = vunpack.c.l.b16 %v103
  %v448 = vunpack.c.l.b16 %v104
  %v449 = vunpack.c.l.b16 %v105
  %v450 = vunpack.c.l.b16 %v106
  %v451 = vunpack.c.l.b16 %v107
  %v452 = vunpack.c.l.b16 %v108
  %v453 = vunpack.c.l.b16 %v109
  %v454 = vunpack.c.l.b16 %v110
  %v455 = vunpack.c.l.b16 %v111
  %v456 = vunpack.c.l.b16 %v112
  %v457 = vunpack.c.l.b16 %v113
  %v458 = vunpack.c.l.b16 %v114
  %v459 = vunpack.c.l.b16 %v115
  %v460 = vunpack.c.l.b16 %v116
  %v461 = vunpack.c.l.b16 %v117
  %v462 = vunpack.c.l.b16 %v118
  %v463 = vunpack.c.l.b16 %v119
  %v464 = vunpack.c.l.b16 %v120
  %v465 = vunpack.c.l.b16 %v121
  %v466 = vunpack.c.l.b16 %v122
  %v467 = vunpack.c.l.b16 %v123
  %v468 = vunpack.c.l.b16 %v124
  %v469 = vunpack.c.l.b16 %v125
  %v470 = vunpack.c.l.b16 %v126
  %v471 = vunpack.c.l.b16 %v127
  %v472 = vunpack.c.l.b16 %v128
  %v473 = vunpack.c.l.b16 %v129
  %v474 = vunpack.c.l.b16 %v130
  %v475 = vunpack.c.l.b16 %v131
  %v476 = vunpack.c.l.b16 %v132
  %v477 = vunpack.c.l.b16 %v133
  %v478 = vunpack.c.l.b16 %v134
  %v479 = vunpack.c.l.b16 %v135
  %v480 = vunpack.c.l.b16 %v136
  %v481 = vunpack.c.l.b16 %v137
  %v482 = vpack.c.b16 %v411, %v410
  %v483 = vpack.c.b16 %v413, %v412
  %v484 = vpack.c.b16 %v415, %v414
  %v485 = vpack.c.b16 %v417, %v416
  %v486 = vpack.c.b16 %v419, %v418
  %v487 = vpack.c.b16 %v421, %v420
  %v488 = vpack.c.b16 %v423, %v422
  %v489 = vpack.c.b16 %v425, %v424
  %v490 = vpack.c.b16 %v427, %v426
  %v491 = vpack.c.b16 %v429, %v428
  %v492 = vpack.c.b16 %v431, %v430
  %v493 = vpack.c.b16 %v433, %v432
  %v494 = vpack.c.b16 %v435, %v434
  %v495 = vpack.c.b16 %v437, %v436
  %v496 = vpack.c.b16 %v439, %v438
  %v497 = vpack.c.b16 %v441, %v440
  %v498 = vpack.c.b16 %v443, %v442
  %v499 = vpack.c.b16 %v445, %v444
  %v500 = vpack.c.b16 %v447, %v446
  %v501 = vpack.c.b16 %v449, %v448
  %v502 = vpack.c.b16 %v451, %v450
  %v503 = vpack.c.b16 %v453, %v452
  %v504 = vpack.c.b16 %v455, %v454
  %v505 = vpack.c.b16 %v457, %v456
  %v506 = vpack.c.b16 %v459, %v458
  %v507 = vpack.c.b16 %v461, %v460
  %v508 = vpack.c.b16 %v463, %v462
  %v509 = vpack.c.b16 %v465, %v464
  %v510 = vpack.c.b16 %v467, %v466
  %v511 = vpack.c.b16 %v469, %v468
  %v512 = vpack.c.b16 %v471, %v470
  %v513 = vpack.c.b16 %v473, %v472
  %v514 = vpack.c.b16 %v475, %v474
  %v515 = vpack.c.b16 %v477, %v476
  %v516 = vpack.c.b16 %v479, %v478
  %v517 = vpack.c.b16 %v481, %v480
  %vm554 = vcmask 523264
  %v556 = vsel %vm554, %v270, 0
  %v559 = vsel %vm554, %v275, 0
  %v562 = vsel %vm554, %v280, 0
  %v565 = vsel %vm554, %v285, 0
  %v568 = vsel %vm554, %v290, 0
  %v571 = vsel %vm554, %v295, 0
  %v574 = vsel %vm554, %v300, 0
  %v577 = vsel %vm554, %v305, 0
  %579 = vmatprep.subr.bf16.mxu0 0
  %580 = vmatpush1.bf16.msra.mxu0 %v489
  %581 = vmatprep.subr.bf16.mxu0 0
  %582 = vmatpush1.bf16.msra.mxu0 %v488
  %583 = vmatprep.subr.bf16.mxu0 0
  %584 = vmatpush1.bf16.msra.mxu0 %v487
  %585 = vmatprep.subr.bf16.mxu0 0
  %586 = vmatpush1.bf16.msra.mxu0 %v486
  %587 = vmatprep.subr.bf16.mxu0 0
  %588 = vmatpush1.bf16.msra.mxu0 %v485
  %589 = vmatprep.subr.bf16.mxu0 0
  %590 = vmatpush1.bf16.msra.mxu0 %v484
  %591 = vmatprep.subr.bf16.mxu0 0
  %592 = vmatpush1.bf16.msra.mxu0 %v483
  %593 = vmatprep.subr.bf16.mxu0 0
  %594 = vmatpush1.bf16.msra.mxu0 %v482
  %595 = vmatprep.subr.bf16.mxu0 0
  %596 = vmatpush2.bf16.msra.mxu0 %v497
  %597 = vmatprep.subr.bf16.mxu0 0
  %598 = vmatpush2.bf16.msra.mxu0 %v496
  %599 = vmatprep.subr.bf16.mxu0 0
  %600 = vmatpush2.bf16.msra.mxu0 %v495
  %601 = vmatprep.subr.bf16.mxu0 0
  %602 = vmatpush2.bf16.msra.mxu0 %v494
  %603 = vmatprep.subr.bf16.mxu0 0
  %604 = vmatpush2.bf16.msra.mxu0 %v493
  %605 = vmatprep.subr.bf16.mxu0 0
  %606 = vmatpush2.bf16.msra.mxu0 %v492
  %607 = vmatprep.subr.bf16.mxu0 0
  %608 = vmatpush2.bf16.msra.mxu0 %v491
  %609 = vmatprep.subr.bf16.mxu0 0
  %610 = vmatpush2.bf16.msra.mxu0 %v490
  %611 = vmatprep.mubr.bf16.mxu0 %v267
  %612 = vmatmul.mubr.bf16.gmra.mxu0 %v266
  %v613 = vpop.f32.mrf.mxu0
  %v614 = vadd.f32 0.0, %v613
  %v615 = vpop.f32.mrf.mxu0
  %v616 = vpop.f32.mrf.mxu0
  %v617 = vadd.f32 0.0, %v616
  %v618 = vpop.f32.mrf.mxu0
  %619 = vmatprep.mubr.bf16.mxu0 %v272
  %620 = vmatmul.mubr.bf16.gmra.mxu0 %v271
  %v621 = vpop.f32.mrf.mxu0
  %v622 = vadd.f32 0.0, %v621
  %v623 = vpop.f32.mrf.mxu0
  %v624 = vpop.f32.mrf.mxu0
  %v625 = vadd.f32 0.0, %v624
  %v626 = vpop.f32.mrf.mxu0
  %627 = vmatprep.mubr.bf16.mxu0 %v277
  %628 = vmatmul.mubr.bf16.gmra.mxu0 %v276
  %v629 = vpop.f32.mrf.mxu0
  %v630 = vadd.f32 0.0, %v629
  %v631 = vpop.f32.mrf.mxu0
  %v632 = vpop.f32.mrf.mxu0
  %v633 = vadd.f32 0.0, %v632
  %v634 = vpop.f32.mrf.mxu0
  %635 = vmatprep.mubr.bf16.mxu0 %v282
  %636 = vmatmul.mubr.bf16.gmra.mxu0 %v281
  %v637 = vpop.f32.mrf.mxu0
  %v638 = vadd.f32 0.0, %v637
  %v639 = vpop.f32.mrf.mxu0
  %v640 = vpop.f32.mrf.mxu0
  %v641 = vadd.f32 0.0, %v640
  %v642 = vpop.f32.mrf.mxu0
  %643 = vmatprep.mubr.bf16.mxu0 %v287
  %644 = vmatmul.mubr.bf16.gmra.mxu0 %v286
  %v645 = vpop.f32.mrf.mxu0
  %v646 = vadd.f32 0.0, %v645
  %v647 = vpop.f32.mrf.mxu0
  %v648 = vpop.f32.mrf.mxu0
  %v649 = vadd.f32 0.0, %v648
  %v650 = vpop.f32.mrf.mxu0
  %651 = vmatprep.mubr.bf16.mxu0 %v292
  %652 = vmatmul.mubr.bf16.gmra.mxu0 %v291
  %v653 = vpop.f32.mrf.mxu0
  %v654 = vadd.f32 0.0, %v653
  %v655 = vpop.f32.mrf.mxu0
  %v656 = vpop.f32.mrf.mxu0
  %v657 = vadd.f32 0.0, %v656
  %v658 = vpop.f32.mrf.mxu0
  %659 = vmatprep.mubr.bf16.mxu0 %v297
  %660 = vmatmul.mubr.bf16.gmra.mxu0 %v296
  %v661 = vpop.f32.mrf.mxu0
  %v662 = vadd.f32 0.0, %v661
  %v663 = vpop.f32.mrf.mxu0
  %v664 = vpop.f32.mrf.mxu0
  %v665 = vadd.f32 0.0, %v664
  %v666 = vpop.f32.mrf.mxu0
  %667 = vmatprep.mubr.bf16.mxu0 %v302
  %668 = vmatmul.mubr.bf16.gmra.mxu0 %v301
  %v669 = vpop.f32.mrf.mxu0
  %v670 = vadd.f32 0.0, %v669
  %v671 = vpop.f32.mrf.mxu0
  %v672 = vpop.f32.mrf.mxu0
  %v673 = vadd.f32 0.0, %v672
  %v674 = vpop.f32.mrf.mxu0
  %675 = vdwg.mxu0
  %676 = vmatprep.subr.bf16.mxu0 0
  %677 = vmatpush1.bf16.msra.mxu0 %v505
  %678 = vmatprep.subr.bf16.mxu0 0
  %679 = vmatpush1.bf16.msra.mxu0 %v504
  %680 = vmatprep.subr.bf16.mxu0 0
  %681 = vmatpush1.bf16.msra.mxu0 %v503
  %682 = vmatprep.subr.bf16.mxu0 0
  %683 = vmatpush1.bf16.msra.mxu0 %v502
  %684 = vmatprep.subr.bf16.mxu0 0
  %685 = vmatpush1.bf16.msra.mxu0 %v501
  %686 = vmatprep.subr.bf16.mxu0 0
  %687 = vmatpush1.bf16.msra.mxu0 %v500
  %688 = vmatprep.subr.bf16.mxu0 0
  %689 = vmatpush1.bf16.msra.mxu0 %v499
  %690 = vmatprep.subr.bf16.mxu0 0
  %691 = vmatpush1.bf16.msra.mxu0 %v498
  %692 = vmatprep.subr.bf16.mxu0 0
  %693 = vmatpush2.bf16.msra.mxu0 %v513
  %694 = vmatprep.subr.bf16.mxu0 0
  %695 = vmatpush2.bf16.msra.mxu0 %v512
  %696 = vmatprep.subr.bf16.mxu0 0
  %697 = vmatpush2.bf16.msra.mxu0 %v511
  %698 = vmatprep.subr.bf16.mxu0 0
  %699 = vmatpush2.bf16.msra.mxu0 %v510
  %700 = vmatprep.subr.bf16.mxu0 0
  %701 = vmatpush2.bf16.msra.mxu0 %v509
  %702 = vmatprep.subr.bf16.mxu0 0
  %703 = vmatpush2.bf16.msra.mxu0 %v508
  %704 = vmatprep.subr.bf16.mxu0 0
  %705 = vmatpush2.bf16.msra.mxu0 %v507
  %706 = vmatprep.subr.bf16.mxu0 0
  %707 = vmatpush2.bf16.msra.mxu0 %v506
  %708 = vmatprep.mubr.bf16.mxu0 %v269
  %709 = vmatmul.mubr.bf16.gmra.mxu0 %v268
  %v710 = vpop.f32.mrf.mxu0
  %v711 = vadd.f32 %v614, %v710
  %v712 = vpop.f32.mrf.mxu0
  %v713 = vpop.f32.mrf.mxu0
  %v714 = vadd.f32 %v617, %v713
  %v715 = vpop.f32.mrf.mxu0
  %716 = vmatprep.mubr.bf16.mxu0 %v274
  %717 = vmatmul.mubr.bf16.gmra.mxu0 %v273
  %v718 = vpop.f32.mrf.mxu0
  %v719 = vadd.f32 %v622, %v718
  %v720 = vpop.f32.mrf.mxu0
  %v721 = vpop.f32.mrf.mxu0
  %v722 = vadd.f32 %v625, %v721
  %v723 = vpop.f32.mrf.mxu0
  %724 = vmatprep.mubr.bf16.mxu0 %v279
  %725 = vmatmul.mubr.bf16.gmra.mxu0 %v278
  %v726 = vpop.f32.mrf.mxu0
  %v727 = vadd.f32 %v630, %v726
  %v728 = vpop.f32.mrf.mxu0
  %v729 = vpop.f32.mrf.mxu0
  %v730 = vadd.f32 %v633, %v729
  %v731 = vpop.f32.mrf.mxu0
  %732 = vmatprep.mubr.bf16.mxu0 %v284
  %733 = vmatmul.mubr.bf16.gmra.mxu0 %v283
  %v734 = vpop.f32.mrf.mxu0
  %v735 = vadd.f32 %v638, %v734
  %v736 = vpop.f32.mrf.mxu0
  %v737 = vpop.f32.mrf.mxu0
  %v738 = vadd.f32 %v641, %v737
  %v739 = vpop.f32.mrf.mxu0
  %740 = vmatprep.mubr.bf16.mxu0 %v289
  %741 = vmatmul.mubr.bf16.gmra.mxu0 %v288
  %v742 = vpop.f32.mrf.mxu0
  %v743 = vadd.f32 %v646, %v742
  %v744 = vpop.f32.mrf.mxu0
  %v745 = vpop.f32.mrf.mxu0
  %v746 = vadd.f32 %v649, %v745
  %v747 = vpop.f32.mrf.mxu0
  %748 = vmatprep.mubr.bf16.mxu0 %v294
  %749 = vmatmul.mubr.bf16.gmra.mxu0 %v293
  %v750 = vpop.f32.mrf.mxu0
  %v751 = vadd.f32 %v654, %v750
  %v752 = vpop.f32.mrf.mxu0
  %v753 = vpop.f32.mrf.mxu0
  %v754 = vadd.f32 %v657, %v753
  %v755 = vpop.f32.mrf.mxu0
  %756 = vmatprep.mubr.bf16.mxu0 %v299
  %757 = vmatmul.mubr.bf16.gmra.mxu0 %v298
  %v758 = vpop.f32.mrf.mxu0
  %v759 = vadd.f32 %v662, %v758
  %v760 = vpop.f32.mrf.mxu0
  %v761 = vpop.f32.mrf.mxu0
  %v762 = vadd.f32 %v665, %v761
  %v763 = vpop.f32.mrf.mxu0
  %764 = vmatprep.mubr.bf16.mxu0 %v304
  %765 = vmatmul.mubr.bf16.gmra.mxu0 %v303
  %v766 = vpop.f32.mrf.mxu0
  %v767 = vadd.f32 %v670, %v766
  %v768 = vpop.f32.mrf.mxu0
  %v769 = vpop.f32.mrf.mxu0
  %v770 = vadd.f32 %v673, %v769
  %v771 = vpop.f32.mrf.mxu0
  %772 = vdwg.mxu0
  %773 = vmatprep.subr.bf16.mxu0 0
  %774 = vmatpush1.bf16.msra.mxu0 0
  %775 = vmatprep.subr.bf16.mxu0 0
  %776 = vmatpush1.bf16.msra.mxu0 0
  %777 = vmatprep.subr.bf16.mxu0 0
  %778 = vmatpush1.bf16.msra.mxu0 0
  %779 = vmatprep.subr.bf16.mxu0 0
  %780 = vmatpush1.bf16.msra.mxu0 0
  %781 = vmatprep.subr.bf16.mxu0 0
  %782 = vmatpush1.bf16.msra.mxu0 %v517
  %783 = vmatprep.subr.bf16.mxu0 0
  %784 = vmatpush1.bf16.msra.mxu0 %v516
  %785 = vmatprep.subr.bf16.mxu0 0
  %786 = vmatpush1.bf16.msra.mxu0 %v515
  %787 = vmatprep.subr.bf16.mxu0 0
  %788 = vmatpush1.bf16.msra.mxu0 %v514
  %789 = vmatprep.subr.bf16.mxu0 0
  %790 = vmatpush2.bf16.msra.mxu0 0
  %791 = vmatprep.subr.bf16.mxu0 0
  %792 = vmatpush2.bf16.msra.mxu0 0
  %793 = vmatprep.subr.bf16.mxu0 0
  %794 = vmatpush2.bf16.msra.mxu0 0
  %795 = vmatprep.subr.bf16.mxu0 0
  %796 = vmatpush2.bf16.msra.mxu0 0
  %797 = vmatprep.subr.bf16.mxu0 0
  %798 = vmatpush2.bf16.msra.mxu0 0
  %799 = vmatprep.subr.bf16.mxu0 0
  %800 = vmatpush2.bf16.msra.mxu0 0
  %801 = vmatprep.subr.bf16.mxu0 0
  %802 = vmatpush2.bf16.msra.mxu0 0
  %803 = vmatprep.subr.bf16.mxu0 0
  %804 = vmatpush2.bf16.msra.mxu0 0
  %805 = vmatprep.mubr.bf16.mxu0 0
  %806 = vmatmul.mubr.bf16.gmra.mxu0 %v556
  %v807 = vpop.f32.mrf.mxu0
  %v808 = vadd.f32 %v711, %v807
  %v809 = vpop.f32.mrf.mxu0
  %v810 = vpop.f32.mrf.mxu0
  %v811 = vadd.f32 %v714, %v810
  %v812 = vpop.f32.mrf.mxu0
  %813 = vmatprep.mubr.bf16.mxu0 0
  %814 = vmatmul.mubr.bf16.gmra.mxu0 %v559
  %v815 = vpop.f32.mrf.mxu0
  %v816 = vadd.f32 %v719, %v815
  %v817 = vpop.f32.mrf.mxu0
  %v818 = vpop.f32.mrf.mxu0
  %v819 = vadd.f32 %v722, %v818
  %v820 = vpop.f32.mrf.mxu0
  %821 = vmatprep.mubr.bf16.mxu0 0
  %822 = vmatmul.mubr.bf16.gmra.mxu0 %v562
  %v823 = vpop.f32.mrf.mxu0
  %v824 = vadd.f32 %v727, %v823
  %v825 = vpop.f32.mrf.mxu0
  %v826 = vpop.f32.mrf.mxu0
  %v827 = vadd.f32 %v730, %v826
  %v828 = vpop.f32.mrf.mxu0
  %829 = vmatprep.mubr.bf16.mxu0 0
  %830 = vmatmul.mubr.bf16.gmra.mxu0 %v565
  %v831 = vpop.f32.mrf.mxu0
  %v832 = vadd.f32 %v735, %v831
  %v833 = vpop.f32.mrf.mxu0
  %v834 = vpop.f32.mrf.mxu0
  %v835 = vadd.f32 %v738, %v834
  %v836 = vpop.f32.mrf.mxu0
  %837 = vmatprep.mubr.bf16.mxu0 0
  %838 = vmatmul.mubr.bf16.gmra.mxu0 %v568
  %v839 = vpop.f32.mrf.mxu0
  %v840 = vadd.f32 %v743, %v839
  %v841 = vpop.f32.mrf.mxu0
  %v842 = vpop.f32.mrf.mxu0
  %v843 = vadd.f32 %v746, %v842
  %v844 = vpop.f32.mrf.mxu0
  %845 = vmatprep.mubr.bf16.mxu0 0
  %846 = vmatmul.mubr.bf16.gmra.mxu0 %v571
  %v847 = vpop.f32.mrf.mxu0
  %v848 = vadd.f32 %v751, %v847
  %v849 = vpop.f32.mrf.mxu0
  %v850 = vpop.f32.mrf.mxu0
  %v851 = vadd.f32 %v754, %v850
  %v852 = vpop.f32.mrf.mxu0
  %853 = vmatprep.mubr.bf16.mxu0 0
  %854 = vmatmul.mubr.bf16.gmra.mxu0 %v574
  %v855 = vpop.f32.mrf.mxu0
  %v856 = vadd.f32 %v759, %v855
  %v857 = vpop.f32.mrf.mxu0
  %v858 = vpop.f32.mrf.mxu0
  %v859 = vadd.f32 %v762, %v858
  %v860 = vpop.f32.mrf.mxu0
  %861 = vmatprep.mubr.bf16.mxu0 0
  %862 = vmatmul.mubr.bf16.gmra.mxu0 %v577
  %v863 = vpop.f32.mrf.mxu0
  %v864 = vadd.f32 %v767, %v863
  %v865 = vpop.f32.mrf.mxu0
  %v866 = vpop.f32.mrf.mxu0
  %v867 = vadd.f32 %v770, %v866
  %v868 = vpop.f32.mrf.mxu0
  %869 = vdwg.mxu0
  %v870 = vld [vmem:[%s2] sm:$0x1]
  %v872 = vlaneseq
  %v873 = vshrl.u32 %v872, 7
  %v874 = vsub.s32 0, %v873
  %v875 = vrot.slane %v870, %v874
  %v877 = vmul.f32 %v808, %v875
  %v878 = vmul.f32 %v811, %v875
  %v879 = vmul.f32 %v816, %v875
  %v880 = vmul.f32 %v819, %v875
  %v881 = vmul.f32 %v824, %v875
  %v882 = vmul.f32 %v827, %v875
  %v883 = vmul.f32 %v832, %v875
  %v884 = vmul.f32 %v835, %v875
  %v885 = vmul.f32 %v840, %v875
  %v886 = vmul.f32 %v843, %v875
  %v887 = vmul.f32 %v848, %v875
  %v888 = vmul.f32 %v851, %v875
  %v889 = vmul.f32 %v856, %v875
  %v890 = vmul.f32 %v859, %v875
  %v891 = vmul.f32 %v864, %v875
  %v892 = vmul.f32 %v867, %v875
  %v893 = vld [vmem:[%s3] sm:$0x1]
  %v895 = vlaneseq
  %v896 = vshrl.u32 %v895, 7
  %v897 = vsub.s32 0, %v896
  %v898 = vrot.slane %v893, %v897
  %v900 = vadd.f32 %v877, %v898
  %v901 = vadd.f32 %v878, %v898
  %v902 = vadd.f32 %v879, %v898
  %v903 = vadd.f32 %v880, %v898
  %v904 = vadd.f32 %v881, %v898
  %v905 = vadd.f32 %v882, %v898
  %v906 = vadd.f32 %v883, %v898
  %v907 = vadd.f32 %v884, %v898
  %v908 = vadd.f32 %v885, %v898
  %v909 = vadd.f32 %v886, %v898
  %v910 = vadd.f32 %v887, %v898
  %v911 = vadd.f32 %v888, %v898
  %v912 = vadd.f32 %v889, %v898
  %v913 = vadd.f32 %v890, %v898
  %v914 = vadd.f32 %v891, %v898
  %v915 = vadd.f32 %v892, %v898
  %v916 = vmax.f32 %v900, 0.0
  %v917 = vmax.f32 %v901, 0.0
  %v918 = vmax.f32 %v902, 0.0
  %v919 = vmax.f32 %v903, 0.0
  %v920 = vmax.f32 %v904, 0.0
  %v921 = vmax.f32 %v905, 0.0
  %v922 = vmax.f32 %v906, 0.0
  %v923 = vmax.f32 %v907, 0.0
  %v924 = vmax.f32 %v908, 0.0
  %v925 = vmax.f32 %v909, 0.0
  %v926 = vmax.f32 %v910, 0.0
  %v927 = vmax.f32 %v911, 0.0
  %v928 = vmax.f32 %v912, 0.0
  %v929 = vmax.f32 %v913, 0.0
  %v930 = vmax.f32 %v914, 0.0
  %v931 = vmax.f32 %v915, 0.0
  %v932 = vpack.c.bf16 %v917, %v916
  %v933 = vpack.c.bf16 %v919, %v918
  %v934 = vpack.c.bf16 %v921, %v920
  %v935 = vpack.c.bf16 %v923, %v922
  %v936 = vpack.c.bf16 %v925, %v924
  %v937 = vpack.c.bf16 %v927, %v926
  %v938 = vpack.c.bf16 %v929, %v928
  %v939 = vpack.c.bf16 %v931, %v930
  %v948 = vunpack.c.l.b16 %v932
  %v949 = vunpack.c.h.b16 %v932
  %v950 = vunpack.c.l.b16 %v933
  %v951 = vunpack.c.h.b16 %v933
  %v952 = vunpack.c.l.b16 %v934
  %v953 = vunpack.c.h.b16 %v934
  %v954 = vunpack.c.l.b16 %v935
  %v955 = vunpack.c.h.b16 %v935
  %v956 = vunpack.c.l.b16 %v936
  %v957 = vunpack.c.h.b16 %v936
  %v958 = vunpack.c.l.b16 %v937
  %v959 = vunpack.c.h.b16 %v937
  %v960 = vunpack.c.l.b16 %v938
  %v961 = vunpack.c.h.b16 %v938
  %v962 = vunpack.c.l.b16 %v939
  %v963 = vunpack.c.h.b16 %v939
  %v964 = vpack.c.b16 %v948, %v948
  %v965 = vpack.c.b16 %v949, %v949
  %v966 = vpack.c.b16 %v950, %v950
  %v967 = vpack.c.b16 %v951, %v951
  %v968 = vpack.c.b16 %v952, %v952
  %v969 = vpack.c.b16 %v953, %v953
  %v970 = vpack.c.b16 %v954, %v954
  %v971 = vpack.c.b16 %v955, %v955
  %v972 = vpack.c.b16 %v956, %v956
  %v973 = vpack.c.b16 %v957, %v957
  %v974 = vpack.c.b16 %v958, %v958
  %v975 = vpack.c.b16 %v959, %v959
  %v976 = vpack.c.b16 %v960, %v960
  %v977 = vpack.c.b16 %v961, %v961
  %v978 = vpack.c.b16 %v962, %v962
  %v979 = vpack.c.b16 %v963, %v963
  %996 = vst [vmem:[%s4] sm:$0xf] %v964
  %997 = vst [vmem:[%s4 + $0x4] sm:$0xf] %v965
  %998 = vst [vmem:[%s4 + $0x8] sm:$0xf] %v966
  %999 = vst [vmem:[%s4 + $0xc] sm:$0xf] %v967
  %1000 = vst [vmem:[%s4 + $0x10] sm:$0xf] %v968
  %1001 = vst [vmem:[%s4 + $0x14] sm:$0xf] %v969
  %1002 = vst [vmem:[%s4 + $0x18] sm:$0xf] %v970
  %1003 = vst [vmem:[%s4 + $0x1c] sm:$0xf] %v971
  %1004 = vst [vmem:[%s4 + $0x20] sm:$0xf] %v972
  %1005 = vst [vmem:[%s4 + $0x24] sm:$0xf] %v973
  %1006 = vst [vmem:[%s4 + $0x28] sm:$0xf] %v974
  %1007 = vst [vmem:[%s4 + $0x2c] sm:$0xf] %v975
  %1008 = vst [vmem:[%s4 + $0x30] sm:$0xf] %v976
  %1009 = vst [vmem:[%s4 + $0x34] sm:$0xf] %v977
  %1010 = vst [vmem:[%s4 + $0x38] sm:$0xf] %v978
  %1011 = vst [vmem:[%s4 + $0x3c] sm:$0xf] %v979
  // Predicated region
  $region18: #{resnet_forward.19} parent=0 // pred_check
    _
  $region19: #{resnet_forward.19} parent=0 // pred_check_branch
    %1013 = sbr.rel (0) target = $region21
  $region20: #{resnet_forward.19} parent=0 // pred_region
    _
  $region21: #{resnet_forward.19} parent=0 // pred_fallthru
    _
  // Predicated region
  $region22: #{resnet_forward.19} parent=0 // pred_check
    _
  $region23: #{resnet_forward.19} parent=0 // pred_check_branch
    %1015 = sbr.rel (0) target = $region25
  $region24: #{resnet_forward.19} parent=0 // pred_region
    _
  $region25: #{resnet_forward.19} parent=0 // pred_fallthru
    _

// kernel: resnet_forward.18
$region0: #{resnet_forward.18}
  #allocation0 [shape = 'u32[]', space=smem, size = 0x4, offset = 0x4, fixed_abs, tag = 'smem constant byte address 0x4 - core index']
  #allocation1 [shape = 'u32[144,128]{1,0:T(1,128)}', space=vmem, size = 0x12000, scoped, tag = 'internal scratch']
  %s0 = inlined_call_operand.vmem [shape: bf16[128,64], index: 0, kind: input, shape index: {}]
  %s1 = inlined_call_operand.vmem [shape: bf16[64,128], index: 1, kind: input, shape index: {}]
  %s2 = inlined_call_operand.vmem [shape: f32[1,128], index: 2, kind: input, shape index: {}]
  %s3 = inlined_call_operand.vmem [shape: f32[1,128], index: 3, kind: input, shape index: {}]
  %s4 = inlined_call_operand.vmem [shape: bf16[128,128], index: 4, kind: output, shape index: {}]
  %s5 = sld [smem:[#allocation0]]
  $region26: #{resnet_forward.18} parent=0
    _
  %s7 = ssub.s32 1, %s5
  %s8 = scalar_select 0, %s7, %s5
  // Predicated region
  $region2: #{resnet_forward.18} parent=0 // pred_check
    _
  $region3: #{resnet_forward.18} parent=0 // pred_check_branch
    %10 = sbr.rel (0) target = $region5
  $region4: #{resnet_forward.18} parent=0 // pred_region
    _
  $region5: #{resnet_forward.18} parent=0 // pred_fallthru
    _
  // Predicated region
  $region6: #{resnet_forward.18} parent=0 // pred_check
    _
  $region7: #{resnet_forward.18} parent=0 // pred_check_branch
    %12 = sbr.rel (0) target = $region9
  $region8: #{resnet_forward.18} parent=0 // pred_region
    _
  $region9: #{resnet_forward.18} parent=0 // pred_fallthru
    _
  // Predicated region
  $region10: #{resnet_forward.18} parent=0 // pred_check
    _
  $region11: #{resnet_forward.18} parent=0 // pred_check_branch
    %14 = sbr.rel (0) target = $region13
  $region12: #{resnet_forward.18} parent=0 // pred_region
    _
  $region13: #{resnet_forward.18} parent=0 // pred_fallthru
    _
  // Predicated region
  $region14: #{resnet_forward.18} parent=0 // pred_check
    _
  $region15: #{resnet_forward.18} parent=0 // pred_check_branch
    %16 = sbr.rel (0) target = $region17
  $region16: #{resnet_forward.18} parent=0 // pred_region
    _
  $region17: #{resnet_forward.18} parent=0 // pred_fallthru
    _
  %v18 = vld [vmem:[%s0] sm:$0xf]
  %v19 = vld [vmem:[%s0 + $0x4] sm:$0xf]
  %v20 = vld [vmem:[%s0 + $0x8] sm:$0xf]
  %v21 = vld [vmem:[%s0 + $0xc] sm:$0xf]
  %v22 = vld [vmem:[%s0 + $0x10] sm:$0xf]
  %v23 = vld [vmem:[%s0 + $0x14] sm:$0xf]
  %v24 = vld [vmem:[%s0 + $0x18] sm:$0xf]
  %v25 = vld [vmem:[%s0 + $0x1c] sm:$0xf]
  %v26 = vld [vmem:[%s0 + $0x20] sm:$0xf]
  %v27 = vld [vmem:[%s0 + $0x24] sm:$0xf]
  %v28 = vld [vmem:[%s0 + $0x28] sm:$0xf]
  %v29 = vld [vmem:[%s0 + $0x2c] sm:$0xf]
  %v30 = vld [vmem:[%s0 + $0x30] sm:$0xf]
  %v31 = vld [vmem:[%s0 + $0x34] sm:$0xf]
  %v32 = vld [vmem:[%s0 + $0x38] sm:$0xf]
  %v33 = vld [vmem:[%s0 + $0x3c] sm:$0xf]
  %v34 = vld [vmem:[%s1] sm:$0xf]
  %v35 = vld [vmem:[%s1 + $0x4] sm:$0xf]
  %v36 = vld [vmem:[%s1 + $0x8] sm:$0xf]
  %v37 = vld [vmem:[%s1 + $0xc] sm:$0xf]
  %v38 = vld [vmem:[%s1 + $0x10] sm:$0xf]
  %v39 = vld [vmem:[%s1 + $0x14] sm:$0xf]
  %v40 = vld [vmem:[%s1 + $0x18] sm:$0xf]
  %v41 = vld [vmem:[%s1 + $0x1c] sm:$0xf]
  %v58 = vunpack.c.l.b16 %v18
  %v59 = vunpack.c.l.b16 %v19
  %v60 = vunpack.c.l.b16 %v20
  %v61 = vunpack.c.l.b16 %v21
  %v62 = vunpack.c.l.b16 %v22
  %v63 = vunpack.c.l.b16 %v23
  %v64 = vunpack.c.l.b16 %v24
  %v65 = vunpack.c.l.b16 %v25
  %v66 = vunpack.c.l.b16 %v26
  %v67 = vunpack.c.l.b16 %v27
  %v68 = vunpack.c.l.b16 %v28
  %v69 = vunpack.c.l.b16 %v29
  %v70 = vunpack.c.l.b16 %v30
  %v71 = vunpack.c.l.b16 %v31
  %v72 = vunpack.c.l.b16 %v32
  %v73 = vunpack.c.l.b16 %v33
  %v74 = vpack.c.b16 %v59, %v58
  %v75 = vpack.c.b16 %v61, %v60
  %v76 = vpack.c.b16 %v63, %v62
  %v77 = vpack.c.b16 %v65, %v64
  %v78 = vpack.c.b16 %v67, %v66
  %v79 = vpack.c.b16 %v69, %v68
  %v80 = vpack.c.b16 %v71, %v70
  %v81 = vpack.c.b16 %v73, %v72
  %v90 = vunpack.c.l.b16 %v34
  %v91 = vunpack.c.l.b16 %v35
  %v92 = vunpack.c.l.b16 %v36
  %v93 = vunpack.c.l.b16 %v37
  %v94 = vunpack.c.l.b16 %v38
  %v95 = vunpack.c.l.b16 %v39
  %v96 = vunpack.c.l.b16 %v40
  %v97 = vunpack.c.l.b16 %v41
  %v98 = vpack.c.b16 %v91, %v90
  %v99 = vpack.c.b16 %v93, %v92
  %v100 = vpack.c.b16 %v95, %v94
  %v101 = vpack.c.b16 %v97, %v96
  %vm106 = vcmask 523264
  %v108 = vsel %vm106, %v74, 0
  %v111 = vsel %vm106, %v75, 0
  %v114 = vsel %vm106, %v76, 0
  %v117 = vsel %vm106, %v77, 0
  %v120 = vsel %vm106, %v78, 0
  %v123 = vsel %vm106, %v79, 0
  %v126 = vsel %vm106, %v80, 0
  %v129 = vsel %vm106, %v81, 0
  %131 = vmatprep.subr.bf16.mxu0 0
  %132 = vmatpush1.bf16.msra.mxu0 0
  %133 = vmatprep.subr.bf16.mxu0 0
  %134 = vmatpush1.bf16.msra.mxu0 0
  %135 = vmatprep.subr.bf16.mxu0 0
  %136 = vmatpush1.bf16.msra.mxu0 0
  %137 = vmatprep.subr.bf16.mxu0 0
  %138 = vmatpush1.bf16.msra.mxu0 0
  %139 = vmatprep.subr.bf16.mxu0 0
  %140 = vmatpush1.bf16.msra.mxu0 %v101
  %141 = vmatprep.subr.bf16.mxu0 0
  %142 = vmatpush1.bf16.msra.mxu0 %v100
  %143 = vmatprep.subr.bf16.mxu0 0
  %144 = vmatpush1.bf16.msra.mxu0 %v99
  %145 = vmatprep.subr.bf16.mxu0 0
  %146 = vmatpush1.bf16.msra.mxu0 %v98
  %147 = vmatprep.subr.bf16.mxu0 0
  %148 = vmatpush2.bf16.msra.mxu0 0
  %149 = vmatprep.subr.bf16.mxu0 0
  %150 = vmatpush2.bf16.msra.mxu0 0
  %151 = vmatprep.subr.bf16.mxu0 0
  %152 = vmatpush2.bf16.msra.mxu0 0
  %153 = vmatprep.subr.bf16.mxu0 0
  %154 = vmatpush2.bf16.msra.mxu0 0
  %155 = vmatprep.subr.bf16.mxu0 0
  %156 = vmatpush2.bf16.msra.mxu0 0
  %157 = vmatprep.subr.bf16.mxu0 0
  %158 = vmatpush2.bf16.msra.mxu0 0
  %159 = vmatprep.subr.bf16.mxu0 0
  %160 = vmatpush2.bf16.msra.mxu0 0
  %161 = vmatprep.subr.bf16.mxu0 0
  %162 = vmatpush2.bf16.msra.mxu0 0
  %163 = vmatprep.mubr.bf16.mxu0 0
  %164 = vmatmul.mubr.bf16.gmra.mxu0 %v108
  %v165 = vpop.f32.mrf.mxu0
  %v166 = vadd.f32 0.0, %v165
  %v167 = vpop.f32.mrf.mxu0
  %v168 = vpop.f32.mrf.mxu0
  %v169 = vadd.f32 0.0, %v168
  %v170 = vpop.f32.mrf.mxu0
  %171 = vmatprep.mubr.bf16.mxu0 0
  %172 = vmatmul.mubr.bf16.gmra.mxu0 %v111
  %v173 = vpop.f32.mrf.mxu0
  %v174 = vadd.f32 0.0, %v173
  %v175 = vpop.f32.mrf.mxu0
  %v176 = vpop.f32.mrf.mxu0
  %v177 = vadd.f32 0.0, %v176
  %v178 = vpop.f32.mrf.mxu0
  %179 = vmatprep.mubr.bf16.mxu0 0
  %180 = vmatmul.mubr.bf16.gmra.mxu0 %v114
  %v181 = vpop.f32.mrf.mxu0
  %v182 = vadd.f32 0.0, %v181
  %v183 = vpop.f32.mrf.mxu0
  %v184 = vpop.f32.mrf.mxu0
  %v185 = vadd.f32 0.0, %v184
  %v186 = vpop.f32.mrf.mxu0
  %187 = vmatprep.mubr.bf16.mxu0 0
  %188 = vmatmul.mubr.bf16.gmra.mxu0 %v117
  %v189 = vpop.f32.mrf.mxu0
  %v190 = vadd.f32 0.0, %v189
  %v191 = vpop.f32.mrf.mxu0
  %v192 = vpop.f32.mrf.mxu0
  %v193 = vadd.f32 0.0, %v192
  %v194 = vpop.f32.mrf.mxu0
  %195 = vmatprep.mubr.bf16.mxu0 0
  %196 = vmatmul.mubr.bf16.gmra.mxu0 %v120
  %v197 = vpop.f32.mrf.mxu0
  %v198 = vadd.f32 0.0, %v197
  %v199 = vpop.f32.mrf.mxu0
  %v200 = vpop.f32.mrf.mxu0
  %v201 = vadd.f32 0.0, %v200
  %v202 = vpop.f32.mrf.mxu0
  %203 = vmatprep.mubr.bf16.mxu0 0
  %204 = vmatmul.mubr.bf16.gmra.mxu0 %v123
  %v205 = vpop.f32.mrf.mxu0
  %v206 = vadd.f32 0.0, %v205
  %v207 = vpop.f32.mrf.mxu0
  %v208 = vpop.f32.mrf.mxu0
  %v209 = vadd.f32 0.0, %v208
  %v210 = vpop.f32.mrf.mxu0
  %211 = vmatprep.mubr.bf16.mxu0 0
  %212 = vmatmul.mubr.bf16.gmra.mxu0 %v126
  %v213 = vpop.f32.mrf.mxu0
  %v214 = vadd.f32 0.0, %v213
  %v215 = vpop.f32.mrf.mxu0
  %v216 = vpop.f32.mrf.mxu0
  %v217 = vadd.f32 0.0, %v216
  %v218 = vpop.f32.mrf.mxu0
  %219 = vmatprep.mubr.bf16.mxu0 0
  %220 = vmatmul.mubr.bf16.gmra.mxu0 %v129
  %v221 = vpop.f32.mrf.mxu0
  %v222 = vadd.f32 0.0, %v221
  %v223 = vpop.f32.mrf.mxu0
  %v224 = vpop.f32.mrf.mxu0
  %v225 = vadd.f32 0.0, %v224
  %v226 = vpop.f32.mrf.mxu0
  %227 = vdwg.mxu0
  %v228 = vld [vmem:[%s2] sm:$0x1]
  %v230 = vlaneseq
  %v231 = vshrl.u32 %v230, 7
  %v232 = vsub.s32 0, %v231
  %v233 = vrot.slane %v228, %v232
  %v235 = vmul.f32 %v166, %v233
  %v236 = vmul.f32 %v169, %v233
  %v237 = vmul.f32 %v174, %v233
  %v238 = vmul.f32 %v177, %v233
  %v239 = vmul.f32 %v182, %v233
  %v240 = vmul.f32 %v185, %v233
  %v241 = vmul.f32 %v190, %v233
  %v242 = vmul.f32 %v193, %v233
  %v243 = vmul.f32 %v198, %v233
  %v244 = vmul.f32 %v201, %v233
  %v245 = vmul.f32 %v206, %v233
  %v246 = vmul.f32 %v209, %v233
  %v247 = vmul.f32 %v214, %v233
  %v248 = vmul.f32 %v217, %v233
  %v249 = vmul.f32 %v222, %v233
  %v250 = vmul.f32 %v225, %v233
  %v251 = vld [vmem:[%s3] sm:$0x1]
  %v253 = vlaneseq
  %v254 = vshrl.u32 %v253, 7
  %v255 = vsub.s32 0, %v254
  %v256 = vrot.slane %v251, %v255
  %v258 = vadd.f32 %v235, %v256
  %v259 = vadd.f32 %v236, %v256
  %v260 = vadd.f32 %v237, %v256
  %v261 = vadd.f32 %v238, %v256
  %v262 = vadd.f32 %v239, %v256
  %v263 = vadd.f32 %v240, %v256
  %v264 = vadd.f32 %v241, %v256
  %v265 = vadd.f32 %v242, %v256
  %v266 = vadd.f32 %v243, %v256
  %v267 = vadd.f32 %v244, %v256
  %v268 = vadd.f32 %v245, %v256
  %v269 = vadd.f32 %v246, %v256
  %v270 = vadd.f32 %v247, %v256
  %v271 = vadd.f32 %v248, %v256
  %v272 = vadd.f32 %v249, %v256
  %v273 = vadd.f32 %v250, %v256
  %v274 = vpack.c.bf16 %v259, %v258
  %v275 = vpack.c.bf16 %v261, %v260
  %v276 = vpack.c.bf16 %v263, %v262
  %v277 = vpack.c.bf16 %v265, %v264
  %v278 = vpack.c.bf16 %v267, %v266
  %v279 = vpack.c.bf16 %v269, %v268
  %v280 = vpack.c.bf16 %v271, %v270
  %v281 = vpack.c.bf16 %v273, %v272
  %v290 = vunpack.c.l.b16 %v274
  %v291 = vunpack.c.h.b16 %v274
  %v292 = vunpack.c.l.b16 %v275
  %v293 = vunpack.c.h.b16 %v275
  %v294 = vunpack.c.l.b16 %v276
  %v295 = vunpack.c.h.b16 %v276
  %v296 = vunpack.c.l.b16 %v277
  %v297 = vunpack.c.h.b16 %v277
  %v298 = vunpack.c.l.b16 %v278
  %v299 = vunpack.c.h.b16 %v278
  %v300 = vunpack.c.l.b16 %v279
  %v301 = vunpack.c.h.b16 %v279
  %v302 = vunpack.c.l.b16 %v280
  %v303 = vunpack.c.h.b16 %v280
  %v304 = vunpack.c.l.b16 %v281
  %v305 = vunpack.c.h.b16 %v281
  %v306 = vpack.c.b16 %v290, %v290
  %v307 = vpack.c.b16 %v291, %v291
  %v308 = vpack.c.b16 %v292, %v292
  %v309 = vpack.c.b16 %v293, %v293
  %v310 = vpack.c.b16 %v294, %v294
  %v311 = vpack.c.b16 %v295, %v295
  %v312 = vpack.c.b16 %v296, %v296
  %v313 = vpack.c.b16 %v297, %v297
  %v314 = vpack.c.b16 %v298, %v298
  %v315 = vpack.c.b16 %v299, %v299
  %v316 = vpack.c.b16 %v300, %v300
  %v317 = vpack.c.b16 %v301, %v301
  %v318 = vpack.c.b16 %v302, %v302
  %v319 = vpack.c.b16 %v303, %v303
  %v320 = vpack.c.b16 %v304, %v304
  %v321 = vpack.c.b16 %v305, %v305
  %338 = vst [vmem:[%s4] sm:$0xf] %v306
  %339 = vst [vmem:[%s4 + $0x4] sm:$0xf] %v307
  %340 = vst [vmem:[%s4 + $0x8] sm:$0xf] %v308
  %341 = vst [vmem:[%s4 + $0xc] sm:$0xf] %v309
  %342 = vst [vmem:[%s4 + $0x10] sm:$0xf] %v310
  %343 = vst [vmem:[%s4 + $0x14] sm:$0xf] %v311
  %344 = vst [vmem:[%s4 + $0x18] sm:$0xf] %v312
  %345 = vst [vmem:[%s4 + $0x1c] sm:$0xf] %v313
  %346 = vst [vmem:[%s4 + $0x20] sm:$0xf] %v314
  %347 = vst [vmem:[%s4 + $0x24] sm:$0xf] %v315
  %348 = vst [vmem:[%s4 + $0x28] sm:$0xf] %v316
  %349 = vst [vmem:[%s4 + $0x2c] sm:$0xf] %v317
  %350 = vst [vmem:[%s4 + $0x30] sm:$0xf] %v318
  %351 = vst [vmem:[%s4 + $0x34] sm:$0xf] %v319
  %352 = vst [vmem:[%s4 + $0x38] sm:$0xf] %v320
  %353 = vst [vmem:[%s4 + $0x3c] sm:$0xf] %v321
  // Predicated region
  $region18: #{resnet_forward.18} parent=0 // pred_check
    _
  $region19: #{resnet_forward.18} parent=0 // pred_check_branch
    %355 = sbr.rel (0) target = $region21
  $region20: #{resnet_forward.18} parent=0 // pred_region
    _
  $region21: #{resnet_forward.18} parent=0 // pred_fallthru
    _
  // Predicated region
  $region22: #{resnet_forward.18} parent=0 // pred_check
    _
  $region23: #{resnet_forward.18} parent=0 // pred_check_branch
    %357 = sbr.rel (0) target = $region25
  $region24: #{resnet_forward.18} parent=0 // pred_region
    _
  $region25: #{resnet_forward.18} parent=0 // pred_fallthru
    _

// kernel: resnet_forward.23
$region0: #{resnet_forward.23}
  #allocation0 [shape = 'u32[]', space=smem, size = 0x4, offset = 0x4, fixed_abs, tag = 'smem constant byte address 0x4 - core index']
  #allocation1 [shape = 'u32[144,128]{1,0:T(1,128)}', space=vmem, size = 0x12000, scoped, tag = 'internal scratch']
  %s0 = inlined_call_operand.vmem [shape: bf16[8,1536], index: 0, kind: input, shape index: {}]
  %s1 = inlined_call_operand.vmem [shape: f32[1,1536], index: 1, kind: input, shape index: {}]
  %s2 = inlined_call_operand.vmem [shape: f32[1,1536], index: 2, kind: input, shape index: {}]
  %s3 = inlined_call_operand.vmem [shape: f32[8,1536], index: 3, kind: output, shape index: {}]
  %s4 = sld [smem:[#allocation0]]
  $region22: #{resnet_forward.23} parent=0
    _
  %s6 = ssub.s32 1, %s4
  %s7 = scalar_select 0, %s6, %s4
  // Predicated region
  $region2: #{resnet_forward.23} parent=0 // pred_check
    _
  $region3: #{resnet_forward.23} parent=0 // pred_check_branch
    %9 = sbr.rel (0) target = $region5
  $region4: #{resnet_forward.23} parent=0 // pred_region
    _
  $region5: #{resnet_forward.23} parent=0 // pred_fallthru
    _
  // Predicated region
  $region6: #{resnet_forward.23} parent=0 // pred_check
    _
  $region7: #{resnet_forward.23} parent=0 // pred_check_branch
    %11 = sbr.rel (0) target = $region9
  $region8: #{resnet_forward.23} parent=0 // pred_region
    _
  $region9: #{resnet_forward.23} parent=0 // pred_fallthru
    _
  // Predicated region
  $region10: #{resnet_forward.23} parent=0 // pred_check
    _
  $region11: #{resnet_forward.23} parent=0 // pred_check_branch
    %13 = sbr.rel (0) target = $region13
  $region12: #{resnet_forward.23} parent=0 // pred_region
    _
  $region13: #{resnet_forward.23} parent=0 // pred_fallthru
    _
  %v14 = vld [vmem:[%s0] sm:$0xff]
  %v15 = vld [vmem:[%s0 + $0x8] sm:$0xff]
  %v16 = vld [vmem:[%s0 + $0x10] sm:$0xff]
  %v17 = vld [vmem:[%s0 + $0x18] sm:$0xff]
  %v18 = vld [vmem:[%s0 + $0x20] sm:$0xff]
  %v19 = vld [vmem:[%s0 + $0x28] sm:$0xff]
  %v20 = vunpack.c.l.bf16 %v14
  %v21 = vunpack.c.h.bf16 %v14
  %v22 = vunpack.c.l.bf16 %v15
  %v23 = vunpack.c.h.bf16 %v15
  %v24 = vunpack.c.l.bf16 %v16
  %v25 = vunpack.c.h.bf16 %v16
  %v26 = vunpack.c.l.bf16 %v17
  %v27 = vunpack.c.h.bf16 %v17
  %v28 = vunpack.c.l.bf16 %v18
  %v29 = vunpack.c.h.bf16 %v18
  %v30 = vunpack.c.l.bf16 %v19
  %v31 = vunpack.c.h.bf16 %v19
  %v32 = vadd.f32 %v20, %v21
  %v33 = vadd.f32 %v32, %v22
  %v34 = vadd.f32 %v33, %v23
  %v35 = vadd.f32 %v34, %v24
  %v36 = vadd.f32 %v35, %v25
  %v37 = vadd.f32 %v36, %v26
  %v38 = vadd.f32 %v37, %v27
  %v39 = vadd.f32 %v38, %v28
  %v40 = vadd.f32 %v39, %v29
  %v41 = vadd.f32 %v40, %v30
  %v42 = vadd.f32 %v41, %v31
  %43 = vadd.xlane.f32.xlu0 %v42
  %v44 = vpop.xlane.xlu0 %43
  %v45 = vrcp.pop 1536.0
  %v46 = vmul.f32 %v44, %v45
  %v47 = vsub.f32 %v20, %v46
  %v48 = vsub.f32 %v21, %v46
  %v49 = vsub.f32 %v22, %v46
  %v50 = vsub.f32 %v23, %v46
  %v51 = vsub.f32 %v24, %v46
  %v52 = vsub.f32 %v25, %v46
  %v53 = vsub.f32 %v26, %v46
  %v54 = vsub.f32 %v27, %v46
  %v55 = vsub.f32 %v28, %v46
  %v56 = vsub.f32 %v29, %v46
  %v57 = vsub.f32 %v30, %v46
  %v58 = vsub.f32 %v31, %v46
  %v59 = vmul.f32 %v47, %v47
  %v60 = vmul.f32 %v48, %v48
  %v61 = vmul.f32 %v49, %v49
  %v62 = vmul.f32 %v50, %v50
  %v63 = vmul.f32 %v51, %v51
  %v64 = vmul.f32 %v52, %v52
  %v65 = vmul.f32 %v53, %v53
  %v66 = vmul.f32 %v54, %v54
  %v67 = vmul.f32 %v55, %v55
  %v68 = vmul.f32 %v56, %v56
  %v69 = vmul.f32 %v57, %v57
  %v70 = vmul.f32 %v58, %v58
  %v71 = vadd.f32 %v59, %v60
  %v72 = vadd.f32 %v71, %v61
  %v73 = vadd.f32 %v72, %v62
  %v74 = vadd.f32 %v73, %v63
  %v75 = vadd.f32 %v74, %v64
  %v76 = vadd.f32 %v75, %v65
  %v77 = vadd.f32 %v76, %v66
  %v78 = vadd.f32 %v77, %v67
  %v79 = vadd.f32 %v78, %v68
  %v80 = vadd.f32 %v79, %v69
  %v81 = vadd.f32 %v80, %v70
  %82 = vadd.xlane.f32.xlu0 %v81
  %v83 = vpop.xlane.xlu0 %82
  %v84 = vmul.f32 %v83, %v45
  %v85 = vadd.f32 %v84, 1e-05
  %v86 = vrsqrt.pop %v85
  %v87 = vmul.f32 %v47, %v86
  %v88 = vmul.f32 %v48, %v86
  %v89 = vmul.f32 %v49, %v86
  %v90 = vmul.f32 %v50, %v86
  %v91 = vmul.f32 %v51, %v86
  %v92 = vmul.f32 %v52, %v86
  %v93 = vmul.f32 %v53, %v86
  %v94 = vmul.f32 %v54, %v86
  %v95 = vmul.f32 %v55, %v86
  %v96 = vmul.f32 %v56, %v86
  %v97 = vmul.f32 %v57, %v86
  %v98 = vmul.f32 %v58, %v86
  %v99 = vld [vmem:[%s1] sm:$0xff]
  %v100 = vld [vmem:[%s1 + $0x8] sm:$0xf]
  %v103 = vlaneseq
  %v104 = vshrl.u32 %v103, 7
  %v105 = vsub.s32 0, %v104
  %v106 = vrot.slane %v99, %v105
  %v107 = vlaneseq
  %v108 = vshrl.u32 %v107, 7
  %v109 = vsub.s32 1, %v108
  %v110 = vrot.slane %v99, %v109
  %v111 = vlaneseq
  %v112 = vshrl.u32 %v111, 7
  %v113 = vsub.s32 2, %v112
  %v114 = vrot.slane %v99, %v113
  %v115 = vlaneseq
  %v116 = vshrl.u32 %v115, 7
  %v117 = vsub.s32 3, %v116
  %v118 = vrot.slane %v99, %v117
  %v119 = vlaneseq
  %v120 = vshrl.u32 %v119, 7
  %v121 = vsub.s32 4, %v120
  %v122 = vrot.slane %v99, %v121
  %v123 = vlaneseq
  %v124 = vshrl.u32 %v123, 7
  %v125 = vsub.s32 5, %v124
  %v126 = vrot.slane %v99, %v125
  %v127 = vlaneseq
  %v128 = vshrl.u32 %v127, 7
  %v129 = vsub.s32 6, %v128
  %v130 = vrot.slane %v99, %v129
  %v131 = vlaneseq
  %v132 = vshrl.u32 %v131, 7
  %v133 = vsub.s32 7, %v132
  %v134 = vrot.slane %v99, %v133
  %v135 = vlaneseq
  %v136 = vshrl.u32 %v135, 7
  %v137 = vsub.s32 0, %v136
  %v138 = vrot.slane %v100, %v137
  %v139 = vlaneseq
  %v140 = vshrl.u32 %v139, 7
  %v141 = vsub.s32 1, %v140
  %v142 = vrot.slane %v100, %v141
  %v143 = vlaneseq
  %v144 = vshrl.u32 %v143, 7
  %v145 = vsub.s32 2, %v144
  %v146 = vrot.slane %v100, %v145
  %v147 = vlaneseq
  %v148 = vshrl.u32 %v147, 7
  %v149 = vsub.s32 3, %v148
  %v150 = vrot.slane %v100, %v149
  %v163 = vmul.f32 %v87, %v106
  %v164 = vmul.f32 %v88, %v110
  %v165 = vmul.f32 %v89, %v114
  %v166 = vmul.f32 %v90, %v118
  %v167 = vmul.f32 %v91, %v122
  %v168 = vmul.f32 %v92, %v126
  %v169 = vmul.f32 %v93, %v130
  %v170 = vmul.f32 %v94, %v134
  %v171 = vmul.f32 %v95, %v138
  %v172 = vmul.f32 %v96, %v142
  %v173 = vmul.f32 %v97, %v146
  %v174 = vmul.f32 %v98, %v150
  %v175 = vld [vmem:[%s2] sm:$0xff]
  %v176 = vld [vmem:[%s2 + $0x8] sm:$0xf]
  %v179 = vlaneseq
  %v180 = vshrl.u32 %v179, 7
  %v181 = vsub.s32 0, %v180
  %v182 = vrot.slane %v175, %v181
  %v183 = vlaneseq
  %v184 = vshrl.u32 %v183, 7
  %v185 = vsub.s32 1, %v184
  %v186 = vrot.slane %v175, %v185
  %v187 = vlaneseq
  %v188 = vshrl.u32 %v187, 7
  %v189 = vsub.s32 2, %v188
  %v190 = vrot.slane %v175, %v189
  %v191 = vlaneseq
  %v192 = vshrl.u32 %v191, 7
  %v193 = vsub.s32 3, %v192
  %v194 = vrot.slane %v175, %v193
  %v195 = vlaneseq
  %v196 = vshrl.u32 %v195, 7
  %v197 = vsub.s32 4, %v196
  %v198 = vrot.slane %v175, %v197
  %v199 = vlaneseq
  %v200 = vshrl.u32 %v199, 7
  %v201 = vsub.s32 5, %v200
  %v202 = vrot.slane %v175, %v201
  %v203 = vlaneseq
  %v204 = vshrl.u32 %v203, 7
  %v205 = vsub.s32 6, %v204
  %v206 = vrot.slane %v175, %v205
  %v207 = vlaneseq
  %v208 = vshrl.u32 %v207, 7
  %v209 = vsub.s32 7, %v208
  %v210 = vrot.slane %v175, %v209
  %v211 = vlaneseq
  %v212 = vshrl.u32 %v211, 7
  %v213 = vsub.s32 0, %v212
  %v214 = vrot.slane %v176, %v213
  %v215 = vlaneseq
  %v216 = vshrl.u32 %v215, 7
  %v217 = vsub.s32 1, %v216
  %v218 = vrot.slane %v176, %v217
  %v219 = vlaneseq
  %v220 = vshrl.u32 %v219, 7
  %v221 = vsub.s32 2, %v220
  %v222 = vrot.slane %v176, %v221
  %v223 = vlaneseq
  %v224 = vshrl.u32 %v223, 7
  %v225 = vsub.s32 3, %v224
  %v226 = vrot.slane %v176, %v225
  %v239 = vadd.f32 %v163, %v182
  %v240 = vadd.f32 %v164, %v186
  %v241 = vadd.f32 %v165, %v190
  %v242 = vadd.f32 %v166, %v194
  %v243 = vadd.f32 %v167, %v198
  %v244 = vadd.f32 %v168, %v202
  %v245 = vadd.f32 %v169, %v206
  %v246 = vadd.f32 %v170, %v210
  %v247 = vadd.f32 %v171, %v214
  %v248 = vadd.f32 %v172, %v218
  %v249 = vadd.f32 %v173, %v222
  %v250 = vadd.f32 %v174, %v226
  %251 = vst [vmem:[%s3] sm:$0xff] %v239
  %252 = vst [vmem:[%s3 + $0x8] sm:$0xff] %v240
  %253 = vst [vmem:[%s3 + $0x10] sm:$0xff] %v241
  %254 = vst [vmem:[%s3 + $0x18] sm:$0xff] %v242
  %255 = vst [vmem:[%s3 + $0x20] sm:$0xff] %v243
  %256 = vst [vmem:[%s3 + $0x28] sm:$0xff] %v244
  %257 = vst [vmem:[%s3 + $0x30] sm:$0xff] %v245
  %258 = vst [vmem:[%s3 + $0x38] sm:$0xff] %v246
  %259 = vst [vmem:[%s3 + $0x40] sm:$0xff] %v247
  %260 = vst [vmem:[%s3 + $0x48] sm:$0xff] %v248
  %261 = vst [vmem:[%s3 + $0x50] sm:$0xff] %v249
  %262 = vst [vmem:[%s3 + $0x58] sm:$0xff] %v250
  // Predicated region
  $region14: #{resnet_forward.23} parent=0 // pred_check
    _
  $region15: #{resnet_forward.23} parent=0 // pred_check_branch
    %264 = sbr.rel (0) target = $region17
  $region16: #{resnet_forward.23} parent=0 // pred_region
    _
  $region17: #{resnet_forward.23} parent=0 // pred_fallthru
    _
  // Predicated region
  $region18: #{resnet_forward.23} parent=0 // pred_check
    _
  $region19: #{resnet_forward.23} parent=0 // pred_check_branch
    %266 = sbr.rel (0) target = $region21
  $region20: #{resnet_forward.23} parent=0 // pred_region
    _
  $region21: #{resnet_forward.23} parent=0 // pred_fallthru
    _

// kernel: resnet_forward.20
$region0: #{resnet_forward.20}
  #allocation0 [shape = 'u32[]', space=smem, size = 0x4, offset = 0x4, fixed_abs, tag = 'smem constant byte address 0x4 - core index']
  #allocation1 [shape = 'u32[144,128]{1,0:T(1,128)}', space=vmem, size = 0x12000, scoped, tag = 'internal scratch']
  %s0 = inlined_call_operand.vmem [shape: bf16[256,128], index: 0, kind: input, shape index: {}, may-alias: {0,1}]
  %s1 = inlined_call_operand.vmem [shape: bf16[256,128], index: 1, kind: input, shape index: {}, may-alias: {0,1}]
  %s2 = inlined_call_operand.vmem [shape: bf16[9,128,128], index: 2, kind: input, shape index: {}]
  %s3 = inlined_call_operand.vmem [shape: f32[1,128], index: 3, kind: input, shape index: {}]
  %s4 = inlined_call_operand.vmem [shape: f32[1,128], index: 4, kind: input, shape index: {}]
  %s5 = inlined_call_operand.vmem [shape: bf16[128,128], index: 5, kind: input, shape index: {}]
  %s6 = inlined_call_operand.vmem [shape: bf16[128,128], index: 6, kind: output, shape index: {}]
  %s7 = sld [smem:[#allocation0]]
  $region34: #{resnet_forward.20} parent=0
    _
  %s9 = ssub.s32 1, %s7
  %s10 = scalar_select 0, %s9, %s7
  // Predicated region
  $region2: #{resnet_forward.20} parent=0 // pred_check
    _
  $region3: #{resnet_forward.20} parent=0 // pred_check_branch
    %12 = sbr.rel (0) target = $region5
  $region4: #{resnet_forward.20} parent=0 // pred_region
    _
  $region5: #{resnet_forward.20} parent=0 // pred_fallthru
    _
  // Predicated region
  $region6: #{resnet_forward.20} parent=0 // pred_check
    _
  $region7: #{resnet_forward.20} parent=0 // pred_check_branch
    %14 = sbr.rel (0) target = $region9
  $region8: #{resnet_forward.20} parent=0 // pred_region
    %s15 = sadd.s32 0, 1
    %s16 = smul.u32 16, %s15
    %p17 = scmp.lt.s32.totalorder %s16, 31
    %s18 = scalar_select %p17, %s16, 31
    %s19 = smul.addr %s18, 4
    %s20 = scalar_lea.vmem %s1, %s19
    %s21 = sadd.s32 0, 1
    %s22 = smul.u32 16, %s21
  $region9: #{resnet_forward.20} parent=0 // pred_fallthru
    _
  // Predicated region
  $region10: #{resnet_forward.20} parent=0 // pred_check
    _
  $region11: #{resnet_forward.20} parent=0 // pred_check_branch
    %24 = sbr.rel (0) target = $region13
  $region12: #{resnet_forward.20} parent=0 // pred_region
    _
  $region13: #{resnet_forward.20} parent=0 // pred_fallthru
    _
  // Predicated region
  $region14: #{resnet_forward.20} parent=0 // pred_check
    _
  $region15: #{resnet_forward.20} parent=0 // pred_check_branch
    %26 = sbr.rel (0) target = $region17
  $region16: #{resnet_forward.20} parent=0 // pred_region
    _
  $region17: #{resnet_forward.20} parent=0 // pred_fallthru
    _
  // Predicated region
  $region18: #{resnet_forward.20} parent=0 // pred_check
    _
  $region19: #{resnet_forward.20} parent=0 // pred_check_branch
    %28 = sbr.rel (0) target = $region21
  $region20: #{resnet_forward.20} parent=0 // pred_region
    _
  $region21: #{resnet_forward.20} parent=0 // pred_fallthru
    _
  // Predicated region
  $region22: #{resnet_forward.20} parent=0 // pred_check
    _
  $region23: #{resnet_forward.20} parent=0 // pred_check_branch
    %30 = sbr.rel (0) target = $region25
  $region24: #{resnet_forward.20} parent=0 // pred_region
    _
  $region25: #{resnet_forward.20} parent=0 // pred_fallthru
    _
  %s31 = sadd.s32 0, 1
  %s32 = smul.u32 16, %s31
  %p33 = scmp.lt.s32.totalorder %s32, 31
  %s34 = scalar_select %p33, %s32, 31
  %s35 = smul.addr %s34, 4
  %s36 = scalar_lea.vmem %s1, %s35
  %s37 = sadd.s32 0, 1
  %s38 = smul.u32 16, %s37
  %p39 = scmp.lt.s32.totalorder %s38, 31
  %s40 = scalar_select %p39, %s38, 31
  %s41 = smul.addr %s40, 4
  %s42 = scalar_lea.vmem %s1, %s41
  %s43 = sadd.s32 0, 1
  %s44 = smul.u32 16, %s43
  %v46 = vld [vmem:[%s0] sm:$0xf]
  %v47 = vld [vmem:[%s0 + $0x4] sm:$0xf]
  %v48 = vld [vmem:[%s0 + $0x8] sm:$0xf]
  %v49 = vld [vmem:[%s0 + $0xc] sm:$0xf]
  %v50 = vld [vmem:[%s0 + $0x10] sm:$0xf]
  %v51 = vld [vmem:[%s0 + $0x14] sm:$0xf]
  %v52 = vld [vmem:[%s0 + $0x18] sm:$0xf]
  %v53 = vld [vmem:[%s0 + $0x1c] sm:$0xf]
  %v54 = vld [vmem:[%s0 + $0x20] sm:$0xf]
  %v55 = vld [vmem:[%s0 + $0x24] sm:$0xf]
  %v56 = vld [vmem:[%s0 + $0x28] sm:$0xf]
  %v57 = vld [vmem:[%s0 + $0x2c] sm:$0xf]
  %v58 = vld [vmem:[%s0 + $0x30] sm:$0xf]
  %v59 = vld [vmem:[%s0 + $0x34] sm:$0xf]
  %v60 = vld [vmem:[%s0 + $0x38] sm:$0xf]
  %v61 = vld [vmem:[%s0 + $0x3c] sm:$0xf]
  %v62 = vld [vmem:[%s42] sm:$0xf]
  %v63 = vld [vmem:[%s42 + $0x4] sm:$0xf]
  %v80 = vunpack.c.l.b16 %v46
  %v81 = vunpack.c.l.b16 %v47
  %v82 = vunpack.c.l.b16 %v48
  %v83 = vunpack.c.l.b16 %v49
  %v84 = vunpack.c.l.b16 %v50
  %v85 = vunpack.c.l.b16 %v51
  %v86 = vunpack.c.l.b16 %v52
  %v87 = vunpack.c.l.b16 %v53
  %v88 = vunpack.c.l.b16 %v54
  %v89 = vunpack.c.l.b16 %v55
  %v90 = vunpack.c.l.b16 %v56
  %v91 = vunpack.c.l.b16 %v57
  %v92 = vunpack.c.l.b16 %v58
  %v93 = vunpack.c.l.b16 %v59
  %v94 = vunpack.c.l.b16 %v60
  %v95 = vunpack.c.l.b16 %v61
  %v96 = vpack.c.b16 %v81, %v80
  %v97 = vpack.c.b16 %v83, %v82
  %v98 = vpack.c.b16 %v85, %v84
  %v99 = vpack.c.b16 %v87, %v86
  %v100 = vpack.c.b16 %v89, %v88
  %v101 = vpack.c.b16 %v91, %v90
  %v102 = vpack.c.b16 %v93, %v92
  %v103 = vpack.c.b16 %v95, %v94
  %v114 = vunpack.c.l.b16 %v62
  %v115 = vunpack.c.l.b16 %v63
  %v116 = vpack.c.b16 %v115, %v114
  %v118 = vunpack.c.l.bf16 %v96
  %v119 = vunpack.c.h.bf16 %v96
  %v120 = vunpack.c.l.bf16 %v97
  %v121 = vunpack.c.h.bf16 %v97
  %v122 = vunpack.c.l.bf16 %v98
  %v123 = vunpack.c.h.bf16 %v98
  %v124 = vunpack.c.l.bf16 %v99
  %v125 = vunpack.c.h.bf16 %v99
  %v126 = vunpack.c.l.bf16 %v100
  %v127 = vunpack.c.h.bf16 %v100
  %v128 = vunpack.c.l.bf16 %v101
  %v129 = vunpack.c.h.bf16 %v101
  %v130 = vunpack.c.l.bf16 %v102
  %v131 = vunpack.c.h.bf16 %v102
  %v132 = vunpack.c.l.bf16 %v103
  %v133 = vunpack.c.h.bf16 %v103
  %v134 = vunpack.c.l.bf16 %v116
  %v135 = vunpack.c.h.bf16 %v116
  %v136 = vpack.c.bf16 %v119, %v118
  %v137 = vpack.c.bf16 %v121, %v120
  %v138 = vpack.c.bf16 %v123, %v122
  %v139 = vpack.c.bf16 %v125, %v124
  %v140 = vpack.c.bf16 %v127, %v126
  %v141 = vpack.c.bf16 %v129, %v128
  %v142 = vpack.c.bf16 %v131, %v130
  %v143 = vpack.c.bf16 %v133, %v132
  %v144 = vld [vmem:[%s2] sm:$0xf]
  %v145 = vld [vmem:[%s2 + $0x4] sm:$0xf]
  %v146 = vld [vmem:[%s2 + $0x8] sm:$0xf]
  %v147 = vld [vmem:[%s2 + $0xc] sm:$0xf]
  %v148 = vld [vmem:[%s2 + $0x10] sm:$0xf]
  %v149 = vld [vmem:[%s2 + $0x14] sm:$0xf]
  %v150 = vld [vmem:[%s2 + $0x18] sm:$0xf]
  %v151 = vld [vmem:[%s2 + $0x1c] sm:$0xf]
  %v152 = vld [vmem:[%s2 + $0x20] sm:$0xf]
  %v153 = vld [vmem:[%s2 + $0x24] sm:$0xf]
  %v154 = vld [vmem:[%s2 + $0x28] sm:$0xf]
  %v155 = vld [vmem:[%s2 + $0x2c] sm:$0xf]
  %v156 = vld [vmem:[%s2 + $0x30] sm:$0xf]
  %v157 = vld [vmem:[%s2 + $0x34] sm:$0xf]
  %v158 = vld [vmem:[%s2 + $0x38] sm:$0xf]
  %v159 = vld [vmem:[%s2 + $0x3c] sm:$0xf]
  %v160 = vpack.c.bf16 %v134, %v134
  %s161 = scalar_lea.vmem %s2, 64
  %v162 = vld [vmem:[%s161] sm:$0xf]
  %v163 = vld [vmem:[%s161 + $0x4] sm:$0xf]
  %v164 = vld [vmem:[%s161 + $0x8] sm:$0xf]
  %v165 = vld [vmem:[%s161 + $0xc] sm:$0xf]
  %v166 = vld [vmem:[%s161 + $0x10] sm:$0xf]
  %v167 = vld [vmem:[%s161 + $0x14] sm:$0xf]
  %v168 = vld [vmem:[%s161 + $0x18] sm:$0xf]
  %v169 = vld [vmem:[%s161 + $0x1c] sm:$0xf]
  %v170 = vld [vmem:[%s161 + $0x20] sm:$0xf]
  %v171 = vld [vmem:[%s161 + $0x24] sm:$0xf]
  %v172 = vld [vmem:[%s161 + $0x28] sm:$0xf]
  %v173 = vld [vmem:[%s161 + $0x2c] sm:$0xf]
  %v174 = vld [vmem:[%s161 + $0x30] sm:$0xf]
  %v175 = vld [vmem:[%s161 + $0x34] sm:$0xf]
  %v176 = vld [vmem:[%s161 + $0x38] sm:$0xf]
  %v177 = vld [vmem:[%s161 + $0x3c] sm:$0xf]
  %vm178 = vsmask.f32 7424
  %v180 = vshrl.u32 %v136, 16
  %v182 = vshll.u32 %v136, 16
  %v184 = vrot.slane %v182, 1
  %v185 = vor.u32 %v180, %v184
  %v187 = vshll.u32 %v137, 16
  %v189 = vrot.slane %v187, 1
  %v190 = vsel %vm178, %v185, %v189
  %v191 = vshrl.u32 %v137, 16
  %v193 = vor.u32 %v191, %v189
  %v195 = vshll.u32 %v138, 16
  %v197 = vrot.slane %v195, 1
  %v198 = vsel %vm178, %v193, %v197
  %v199 = vshrl.u32 %v138, 16
  %v201 = vor.u32 %v199, %v197
  %v203 = vshll.u32 %v139, 16
  %v205 = vrot.slane %v203, 1
  %v206 = vsel %vm178, %v201, %v205
  %v207 = vshrl.u32 %v139, 16
  %v209 = vor.u32 %v207, %v205
  %v211 = vshll.u32 %v140, 16
  %v213 = vrot.slane %v211, 1
  %v214 = vsel %vm178, %v209, %v213
  %v215 = vshrl.u32 %v140, 16
  %v217 = vor.u32 %v215, %v213
  %v219 = vshll.u32 %v141, 16
  %v221 = vrot.slane %v219, 1
  %v222 = vsel %vm178, %v217, %v221
  %v223 = vshrl.u32 %v141, 16
  %v225 = vor.u32 %v223, %v221
  %v227 = vshll.u32 %v142, 16
  %v229 = vrot.slane %v227, 1
  %v230 = vsel %vm178, %v225, %v229
  %v231 = vshrl.u32 %v142, 16
  %v233 = vor.u32 %v231, %v229
  %v235 = vshll.u32 %v143, 16
  %v237 = vrot.slane %v235, 1
  %v238 = vsel %vm178, %v233, %v237
  %v239 = vshrl.u32 %v143, 16
  %v241 = vor.u32 %v239, %v237
  %v243 = vshll.u32 %v160, 16
  %v245 = vrot.slane %v243, 1
  %v246 = vsel %vm178, %v241, %v245
  %v271 = vunpack.c.l.b16 %v162
  %v272 = vunpack.c.l.b16 %v163
  %v273 = vunpack.c.l.b16 %v164
  %v274 = vunpack.c.l.b16 %v165
  %v275 = vunpack.c.l.b16 %v166
  %v276 = vunpack.c.l.b16 %v167
  %v277 = vunpack.c.l.b16 %v168
  %v278 = vunpack.c.l.b16 %v169
  %v279 = vunpack.c.l.b16 %v170
  %v280 = vunpack.c.l.b16 %v171
  %v281 = vunpack.c.l.b16 %v172
  %v282 = vunpack.c.l.b16 %v173
  %v283 = vunpack.c.l.b16 %v174
  %v284 = vunpack.c.l.b16 %v175
  %v285 = vunpack.c.l.b16 %v176
  %v286 = vunpack.c.l.b16 %v177
  %v287 = vpack.c.b16 %v272, %v271
  %v288 = vpack.c.b16 %v274, %v273
  %v289 = vpack.c.b16 %v276, %v275
  %v290 = vpack.c.b16 %v278, %v277
  %v291 = vpack.c.b16 %v280, %v279
  %v292 = vpack.c.b16 %v282, %v281
  %v293 = vpack.c.b16 %v284, %v283
  %v294 = vpack.c.b16 %v286, %v285
  %303 = vmatprep.subr.bf16.mxu0 0
  %304 = vmatpush1.bf16.msra.mxu0 %v294
  %305 = vmatprep.subr.bf16.mxu0 0
  %306 = vmatpush1.bf16.msra.mxu0 %v293
  %307 = vmatprep.subr.bf16.mxu0 0
  %308 = vmatpush1.bf16.msra.mxu0 %v292
  %309 = vmatprep.subr.bf16.mxu0 0
  %310 = vmatpush1.bf16.msra.mxu0 %v291
  %311 = vmatprep.subr.bf16.mxu0 0
  %312 = vmatpush1.bf16.msra.mxu0 %v290
  %313 = vmatprep.subr.bf16.mxu0 0
  %314 = vmatpush1.bf16.msra.mxu0 %v289
  %315 = vmatprep.subr.bf16.mxu0 0
  %316 = vmatpush1.bf16.msra.mxu0 %v288
  %317 = vmatprep.subr.bf16.mxu0 0
  %318 = vmatpush1.bf16.msra.mxu0 %v287
  %319 = vmatprep.subr.bf16.mxu0 0
  %320 = vmatpush2.bf16.msra.mxu0 0
  %321 = vmatprep.subr.bf16.mxu0 0
  %322 = vmatpush2.bf16.msra.mxu0 0
  %323 = vmatprep.subr.bf16.mxu0 0
  %324 = vmatpush2.bf16.msra.mxu0 0
  %325 = vmatprep.subr.bf16.mxu0 0
  %326 = vmatpush2.bf16.msra.mxu0 0
  %327 = vmatprep.subr.bf16.mxu0 0
  %328 = vmatpush2.bf16.msra.mxu0 0
  %329 = vmatprep.subr.bf16.mxu0 0
  %330 = vmatpush2.bf16.msra.mxu0 0
  %331 = vmatprep.subr.bf16.mxu0 0
  %332 = vmatpush2.bf16.msra.mxu0 0
  %333 = vmatprep.subr.bf16.mxu0 0
  %334 = vmatpush2.bf16.msra.mxu0 0
  %335 = vmatprep.mubr.bf16.mxu0 0
  %336 = vmatmul.mubr.bf16.gmra.mxu0 %v190
  %v337 = vpop.f32.mrf.mxu0
  %v338 = vadd.f32 0.0, %v337
  %v339 = vpop.f32.mrf.mxu0
  %v340 = vpop.f32.mrf.mxu0
  %v341 = vadd.f32 0.0, %v340
  %v342 = vpop.f32.mrf.mxu0
  %343 = vmatprep.mubr.bf16.mxu0 0
  %344 = vmatmul.mubr.bf16.gmra.mxu0 %v198
  %v345 = vpop.f32.mrf.mxu0
  %v346 = vadd.f32 0.0, %v345
  %v347 = vpop.f32.mrf.mxu0
  %v348 = vpop.f32.mrf.mxu0
  %v349 = vadd.f32 0.0, %v348
  %v350 = vpop.f32.mrf.mxu0
  %351 = vmatprep.mubr.bf16.mxu0 0
  %352 = vmatmul.mubr.bf16.gmra.mxu0 %v206
  %v353 = vpop.f32.mrf.mxu0
  %v354 = vadd.f32 0.0, %v353
  %v355 = vpop.f32.mrf.mxu0
  %v356 = vpop.f32.mrf.mxu0
  %v357 = vadd.f32 0.0, %v356
  %v358 = vpop.f32.mrf.mxu0
  %359 = vmatprep.mubr.bf16.mxu0 0
  %360 = vmatmul.mubr.bf16.gmra.mxu0 %v214
  %v361 = vpop.f32.mrf.mxu0
  %v362 = vadd.f32 0.0, %v361
  %v363 = vpop.f32.mrf.mxu0
  %v364 = vpop.f32.mrf.mxu0
  %v365 = vadd.f32 0.0, %v364
  %v366 = vpop.f32.mrf.mxu0
  %367 = vmatprep.mubr.bf16.mxu0 0
  %368 = vmatmul.mubr.bf16.gmra.mxu0 %v222
  %v369 = vpop.f32.mrf.mxu0
  %v370 = vadd.f32 0.0, %v369
  %v371 = vpop.f32.mrf.mxu0
  %v372 = vpop.f32.mrf.mxu0
  %v373 = vadd.f32 0.0, %v372
  %v374 = vpop.f32.mrf.mxu0
  %375 = vmatprep.mubr.bf16.mxu0 0
  %376 = vmatmul.mubr.bf16.gmra.mxu0 %v230
  %v377 = vpop.f32.mrf.mxu0
  %v378 = vadd.f32 0.0, %v377
  %v379 = vpop.f32.mrf.mxu0
  %v380 = vpop.f32.mrf.mxu0
  %v381 = vadd.f32 0.0, %v380
  %v382 = vpop.f32.mrf.mxu0
  %383 = vmatprep.mubr.bf16.mxu0 0
  %384 = vmatmul.mubr.bf16.gmra.mxu0 %v238
  %v385 = vpop.f32.mrf.mxu0
  %v386 = vadd.f32 0.0, %v385
  %v387 = vpop.f32.mrf.mxu0
  %v388 = vpop.f32.mrf.mxu0
  %v389 = vadd.f32 0.0, %v388
  %v390 = vpop.f32.mrf.mxu0
  %391 = vmatprep.mubr.bf16.mxu0 0
  %392 = vmatmul.mubr.bf16.gmra.mxu0 %v246
  %v393 = vpop.f32.mrf.mxu0
  %v394 = vadd.f32 0.0, %v393
  %v395 = vpop.f32.mrf.mxu0
  %v396 = vpop.f32.mrf.mxu0
  %v397 = vadd.f32 0.0, %v396
  %v398 = vpop.f32.mrf.mxu0
  %399 = vdwg.mxu0
  %v416 = vunpack.c.l.b16 %v144
  %v417 = vunpack.c.l.b16 %v145
  %v418 = vunpack.c.l.b16 %v146
  %v419 = vunpack.c.l.b16 %v147
  %v420 = vunpack.c.l.b16 %v148
  %v421 = vunpack.c.l.b16 %v149
  %v422 = vunpack.c.l.b16 %v150
  %v423 = vunpack.c.l.b16 %v151
  %v424 = vunpack.c.l.b16 %v152
  %v425 = vunpack.c.l.b16 %v153
  %v426 = vunpack.c.l.b16 %v154
  %v427 = vunpack.c.l.b16 %v155
  %v428 = vunpack.c.l.b16 %v156
  %v429 = vunpack.c.l.b16 %v157
  %v430 = vunpack.c.l.b16 %v158
  %v431 = vunpack.c.l.b16 %v159
  %v432 = vpack.c.b16 %v417, %v416
  %v433 = vpack.c.b16 %v419, %v418
  %v434 = vpack.c.b16 %v421, %v420
  %v435 = vpack.c.b16 %v423, %v422
  %v436 = vpack.c.b16 %v425, %v424
  %v437 = vpack.c.b16 %v427, %v426
  %v438 = vpack.c.b16 %v429, %v428
  %v439 = vpack.c.b16 %v431, %v430
  %448 = vmatprep.subr.bf16.mxu0 0
  %449 = vmatpush1.bf16.msra.mxu0 %v439
  %450 = vmatprep.subr.bf16.mxu0 0
  %451 = vmatpush1.bf16.msra.mxu0 %v438
  %452 = vmatprep.subr.bf16.mxu0 0
  %453 = vmatpush1.bf16.msra.mxu0 %v437
  %454 = vmatprep.subr.bf16.mxu0 0
  %455 = vmatpush1.bf16.msra.mxu0 %v436
  %456 = vmatprep.subr.bf16.mxu0 0
  %457 = vmatpush1.bf16.msra.mxu0 %v435
  %458 = vmatprep.subr.bf16.mxu0 0
  %459 = vmatpush1.bf16.msra.mxu0 %v434
  %460 = vmatprep.subr.bf16.mxu0 0
  %461 = vmatpush1.bf16.msra.mxu0 %v433
  %462 = vmatprep.subr.bf16.mxu0 0
  %463 = vmatpush1.bf16.msra.mxu0 %v432
  %464 = vmatprep.subr.bf16.mxu0 0
  %465 = vmatpush2.bf16.msra.mxu0 0
  %466 = vmatprep.subr.bf16.mxu0 0
  %467 = vmatpush2.bf16.msra.mxu0 0
  %468 = vmatprep.subr.bf16.mxu0 0
  %469 = vmatpush2.bf16.msra.mxu0 0
  %470 = vmatprep.subr.bf16.mxu0 0
  %471 = vmatpush2.bf16.msra.mxu0 0
  %472 = vmatprep.subr.bf16.mxu0 0
  %473 = vmatpush2.bf16.msra.mxu0 0
  %474 = vmatprep.subr.bf16.mxu0 0
  %475 = vmatpush2.bf16.msra.mxu0 0
  %476 = vmatprep.subr.bf16.mxu0 0
  %477 = vmatpush2.bf16.msra.mxu0 0
  %478 = vmatprep.subr.bf16.mxu0 0
  %479 = vmatpush2.bf16.msra.mxu0 0
  %480 = vmatprep.mubr.bf16.mxu0 0
  %481 = vmatmul.mubr.bf16.gmra.mxu0 %v136
  %v482 = vpop.f32.mrf.mxu0
  %v483 = vadd.f32 %v338, %v482
  %v484 = vpop.f32.mrf.mxu0
  %v485 = vpop.f32.mrf.mxu0
  %v486 = vadd.f32 %v341, %v485
  %v487 = vpop.f32.mrf.mxu0
  %488 = vmatprep.mubr.bf16.mxu0 0
  %489 = vmatmul.mubr.bf16.gmra.mxu0 %v137
  %v490 = vpop.f32.mrf.mxu0
  %v491 = vadd.f32 %v346, %v490
  %v492 = vpop.f32.mrf.mxu0
  %v493 = vpop.f32.mrf.mxu0
  %v494 = vadd.f32 %v349, %v493
  %v495 = vpop.f32.mrf.mxu0
  %496 = vmatprep.mubr.bf16.mxu0 0
  %497 = vmatmul.mubr.bf16.gmra.mxu0 %v138
  %v498 = vpop.f32.mrf.mxu0
  %v499 = vadd.f32 %v354, %v498
  %v500 = vpop.f32.mrf.mxu0
  %v501 = vpop.f32.mrf.mxu0
  %v502 = vadd.f32 %v357, %v501
  %v503 = vpop.f32.mrf.mxu0
  %504 = vmatprep.mubr.bf16.mxu0 0
  %505 = vmatmul.mubr.bf16.gmra.mxu0 %v139
  %v506 = vpop.f32.mrf.mxu0
  %v507 = vadd.f32 %v362, %v506
  %v508 = vpop.f32.mrf.mxu0
  %v509 = vpop.f32.mrf.mxu0
  %v510 = vadd.f32 %v365, %v509
  %v511 = vpop.f32.mrf.mxu0
  %512 = vmatprep.mubr.bf16.mxu0 0
  %513 = vmatmul.mubr.bf16.gmra.mxu0 %v140
  %v514 = vpop.f32.mrf.mxu0
  %v515 = vadd.f32 %v370, %v514
  %v516 = vpop.f32.mrf.mxu0
  %v517 = vpop.f32.mrf.mxu0
  %v518 = vadd.f32 %v373, %v517
  %v519 = vpop.f32.mrf.mxu0
  %520 = vmatprep.mubr.bf16.mxu0 0
  %521 = vmatmul.mubr.bf16.gmra.mxu0 %v141
  %v522 = vpop.f32.mrf.mxu0
  %v523 = vadd.f32 %v378, %v522
  %v524 = vpop.f32.mrf.mxu0
  %v525 = vpop.f32.mrf.mxu0
  %v526 = vadd.f32 %v381, %v525
  %v527 = vpop.f32.mrf.mxu0
  %528 = vmatprep.mubr.bf16.mxu0 0
  %529 = vmatmul.mubr.bf16.gmra.mxu0 %v142
  %v530 = vpop.f32.mrf.mxu0
  %v531 = vadd.f32 %v386, %v530
  %v532 = vpop.f32.mrf.mxu0
  %v533 = vpop.f32.mrf.mxu0
  %v534 = vadd.f32 %v389, %v533
  %v535 = vpop.f32.mrf.mxu0
  %536 = vmatprep.mubr.bf16.mxu0 0
  %537 = vmatmul.mubr.bf16.gmra.mxu0 %v143
  %v538 = vpop.f32.mrf.mxu0
  %v539 = vadd.f32 %v394, %v538
  %v540 = vpop.f32.mrf.mxu0
  %v541 = vpop.f32.mrf.mxu0
  %v542 = vadd.f32 %v397, %v541
  %v543 = vpop.f32.mrf.mxu0
  %544 = vdwg.mxu0
  %s545 = scalar_lea.vmem %s2, 128
  %v546 = vld [vmem:[%s545] sm:$0xf]
  %v547 = vld [vmem:[%s545 + $0x4] sm:$0xf]
  %v548 = vld [vmem:[%s545 + $0x8] sm:$0xf]
  %v549 = vld [vmem:[%s545 + $0xc] sm:$0xf]
  %v550 = vld [vmem:[%s545 + $0x10] sm:$0xf]
  %v551 = vld [vmem:[%s545 + $0x14] sm:$0xf]
  %v552 = vld [vmem:[%s545 + $0x18] sm:$0xf]
  %v553 = vld [vmem:[%s545 + $0x1c] sm:$0xf]
  %v554 = vld [vmem:[%s545 + $0x20] sm:$0xf]
  %v555 = vld [vmem:[%s545 + $0x24] sm:$0xf]
  %v556 = vld [vmem:[%s545 + $0x28] sm:$0xf]
  %v557 = vld [vmem:[%s545 + $0x2c] sm:$0xf]
  %v558 = vld [vmem:[%s545 + $0x30] sm:$0xf]
  %v559 = vld [vmem:[%s545 + $0x34] sm:$0xf]
  %v560 = vld [vmem:[%s545 + $0x38] sm:$0xf]
  %v561 = vld [vmem:[%s545 + $0x3c] sm:$0xf]
  %vm571 = vcmask 1046528
  %v572 = vrot.slane %v136, 1
  %v573 = vrot.slane %v137, 1
  %v574 = vsel %vm571, %v572, %v573
  %v575 = vrot.slane %v138, 1
  %v576 = vsel %vm571, %v573, %v575
  %v577 = vrot.slane %v139, 1
  %v578 = vsel %vm571, %v575, %v577
  %v579 = vrot.slane %v140, 1
  %v580 = vsel %vm571, %v577, %v579
  %v581 = vrot.slane %v141, 1
  %v582 = vsel %vm571, %v579, %v581
  %v583 = vrot.slane %v142, 1
  %v584 = vsel %vm571, %v581, %v583
  %v585 = vrot.slane %v143, 1
  %v586 = vsel %vm571, %v583, %v585
  %v587 = vrot.slane %v160, 1
  %v588 = vsel %vm571, %v585, %v587
  %v613 = vunpack.c.l.b16 %v546
  %v614 = vunpack.c.l.b16 %v547
  %v615 = vunpack.c.l.b16 %v548
  %v616 = vunpack.c.l.b16 %v549
  %v617 = vunpack.c.l.b16 %v550
  %v618 = vunpack.c.l.b16 %v551
  %v619 = vunpack.c.l.b16 %v552
  %v620 = vunpack.c.l.b16 %v553
  %v621 = vunpack.c.l.b16 %v554
  %v622 = vunpack.c.l.b16 %v555
  %v623 = vunpack.c.l.b16 %v556
  %v624 = vunpack.c.l.b16 %v557
  %v625 = vunpack.c.l.b16 %v558
  %v626 = vunpack.c.l.b16 %v559
  %v627 = vunpack.c.l.b16 %v560
  %v628 = vunpack.c.l.b16 %v561
  %v629 = vpack.c.b16 %v614, %v613
  %v630 = vpack.c.b16 %v616, %v615
  %v631 = vpack.c.b16 %v618, %v617
  %v632 = vpack.c.b16 %v620, %v619
  %v633 = vpack.c.b16 %v622, %v621
  %v634 = vpack.c.b16 %v624, %v623
  %v635 = vpack.c.b16 %v626, %v625
  %v636 = vpack.c.b16 %v628, %v627
  %645 = vmatprep.subr.bf16.mxu0 0
  %646 = vmatpush1.bf16.msra.mxu0 %v636
  %647 = vmatprep.subr.bf16.mxu0 0
  %648 = vmatpush1.bf16.msra.mxu0 %v635
  %649 = vmatprep.subr.bf16.mxu0 0
  %650 = vmatpush1.bf16.msra.mxu0 %v634
  %651 = vmatprep.subr.bf16.mxu0 0
  %652 = vmatpush1.bf16.msra.mxu0 %v633
  %653 = vmatprep.subr.bf16.mxu0 0
  %654 = vmatpush1.bf16.msra.mxu0 %v632
  %655 = vmatprep.subr.bf16.mxu0 0
  %656 = vmatpush1.bf16.msra.mxu0 %v631
  %657 = vmatprep.subr.bf16.mxu0 0
  %658 = vmatpush1.bf16.msra.mxu0 %v630
  %659 = vmatprep.subr.bf16.mxu0 0
  %660 = vmatpush1.bf16.msra.mxu0 %v629
  %661 = vmatprep.subr.bf16.mxu0 0
  %662 = vmatpush2.bf16.msra.mxu0 0
  %663 = vmatprep.subr.bf16.mxu0 0
  %664 = vmatpush2.bf16.msra.mxu0 0
  %665 = vmatprep.subr.bf16.mxu0 0
  %666 = vmatpush2.bf16.msra.mxu0 0
  %667 = vmatprep.subr.bf16.mxu0 0
  %668 = vmatpush2.bf16.msra.mxu0 0
  %669 = vmatprep.subr.bf16.mxu0 0
  %670 = vmatpush2.bf16.msra.mxu0 0
  %671 = vmatprep.subr.bf16.mxu0 0
  %672 = vmatpush2.bf16.msra.mxu0 0
  %673 = vmatprep.subr.bf16.mxu0 0
  %674 = vmatpush2.bf16.msra.mxu0 0
  %675 = vmatprep.subr.bf16.mxu0 0
  %676 = vmatpush2.bf16.msra.mxu0 0
  %677 = vmatprep.mubr.bf16.mxu0 0
  %678 = vmatmul.mubr.bf16.gmra.mxu0 %v574
  %v679 = vpop.f32.mrf.mxu0
  %v680 = vadd.f32 0.0, %v679
  %v681 = vpop.f32.mrf.mxu0
  %v682 = vpop.f32.mrf.mxu0
  %v683 = vadd.f32 0.0, %v682
  %v684 = vpop.f32.mrf.mxu0
  %685 = vmatprep.mubr.bf16.mxu0 0
  %686 = vmatmul.mubr.bf16.gmra.mxu0 %v576
  %v687 = vpop.f32.mrf.mxu0
  %v688 = vadd.f32 0.0, %v687
  %v689 = vpop.f32.mrf.mxu0
  %v690 = vpop.f32.mrf.mxu0
  %v691 = vadd.f32 0.0, %v690
  %v692 = vpop.f32.mrf.mxu0
  %693 = vmatprep.mubr.bf16.mxu0 0
  %694 = vmatmul.mubr.bf16.gmra.mxu0 %v578
  %v695 = vpop.f32.mrf.mxu0
  %v696 = vadd.f32 0.0, %v695
  %v697 = vpop.f32.mrf.mxu0
  %v698 = vpop.f32.mrf.mxu0
  %v699 = vadd.f32 0.0, %v698
  %v700 = vpop.f32.mrf.mxu0
  %701 = vmatprep.mubr.bf16.mxu0 0
  %702 = vmatmul.mubr.bf16.gmra.mxu0 %v580
  %v703 = vpop.f32.mrf.mxu0
  %v704 = vadd.f32 0.0, %v703
  %v705 = vpop.f32.mrf.mxu0
  %v706 = vpop.f32.mrf.mxu0
  %v707 = vadd.f32 0.0, %v706
  %v708 = vpop.f32.mrf.mxu0
  %709 = vmatprep.mubr.bf16.mxu0 0
  %710 = vmatmul.mubr.bf16.gmra.mxu0 %v582
  %v711 = vpop.f32.mrf.mxu0
  %v712 = vadd.f32 0.0, %v711
  %v713 = vpop.f32.mrf.mxu0
  %v714 = vpop.f32.mrf.mxu0
  %v715 = vadd.f32 0.0, %v714
  %v716 = vpop.f32.mrf.mxu0
  %717 = vmatprep.mubr.bf16.mxu0 0
  %718 = vmatmul.mubr.bf16.gmra.mxu0 %v584
  %v719 = vpop.f32.mrf.mxu0
  %v720 = vadd.f32 0.0, %v719
  %v721 = vpop.f32.mrf.mxu0
  %v722 = vpop.f32.mrf.mxu0
  %v723 = vadd.f32 0.0, %v722
  %v724 = vpop.f32.mrf.mxu0
  %725 = vmatprep.mubr.bf16.mxu0 0
  %726 = vmatmul.mubr.bf16.gmra.mxu0 %v586
  %v727 = vpop.f32.mrf.mxu0
  %v728 = vadd.f32 0.0, %v727
  %v729 = vpop.f32.mrf.mxu0
  %v730 = vpop.f32.mrf.mxu0
  %v731 = vadd.f32 0.0, %v730
  %v732 = vpop.f32.mrf.mxu0
  %733 = vmatprep.mubr.bf16.mxu0 0
  %734 = vmatmul.mubr.bf16.gmra.mxu0 %v588
  %v735 = vpop.f32.mrf.mxu0
  %v736 = vadd.f32 0.0, %v735
  %v737 = vpop.f32.mrf.mxu0
  %v738 = vpop.f32.mrf.mxu0
  %v739 = vadd.f32 0.0, %v738
  %v740 = vpop.f32.mrf.mxu0
  %741 = vdwg.mxu0
  %v742 = vadd.f32 %v483, %v680
  %v743 = vadd.f32 %v486, %v683
  %v744 = vadd.f32 %v491, %v688
  %v745 = vadd.f32 %v494, %v691
  %v746 = vadd.f32 %v499, %v696
  %v747 = vadd.f32 %v502, %v699
  %v748 = vadd.f32 %v507, %v704
  %v749 = vadd.f32 %v510, %v707
  %v750 = vadd.f32 %v515, %v712
  %v751 = vadd.f32 %v518, %v715
  %v752 = vadd.f32 %v523, %v720
  %v753 = vadd.f32 %v526, %v723
  %v754 = vadd.f32 %v531, %v728
  %v755 = vadd.f32 %v534, %v731
  %v756 = vadd.f32 %v539, %v736
  %v757 = vadd.f32 %v542, %v739
  %s758 = scalar_lea.vmem %s2, 192
  %v759 = vld [vmem:[%s758] sm:$0xf]
  %v760 = vld [vmem:[%s758 + $0x4] sm:$0xf]
  %v761 = vld [vmem:[%s758 + $0x8] sm:$0xf]
  %v762 = vld [vmem:[%s758 + $0xc] sm:$0xf]
  %v763 = vld [vmem:[%s758 + $0x10] sm:$0xf]
  %v764 = vld [vmem:[%s758 + $0x14] sm:$0xf]
  %v765 = vld [vmem:[%s758 + $0x18] sm:$0xf]
  %v766 = vld [vmem:[%s758 + $0x1c] sm:$0xf]
  %v767 = vld [vmem:[%s758 + $0x20] sm:$0xf]
  %v768 = vld [vmem:[%s758 + $0x24] sm:$0xf]
  %v769 = vld [vmem:[%s758 + $0x28] sm:$0xf]
  %v770 = vld [vmem:[%s758 + $0x2c] sm:$0xf]
  %v771 = vld [vmem:[%s758 + $0x30] sm:$0xf]
  %v772 = vld [vmem:[%s758 + $0x34] sm:$0xf]
  %v773 = vld [vmem:[%s758 + $0x38] sm:$0xf]
  %v774 = vld [vmem:[%s758 + $0x3c] sm:$0xf]
  %vm775 = vcmask 1045504
  %v776 = vrot.slane %v136, 2
  %v777 = vrot.slane %v137, 2
  %v778 = vsel %vm775, %v776, %v777
  %v779 = vrot.slane %v138, 2
  %v780 = vsel %vm775, %v777, %v779
  %v781 = vrot.slane %v139, 2
  %v782 = vsel %vm775, %v779, %v781
  %v783 = vrot.slane %v140, 2
  %v784 = vsel %vm775, %v781, %v783
  %v785 = vrot.slane %v141, 2
  %v786 = vsel %vm775, %v783, %v785
  %v787 = vrot.slane %v142, 2
  %v788 = vsel %vm775, %v785, %v787
  %v789 = vrot.slane %v143, 2
  %v790 = vsel %vm775, %v787, %v789
  %v791 = vrot.slane %v160, 2
  %v792 = vsel %vm775, %v789, %v791
  %v817 = vunpack.c.l.b16 %v759
  %v818 = vunpack.c.l.b16 %v760
  %v819 = vunpack.c.l.b16 %v761
  %v820 = vunpack.c.l.b16 %v762
  %v821 = vunpack.c.l.b16 %v763
  %v822 = vunpack.c.l.b16 %v764
  %v823 = vunpack.c.l.b16 %v765
  %v824 = vunpack.c.l.b16 %v766
  %v825 = vunpack.c.l.b16 %v767
  %v826 = vunpack.c.l.b16 %v768
  %v827 = vunpack.c.l.b16 %v769
  %v828 = vunpack.c.l.b16 %v770
  %v829 = vunpack.c.l.b16 %v771
  %v830 = vunpack.c.l.b16 %v772
  %v831 = vunpack.c.l.b16 %v773
  %v832 = vunpack.c.l.b16 %v774
  %v833 = vpack.c.b16 %v818, %v817
  %v834 = vpack.c.b16 %v820, %v819
  %v835 = vpack.c.b16 %v822, %v821
  %v836 = vpack.c.b16 %v824, %v823
  %v837 = vpack.c.b16 %v826, %v825
  %v838 = vpack.c.b16 %v828, %v827
  %v839 = vpack.c.b16 %v830, %v829
  %v840 = vpack.c.b16 %v832, %v831
  %849 = vmatprep.subr.bf16.mxu0 0
  %850 = vmatpush1.bf16.msra.mxu0 %v840
  %851 = vmatprep.subr.bf16.mxu0 0
  %852 = vmatpush1.bf16.msra.mxu0 %v839
  %853 = vmatprep.subr.bf16.mxu0 0
  %854 = vmatpush1.bf16.msra.mxu0 %v838
  %855 = vmatprep.subr.bf16.mxu0 0
  %856 = vmatpush1.bf16.msra.mxu0 %v837
  %857 = vmatprep.subr.bf16.mxu0 0
  %858 = vmatpush1.bf16.msra.mxu0 %v836
  %859 = vmatprep.subr.bf16.mxu0 0
  %860 = vmatpush1.bf16.msra.mxu0 %v835
  %861 = vmatprep.subr.bf16.mxu0 0
  %862 = vmatpush1.bf16.msra.mxu0 %v834
  %863 = vmatprep.subr.bf16.mxu0 0
  %864 = vmatpush1.bf16.msra.mxu0 %v833
  %865 = vmatprep.subr.bf16.mxu0 0
  %866 = vmatpush2.bf16.msra.mxu0 0
  %867 = vmatprep.subr.bf16.mxu0 0
  %868 = vmatpush2.bf16.msra.mxu0 0
  %869 = vmatprep.subr.bf16.mxu0 0
  %870 = vmatpush2.bf16.msra.mxu0 0
  %871 = vmatprep.subr.bf16.mxu0 0
  %872 = vmatpush2.bf16.msra.mxu0 0
  %873 = vmatprep.subr.bf16.mxu0 0
  %874 = vmatpush2.bf16.msra.mxu0 0
  %875 = vmatprep.subr.bf16.mxu0 0
  %876 = vmatpush2.bf16.msra.mxu0 0
  %877 = vmatprep.subr.bf16.mxu0 0
  %878 = vmatpush2.bf16.msra.mxu0 0
  %879 = vmatprep.subr.bf16.mxu0 0
  %880 = vmatpush2.bf16.msra.mxu0 0
  %881 = vmatprep.mubr.bf16.mxu0 0
  %882 = vmatmul.mubr.bf16.gmra.mxu0 %v778
  %v883 = vpop.f32.mrf.mxu0
  %v884 = vadd.f32 0.0, %v883
  %v885 = vpop.f32.mrf.mxu0
  %v886 = vpop.f32.mrf.mxu0
  %v887 = vadd.f32 0.0, %v886
  %v888 = vpop.f32.mrf.mxu0
  %889 = vmatprep.mubr.bf16.mxu0 0
  %890 = vmatmul.mubr.bf16.gmra.mxu0 %v780
  %v891 = vpop.f32.mrf.mxu0
  %v892 = vadd.f32 0.0, %v891
  %v893 = vpop.f32.mrf.mxu0
  %v894 = vpop.f32.mrf.mxu0
  %v895 = vadd.f32 0.0, %v894
  %v896 = vpop.f32.mrf.mxu0
  %897 = vmatprep.mubr.bf16.mxu0 0
  %898 = vmatmul.mubr.bf16.gmra.mxu0 %v782
  %v899 = vpop.f32.mrf.mxu0
  %v900 = vadd.f32 0.0, %v899
  %v901 = vpop.f32.mrf.mxu0
  %v902 = vpop.f32.mrf.mxu0
  %v903 = vadd.f32 0.0, %v902
  %v904 = vpop.f32.mrf.mxu0
  %905 = vmatprep.mubr.bf16.mxu0 0
  %906 = vmatmul.mubr.bf16.gmra.mxu0 %v784
  %v907 = vpop.f32.mrf.mxu0
  %v908 = vadd.f32 0.0, %v907
  %v909 = vpop.f32.mrf.mxu0
  %v910 = vpop.f32.mrf.mxu0
  %v911 = vadd.f32 0.0, %v910
  %v912 = vpop.f32.mrf.mxu0
  %913 = vmatprep.mubr.bf16.mxu0 0
  %914 = vmatmul.mubr.bf16.gmra.mxu0 %v786
  %v915 = vpop.f32.mrf.mxu0
  %v916 = vadd.f32 0.0, %v915
  %v917 = vpop.f32.mrf.mxu0
  %v918 = vpop.f32.mrf.mxu0
  %v919 = vadd.f32 0.0, %v918
  %v920 = vpop.f32.mrf.mxu0
  %921 = vmatprep.mubr.bf16.mxu0 0
  %922 = vmatmul.mubr.bf16.gmra.mxu0 %v788
  %v923 = vpop.f32.mrf.mxu0
  %v924 = vadd.f32 0.0, %v923
  %v925 = vpop.f32.mrf.mxu0
  %v926 = vpop.f32.mrf.mxu0
  %v927 = vadd.f32 0.0, %v926
  %v928 = vpop.f32.mrf.mxu0
  %929 = vmatprep.mubr.bf16.mxu0 0
  %930 = vmatmul.mubr.bf16.gmra.mxu0 %v790
  %v931 = vpop.f32.mrf.mxu0
  %v932 = vadd.f32 0.0, %v931
  %v933 = vpop.f32.mrf.mxu0
  %v934 = vpop.f32.mrf.mxu0
  %v935 = vadd.f32 0.0, %v934
  %v936 = vpop.f32.mrf.mxu0
  %937 = vmatprep.mubr.bf16.mxu0 0
  %938 = vmatmul.mubr.bf16.gmra.mxu0 %v792
  %v939 = vpop.f32.mrf.mxu0
  %v940 = vadd.f32 0.0, %v939
  %v941 = vpop.f32.mrf.mxu0
  %v942 = vpop.f32.mrf.mxu0
  %v943 = vadd.f32 0.0, %v942
  %v944 = vpop.f32.mrf.mxu0
  %945 = vdwg.mxu0
  %v946 = vadd.f32 %v742, %v884
  %v947 = vadd.f32 %v743, %v887
  %v948 = vadd.f32 %v744, %v892
  %v949 = vadd.f32 %v745, %v895
  %v950 = vadd.f32 %v746, %v900
  %v951 = vadd.f32 %v747, %v903
  %v952 = vadd.f32 %v748, %v908
  %v953 = vadd.f32 %v749, %v911
  %v954 = vadd.f32 %v750, %v916
  %v955 = vadd.f32 %v751, %v919
  %v956 = vadd.f32 %v752, %v924
  %v957 = vadd.f32 %v753, %v927
  %v958 = vadd.f32 %v754, %v932
  %v959 = vadd.f32 %v755, %v935
  %v960 = vadd.f32 %v756, %v940
  %v961 = vadd.f32 %v757, %v943
  %s962 = scalar_lea.vmem %s2, 256
  %v963 = vld [vmem:[%s962] sm:$0xf]
  %v964 = vld [vmem:[%s962 + $0x4] sm:$0xf]
  %v965 = vld [vmem:[%s962 + $0x8] sm:$0xf]
  %v966 = vld [vmem:[%s962 + $0xc] sm:$0xf]
  %v967 = vld [vmem:[%s962 + $0x10] sm:$0xf]
  %v968 = vld [vmem:[%s962 + $0x14] sm:$0xf]
  %v969 = vld [vmem:[%s962 + $0x18] sm:$0xf]
  %v970 = vld [vmem:[%s962 + $0x1c] sm:$0xf]
  %v971 = vld [vmem:[%s962 + $0x20] sm:$0xf]
  %v972 = vld [vmem:[%s962 + $0x24] sm:$0xf]
  %v973 = vld [vmem:[%s962 + $0x28] sm:$0xf]
  %v974 = vld [vmem:[%s962 + $0x2c] sm:$0xf]
  %v975 = vld [vmem:[%s962 + $0x30] sm:$0xf]
  %v976 = vld [vmem:[%s962 + $0x34] sm:$0xf]
  %v977 = vld [vmem:[%s962 + $0x38] sm:$0xf]
  %v978 = vld [vmem:[%s962 + $0x3c] sm:$0xf]
  %vm979 = vsmask.f32 5376
  %v980 = vrot.slane %v180, 2
  %v981 = vrot.slane %v182, 3
  %v982 = vor.u32 %v980, %v981
  %v983 = vrot.slane %v191, 2
  %v984 = vrot.slane %v187, 3
  %v985 = vor.u32 %v983, %v984
  %v986 = vsel %vm979, %v982, %v985
  %v987 = vrot.slane %v199, 2
  %v988 = vrot.slane %v195, 3
  %v989 = vor.u32 %v987, %v988
  %v990 = vsel %vm979, %v985, %v989
  %v991 = vrot.slane %v207, 2
  %v992 = vrot.slane %v203, 3
  %v993 = vor.u32 %v991, %v992
  %v994 = vsel %vm979, %v989, %v993
  %v995 = vrot.slane %v215, 2
  %v996 = vrot.slane %v211, 3
  %v997 = vor.u32 %v995, %v996
  %v998 = vsel %vm979, %v993, %v997
  %v999 = vrot.slane %v223, 2
  %v1000 = vrot.slane %v219, 3
  %v1001 = vor.u32 %v999, %v1000
  %v1002 = vsel %vm979, %v997, %v1001
  %v1003 = vrot.slane %v231, 2
  %v1004 = vrot.slane %v227, 3
  %v1005 = vor.u32 %v1003, %v1004
  %v1006 = vsel %vm979, %v1001, %v1005
  %v1007 = vrot.slane %v239, 2
  %v1008 = vrot.slane %v235, 3
  %v1009 = vor.u32 %v1007, %v1008
  %v1010 = vsel %vm979, %v1005, %v1009
  %v1011 = vshrl.u32 %v160, 16
  %v1013 = vrot.slane %v1011, 2
  %v1014 = vrot.slane %v243, 3
  %v1015 = vor.u32 %v1013, %v1014
  %v1016 = vsel %vm979, %v1009, %v1015
  %v1041 = vunpack.c.l.b16 %v963
  %v1042 = vunpack.c.l.b16 %v964
  %v1043 = vunpack.c.l.b16 %v965
  %v1044 = vunpack.c.l.b16 %v966
  %v1045 = vunpack.c.l.b16 %v967
  %v1046 = vunpack.c.l.b16 %v968
  %v1047 = vunpack.c.l.b16 %v969
  %v1048 = vunpack.c.l.b16 %v970
  %v1049 = vunpack.c.l.b16 %v971
  %v1050 = vunpack.c.l.b16 %v972
  %v1051 = vunpack.c.l.b16 %v973
  %v1052 = vunpack.c.l.b16 %v974
  %v1053 = vunpack.c.l.b16 %v975
  %v1054 = vunpack.c.l.b16 %v976
  %v1055 = vunpack.c.l.b16 %v977
  %v1056 = vunpack.c.l.b16 %v978
  %v1057 = vpack.c.b16 %v1042, %v1041
  %v1058 = vpack.c.b16 %v1044, %v1043
  %v1059 = vpack.c.b16 %v1046, %v1045
  %v1060 = vpack.c.b16 %v1048, %v1047
  %v1061 = vpack.c.b16 %v1050, %v1049
  %v1062 = vpack.c.b16 %v1052, %v1051
  %v1063 = vpack.c.b16 %v1054, %v1053
  %v1064 = vpack.c.b16 %v1056, %v1055
  %1073 = vmatprep.subr.bf16.mxu0 0
  %1074 = vmatpush1.bf16.msra.mxu0 %v1064
  %1075 = vmatprep.subr.bf16.mxu0 0
  %1076 = vmatpush1.bf16.msra.mxu0 %v1063
  %1077 = vmatprep.subr.bf16.mxu0 0
  %1078 = vmatpush1.bf16.msra.mxu0 %v1062
  %1079 = vmatprep.subr.bf16.mxu0 0
  %1080 = vmatpush1.bf16.msra.mxu0 %v1061
  %1081 = vmatprep.subr.bf16.mxu0 0
  %1082 = vmatpush1.bf16.msra.mxu0 %v1060
  %1083 = vmatprep.subr.bf16.mxu0 0
  %1084 = vmatpush1.bf16.msra.mxu0 %v1059
  %1085 = vmatprep.subr.bf16.mxu0 0
  %1086 = vmatpush1.bf16.msra.mxu0 %v1058
  %1087 = vmatprep.subr.bf16.mxu0 0
  %1088 = vmatpush1.bf16.msra.mxu0 %v1057
  %1089 = vmatprep.subr.bf16.mxu0 0
  %1090 = vmatpush2.bf16.msra.mxu0 0
  %1091 = vmatprep.subr.bf16.mxu0 0
  %1092 = vmatpush2.bf16.msra.mxu0 0
  %1093 = vmatprep.subr.bf16.mxu0 0
  %1094 = vmatpush2.bf16.msra.mxu0 0
  %1095 = vmatprep.subr.bf16.mxu0 0
  %1096 = vmatpush2.bf16.msra.mxu0 0
  %1097 = vmatprep.subr.bf16.mxu0 0
  %1098 = vmatpush2.bf16.msra.mxu0 0
  %1099 = vmatprep.subr.bf16.mxu0 0
  %1100 = vmatpush2.bf16.msra.mxu0 0
  %1101 = vmatprep.subr.bf16.mxu0 0
  %1102 = vmatpush2.bf16.msra.mxu0 0
  %1103 = vmatprep.subr.bf16.mxu0 0
  %1104 = vmatpush2.bf16.msra.mxu0 0
  %1105 = vmatprep.mubr.bf16.mxu0 0
  %1106 = vmatmul.mubr.bf16.gmra.mxu0 %v986
  %v1107 = vpop.f32.mrf.mxu0
  %v1108 = vadd.f32 0.0, %v1107
  %v1109 = vpop.f32.mrf.mxu0
  %v1110 = vpop.f32.mrf.mxu0
  %v1111 = vadd.f32 0.0, %v1110
  %v1112 = vpop.f32.mrf.mxu0
  %1113 = vmatprep.mubr.bf16.mxu0 0
  %1114 = vmatmul.mubr.bf16.gmra.mxu0 %v990
  %v1115 = vpop.f32.mrf.mxu0
  %v1116 = vadd.f32 0.0, %v1115
  %v1117 = vpop.f32.mrf.mxu0
  %v1118 = vpop.f32.mrf.mxu0
  %v1119 = vadd.f32 0.0, %v1118
  %v1120 = vpop.f32.mrf.mxu0
  %1121 = vmatprep.mubr.bf16.mxu0 0
  %1122 = vmatmul.mubr.bf16.gmra.mxu0 %v994
  %v1123 = vpop.f32.mrf.mxu0
  %v1124 = vadd.f32 0.0, %v1123
  %v1125 = vpop.f32.mrf.mxu0
  %v1126 = vpop.f32.mrf.mxu0
  %v1127 = vadd.f32 0.0, %v1126
  %v1128 = vpop.f32.mrf.mxu0
  %1129 = vmatprep.mubr.bf16.mxu0 0
  %1130 = vmatmul.mubr.bf16.gmra.mxu0 %v998
  %v1131 = vpop.f32.mrf.mxu0
  %v1132 = vadd.f32 0.0, %v1131
  %v1133 = vpop.f32.mrf.mxu0
  %v1134 = vpop.f32.mrf.mxu0
  %v1135 = vadd.f32 0.0, %v1134
  %v1136 = vpop.f32.mrf.mxu0
  %1137 = vmatprep.mubr.bf16.mxu0 0
  %1138 = vmatmul.mubr.bf16.gmra.mxu0 %v1002
  %v1139 = vpop.f32.mrf.mxu0
  %v1140 = vadd.f32 0.0, %v1139
  %v1141 = vpop.f32.mrf.mxu0
  %v1142 = vpop.f32.mrf.mxu0
  %v1143 = vadd.f32 0.0, %v1142
  %v1144 = vpop.f32.mrf.mxu0
  %1145 = vmatprep.mubr.bf16.mxu0 0
  %1146 = vmatmul.mubr.bf16.gmra.mxu0 %v1006
  %v1147 = vpop.f32.mrf.mxu0
  %v1148 = vadd.f32 0.0, %v1147
  %v1149 = vpop.f32.mrf.mxu0
  %v1150 = vpop.f32.mrf.mxu0
  %v1151 = vadd.f32 0.0, %v1150
  %v1152 = vpop.f32.mrf.mxu0
  %1153 = vmatprep.mubr.bf16.mxu0 0
  %1154 = vmatmul.mubr.bf16.gmra.mxu0 %v1010
  %v1155 = vpop.f32.mrf.mxu0
  %v1156 = vadd.f32 0.0, %v1155
  %v1157 = vpop.f32.mrf.mxu0
  %v1158 = vpop.f32.mrf.mxu0
  %v1159 = vadd.f32 0.0, %v1158
  %v1160 = vpop.f32.mrf.mxu0
  %1161 = vmatprep.mubr.bf16.mxu0 0
  %1162 = vmatmul.mubr.bf16.gmra.mxu0 %v1016
  %v1163 = vpop.f32.mrf.mxu0
  %v1164 = vadd.f32 0.0, %v1163
  %v1165 = vpop.f32.mrf.mxu0
  %v1166 = vpop.f32.mrf.mxu0
  %v1167 = vadd.f32 0.0, %v1166
  %v1168 = vpop.f32.mrf.mxu0
  %1169 = vdwg.mxu0
  %v1170 = vadd.f32 %v946, %v1108
  %v1171 = vadd.f32 %v947, %v1111
  %v1172 = vadd.f32 %v948, %v1116
  %v1173 = vadd.f32 %v949, %v1119
  %v1174 = vadd.f32 %v950, %v1124
  %v1175 = vadd.f32 %v951, %v1127
  %v1176 = vadd.f32 %v952, %v1132
  %v1177 = vadd.f32 %v953, %v1135
  %v1178 = vadd.f32 %v954, %v1140
  %v1179 = vadd.f32 %v955, %v1143
  %v1180 = vadd.f32 %v956, %v1148
  %v1181 = vadd.f32 %v957, %v1151
  %v1182 = vadd.f32 %v958, %v1156
  %v1183 = vadd.f32 %v959, %v1159
  %v1184 = vadd.f32 %v960, %v1164
  %v1185 = vadd.f32 %v961, %v1167
  %s1186 = scalar_lea.vmem %s2, 320
  %v1187 = vld [vmem:[%s1186] sm:$0xf]
  %v1188 = vld [vmem:[%s1186 + $0x4] sm:$0xf]
  %v1189 = vld [vmem:[%s1186 + $0x8] sm:$0xf]
  %v1190 = vld [vmem:[%s1186 + $0xc] sm:$0xf]
  %v1191 = vld [vmem:[%s1186 + $0x10] sm:$0xf]
  %v1192 = vld [vmem:[%s1186 + $0x14] sm:$0xf]
  %v1193 = vld [vmem:[%s1186 + $0x18] sm:$0xf]
  %v1194 = vld [vmem:[%s1186 + $0x1c] sm:$0xf]
  %v1195 = vld [vmem:[%s1186 + $0x20] sm:$0xf]
  %v1196 = vld [vmem:[%s1186 + $0x24] sm:$0xf]
  %v1197 = vld [vmem:[%s1186 + $0x28] sm:$0xf]
  %v1198 = vld [vmem:[%s1186 + $0x2c] sm:$0xf]
  %v1199 = vld [vmem:[%s1186 + $0x30] sm:$0xf]
  %v1200 = vld [vmem:[%s1186 + $0x34] sm:$0xf]
  %v1201 = vld [vmem:[%s1186 + $0x38] sm:$0xf]
  %v1202 = vld [vmem:[%s1186 + $0x3c] sm:$0xf]
  %vm1203 = vcmask 1044480
  %v1204 = vrot.slane %v136, 3
  %v1205 = vrot.slane %v137, 3
  %v1206 = vsel %vm1203, %v1204, %v1205
  %v1207 = vrot.slane %v138, 3
  %v1208 = vsel %vm1203, %v1205, %v1207
  %v1209 = vrot.slane %v139, 3
  %v1210 = vsel %vm1203, %v1207, %v1209
  %v1211 = vrot.slane %v140, 3
  %v1212 = vsel %vm1203, %v1209, %v1211
  %v1213 = vrot.slane %v141, 3
  %v1214 = vsel %vm1203, %v1211, %v1213
  %v1215 = vrot.slane %v142, 3
  %v1216 = vsel %vm1203, %v1213, %v1215
  %v1217 = vrot.slane %v143, 3
  %v1218 = vsel %vm1203, %v1215, %v1217
  %v1219 = vrot.slane %v160, 3
  %v1220 = vsel %vm1203, %v1217, %v1219
  %v1245 = vunpack.c.l.b16 %v1187
  %v1246 = vunpack.c.l.b16 %v1188
  %v1247 = vunpack.c.l.b16 %v1189
  %v1248 = vunpack.c.l.b16 %v1190
  %v1249 = vunpack.c.l.b16 %v1191
  %v1250 = vunpack.c.l.b16 %v1192
  %v1251 = vunpack.c.l.b16 %v1193
  %v1252 = vunpack.c.l.b16 %v1194
  %v1253 = vunpack.c.l.b16 %v1195
  %v1254 = vunpack.c.l.b16 %v1196
  %v1255 = vunpack.c.l.b16 %v1197
  %v1256 = vunpack.c.l.b16 %v1198
  %v1257 = vunpack.c.l.b16 %v1199
  %v1258 = vunpack.c.l.b16 %v1200
  %v1259 = vunpack.c.l.b16 %v1201
  %v1260 = vunpack.c.l.b16 %v1202
  %v1261 = vpack.c.b16 %v1246, %v1245
  %v1262 = vpack.c.b16 %v1248, %v1247
  %v1263 = vpack.c.b16 %v1250, %v1249
  %v1264 = vpack.c.b16 %v1252, %v1251
  %v1265 = vpack.c.b16 %v1254, %v1253
  %v1266 = vpack.c.b16 %v1256, %v1255
  %v1267 = vpack.c.b16 %v1258, %v1257
  %v1268 = vpack.c.b16 %v1260, %v1259
  %1277 = vmatprep.subr.bf16.mxu0 0
  %1278 = vmatpush1.bf16.msra.mxu0 %v1268
  %1279 = vmatprep.subr.bf16.mxu0 0
  %1280 = vmatpush1.bf16.msra.mxu0 %v1267
  %1281 = vmatprep.subr.bf16.mxu0 0
  %1282 = vmatpush1.bf16.msra.mxu0 %v1266
  %1283 = vmatprep.subr.bf16.mxu0 0
  %1284 = vmatpush1.bf16.msra.mxu0 %v1265
  %1285 = vmatprep.subr.bf16.mxu0 0
  %1286 = vmatpush1.bf16.msra.mxu0 %v1264
  %1287 = vmatprep.subr.bf16.mxu0 0
  %1288 = vmatpush1.bf16.msra.mxu0 %v1263
  %1289 = vmatprep.subr.bf16.mxu0 0
  %1290 = vmatpush1.bf16.msra.mxu0 %v1262
  %1291 = vmatprep.subr.bf16.mxu0 0
  %1292 = vmatpush1.bf16.msra.mxu0 %v1261
  %1293 = vmatprep.subr.bf16.mxu0 0
  %1294 = vmatpush2.bf16.msra.mxu0 0
  %1295 = vmatprep.subr.bf16.mxu0 0
  %1296 = vmatpush2.bf16.msra.mxu0 0
  %1297 = vmatprep.subr.bf16.mxu0 0
  %1298 = vmatpush2.bf16.msra.mxu0 0
  %1299 = vmatprep.subr.bf16.mxu0 0
  %1300 = vmatpush2.bf16.msra.mxu0 0
  %1301 = vmatprep.subr.bf16.mxu0 0
  %1302 = vmatpush2.bf16.msra.mxu0 0
  %1303 = vmatprep.subr.bf16.mxu0 0
  %1304 = vmatpush2.bf16.msra.mxu0 0
  %1305 = vmatprep.subr.bf16.mxu0 0
  %1306 = vmatpush2.bf16.msra.mxu0 0
  %1307 = vmatprep.subr.bf16.mxu0 0
  %1308 = vmatpush2.bf16.msra.mxu0 0
  %1309 = vmatprep.mubr.bf16.mxu0 0
  %1310 = vmatmul.mubr.bf16.gmra.mxu0 %v1206
  %v1311 = vpop.f32.mrf.mxu0
  %v1312 = vadd.f32 0.0, %v1311
  %v1313 = vpop.f32.mrf.mxu0
  %v1314 = vpop.f32.mrf.mxu0
  %v1315 = vadd.f32 0.0, %v1314
  %v1316 = vpop.f32.mrf.mxu0
  %1317 = vmatprep.mubr.bf16.mxu0 0
  %1318 = vmatmul.mubr.bf16.gmra.mxu0 %v1208
  %v1319 = vpop.f32.mrf.mxu0
  %v1320 = vadd.f32 0.0, %v1319
  %v1321 = vpop.f32.mrf.mxu0
  %v1322 = vpop.f32.mrf.mxu0
  %v1323 = vadd.f32 0.0, %v1322
  %v1324 = vpop.f32.mrf.mxu0
  %1325 = vmatprep.mubr.bf16.mxu0 0
  %1326 = vmatmul.mubr.bf16.gmra.mxu0 %v1210
  %v1327 = vpop.f32.mrf.mxu0
  %v1328 = vadd.f32 0.0, %v1327
  %v1329 = vpop.f32.mrf.mxu0
  %v1330 = vpop.f32.mrf.mxu0
  %v1331 = vadd.f32 0.0, %v1330
  %v1332 = vpop.f32.mrf.mxu0
  %1333 = vmatprep.mubr.bf16.mxu0 0
  %1334 = vmatmul.mubr.bf16.gmra.mxu0 %v1212
  %v1335 = vpop.f32.mrf.mxu0
  %v1336 = vadd.f32 0.0, %v1335
  %v1337 = vpop.f32.mrf.mxu0
  %v1338 = vpop.f32.mrf.mxu0
  %v1339 = vadd.f32 0.0, %v1338
  %v1340 = vpop.f32.mrf.mxu0
  %1341 = vmatprep.mubr.bf16.mxu0 0
  %1342 = vmatmul.mubr.bf16.gmra.mxu0 %v1214
  %v1343 = vpop.f32.mrf.mxu0
  %v1344 = vadd.f32 0.0, %v1343
  %v1345 = vpop.f32.mrf.mxu0
  %v1346 = vpop.f32.mrf.mxu0
  %v1347 = vadd.f32 0.0, %v1346
  %v1348 = vpop.f32.mrf.mxu0
  %1349 = vmatprep.mubr.bf16.mxu0 0
  %1350 = vmatmul.mubr.bf16.gmra.mxu0 %v1216
  %v1351 = vpop.f32.mrf.mxu0
  %v1352 = vadd.f32 0.0, %v1351
  %v1353 = vpop.f32.mrf.mxu0
  %v1354 = vpop.f32.mrf.mxu0
  %v1355 = vadd.f32 0.0, %v1354
  %v1356 = vpop.f32.mrf.mxu0
  %1357 = vmatprep.mubr.bf16.mxu0 0
  %1358 = vmatmul.mubr.bf16.gmra.mxu0 %v1218
  %v1359 = vpop.f32.mrf.mxu0
  %v1360 = vadd.f32 0.0, %v1359
  %v1361 = vpop.f32.mrf.mxu0
  %v1362 = vpop.f32.mrf.mxu0
  %v1363 = vadd.f32 0.0, %v1362
  %v1364 = vpop.f32.mrf.mxu0
  %1365 = vmatprep.mubr.bf16.mxu0 0
  %1366 = vmatmul.mubr.bf16.gmra.mxu0 %v1220
  %v1367 = vpop.f32.mrf.mxu0
  %v1368 = vadd.f32 0.0, %v1367
  %v1369 = vpop.f32.mrf.mxu0
  %v1370 = vpop.f32.mrf.mxu0
  %v1371 = vadd.f32 0.0, %v1370
  %v1372 = vpop.f32.mrf.mxu0
  %1373 = vdwg.mxu0
  %v1374 = vadd.f32 %v1170, %v1312
  %v1375 = vadd.f32 %v1171, %v1315
  %v1376 = vadd.f32 %v1172, %v1320
  %v1377 = vadd.f32 %v1173, %v1323
  %v1378 = vadd.f32 %v1174, %v1328
  %v1379 = vadd.f32 %v1175, %v1331
  %v1380 = vadd.f32 %v1176, %v1336
  %v1381 = vadd.f32 %v1177, %v1339
  %v1382 = vadd.f32 %v1178, %v1344
  %v1383 = vadd.f32 %v1179, %v1347
  %v1384 = vadd.f32 %v1180, %v1352
  %v1385 = vadd.f32 %v1181, %v1355
  %v1386 = vadd.f32 %v1182, %v1360
  %v1387 = vadd.f32 %v1183, %v1363
  %v1388 = vadd.f32 %v1184, %v1368
  %v1389 = vadd.f32 %v1185, %v1371
  %v1390 = vpack.c.bf16 %v120, %v119
  %v1391 = vpack.c.bf16 %v122, %v121
  %v1392 = vpack.c.bf16 %v124, %v123
  %v1393 = vpack.c.bf16 %v126, %v125
  %v1394 = vpack.c.bf16 %v128, %v127
  %v1395 = vpack.c.bf16 %v130, %v129
  %v1396 = vpack.c.bf16 %v132, %v131
  %v1397 = vpack.c.bf16 %v134, %v133
  %s1398 = scalar_lea.vmem %s2, 384
  %v1399 = vld [vmem:[%s1398] sm:$0xf]
  %v1400 = vld [vmem:[%s1398 + $0x4] sm:$0xf]
  %v1401 = vld [vmem:[%s1398 + $0x8] sm:$0xf]
  %v1402 = vld [vmem:[%s1398 + $0xc] sm:$0xf]
  %v1403 = vld [vmem:[%s1398 + $0x10] sm:$0xf]
  %v1404 = vld [vmem:[%s1398 + $0x14] sm:$0xf]
  %v1405 = vld [vmem:[%s1398 + $0x18] sm:$0xf]
  %v1406 = vld [vmem:[%s1398 + $0x1c] sm:$0xf]
  %v1407 = vld [vmem:[%s1398 + $0x20] sm:$0xf]
  %v1408 = vld [vmem:[%s1398 + $0x24] sm:$0xf]
  %v1409 = vld [vmem:[%s1398 + $0x28] sm:$0xf]
  %v1410 = vld [vmem:[%s1398 + $0x2c] sm:$0xf]
  %v1411 = vld [vmem:[%s1398 + $0x30] sm:$0xf]
  %v1412 = vld [vmem:[%s1398 + $0x34] sm:$0xf]
  %v1413 = vld [vmem:[%s1398 + $0x38] sm:$0xf]
  %v1414 = vld [vmem:[%s1398 + $0x3c] sm:$0xf]
  %v1431 = vunpack.c.l.b16 %v1399
  %v1432 = vunpack.c.l.b16 %v1400
  %v1433 = vunpack.c.l.b16 %v1401
  %v1434 = vunpack.c.l.b16 %v1402
  %v1435 = vunpack.c.l.b16 %v1403
  %v1436 = vunpack.c.l.b16 %v1404
  %v1437 = vunpack.c.l.b16 %v1405
  %v1438 = vunpack.c.l.b16 %v1406
  %v1439 = vunpack.c.l.b16 %v1407
  %v1440 = vunpack.c.l.b16 %v1408
  %v1441 = vunpack.c.l.b16 %v1409
  %v1442 = vunpack.c.l.b16 %v1410
  %v1443 = vunpack.c.l.b16 %v1411
  %v1444 = vunpack.c.l.b16 %v1412
  %v1445 = vunpack.c.l.b16 %v1413
  %v1446 = vunpack.c.l.b16 %v1414
  %v1447 = vpack.c.b16 %v1432, %v1431
  %v1448 = vpack.c.b16 %v1434, %v1433
  %v1449 = vpack.c.b16 %v1436, %v1435
  %v1450 = vpack.c.b16 %v1438, %v1437
  %v1451 = vpack.c.b16 %v1440, %v1439
  %v1452 = vpack.c.b16 %v1442, %v1441
  %v1453 = vpack.c.b16 %v1444, %v1443
  %v1454 = vpack.c.b16 %v1446, %v1445
  %1463 = vmatprep.subr.bf16.mxu0 0
  %1464 = vmatpush1.bf16.msra.mxu0 %v1454
  %1465 = vmatprep.subr.bf16.mxu0 0
  %1466 = vmatpush1.bf16.msra.mxu0 %v1453
  %1467 = vmatprep.subr.bf16.mxu0 0
  %1468 = vmatpush1.bf16.msra.mxu0 %v1452
  %1469 = vmatprep.subr.bf16.mxu0 0
  %1470 = vmatpush1.bf16.msra.mxu0 %v1451
  %1471 = vmatprep.subr.bf16.mxu0 0
  %1472 = vmatpush1.bf16.msra.mxu0 %v1450
  %1473 = vmatprep.subr.bf16.mxu0 0
  %1474 = vmatpush1.bf16.msra.mxu0 %v1449
  %1475 = vmatprep.subr.bf16.mxu0 0
  %1476 = vmatpush1.bf16.msra.mxu0 %v1448
  %1477 = vmatprep.subr.bf16.mxu0 0
  %1478 = vmatpush1.bf16.msra.mxu0 %v1447
  %1479 = vmatprep.subr.bf16.mxu0 0
  %1480 = vmatpush2.bf16.msra.mxu0 0
  %1481 = vmatprep.subr.bf16.mxu0 0
  %1482 = vmatpush2.bf16.msra.mxu0 0
  %1483 = vmatprep.subr.bf16.mxu0 0
  %1484 = vmatpush2.bf16.msra.mxu0 0
  %1485 = vmatprep.subr.bf16.mxu0 0
  %1486 = vmatpush2.bf16.msra.mxu0 0
  %1487 = vmatprep.subr.bf16.mxu0 0
  %1488 = vmatpush2.bf16.msra.mxu0 0
  %1489 = vmatprep.subr.bf16.mxu0 0
  %1490 = vmatpush2.bf16.msra.mxu0 0
  %1491 = vmatprep.subr.bf16.mxu0 0
  %1492 = vmatpush2.bf16.msra.mxu0 0
  %1493 = vmatprep.subr.bf16.mxu0 0
  %1494 = vmatpush2.bf16.msra.mxu0 0
  %1495 = vmatprep.mubr.bf16.mxu0 0
  %1496 = vmatmul.mubr.bf16.gmra.mxu0 %v1390
  %v1497 = vpop.f32.mrf.mxu0
  %v1498 = vadd.f32 0.0, %v1497
  %v1499 = vpop.f32.mrf.mxu0
  %v1500 = vpop.f32.mrf.mxu0
  %v1501 = vadd.f32 0.0, %v1500
  %v1502 = vpop.f32.mrf.mxu0
  %1503 = vmatprep.mubr.bf16.mxu0 0
  %1504 = vmatmul.mubr.bf16.gmra.mxu0 %v1391
  %v1505 = vpop.f32.mrf.mxu0
  %v1506 = vadd.f32 0.0, %v1505
  %v1507 = vpop.f32.mrf.mxu0
  %v1508 = vpop.f32.mrf.mxu0
  %v1509 = vadd.f32 0.0, %v1508
  %v1510 = vpop.f32.mrf.mxu0
  %1511 = vmatprep.mubr.bf16.mxu0 0
  %1512 = vmatmul.mubr.bf16.gmra.mxu0 %v1392
  %v1513 = vpop.f32.mrf.mxu0
  %v1514 = vadd.f32 0.0, %v1513
  %v1515 = vpop.f32.mrf.mxu0
  %v1516 = vpop.f32.mrf.mxu0
  %v1517 = vadd.f32 0.0, %v1516
  %v1518 = vpop.f32.mrf.mxu0
  %1519 = vmatprep.mubr.bf16.mxu0 0
  %1520 = vmatmul.mubr.bf16.gmra.mxu0 %v1393
  %v1521 = vpop.f32.mrf.mxu0
  %v1522 = vadd.f32 0.0, %v1521
  %v1523 = vpop.f32.mrf.mxu0
  %v1524 = vpop.f32.mrf.mxu0
  %v1525 = vadd.f32 0.0, %v1524
  %v1526 = vpop.f32.mrf.mxu0
  %1527 = vmatprep.mubr.bf16.mxu0 0
  %1528 = vmatmul.mubr.bf16.gmra.mxu0 %v1394
  %v1529 = vpop.f32.mrf.mxu0
  %v1530 = vadd.f32 0.0, %v1529
  %v1531 = vpop.f32.mrf.mxu0
  %v1532 = vpop.f32.mrf.mxu0
  %v1533 = vadd.f32 0.0, %v1532
  %v1534 = vpop.f32.mrf.mxu0
  %1535 = vmatprep.mubr.bf16.mxu0 0
  %1536 = vmatmul.mubr.bf16.gmra.mxu0 %v1395
  %v1537 = vpop.f32.mrf.mxu0
  %v1538 = vadd.f32 0.0, %v1537
  %v1539 = vpop.f32.mrf.mxu0
  %v1540 = vpop.f32.mrf.mxu0
  %v1541 = vadd.f32 0.0, %v1540
  %v1542 = vpop.f32.mrf.mxu0
  %1543 = vmatprep.mubr.bf16.mxu0 0
  %1544 = vmatmul.mubr.bf16.gmra.mxu0 %v1396
  %v1545 = vpop.f32.mrf.mxu0
  %v1546 = vadd.f32 0.0, %v1545
  %v1547 = vpop.f32.mrf.mxu0
  %v1548 = vpop.f32.mrf.mxu0
  %v1549 = vadd.f32 0.0, %v1548
  %v1550 = vpop.f32.mrf.mxu0
  %1551 = vmatprep.mubr.bf16.mxu0 0
  %1552 = vmatmul.mubr.bf16.gmra.mxu0 %v1397
  %v1553 = vpop.f32.mrf.mxu0
  %v1554 = vadd.f32 0.0, %v1553
  %v1555 = vpop.f32.mrf.mxu0
  %v1556 = vpop.f32.mrf.mxu0
  %v1557 = vadd.f32 0.0, %v1556
  %v1558 = vpop.f32.mrf.mxu0
  %1559 = vdwg.mxu0
  %v1560 = vadd.f32 %v1374, %v1498
  %v1561 = vadd.f32 %v1375, %v1501
  %v1562 = vadd.f32 %v1376, %v1506
  %v1563 = vadd.f32 %v1377, %v1509
  %v1564 = vadd.f32 %v1378, %v1514
  %v1565 = vadd.f32 %v1379, %v1517
  %v1566 = vadd.f32 %v1380, %v1522
  %v1567 = vadd.f32 %v1381, %v1525
  %v1568 = vadd.f32 %v1382, %v1530
  %v1569 = vadd.f32 %v1383, %v1533
  %v1570 = vadd.f32 %v1384, %v1538
  %v1571 = vadd.f32 %v1385, %v1541
  %v1572 = vadd.f32 %v1386, %v1546
  %v1573 = vadd.f32 %v1387, %v1549
  %v1574 = vadd.f32 %v1388, %v1554
  %v1575 = vadd.f32 %v1389, %v1557
  %v1576 = vpack.c.bf16 %v135, %v135
  %s1577 = scalar_lea.vmem %s2, 448
  %v1578 = vld [vmem:[%s1577] sm:$0xf]
  %v1579 = vld [vmem:[%s1577 + $0x4] sm:$0xf]
  %v1580 = vld [vmem:[%s1577 + $0x8] sm:$0xf]
  %v1581 = vld [vmem:[%s1577 + $0xc] sm:$0xf]
  %v1582 = vld [vmem:[%s1577 + $0x10] sm:$0xf]
  %v1583 = vld [vmem:[%s1577 + $0x14] sm:$0xf]
  %v1584 = vld [vmem:[%s1577 + $0x18] sm:$0xf]
  %v1585 = vld [vmem:[%s1577 + $0x1c] sm:$0xf]
  %v1586 = vld [vmem:[%s1577 + $0x20] sm:$0xf]
  %v1587 = vld [vmem:[%s1577 + $0x24] sm:$0xf]
  %v1588 = vld [vmem:[%s1577 + $0x28] sm:$0xf]
  %v1589 = vld [vmem:[%s1577 + $0x2c] sm:$0xf]
  %v1590 = vld [vmem:[%s1577 + $0x30] sm:$0xf]
  %v1591 = vld [vmem:[%s1577 + $0x34] sm:$0xf]
  %v1592 = vld [vmem:[%s1577 + $0x38] sm:$0xf]
  %v1593 = vld [vmem:[%s1577 + $0x3c] sm:$0xf]
  %v1595 = vshrl.u32 %v1390, 16
  %v1597 = vshll.u32 %v1390, 16
  %v1599 = vrot.slane %v1597, 1
  %v1600 = vor.u32 %v1595, %v1599
  %v1602 = vshll.u32 %v1391, 16
  %v1604 = vrot.slane %v1602, 1
  %v1605 = vsel %vm178, %v1600, %v1604
  %v1606 = vshrl.u32 %v1391, 16
  %v1608 = vor.u32 %v1606, %v1604
  %v1610 = vshll.u32 %v1392, 16
  %v1612 = vrot.slane %v1610, 1
  %v1613 = vsel %vm178, %v1608, %v1612
  %v1614 = vshrl.u32 %v1392, 16
  %v1616 = vor.u32 %v1614, %v1612
  %v1618 = vshll.u32 %v1393, 16
  %v1620 = vrot.slane %v1618, 1
  %v1621 = vsel %vm178, %v1616, %v1620
  %v1622 = vshrl.u32 %v1393, 16
  %v1624 = vor.u32 %v1622, %v1620
  %v1626 = vshll.u32 %v1394, 16
  %v1628 = vrot.slane %v1626, 1
  %v1629 = vsel %vm178, %v1624, %v1628
  %v1630 = vshrl.u32 %v1394, 16
  %v1632 = vor.u32 %v1630, %v1628
  %v1634 = vshll.u32 %v1395, 16
  %v1636 = vrot.slane %v1634, 1
  %v1637 = vsel %vm178, %v1632, %v1636
  %v1638 = vshrl.u32 %v1395, 16
  %v1640 = vor.u32 %v1638, %v1636
  %v1642 = vshll.u32 %v1396, 16
  %v1644 = vrot.slane %v1642, 1
  %v1645 = vsel %vm178, %v1640, %v1644
  %v1646 = vshrl.u32 %v1396, 16
  %v1648 = vor.u32 %v1646, %v1644
  %v1650 = vshll.u32 %v1397, 16
  %v1652 = vrot.slane %v1650, 1
  %v1653 = vsel %vm178, %v1648, %v1652
  %v1654 = vshrl.u32 %v1397, 16
  %v1656 = vor.u32 %v1654, %v1652
  %v1658 = vshll.u32 %v1576, 16
  %v1660 = vrot.slane %v1658, 1
  %v1661 = vsel %vm178, %v1656, %v1660
  %v1686 = vunpack.c.l.b16 %v1578
  %v1687 = vunpack.c.l.b16 %v1579
  %v1688 = vunpack.c.l.b16 %v1580
  %v1689 = vunpack.c.l.b16 %v1581
  %v1690 = vunpack.c.l.b16 %v1582
  %v1691 = vunpack.c.l.b16 %v1583
  %v1692 = vunpack.c.l.b16 %v1584
  %v1693 = vunpack.c.l.b16 %v1585
  %v1694 = vunpack.c.l.b16 %v1586
  %v1695 = vunpack.c.l.b16 %v1587
  %v1696 = vunpack.c.l.b16 %v1588
  %v1697 = vunpack.c.l.b16 %v1589
  %v1698 = vunpack.c.l.b16 %v1590
  %v1699 = vunpack.c.l.b16 %v1591
  %v1700 = vunpack.c.l.b16 %v1592
  %v1701 = vunpack.c.l.b16 %v1593
  %v1702 = vpack.c.b16 %v1687, %v1686
  %v1703 = vpack.c.b16 %v1689, %v1688
  %v1704 = vpack.c.b16 %v1691, %v1690
  %v1705 = vpack.c.b16 %v1693, %v1692
  %v1706 = vpack.c.b16 %v1695, %v1694
  %v1707 = vpack.c.b16 %v1697, %v1696
  %v1708 = vpack.c.b16 %v1699, %v1698
  %v1709 = vpack.c.b16 %v1701, %v1700
  %1718 = vmatprep.subr.bf16.mxu0 0
  %1719 = vmatpush1.bf16.msra.mxu0 %v1709
  %1720 = vmatprep.subr.bf16.mxu0 0
  %1721 = vmatpush1.bf16.msra.mxu0 %v1708
  %1722 = vmatprep.subr.bf16.mxu0 0
  %1723 = vmatpush1.bf16.msra.mxu0 %v1707
  %1724 = vmatprep.subr.bf16.mxu0 0
  %1725 = vmatpush1.bf16.msra.mxu0 %v1706
  %1726 = vmatprep.subr.bf16.mxu0 0
  %1727 = vmatpush1.bf16.msra.mxu0 %v1705
  %1728 = vmatprep.subr.bf16.mxu0 0
  %1729 = vmatpush1.bf16.msra.mxu0 %v1704
  %1730 = vmatprep.subr.bf16.mxu0 0
  %1731 = vmatpush1.bf16.msra.mxu0 %v1703
  %1732 = vmatprep.subr.bf16.mxu0 0
  %1733 = vmatpush1.bf16.msra.mxu0 %v1702
  %1734 = vmatprep.subr.bf16.mxu0 0
  %1735 = vmatpush2.bf16.msra.mxu0 0
  %1736 = vmatprep.subr.bf16.mxu0 0
  %1737 = vmatpush2.bf16.msra.mxu0 0
  %1738 = vmatprep.subr.bf16.mxu0 0
  %1739 = vmatpush2.bf16.msra.mxu0 0
  %1740 = vmatprep.subr.bf16.mxu0 0
  %1741 = vmatpush2.bf16.msra.mxu0 0
  %1742 = vmatprep.subr.bf16.mxu0 0
  %1743 = vmatpush2.bf16.msra.mxu0 0
  %1744 = vmatprep.subr.bf16.mxu0 0
  %1745 = vmatpush2.bf16.msra.mxu0 0
  %1746 = vmatprep.subr.bf16.mxu0 0
  %1747 = vmatpush2.bf16.msra.mxu0 0
  %1748 = vmatprep.subr.bf16.mxu0 0
  %1749 = vmatpush2.bf16.msra.mxu0 0
  %1750 = vmatprep.mubr.bf16.mxu0 0
  %1751 = vmatmul.mubr.bf16.gmra.mxu0 %v1605
  %v1752 = vpop.f32.mrf.mxu0
  %v1753 = vadd.f32 0.0, %v1752
  %v1754 = vpop.f32.mrf.mxu0
  %v1755 = vpop.f32.mrf.mxu0
  %v1756 = vadd.f32 0.0, %v1755
  %v1757 = vpop.f32.mrf.mxu0
  %1758 = vmatprep.mubr.bf16.mxu0 0
  %1759 = vmatmul.mubr.bf16.gmra.mxu0 %v1613
  %v1760 = vpop.f32.mrf.mxu0
  %v1761 = vadd.f32 0.0, %v1760
  %v1762 = vpop.f32.mrf.mxu0
  %v1763 = vpop.f32.mrf.mxu0
  %v1764 = vadd.f32 0.0, %v1763
  %v1765 = vpop.f32.mrf.mxu0
  %1766 = vmatprep.mubr.bf16.mxu0 0
  %1767 = vmatmul.mubr.bf16.gmra.mxu0 %v1621
  %v1768 = vpop.f32.mrf.mxu0
  %v1769 = vadd.f32 0.0, %v1768
  %v1770 = vpop.f32.mrf.mxu0
  %v1771 = vpop.f32.mrf.mxu0
  %v1772 = vadd.f32 0.0, %v1771
  %v1773 = vpop.f32.mrf.mxu0
  %1774 = vmatprep.mubr.bf16.mxu0 0
  %1775 = vmatmul.mubr.bf16.gmra.mxu0 %v1629
  %v1776 = vpop.f32.mrf.mxu0
  %v1777 = vadd.f32 0.0, %v1776
  %v1778 = vpop.f32.mrf.mxu0
  %v1779 = vpop.f32.mrf.mxu0
  %v1780 = vadd.f32 0.0, %v1779
  %v1781 = vpop.f32.mrf.mxu0
  %1782 = vmatprep.mubr.bf16.mxu0 0
  %1783 = vmatmul.mubr.bf16.gmra.mxu0 %v1637
  %v1784 = vpop.f32.mrf.mxu0
  %v1785 = vadd.f32 0.0, %v1784
  %v1786 = vpop.f32.mrf.mxu0
  %v1787 = vpop.f32.mrf.mxu0
  %v1788 = vadd.f32 0.0, %v1787
  %v1789 = vpop.f32.mrf.mxu0
  %1790 = vmatprep.mubr.bf16.mxu0 0
  %1791 = vmatmul.mubr.bf16.gmra.mxu0 %v1645
  %v1792 = vpop.f32.mrf.mxu0
  %v1793 = vadd.f32 0.0, %v1792
  %v1794 = vpop.f32.mrf.mxu0
  %v1795 = vpop.f32.mrf.mxu0
  %v1796 = vadd.f32 0.0, %v1795
  %v1797 = vpop.f32.mrf.mxu0
  %1798 = vmatprep.mubr.bf16.mxu0 0
  %1799 = vmatmul.mubr.bf16.gmra.mxu0 %v1653
  %v1800 = vpop.f32.mrf.mxu0
  %v1801 = vadd.f32 0.0, %v1800
  %v1802 = vpop.f32.mrf.mxu0
  %v1803 = vpop.f32.mrf.mxu0
  %v1804 = vadd.f32 0.0, %v1803
  %v1805 = vpop.f32.mrf.mxu0
  %1806 = vmatprep.mubr.bf16.mxu0 0
  %1807 = vmatmul.mubr.bf16.gmra.mxu0 %v1661
  %v1808 = vpop.f32.mrf.mxu0
  %v1809 = vadd.f32 0.0, %v1808
  %v1810 = vpop.f32.mrf.mxu0
  %v1811 = vpop.f32.mrf.mxu0
  %v1812 = vadd.f32 0.0, %v1811
  %v1813 = vpop.f32.mrf.mxu0
  %1814 = vdwg.mxu0
  %v1815 = vadd.f32 %v1560, %v1753
  %v1816 = vadd.f32 %v1561, %v1756
  %v1817 = vadd.f32 %v1562, %v1761
  %v1818 = vadd.f32 %v1563, %v1764
  %v1819 = vadd.f32 %v1564, %v1769
  %v1820 = vadd.f32 %v1565, %v1772
  %v1821 = vadd.f32 %v1566, %v1777
  %v1822 = vadd.f32 %v1567, %v1780
  %v1823 = vadd.f32 %v1568, %v1785
  %v1824 = vadd.f32 %v1569, %v1788
  %v1825 = vadd.f32 %v1570, %v1793
  %v1826 = vadd.f32 %v1571, %v1796
  %v1827 = vadd.f32 %v1572, %v1801
  %v1828 = vadd.f32 %v1573, %v1804
  %v1829 = vadd.f32 %v1574, %v1809
  %v1830 = vadd.f32 %v1575, %v1812
  %s1831 = scalar_lea.vmem %s2, 512
  %v1832 = vld [vmem:[%s1831] sm:$0xf]
  %v1833 = vld [vmem:[%s1831 + $0x4] sm:$0xf]
  %v1834 = vld [vmem:[%s1831 + $0x8] sm:$0xf]
  %v1835 = vld [vmem:[%s1831 + $0xc] sm:$0xf]
  %v1836 = vld [vmem:[%s1831 + $0x10] sm:$0xf]
  %v1837 = vld [vmem:[%s1831 + $0x14] sm:$0xf]
  %v1838 = vld [vmem:[%s1831 + $0x18] sm:$0xf]
  %v1839 = vld [vmem:[%s1831 + $0x1c] sm:$0xf]
  %v1840 = vld [vmem:[%s1831 + $0x20] sm:$0xf]
  %v1841 = vld [vmem:[%s1831 + $0x24] sm:$0xf]
  %v1842 = vld [vmem:[%s1831 + $0x28] sm:$0xf]
  %v1843 = vld [vmem:[%s1831 + $0x2c] sm:$0xf]
  %v1844 = vld [vmem:[%s1831 + $0x30] sm:$0xf]
  %v1845 = vld [vmem:[%s1831 + $0x34] sm:$0xf]
  %v1846 = vld [vmem:[%s1831 + $0x38] sm:$0xf]
  %v1847 = vld [vmem:[%s1831 + $0x3c] sm:$0xf]
  %v1857 = vrot.slane %v1390, 1
  %v1858 = vrot.slane %v1391, 1
  %v1859 = vsel %vm571, %v1857, %v1858
  %v1860 = vrot.slane %v1392, 1
  %v1861 = vsel %vm571, %v1858, %v1860
  %v1862 = vrot.slane %v1393, 1
  %v1863 = vsel %vm571, %v1860, %v1862
  %v1864 = vrot.slane %v1394, 1
  %v1865 = vsel %vm571, %v1862, %v1864
  %v1866 = vrot.slane %v1395, 1
  %v1867 = vsel %vm571, %v1864, %v1866
  %v1868 = vrot.slane %v1396, 1
  %v1869 = vsel %vm571, %v1866, %v1868
  %v1870 = vrot.slane %v1397, 1
  %v1871 = vsel %vm571, %v1868, %v1870
  %v1872 = vrot.slane %v1576, 1
  %v1873 = vsel %vm571, %v1870, %v1872
  %v1898 = vunpack.c.l.b16 %v1832
  %v1899 = vunpack.c.l.b16 %v1833
  %v1900 = vunpack.c.l.b16 %v1834
  %v1901 = vunpack.c.l.b16 %v1835
  %v1902 = vunpack.c.l.b16 %v1836
  %v1903 = vunpack.c.l.b16 %v1837
  %v1904 = vunpack.c.l.b16 %v1838
  %v1905 = vunpack.c.l.b16 %v1839
  %v1906 = vunpack.c.l.b16 %v1840
  %v1907 = vunpack.c.l.b16 %v1841
  %v1908 = vunpack.c.l.b16 %v1842
  %v1909 = vunpack.c.l.b16 %v1843
  %v1910 = vunpack.c.l.b16 %v1844
  %v1911 = vunpack.c.l.b16 %v1845
  %v1912 = vunpack.c.l.b16 %v1846
  %v1913 = vunpack.c.l.b16 %v1847
  %v1914 = vpack.c.b16 %v1899, %v1898
  %v1915 = vpack.c.b16 %v1901, %v1900
  %v1916 = vpack.c.b16 %v1903, %v1902
  %v1917 = vpack.c.b16 %v1905, %v1904
  %v1918 = vpack.c.b16 %v1907, %v1906
  %v1919 = vpack.c.b16 %v1909, %v1908
  %v1920 = vpack.c.b16 %v1911, %v1910
  %v1921 = vpack.c.b16 %v1913, %v1912
  %1930 = vmatprep.subr.bf16.mxu0 0
  %1931 = vmatpush1.bf16.msra.mxu0 %v1921
  %1932 = vmatprep.subr.bf16.mxu0 0
  %1933 = vmatpush1.bf16.msra.mxu0 %v1920
  %1934 = vmatprep.subr.bf16.mxu0 0
  %1935 = vmatpush1.bf16.msra.mxu0 %v1919
  %1936 = vmatprep.subr.bf16.mxu0 0
  %1937 = vmatpush1.bf16.msra.mxu0 %v1918
  %1938 = vmatprep.subr.bf16.mxu0 0
  %1939 = vmatpush1.bf16.msra.mxu0 %v1917
  %1940 = vmatprep.subr.bf16.mxu0 0
  %1941 = vmatpush1.bf16.msra.mxu0 %v1916
  %1942 = vmatprep.subr.bf16.mxu0 0
  %1943 = vmatpush1.bf16.msra.mxu0 %v1915
  %1944 = vmatprep.subr.bf16.mxu0 0
  %1945 = vmatpush1.bf16.msra.mxu0 %v1914
  %1946 = vmatprep.subr.bf16.mxu0 0
  %1947 = vmatpush2.bf16.msra.mxu0 0
  %1948 = vmatprep.subr.bf16.mxu0 0
  %1949 = vmatpush2.bf16.msra.mxu0 0
  %1950 = vmatprep.subr.bf16.mxu0 0
  %1951 = vmatpush2.bf16.msra.mxu0 0
  %1952 = vmatprep.subr.bf16.mxu0 0
  %1953 = vmatpush2.bf16.msra.mxu0 0
  %1954 = vmatprep.subr.bf16.mxu0 0
  %1955 = vmatpush2.bf16.msra.mxu0 0
  %1956 = vmatprep.subr.bf16.mxu0 0
  %1957 = vmatpush2.bf16.msra.mxu0 0
  %1958 = vmatprep.subr.bf16.mxu0 0
  %1959 = vmatpush2.bf16.msra.mxu0 0
  %1960 = vmatprep.subr.bf16.mxu0 0
  %1961 = vmatpush2.bf16.msra.mxu0 0
  %1962 = vmatprep.mubr.bf16.mxu0 0
  %1963 = vmatmul.mubr.bf16.gmra.mxu0 %v1859
  %v1964 = vpop.f32.mrf.mxu0
  %v1965 = vadd.f32 0.0, %v1964
  %v1966 = vpop.f32.mrf.mxu0
  %v1967 = vpop.f32.mrf.mxu0
  %v1968 = vadd.f32 0.0, %v1967
  %v1969 = vpop.f32.mrf.mxu0
  %1970 = vmatprep.mubr.bf16.mxu0 0
  %1971 = vmatmul.mubr.bf16.gmra.mxu0 %v1861
  %v1972 = vpop.f32.mrf.mxu0
  %v1973 = vadd.f32 0.0, %v1972
  %v1974 = vpop.f32.mrf.mxu0
  %v1975 = vpop.f32.mrf.mxu0
  %v1976 = vadd.f32 0.0, %v1975
  %v1977 = vpop.f32.mrf.mxu0
  %1978 = vmatprep.mubr.bf16.mxu0 0
  %1979 = vmatmul.mubr.bf16.gmra.mxu0 %v1863
  %v1980 = vpop.f32.mrf.mxu0
  %v1981 = vadd.f32 0.0, %v1980
  %v1982 = vpop.f32.mrf.mxu0
  %v1983 = vpop.f32.mrf.mxu0
  %v1984 = vadd.f32 0.0, %v1983
  %v1985 = vpop.f32.mrf.mxu0
  %1986 = vmatprep.mubr.bf16.mxu0 0
  %1987 = vmatmul.mubr.bf16.gmra.mxu0 %v1865
  %v1988 = vpop.f32.mrf.mxu0
  %v1989 = vadd.f32 0.0, %v1988
  %v1990 = vpop.f32.mrf.mxu0
  %v1991 = vpop.f32.mrf.mxu0
  %v1992 = vadd.f32 0.0, %v1991
  %v1993 = vpop.f32.mrf.mxu0
  %1994 = vmatprep.mubr.bf16.mxu0 0
  %1995 = vmatmul.mubr.bf16.gmra.mxu0 %v1867
  %v1996 = vpop.f32.mrf.mxu0
  %v1997 = vadd.f32 0.0, %v1996
  %v1998 = vpop.f32.mrf.mxu0
  %v1999 = vpop.f32.mrf.mxu0
  %v2000 = vadd.f32 0.0, %v1999
  %v2001 = vpop.f32.mrf.mxu0
  %2002 = vmatprep.mubr.bf16.mxu0 0
  %2003 = vmatmul.mubr.bf16.gmra.mxu0 %v1869
  %v2004 = vpop.f32.mrf.mxu0
  %v2005 = vadd.f32 0.0, %v2004
  %v2006 = vpop.f32.mrf.mxu0
  %v2007 = vpop.f32.mrf.mxu0
  %v2008 = vadd.f32 0.0, %v2007
  %v2009 = vpop.f32.mrf.mxu0
  %2010 = vmatprep.mubr.bf16.mxu0 0
  %2011 = vmatmul.mubr.bf16.gmra.mxu0 %v1871
  %v2012 = vpop.f32.mrf.mxu0
  %v2013 = vadd.f32 0.0, %v2012
  %v2014 = vpop.f32.mrf.mxu0
  %v2015 = vpop.f32.mrf.mxu0
  %v2016 = vadd.f32 0.0, %v2015
  %v2017 = vpop.f32.mrf.mxu0
  %2018 = vmatprep.mubr.bf16.mxu0 0
  %2019 = vmatmul.mubr.bf16.gmra.mxu0 %v1873
  %v2020 = vpop.f32.mrf.mxu0
  %v2021 = vadd.f32 0.0, %v2020
  %v2022 = vpop.f32.mrf.mxu0
  %v2023 = vpop.f32.mrf.mxu0
  %v2024 = vadd.f32 0.0, %v2023
  %v2025 = vpop.f32.mrf.mxu0
  %2026 = vdwg.mxu0
  %v2027 = vadd.f32 %v1815, %v1965
  %v2028 = vadd.f32 %v1816, %v1968
  %v2029 = vadd.f32 %v1817, %v1973
  %v2030 = vadd.f32 %v1818, %v1976
  %v2031 = vadd.f32 %v1819, %v1981
  %v2032 = vadd.f32 %v1820, %v1984
  %v2033 = vadd.f32 %v1821, %v1989
  %v2034 = vadd.f32 %v1822, %v1992
  %v2035 = vadd.f32 %v1823, %v1997
  %v2036 = vadd.f32 %v1824, %v2000
  %v2037 = vadd.f32 %v1825, %v2005
  %v2038 = vadd.f32 %v1826, %v2008
  %v2039 = vadd.f32 %v1827, %v2013
  %v2040 = vadd.f32 %v1828, %v2016
  %v2041 = vadd.f32 %v1829, %v2021
  %v2042 = vadd.f32 %v1830, %v2024
  %v2043 = vld [vmem:[%s3] sm:$0x1]
  %v2045 = vlaneseq
  %v2046 = vshrl.u32 %v2045, 7
  %v2047 = vsub.s32 0, %v2046
  %v2048 = vrot.slane %v2043, %v2047
  %v2050 = vmul.f32 %v2027, %v2048
  %v2051 = vmul.f32 %v2028, %v2048
  %v2052 = vmul.f32 %v2029, %v2048
  %v2053 = vmul.f32 %v2030, %v2048
  %v2054 = vmul.f32 %v2031, %v2048
  %v2055 = vmul.f32 %v2032, %v2048
  %v2056 = vmul.f32 %v2033, %v2048
  %v2057 = vmul.f32 %v2034, %v2048
  %v2058 = vmul.f32 %v2035, %v2048
  %v2059 = vmul.f32 %v2036, %v2048
  %v2060 = vmul.f32 %v2037, %v2048
  %v2061 = vmul.f32 %v2038, %v2048
  %v2062 = vmul.f32 %v2039, %v2048
  %v2063 = vmul.f32 %v2040, %v2048
  %v2064 = vmul.f32 %v2041, %v2048
  %v2065 = vmul.f32 %v2042, %v2048
  %v2066 = vld [vmem:[%s4] sm:$0x1]
  %v2068 = vlaneseq
  %v2069 = vshrl.u32 %v2068, 7
  %v2070 = vsub.s32 0, %v2069
  %v2071 = vrot.slane %v2066, %v2070
  %v2073 = vadd.f32 %v2050, %v2071
  %v2074 = vadd.f32 %v2051, %v2071
  %v2075 = vadd.f32 %v2052, %v2071
  %v2076 = vadd.f32 %v2053, %v2071
  %v2077 = vadd.f32 %v2054, %v2071
  %v2078 = vadd.f32 %v2055, %v2071
  %v2079 = vadd.f32 %v2056, %v2071
  %v2080 = vadd.f32 %v2057, %v2071
  %v2081 = vadd.f32 %v2058, %v2071
  %v2082 = vadd.f32 %v2059, %v2071
  %v2083 = vadd.f32 %v2060, %v2071
  %v2084 = vadd.f32 %v2061, %v2071
  %v2085 = vadd.f32 %v2062, %v2071
  %v2086 = vadd.f32 %v2063, %v2071
  %v2087 = vadd.f32 %v2064, %v2071
  %v2088 = vadd.f32 %v2065, %v2071
  %v2089 = vld [vmem:[%s5] sm:$0xf]
  %v2090 = vld [vmem:[%s5 + $0x4] sm:$0xf]
  %v2091 = vld [vmem:[%s5 + $0x8] sm:$0xf]
  %v2092 = vld [vmem:[%s5 + $0xc] sm:$0xf]
  %v2093 = vld [vmem:[%s5 + $0x10] sm:$0xf]
  %v2094 = vld [vmem:[%s5 + $0x14] sm:$0xf]
  %v2095 = vld [vmem:[%s5 + $0x18] sm:$0xf]
  %v2096 = vld [vmem:[%s5 + $0x1c] sm:$0xf]
  %v2097 = vld [vmem:[%s5 + $0x20] sm:$0xf]
  %v2098 = vld [vmem:[%s5 + $0x24] sm:$0xf]
  %v2099 = vld [vmem:[%s5 + $0x28] sm:$0xf]
  %v2100 = vld [vmem:[%s5 + $0x2c] sm:$0xf]
  %v2101 = vld [vmem:[%s5 + $0x30] sm:$0xf]
  %v2102 = vld [vmem:[%s5 + $0x34] sm:$0xf]
  %v2103 = vld [vmem:[%s5 + $0x38] sm:$0xf]
  %v2104 = vld [vmem:[%s5 + $0x3c] sm:$0xf]
  %v2105 = vunpack.c.l.bf16 %v2089
  %v2106 = vunpack.c.l.bf16 %v2090
  %v2107 = vunpack.c.l.bf16 %v2091
  %v2108 = vunpack.c.l.bf16 %v2092
  %v2109 = vunpack.c.l.bf16 %v2093
  %v2110 = vunpack.c.l.bf16 %v2094
  %v2111 = vunpack.c.l.bf16 %v2095
  %v2112 = vunpack.c.l.bf16 %v2096
  %v2113 = vunpack.c.l.bf16 %v2097
  %v2114 = vunpack.c.l.bf16 %v2098
  %v2115 = vunpack.c.l.bf16 %v2099
  %v2116 = vunpack.c.l.bf16 %v2100
  %v2117 = vunpack.c.l.bf16 %v2101
  %v2118 = vunpack.c.l.bf16 %v2102
  %v2119 = vunpack.c.l.bf16 %v2103
  %v2120 = vunpack.c.l.bf16 %v2104
  %v2121 = vadd.f32 %v2073, %v2105
  %v2122 = vadd.f32 %v2074, %v2106
  %v2123 = vadd.f32 %v2075, %v2107
  %v2124 = vadd.f32 %v2076, %v2108
  %v2125 = vadd.f32 %v2077, %v2109
  %v2126 = vadd.f32 %v2078, %v2110
  %v2127 = vadd.f32 %v2079, %v2111
  %v2128 = vadd.f32 %v2080, %v2112
  %v2129 = vadd.f32 %v2081, %v2113
  %v2130 = vadd.f32 %v2082, %v2114
  %v2131 = vadd.f32 %v2083, %v2115
  %v2132 = vadd.f32 %v2084, %v2116
  %v2133 = vadd.f32 %v2085, %v2117
  %v2134 = vadd.f32 %v2086, %v2118
  %v2135 = vadd.f32 %v2087, %v2119
  %v2136 = vadd.f32 %v2088, %v2120
  %v2137 = vmax.f32 %v2121, 0.0
  %v2138 = vmax.f32 %v2122, 0.0
  %v2139 = vmax.f32 %v2123, 0.0
  %v2140 = vmax.f32 %v2124, 0.0
  %v2141 = vmax.f32 %v2125, 0.0
  %v2142 = vmax.f32 %v2126, 0.0
  %v2143 = vmax.f32 %v2127, 0.0
  %v2144 = vmax.f32 %v2128, 0.0
  %v2145 = vmax.f32 %v2129, 0.0
  %v2146 = vmax.f32 %v2130, 0.0
  %v2147 = vmax.f32 %v2131, 0.0
  %v2148 = vmax.f32 %v2132, 0.0
  %v2149 = vmax.f32 %v2133, 0.0
  %v2150 = vmax.f32 %v2134, 0.0
  %v2151 = vmax.f32 %v2135, 0.0
  %v2152 = vmax.f32 %v2136, 0.0
  %v2153 = vpack.c.bf16 %v2138, %v2137
  %v2154 = vpack.c.bf16 %v2140, %v2139
  %v2155 = vpack.c.bf16 %v2142, %v2141
  %v2156 = vpack.c.bf16 %v2144, %v2143
  %v2157 = vpack.c.bf16 %v2146, %v2145
  %v2158 = vpack.c.bf16 %v2148, %v2147
  %v2159 = vpack.c.bf16 %v2150, %v2149
  %v2160 = vpack.c.bf16 %v2152, %v2151
  %v2169 = vunpack.c.l.b16 %v2153
  %v2170 = vunpack.c.h.b16 %v2153
  %v2171 = vunpack.c.l.b16 %v2154
  %v2172 = vunpack.c.h.b16 %v2154
  %v2173 = vunpack.c.l.b16 %v2155
  %v2174 = vunpack.c.h.b16 %v2155
  %v2175 = vunpack.c.l.b16 %v2156
  %v2176 = vunpack.c.h.b16 %v2156
  %v2177 = vunpack.c.l.b16 %v2157
  %v2178 = vunpack.c.h.b16 %v2157
  %v2179 = vunpack.c.l.b16 %v2158
  %v2180 = vunpack.c.h.b16 %v2158
  %v2181 = vunpack.c.l.b16 %v2159
  %v2182 = vunpack.c.h.b16 %v2159
  %v2183 = vunpack.c.l.b16 %v2160
  %v2184 = vunpack.c.h.b16 %v2160
  %v2185 = vpack.c.b16 %v2169, %v2169
  %v2186 = vpack.c.b16 %v2170, %v2170
  %v2187 = vpack.c.b16 %v2171, %v2171
  %v2188 = vpack.c.b16 %v2172, %v2172
  %v2189 = vpack.c.b16 %v2173, %v2173
  %v2190 = vpack.c.b16 %v2174, %v2174
  %v2191 = vpack.c.b16 %v2175, %v2175
  %v2192 = vpack.c.b16 %v2176, %v2176
  %v2193 = vpack.c.b16 %v2177, %v2177
  %v2194 = vpack.c.b16 %v2178, %v2178
  %v2195 = vpack.c.b16 %v2179, %v2179
  %v2196 = vpack.c.b16 %v2180, %v2180
  %v2197 = vpack.c.b16 %v2181, %v2181
  %v2198 = vpack.c.b16 %v2182, %v2182
  %v2199 = vpack.c.b16 %v2183, %v2183
  %v2200 = vpack.c.b16 %v2184, %v2184
  %2217 = vst [vmem:[%s6] sm:$0xf] %v2185
  %2218 = vst [vmem:[%s6 + $0x4] sm:$0xf] %v2186
  %2219 = vst [vmem:[%s6 + $0x8] sm:$0xf] %v2187
  %2220 = vst [vmem:[%s6 + $0xc] sm:$0xf] %v2188
  %2221 = vst [vmem:[%s6 + $0x10] sm:$0xf] %v2189
  %2222 = vst [vmem:[%s6 + $0x14] sm:$0xf] %v2190
  %2223 = vst [vmem:[%s6 + $0x18] sm:$0xf] %v2191
  %2224 = vst [vmem:[%s6 + $0x1c] sm:$0xf] %v2192
  %2225 = vst [vmem:[%s6 + $0x20] sm:$0xf] %v2193
  %2226 = vst [vmem:[%s6 + $0x24] sm:$0xf] %v2194
  %2227 = vst [vmem:[%s6 + $0x28] sm:$0xf] %v2195
  %2228 = vst [vmem:[%s6 + $0x2c] sm:$0xf] %v2196
  %2229 = vst [vmem:[%s6 + $0x30] sm:$0xf] %v2197
  %2230 = vst [vmem:[%s6 + $0x34] sm:$0xf] %v2198
  %2231 = vst [vmem:[%s6 + $0x38] sm:$0xf] %v2199
  %2232 = vst [vmem:[%s6 + $0x3c] sm:$0xf] %v2200
  // Predicated region
  $region26: #{resnet_forward.20} parent=0 // pred_check
    _
  $region27: #{resnet_forward.20} parent=0 // pred_check_branch
    %2234 = sbr.rel (0) target = $region29
  $region28: #{resnet_forward.20} parent=0 // pred_region
    _
  $region29: #{resnet_forward.20} parent=0 // pred_fallthru
    _
  // Predicated region
  $region30: #{resnet_forward.20} parent=0 // pred_check
    _
  $region31: #{resnet_forward.20} parent=0 // pred_check_branch
    %2236 = sbr.rel (0) target = $region33
  $region32: #{resnet_forward.20} parent=0 // pred_region
    _
  $region33: #{resnet_forward.20} parent=0 // pred_fallthru
    _

// kernel: resnet_forward.21
$region0: #{resnet_forward.21}
  #allocation0 [shape = 'u32[]', space=smem, size = 0x4, offset = 0x4, fixed_abs, tag = 'smem constant byte address 0x4 - core index']
  #allocation1 [shape = 'u32[144,128]{1,0:T(1,128)}', space=vmem, size = 0x12000, scoped, tag = 'internal scratch']
  %s0 = inlined_call_operand.vmem [shape: bf16[256,128], index: 0, kind: input, shape index: {}, may-alias: {0,1}]
  %s1 = inlined_call_operand.vmem [shape: bf16[256,128], index: 1, kind: input, shape index: {}, may-alias: {0,1}]
  %s2 = inlined_call_operand.vmem [shape: bf16[9,128,128], index: 2, kind: input, shape index: {}]
  %s3 = inlined_call_operand.vmem [shape: f32[1,128], index: 3, kind: input, shape index: {}]
  %s4 = inlined_call_operand.vmem [shape: f32[1,128], index: 4, kind: input, shape index: {}]
  %s5 = inlined_call_operand.vmem [shape: bf16[128,128], index: 5, kind: output, shape index: {}]
  %s6 = sld [smem:[#allocation0]]
  $region30: #{resnet_forward.21} parent=0
    _
  %s8 = ssub.s32 1, %s6
  %s9 = scalar_select 0, %s8, %s6
  // Predicated region
  $region2: #{resnet_forward.21} parent=0 // pred_check
    _
  $region3: #{resnet_forward.21} parent=0 // pred_check_branch
    %11 = sbr.rel (0) target = $region5
  $region4: #{resnet_forward.21} parent=0 // pred_region
    _
  $region5: #{resnet_forward.21} parent=0 // pred_fallthru
    _
  // Predicated region
  $region6: #{resnet_forward.21} parent=0 // pred_check
    _
  $region7: #{resnet_forward.21} parent=0 // pred_check_branch
    %13 = sbr.rel (0) target = $region9
  $region8: #{resnet_forward.21} parent=0 // pred_region
    %s14 = sadd.s32 0, 1
    %s15 = smul.u32 16, %s14
    %p16 = scmp.lt.s32.totalorder %s15, 31
    %s17 = scalar_select %p16, %s15, 31
    %s18 = smul.addr %s17, 4
    %s19 = scalar_lea.vmem %s1, %s18
    %s20 = sadd.s32 0, 1
    %s21 = smul.u32 16, %s20
  $region9: #{resnet_forward.21} parent=0 // pred_fallthru
    _
  // Predicated region
  $region10: #{resnet_forward.21} parent=0 // pred_check
    _
  $region11: #{resnet_forward.21} parent=0 // pred_check_branch
    %23 = sbr.rel (0) target = $region13
  $region12: #{resnet_forward.21} parent=0 // pred_region
    _
  $region13: #{resnet_forward.21} parent=0 // pred_fallthru
    _
  // Predicated region
  $region14: #{resnet_forward.21} parent=0 // pred_check
    _
  $region15: #{resnet_forward.21} parent=0 // pred_check_branch
    %25 = sbr.rel (0) target = $region17
  $region16: #{resnet_forward.21} parent=0 // pred_region
    _
  $region17: #{resnet_forward.21} parent=0 // pred_fallthru
    _
  // Predicated region
  $region18: #{resnet_forward.21} parent=0 // pred_check
    _
  $region19: #{resnet_forward.21} parent=0 // pred_check_branch
    %27 = sbr.rel (0) target = $region21
  $region20: #{resnet_forward.21} parent=0 // pred_region
    _
  $region21: #{resnet_forward.21} parent=0 // pred_fallthru
    _
  %s28 = sadd.s32 0, 1
  %s29 = smul.u32 16, %s28
  %p30 = scmp.lt.s32.totalorder %s29, 31
  %s31 = scalar_select %p30, %s29, 31
  %s32 = smul.addr %s31, 4
  %s33 = scalar_lea.vmem %s1, %s32
  %s34 = sadd.s32 0, 1
  %s35 = smul.u32 16, %s34
  %p36 = scmp.lt.s32.totalorder %s35, 31
  %s37 = scalar_select %p36, %s35, 31
  %s38 = smul.addr %s37, 4
  %s39 = scalar_lea.vmem %s1, %s38
  %s40 = sadd.s32 0, 1
  %s41 = smul.u32 16, %s40
  %v43 = vld [vmem:[%s0] sm:$0xf]
  %v44 = vld [vmem:[%s0 + $0x4] sm:$0xf]
  %v45 = vld [vmem:[%s0 + $0x8] sm:$0xf]
  %v46 = vld [vmem:[%s0 + $0xc] sm:$0xf]
  %v47 = vld [vmem:[%s0 + $0x10] sm:$0xf]
  %v48 = vld [vmem:[%s0 + $0x14] sm:$0xf]
  %v49 = vld [vmem:[%s0 + $0x18] sm:$0xf]
  %v50 = vld [vmem:[%s0 + $0x1c] sm:$0xf]
  %v51 = vld [vmem:[%s0 + $0x20] sm:$0xf]
  %v52 = vld [vmem:[%s0 + $0x24] sm:$0xf]
  %v53 = vld [vmem:[%s0 + $0x28] sm:$0xf]
  %v54 = vld [vmem:[%s0 + $0x2c] sm:$0xf]
  %v55 = vld [vmem:[%s0 + $0x30] sm:$0xf]
  %v56 = vld [vmem:[%s0 + $0x34] sm:$0xf]
  %v57 = vld [vmem:[%s0 + $0x38] sm:$0xf]
  %v58 = vld [vmem:[%s0 + $0x3c] sm:$0xf]
  %v59 = vld [vmem:[%s39] sm:$0xf]
  %v60 = vld [vmem:[%s39 + $0x4] sm:$0xf]
  %v77 = vunpack.c.l.b16 %v43
  %v78 = vunpack.c.l.b16 %v44
  %v79 = vunpack.c.l.b16 %v45
  %v80 = vunpack.c.l.b16 %v46
  %v81 = vunpack.c.l.b16 %v47
  %v82 = vunpack.c.l.b16 %v48
  %v83 = vunpack.c.l.b16 %v49
  %v84 = vunpack.c.l.b16 %v50
  %v85 = vunpack.c.l.b16 %v51
  %v86 = vunpack.c.l.b16 %v52
  %v87 = vunpack.c.l.b16 %v53
  %v88 = vunpack.c.l.b16 %v54
  %v89 = vunpack.c.l.b16 %v55
  %v90 = vunpack.c.l.b16 %v56
  %v91 = vunpack.c.l.b16 %v57
  %v92 = vunpack.c.l.b16 %v58
  %v93 = vpack.c.b16 %v78, %v77
  %v94 = vpack.c.b16 %v80, %v79
  %v95 = vpack.c.b16 %v82, %v81
  %v96 = vpack.c.b16 %v84, %v83
  %v97 = vpack.c.b16 %v86, %v85
  %v98 = vpack.c.b16 %v88, %v87
  %v99 = vpack.c.b16 %v90, %v89
  %v100 = vpack.c.b16 %v92, %v91
  %v111 = vunpack.c.l.b16 %v59
  %v112 = vunpack.c.l.b16 %v60
  %v113 = vpack.c.b16 %v112, %v111
  %v115 = vunpack.c.l.bf16 %v93
  %v116 = vunpack.c.h.bf16 %v93
  %v117 = vunpack.c.l.bf16 %v94
  %v118 = vunpack.c.h.bf16 %v94
  %v119 = vunpack.c.l.bf16 %v95
  %v120 = vunpack.c.h.bf16 %v95
  %v121 = vunpack.c.l.bf16 %v96
  %v122 = vunpack.c.h.bf16 %v96
  %v123 = vunpack.c.l.bf16 %v97
  %v124 = vunpack.c.h.bf16 %v97
  %v125 = vunpack.c.l.bf16 %v98
  %v126 = vunpack.c.h.bf16 %v98
  %v127 = vunpack.c.l.bf16 %v99
  %v128 = vunpack.c.h.bf16 %v99
  %v129 = vunpack.c.l.bf16 %v100
  %v130 = vunpack.c.h.bf16 %v100
  %v131 = vunpack.c.l.bf16 %v113
  %v132 = vunpack.c.h.bf16 %v113
  %v133 = vpack.c.bf16 %v116, %v115
  %v134 = vpack.c.bf16 %v118, %v117
  %v135 = vpack.c.bf16 %v120, %v119
  %v136 = vpack.c.bf16 %v122, %v121
  %v137 = vpack.c.bf16 %v124, %v123
  %v138 = vpack.c.bf16 %v126, %v125
  %v139 = vpack.c.bf16 %v128, %v127
  %v140 = vpack.c.bf16 %v130, %v129
  %v141 = vld [vmem:[%s2] sm:$0xf]
  %v142 = vld [vmem:[%s2 + $0x4] sm:$0xf]
  %v143 = vld [vmem:[%s2 + $0x8] sm:$0xf]
  %v144 = vld [vmem:[%s2 + $0xc] sm:$0xf]
  %v145 = vld [vmem:[%s2 + $0x10] sm:$0xf]
  %v146 = vld [vmem:[%s2 + $0x14] sm:$0xf]
  %v147 = vld [vmem:[%s2 + $0x18] sm:$0xf]
  %v148 = vld [vmem:[%s2 + $0x1c] sm:$0xf]
  %v149 = vld [vmem:[%s2 + $0x20] sm:$0xf]
  %v150 = vld [vmem:[%s2 + $0x24] sm:$0xf]
  %v151 = vld [vmem:[%s2 + $0x28] sm:$0xf]
  %v152 = vld [vmem:[%s2 + $0x2c] sm:$0xf]
  %v153 = vld [vmem:[%s2 + $0x30] sm:$0xf]
  %v154 = vld [vmem:[%s2 + $0x34] sm:$0xf]
  %v155 = vld [vmem:[%s2 + $0x38] sm:$0xf]
  %v156 = vld [vmem:[%s2 + $0x3c] sm:$0xf]
  %v157 = vpack.c.bf16 %v131, %v131
  %s158 = scalar_lea.vmem %s2, 64
  %v159 = vld [vmem:[%s158] sm:$0xf]
  %v160 = vld [vmem:[%s158 + $0x4] sm:$0xf]
  %v161 = vld [vmem:[%s158 + $0x8] sm:$0xf]
  %v162 = vld [vmem:[%s158 + $0xc] sm:$0xf]
  %v163 = vld [vmem:[%s158 + $0x10] sm:$0xf]
  %v164 = vld [vmem:[%s158 + $0x14] sm:$0xf]
  %v165 = vld [vmem:[%s158 + $0x18] sm:$0xf]
  %v166 = vld [vmem:[%s158 + $0x1c] sm:$0xf]
  %v167 = vld [vmem:[%s158 + $0x20] sm:$0xf]
  %v168 = vld [vmem:[%s158 + $0x24] sm:$0xf]
  %v169 = vld [vmem:[%s158 + $0x28] sm:$0xf]
  %v170 = vld [vmem:[%s158 + $0x2c] sm:$0xf]
  %v171 = vld [vmem:[%s158 + $0x30] sm:$0xf]
  %v172 = vld [vmem:[%s158 + $0x34] sm:$0xf]
  %v173 = vld [vmem:[%s158 + $0x38] sm:$0xf]
  %v174 = vld [vmem:[%s158 + $0x3c] sm:$0xf]
  %vm175 = vsmask.f32 7424
  %v177 = vshrl.u32 %v133, 16
  %v179 = vshll.u32 %v133, 16
  %v181 = vrot.slane %v179, 1
  %v182 = vor.u32 %v177, %v181
  %v184 = vshll.u32 %v134, 16
  %v186 = vrot.slane %v184, 1
  %v187 = vsel %vm175, %v182, %v186
  %v188 = vshrl.u32 %v134, 16
  %v190 = vor.u32 %v188, %v186
  %v192 = vshll.u32 %v135, 16
  %v194 = vrot.slane %v192, 1
  %v195 = vsel %vm175, %v190, %v194
  %v196 = vshrl.u32 %v135, 16
  %v198 = vor.u32 %v196, %v194
  %v200 = vshll.u32 %v136, 16
  %v202 = vrot.slane %v200, 1
  %v203 = vsel %vm175, %v198, %v202
  %v204 = vshrl.u32 %v136, 16
  %v206 = vor.u32 %v204, %v202
  %v208 = vshll.u32 %v137, 16
  %v210 = vrot.slane %v208, 1
  %v211 = vsel %vm175, %v206, %v210
  %v212 = vshrl.u32 %v137, 16
  %v214 = vor.u32 %v212, %v210
  %v216 = vshll.u32 %v138, 16
  %v218 = vrot.slane %v216, 1
  %v219 = vsel %vm175, %v214, %v218
  %v220 = vshrl.u32 %v138, 16
  %v222 = vor.u32 %v220, %v218
  %v224 = vshll.u32 %v139, 16
  %v226 = vrot.slane %v224, 1
  %v227 = vsel %vm175, %v222, %v226
  %v228 = vshrl.u32 %v139, 16
  %v230 = vor.u32 %v228, %v226
  %v232 = vshll.u32 %v140, 16
  %v234 = vrot.slane %v232, 1
  %v235 = vsel %vm175, %v230, %v234
  %v236 = vshrl.u32 %v140, 16
  %v238 = vor.u32 %v236, %v234
  %v240 = vshll.u32 %v157, 16
  %v242 = vrot.slane %v240, 1
  %v243 = vsel %vm175, %v238, %v242
  %v268 = vunpack.c.l.b16 %v159
  %v269 = vunpack.c.l.b16 %v160
  %v270 = vunpack.c.l.b16 %v161
  %v271 = vunpack.c.l.b16 %v162
  %v272 = vunpack.c.l.b16 %v163
  %v273 = vunpack.c.l.b16 %v164
  %v274 = vunpack.c.l.b16 %v165
  %v275 = vunpack.c.l.b16 %v166
  %v276 = vunpack.c.l.b16 %v167
  %v277 = vunpack.c.l.b16 %v168
  %v278 = vunpack.c.l.b16 %v169
  %v279 = vunpack.c.l.b16 %v170
  %v280 = vunpack.c.l.b16 %v171
  %v281 = vunpack.c.l.b16 %v172
  %v282 = vunpack.c.l.b16 %v173
  %v283 = vunpack.c.l.b16 %v174
  %v284 = vpack.c.b16 %v269, %v268
  %v285 = vpack.c.b16 %v271, %v270
  %v286 = vpack.c.b16 %v273, %v272
  %v287 = vpack.c.b16 %v275, %v274
  %v288 = vpack.c.b16 %v277, %v276
  %v289 = vpack.c.b16 %v279, %v278
  %v290 = vpack.c.b16 %v281, %v280
  %v291 = vpack.c.b16 %v283, %v282
  %300 = vmatprep.subr.bf16.mxu0 0
  %301 = vmatpush1.bf16.msra.mxu0 %v291
  %302 = vmatprep.subr.bf16.mxu0 0
  %303 = vmatpush1.bf16.msra.mxu0 %v290
  %304 = vmatprep.subr.bf16.mxu0 0
  %305 = vmatpush1.bf16.msra.mxu0 %v289
  %306 = vmatprep.subr.bf16.mxu0 0
  %307 = vmatpush1.bf16.msra.mxu0 %v288
  %308 = vmatprep.subr.bf16.mxu0 0
  %309 = vmatpush1.bf16.msra.mxu0 %v287
  %310 = vmatprep.subr.bf16.mxu0 0
  %311 = vmatpush1.bf16.msra.mxu0 %v286
  %312 = vmatprep.subr.bf16.mxu0 0
  %313 = vmatpush1.bf16.msra.mxu0 %v285
  %314 = vmatprep.subr.bf16.mxu0 0
  %315 = vmatpush1.bf16.msra.mxu0 %v284
  %316 = vmatprep.subr.bf16.mxu0 0
  %317 = vmatpush2.bf16.msra.mxu0 0
  %318 = vmatprep.subr.bf16.mxu0 0
  %319 = vmatpush2.bf16.msra.mxu0 0
  %320 = vmatprep.subr.bf16.mxu0 0
  %321 = vmatpush2.bf16.msra.mxu0 0
  %322 = vmatprep.subr.bf16.mxu0 0
  %323 = vmatpush2.bf16.msra.mxu0 0
  %324 = vmatprep.subr.bf16.mxu0 0
  %325 = vmatpush2.bf16.msra.mxu0 0
  %326 = vmatprep.subr.bf16.mxu0 0
  %327 = vmatpush2.bf16.msra.mxu0 0
  %328 = vmatprep.subr.bf16.mxu0 0
  %329 = vmatpush2.bf16.msra.mxu0 0
  %330 = vmatprep.subr.bf16.mxu0 0
  %331 = vmatpush2.bf16.msra.mxu0 0
  %332 = vmatprep.mubr.bf16.mxu0 0
  %333 = vmatmul.mubr.bf16.gmra.mxu0 %v187
  %v334 = vpop.f32.mrf.mxu0
  %v335 = vadd.f32 0.0, %v334
  %v336 = vpop.f32.mrf.mxu0
  %v337 = vpop.f32.mrf.mxu0
  %v338 = vadd.f32 0.0, %v337
  %v339 = vpop.f32.mrf.mxu0
  %340 = vmatprep.mubr.bf16.mxu0 0
  %341 = vmatmul.mubr.bf16.gmra.mxu0 %v195
  %v342 = vpop.f32.mrf.mxu0
  %v343 = vadd.f32 0.0, %v342
  %v344 = vpop.f32.mrf.mxu0
  %v345 = vpop.f32.mrf.mxu0
  %v346 = vadd.f32 0.0, %v345
  %v347 = vpop.f32.mrf.mxu0
  %348 = vmatprep.mubr.bf16.mxu0 0
  %349 = vmatmul.mubr.bf16.gmra.mxu0 %v203
  %v350 = vpop.f32.mrf.mxu0
  %v351 = vadd.f32 0.0, %v350
  %v352 = vpop.f32.mrf.mxu0
  %v353 = vpop.f32.mrf.mxu0
  %v354 = vadd.f32 0.0, %v353
  %v355 = vpop.f32.mrf.mxu0
  %356 = vmatprep.mubr.bf16.mxu0 0
  %357 = vmatmul.mubr.bf16.gmra.mxu0 %v211
  %v358 = vpop.f32.mrf.mxu0
  %v359 = vadd.f32 0.0, %v358
  %v360 = vpop.f32.mrf.mxu0
  %v361 = vpop.f32.mrf.mxu0
  %v362 = vadd.f32 0.0, %v361
  %v363 = vpop.f32.mrf.mxu0
  %364 = vmatprep.mubr.bf16.mxu0 0
  %365 = vmatmul.mubr.bf16.gmra.mxu0 %v219
  %v366 = vpop.f32.mrf.mxu0
  %v367 = vadd.f32 0.0, %v366
  %v368 = vpop.f32.mrf.mxu0
  %v369 = vpop.f32.mrf.mxu0
  %v370 = vadd.f32 0.0, %v369
  %v371 = vpop.f32.mrf.mxu0
  %372 = vmatprep.mubr.bf16.mxu0 0
  %373 = vmatmul.mubr.bf16.gmra.mxu0 %v227
  %v374 = vpop.f32.mrf.mxu0
  %v375 = vadd.f32 0.0, %v374
  %v376 = vpop.f32.mrf.mxu0
  %v377 = vpop.f32.mrf.mxu0
  %v378 = vadd.f32 0.0, %v377
  %v379 = vpop.f32.mrf.mxu0
  %380 = vmatprep.mubr.bf16.mxu0 0
  %381 = vmatmul.mubr.bf16.gmra.mxu0 %v235
  %v382 = vpop.f32.mrf.mxu0
  %v383 = vadd.f32 0.0, %v382
  %v384 = vpop.f32.mrf.mxu0
  %v385 = vpop.f32.mrf.mxu0
  %v386 = vadd.f32 0.0, %v385
  %v387 = vpop.f32.mrf.mxu0
  %388 = vmatprep.mubr.bf16.mxu0 0
  %389 = vmatmul.mubr.bf16.gmra.mxu0 %v243
  %v390 = vpop.f32.mrf.mxu0
  %v391 = vadd.f32 0.0, %v390
  %v392 = vpop.f32.mrf.mxu0
  %v393 = vpop.f32.mrf.mxu0
  %v394 = vadd.f32 0.0, %v393
  %v395 = vpop.f32.mrf.mxu0
  %396 = vdwg.mxu0
  %v413 = vunpack.c.l.b16 %v141
  %v414 = vunpack.c.l.b16 %v142
  %v415 = vunpack.c.l.b16 %v143
  %v416 = vunpack.c.l.b16 %v144
  %v417 = vunpack.c.l.b16 %v145
  %v418 = vunpack.c.l.b16 %v146
  %v419 = vunpack.c.l.b16 %v147
  %v420 = vunpack.c.l.b16 %v148
  %v421 = vunpack.c.l.b16 %v149
  %v422 = vunpack.c.l.b16 %v150
  %v423 = vunpack.c.l.b16 %v151
  %v424 = vunpack.c.l.b16 %v152
  %v425 = vunpack.c.l.b16 %v153
  %v426 = vunpack.c.l.b16 %v154
  %v427 = vunpack.c.l.b16 %v155
  %v428 = vunpack.c.l.b16 %v156
  %v429 = vpack.c.b16 %v414, %v413
  %v430 = vpack.c.b16 %v416, %v415
  %v431 = vpack.c.b16 %v418, %v417
  %v432 = vpack.c.b16 %v420, %v419
  %v433 = vpack.c.b16 %v422, %v421
  %v434 = vpack.c.b16 %v424, %v423
  %v435 = vpack.c.b16 %v426, %v425
  %v436 = vpack.c.b16 %v428, %v427
  %445 = vmatprep.subr.bf16.mxu0 0
  %446 = vmatpush1.bf16.msra.mxu0 %v436
  %447 = vmatprep.subr.bf16.mxu0 0
  %448 = vmatpush1.bf16.msra.mxu0 %v435
  %449 = vmatprep.subr.bf16.mxu0 0
  %450 = vmatpush1.bf16.msra.mxu0 %v434
  %451 = vmatprep.subr.bf16.mxu0 0
  %452 = vmatpush1.bf16.msra.mxu0 %v433
  %453 = vmatprep.subr.bf16.mxu0 0
  %454 = vmatpush1.bf16.msra.mxu0 %v432
  %455 = vmatprep.subr.bf16.mxu0 0
  %456 = vmatpush1.bf16.msra.mxu0 %v431
  %457 = vmatprep.subr.bf16.mxu0 0
  %458 = vmatpush1.bf16.msra.mxu0 %v430
  %459 = vmatprep.subr.bf16.mxu0 0
  %460 = vmatpush1.bf16.msra.mxu0 %v429
  %461 = vmatprep.subr.bf16.mxu0 0
  %462 = vmatpush2.bf16.msra.mxu0 0
  %463 = vmatprep.subr.bf16.mxu0 0
  %464 = vmatpush2.bf16.msra.mxu0 0
  %465 = vmatprep.subr.bf16.mxu0 0
  %466 = vmatpush2.bf16.msra.mxu0 0
  %467 = vmatprep.subr.bf16.mxu0 0
  %468 = vmatpush2.bf16.msra.mxu0 0
  %469 = vmatprep.subr.bf16.mxu0 0
  %470 = vmatpush2.bf16.msra.mxu0 0
  %471 = vmatprep.subr.bf16.mxu0 0
  %472 = vmatpush2.bf16.msra.mxu0 0
  %473 = vmatprep.subr.bf16.mxu0 0
  %474 = vmatpush2.bf16.msra.mxu0 0
  %475 = vmatprep.subr.bf16.mxu0 0
  %476 = vmatpush2.bf16.msra.mxu0 0
  %477 = vmatprep.mubr.bf16.mxu0 0
  %478 = vmatmul.mubr.bf16.gmra.mxu0 %v133
  %v479 = vpop.f32.mrf.mxu0
  %v480 = vadd.f32 %v335, %v479
  %v481 = vpop.f32.mrf.mxu0
  %v482 = vpop.f32.mrf.mxu0
  %v483 = vadd.f32 %v338, %v482
  %v484 = vpop.f32.mrf.mxu0
  %485 = vmatprep.mubr.bf16.mxu0 0
  %486 = vmatmul.mubr.bf16.gmra.mxu0 %v134
  %v487 = vpop.f32.mrf.mxu0
  %v488 = vadd.f32 %v343, %v487
  %v489 = vpop.f32.mrf.mxu0
  %v490 = vpop.f32.mrf.mxu0
  %v491 = vadd.f32 %v346, %v490
  %v492 = vpop.f32.mrf.mxu0
  %493 = vmatprep.mubr.bf16.mxu0 0
  %494 = vmatmul.mubr.bf16.gmra.mxu0 %v135
  %v495 = vpop.f32.mrf.mxu0
  %v496 = vadd.f32 %v351, %v495
  %v497 = vpop.f32.mrf.mxu0
  %v498 = vpop.f32.mrf.mxu0
  %v499 = vadd.f32 %v354, %v498
  %v500 = vpop.f32.mrf.mxu0
  %501 = vmatprep.mubr.bf16.mxu0 0
  %502 = vmatmul.mubr.bf16.gmra.mxu0 %v136
  %v503 = vpop.f32.mrf.mxu0
  %v504 = vadd.f32 %v359, %v503
  %v505 = vpop.f32.mrf.mxu0
  %v506 = vpop.f32.mrf.mxu0
  %v507 = vadd.f32 %v362, %v506
  %v508 = vpop.f32.mrf.mxu0
  %509 = vmatprep.mubr.bf16.mxu0 0
  %510 = vmatmul.mubr.bf16.gmra.mxu0 %v137
  %v511 = vpop.f32.mrf.mxu0
  %v512 = vadd.f32 %v367, %v511
  %v513 = vpop.f32.mrf.mxu0
  %v514 = vpop.f32.mrf.mxu0
  %v515 = vadd.f32 %v370, %v514
  %v516 = vpop.f32.mrf.mxu0
  %517 = vmatprep.mubr.bf16.mxu0 0
  %518 = vmatmul.mubr.bf16.gmra.mxu0 %v138
  %v519 = vpop.f32.mrf.mxu0
  %v520 = vadd.f32 %v375, %v519
  %v521 = vpop.f32.mrf.mxu0
  %v522 = vpop.f32.mrf.mxu0
  %v523 = vadd.f32 %v378, %v522
  %v524 = vpop.f32.mrf.mxu0
  %525 = vmatprep.mubr.bf16.mxu0 0
  %526 = vmatmul.mubr.bf16.gmra.mxu0 %v139
  %v527 = vpop.f32.mrf.mxu0
  %v528 = vadd.f32 %v383, %v527
  %v529 = vpop.f32.mrf.mxu0
  %v530 = vpop.f32.mrf.mxu0
  %v531 = vadd.f32 %v386, %v530
  %v532 = vpop.f32.mrf.mxu0
  %533 = vmatprep.mubr.bf16.mxu0 0
  %534 = vmatmul.mubr.bf16.gmra.mxu0 %v140
  %v535 = vpop.f32.mrf.mxu0
  %v536 = vadd.f32 %v391, %v535
  %v537 = vpop.f32.mrf.mxu0
  %v538 = vpop.f32.mrf.mxu0
  %v539 = vadd.f32 %v394, %v538
  %v540 = vpop.f32.mrf.mxu0
  %541 = vdwg.mxu0
  %s542 = scalar_lea.vmem %s2, 128
  %v543 = vld [vmem:[%s542] sm:$0xf]
  %v544 = vld [vmem:[%s542 + $0x4] sm:$0xf]
  %v545 = vld [vmem:[%s542 + $0x8] sm:$0xf]
  %v546 = vld [vmem:[%s542 + $0xc] sm:$0xf]
  %v547 = vld [vmem:[%s542 + $0x10] sm:$0xf]
  %v548 = vld [vmem:[%s542 + $0x14] sm:$0xf]
  %v549 = vld [vmem:[%s542 + $0x18] sm:$0xf]
  %v550 = vld [vmem:[%s542 + $0x1c] sm:$0xf]
  %v551 = vld [vmem:[%s542 + $0x20] sm:$0xf]
  %v552 = vld [vmem:[%s542 + $0x24] sm:$0xf]
  %v553 = vld [vmem:[%s542 + $0x28] sm:$0xf]
  %v554 = vld [vmem:[%s542 + $0x2c] sm:$0xf]
  %v555 = vld [vmem:[%s542 + $0x30] sm:$0xf]
  %v556 = vld [vmem:[%s542 + $0x34] sm:$0xf]
  %v557 = vld [vmem:[%s542 + $0x38] sm:$0xf]
  %v558 = vld [vmem:[%s542 + $0x3c] sm:$0xf]
  %vm568 = vcmask 1046528
  %v569 = vrot.slane %v133, 1
  %v570 = vrot.slane %v134, 1
  %v571 = vsel %vm568, %v569, %v570
  %v572 = vrot.slane %v135, 1
  %v573 = vsel %vm568, %v570, %v572
  %v574 = vrot.slane %v136, 1
  %v575 = vsel %vm568, %v572, %v574
  %v576 = vrot.slane %v137, 1
  %v577 = vsel %vm568, %v574, %v576
  %v578 = vrot.slane %v138, 1
  %v579 = vsel %vm568, %v576, %v578
  %v580 = vrot.slane %v139, 1
  %v581 = vsel %vm568, %v578, %v580
  %v582 = vrot.slane %v140, 1
  %v583 = vsel %vm568, %v580, %v582
  %v584 = vrot.slane %v157, 1
  %v585 = vsel %vm568, %v582, %v584
  %v610 = vunpack.c.l.b16 %v543
  %v611 = vunpack.c.l.b16 %v544
  %v612 = vunpack.c.l.b16 %v545
  %v613 = vunpack.c.l.b16 %v546
  %v614 = vunpack.c.l.b16 %v547
  %v615 = vunpack.c.l.b16 %v548
  %v616 = vunpack.c.l.b16 %v549
  %v617 = vunpack.c.l.b16 %v550
  %v618 = vunpack.c.l.b16 %v551
  %v619 = vunpack.c.l.b16 %v552
  %v620 = vunpack.c.l.b16 %v553
  %v621 = vunpack.c.l.b16 %v554
  %v622 = vunpack.c.l.b16 %v555
  %v623 = vunpack.c.l.b16 %v556
  %v624 = vunpack.c.l.b16 %v557
  %v625 = vunpack.c.l.b16 %v558
  %v626 = vpack.c.b16 %v611, %v610
  %v627 = vpack.c.b16 %v613, %v612
  %v628 = vpack.c.b16 %v615, %v614
  %v629 = vpack.c.b16 %v617, %v616
  %v630 = vpack.c.b16 %v619, %v618
  %v631 = vpack.c.b16 %v621, %v620
  %v632 = vpack.c.b16 %v623, %v622
  %v633 = vpack.c.b16 %v625, %v624
  %642 = vmatprep.subr.bf16.mxu0 0
  %643 = vmatpush1.bf16.msra.mxu0 %v633
  %644 = vmatprep.subr.bf16.mxu0 0
  %645 = vmatpush1.bf16.msra.mxu0 %v632
  %646 = vmatprep.subr.bf16.mxu0 0
  %647 = vmatpush1.bf16.msra.mxu0 %v631
  %648 = vmatprep.subr.bf16.mxu0 0
  %649 = vmatpush1.bf16.msra.mxu0 %v630
  %650 = vmatprep.subr.bf16.mxu0 0
  %651 = vmatpush1.bf16.msra.mxu0 %v629
  %652 = vmatprep.subr.bf16.mxu0 0
  %653 = vmatpush1.bf16.msra.mxu0 %v628
  %654 = vmatprep.subr.bf16.mxu0 0
  %655 = vmatpush1.bf16.msra.mxu0 %v627
  %656 = vmatprep.subr.bf16.mxu0 0
  %657 = vmatpush1.bf16.msra.mxu0 %v626
  %658 = vmatprep.subr.bf16.mxu0 0
  %659 = vmatpush2.bf16.msra.mxu0 0
  %660 = vmatprep.subr.bf16.mxu0 0
  %661 = vmatpush2.bf16.msra.mxu0 0
  %662 = vmatprep.subr.bf16.mxu0 0
  %663 = vmatpush2.bf16.msra.mxu0 0
  %664 = vmatprep.subr.bf16.mxu0 0
  %665 = vmatpush2.bf16.msra.mxu0 0
  %666 = vmatprep.subr.bf16.mxu0 0
  %667 = vmatpush2.bf16.msra.mxu0 0
  %668 = vmatprep.subr.bf16.mxu0 0
  %669 = vmatpush2.bf16.msra.mxu0 0
  %670 = vmatprep.subr.bf16.mxu0 0
  %671 = vmatpush2.bf16.msra.mxu0 0
  %672 = vmatprep.subr.bf16.mxu0 0
  %673 = vmatpush2.bf16.msra.mxu0 0
  %674 = vmatprep.mubr.bf16.mxu0 0
  %675 = vmatmul.mubr.bf16.gmra.mxu0 %v571
  %v676 = vpop.f32.mrf.mxu0
  %v677 = vadd.f32 0.0, %v676
  %v678 = vpop.f32.mrf.mxu0
  %v679 = vpop.f32.mrf.mxu0
  %v680 = vadd.f32 0.0, %v679
  %v681 = vpop.f32.mrf.mxu0
  %682 = vmatprep.mubr.bf16.mxu0 0
  %683 = vmatmul.mubr.bf16.gmra.mxu0 %v573
  %v684 = vpop.f32.mrf.mxu0
  %v685 = vadd.f32 0.0, %v684
  %v686 = vpop.f32.mrf.mxu0
  %v687 = vpop.f32.mrf.mxu0
  %v688 = vadd.f32 0.0, %v687
  %v689 = vpop.f32.mrf.mxu0
  %690 = vmatprep.mubr.bf16.mxu0 0
  %691 = vmatmul.mubr.bf16.gmra.mxu0 %v575
  %v692 = vpop.f32.mrf.mxu0
  %v693 = vadd.f32 0.0, %v692
  %v694 = vpop.f32.mrf.mxu0
  %v695 = vpop.f32.mrf.mxu0
  %v696 = vadd.f32 0.0, %v695
  %v697 = vpop.f32.mrf.mxu0
  %698 = vmatprep.mubr.bf16.mxu0 0
  %699 = vmatmul.mubr.bf16.gmra.mxu0 %v577
  %v700 = vpop.f32.mrf.mxu0
  %v701 = vadd.f32 0.0, %v700
  %v702 = vpop.f32.mrf.mxu0
  %v703 = vpop.f32.mrf.mxu0
  %v704 = vadd.f32 0.0, %v703
  %v705 = vpop.f32.mrf.mxu0
  %706 = vmatprep.mubr.bf16.mxu0 0
  %707 = vmatmul.mubr.bf16.gmra.mxu0 %v579
  %v708 = vpop.f32.mrf.mxu0
  %v709 = vadd.f32 0.0, %v708
  %v710 = vpop.f32.mrf.mxu0
  %v711 = vpop.f32.mrf.mxu0
  %v712 = vadd.f32 0.0, %v711
  %v713 = vpop.f32.mrf.mxu0
  %714 = vmatprep.mubr.bf16.mxu0 0
  %715 = vmatmul.mubr.bf16.gmra.mxu0 %v581
  %v716 = vpop.f32.mrf.mxu0
  %v717 = vadd.f32 0.0, %v716
  %v718 = vpop.f32.mrf.mxu0
  %v719 = vpop.f32.mrf.mxu0
  %v720 = vadd.f32 0.0, %v719
  %v721 = vpop.f32.mrf.mxu0
  %722 = vmatprep.mubr.bf16.mxu0 0
  %723 = vmatmul.mubr.bf16.gmra.mxu0 %v583
  %v724 = vpop.f32.mrf.mxu0
  %v725 = vadd.f32 0.0, %v724
  %v726 = vpop.f32.mrf.mxu0
  %v727 = vpop.f32.mrf.mxu0
  %v728 = vadd.f32 0.0, %v727
  %v729 = vpop.f32.mrf.mxu0
  %730 = vmatprep.mubr.bf16.mxu0 0
  %731 = vmatmul.mubr.bf16.gmra.mxu0 %v585
  %v732 = vpop.f32.mrf.mxu0
  %v733 = vadd.f32 0.0, %v732
  %v734 = vpop.f32.mrf.mxu0
  %v735 = vpop.f32.mrf.mxu0
  %v736 = vadd.f32 0.0, %v735
  %v737 = vpop.f32.mrf.mxu0
  %738 = vdwg.mxu0
  %v739 = vadd.f32 %v480, %v677
  %v740 = vadd.f32 %v483, %v680
  %v741 = vadd.f32 %v488, %v685
  %v742 = vadd.f32 %v491, %v688
  %v743 = vadd.f32 %v496, %v693
  %v744 = vadd.f32 %v499, %v696
  %v745 = vadd.f32 %v504, %v701
  %v746 = vadd.f32 %v507, %v704
  %v747 = vadd.f32 %v512, %v709
  %v748 = vadd.f32 %v515, %v712
  %v749 = vadd.f32 %v520, %v717
  %v750 = vadd.f32 %v523, %v720
  %v751 = vadd.f32 %v528, %v725
  %v752 = vadd.f32 %v531, %v728
  %v753 = vadd.f32 %v536, %v733
  %v754 = vadd.f32 %v539, %v736
  %s755 = scalar_lea.vmem %s2, 192
  %v756 = vld [vmem:[%s755] sm:$0xf]
  %v757 = vld [vmem:[%s755 + $0x4] sm:$0xf]
  %v758 = vld [vmem:[%s755 + $0x8] sm:$0xf]
  %v759 = vld [vmem:[%s755 + $0xc] sm:$0xf]
  %v760 = vld [vmem:[%s755 + $0x10] sm:$0xf]
  %v761 = vld [vmem:[%s755 + $0x14] sm:$0xf]
  %v762 = vld [vmem:[%s755 + $0x18] sm:$0xf]
  %v763 = vld [vmem:[%s755 + $0x1c] sm:$0xf]
  %v764 = vld [vmem:[%s755 + $0x20] sm:$0xf]
  %v765 = vld [vmem:[%s755 + $0x24] sm:$0xf]
  %v766 = vld [vmem:[%s755 + $0x28] sm:$0xf]
  %v767 = vld [vmem:[%s755 + $0x2c] sm:$0xf]
  %v768 = vld [vmem:[%s755 + $0x30] sm:$0xf]
  %v769 = vld [vmem:[%s755 + $0x34] sm:$0xf]
  %v770 = vld [vmem:[%s755 + $0x38] sm:$0xf]
  %v771 = vld [vmem:[%s755 + $0x3c] sm:$0xf]
  %vm772 = vcmask 1045504
  %v773 = vrot.slane %v133, 2
  %v774 = vrot.slane %v134, 2
  %v775 = vsel %vm772, %v773, %v774
  %v776 = vrot.slane %v135, 2
  %v777 = vsel %vm772, %v774, %v776
  %v778 = vrot.slane %v136, 2
  %v779 = vsel %vm772, %v776, %v778
  %v780 = vrot.slane %v137, 2
  %v781 = vsel %vm772, %v778, %v780
  %v782 = vrot.slane %v138, 2
  %v783 = vsel %vm772, %v780, %v782
  %v784 = vrot.slane %v139, 2
  %v785 = vsel %vm772, %v782, %v784
  %v786 = vrot.slane %v140, 2
  %v787 = vsel %vm772, %v784, %v786
  %v788 = vrot.slane %v157, 2
  %v789 = vsel %vm772, %v786, %v788
  %v814 = vunpack.c.l.b16 %v756
  %v815 = vunpack.c.l.b16 %v757
  %v816 = vunpack.c.l.b16 %v758
  %v817 = vunpack.c.l.b16 %v759
  %v818 = vunpack.c.l.b16 %v760
  %v819 = vunpack.c.l.b16 %v761
  %v820 = vunpack.c.l.b16 %v762
  %v821 = vunpack.c.l.b16 %v763
  %v822 = vunpack.c.l.b16 %v764
  %v823 = vunpack.c.l.b16 %v765
  %v824 = vunpack.c.l.b16 %v766
  %v825 = vunpack.c.l.b16 %v767
  %v826 = vunpack.c.l.b16 %v768
  %v827 = vunpack.c.l.b16 %v769
  %v828 = vunpack.c.l.b16 %v770
  %v829 = vunpack.c.l.b16 %v771
  %v830 = vpack.c.b16 %v815, %v814
  %v831 = vpack.c.b16 %v817, %v816
  %v832 = vpack.c.b16 %v819, %v818
  %v833 = vpack.c.b16 %v821, %v820
  %v834 = vpack.c.b16 %v823, %v822
  %v835 = vpack.c.b16 %v825, %v824
  %v836 = vpack.c.b16 %v827, %v826
  %v837 = vpack.c.b16 %v829, %v828
  %846 = vmatprep.subr.bf16.mxu0 0
  %847 = vmatpush1.bf16.msra.mxu0 %v837
  %848 = vmatprep.subr.bf16.mxu0 0
  %849 = vmatpush1.bf16.msra.mxu0 %v836
  %850 = vmatprep.subr.bf16.mxu0 0
  %851 = vmatpush1.bf16.msra.mxu0 %v835
  %852 = vmatprep.subr.bf16.mxu0 0
  %853 = vmatpush1.bf16.msra.mxu0 %v834
  %854 = vmatprep.subr.bf16.mxu0 0
  %855 = vmatpush1.bf16.msra.mxu0 %v833
  %856 = vmatprep.subr.bf16.mxu0 0
  %857 = vmatpush1.bf16.msra.mxu0 %v832
  %858 = vmatprep.subr.bf16.mxu0 0
  %859 = vmatpush1.bf16.msra.mxu0 %v831
  %860 = vmatprep.subr.bf16.mxu0 0
  %861 = vmatpush1.bf16.msra.mxu0 %v830
  %862 = vmatprep.subr.bf16.mxu0 0
  %863 = vmatpush2.bf16.msra.mxu0 0
  %864 = vmatprep.subr.bf16.mxu0 0
  %865 = vmatpush2.bf16.msra.mxu0 0
  %866 = vmatprep.subr.bf16.mxu0 0
  %867 = vmatpush2.bf16.msra.mxu0 0
  %868 = vmatprep.subr.bf16.mxu0 0
  %869 = vmatpush2.bf16.msra.mxu0 0
  %870 = vmatprep.subr.bf16.mxu0 0
  %871 = vmatpush2.bf16.msra.mxu0 0
  %872 = vmatprep.subr.bf16.mxu0 0
  %873 = vmatpush2.bf16.msra.mxu0 0
  %874 = vmatprep.subr.bf16.mxu0 0
  %875 = vmatpush2.bf16.msra.mxu0 0
  %876 = vmatprep.subr.bf16.mxu0 0
  %877 = vmatpush2.bf16.msra.mxu0 0
  %878 = vmatprep.mubr.bf16.mxu0 0
  %879 = vmatmul.mubr.bf16.gmra.mxu0 %v775
  %v880 = vpop.f32.mrf.mxu0
  %v881 = vadd.f32 0.0, %v880
  %v882 = vpop.f32.mrf.mxu0
  %v883 = vpop.f32.mrf.mxu0
  %v884 = vadd.f32 0.0, %v883
  %v885 = vpop.f32.mrf.mxu0
  %886 = vmatprep.mubr.bf16.mxu0 0
  %887 = vmatmul.mubr.bf16.gmra.mxu0 %v777
  %v888 = vpop.f32.mrf.mxu0
  %v889 = vadd.f32 0.0, %v888
  %v890 = vpop.f32.mrf.mxu0
  %v891 = vpop.f32.mrf.mxu0
  %v892 = vadd.f32 0.0, %v891
  %v893 = vpop.f32.mrf.mxu0
  %894 = vmatprep.mubr.bf16.mxu0 0
  %895 = vmatmul.mubr.bf16.gmra.mxu0 %v779
  %v896 = vpop.f32.mrf.mxu0
  %v897 = vadd.f32 0.0, %v896
  %v898 = vpop.f32.mrf.mxu0
  %v899 = vpop.f32.mrf.mxu0
  %v900 = vadd.f32 0.0, %v899
  %v901 = vpop.f32.mrf.mxu0
  %902 = vmatprep.mubr.bf16.mxu0 0
  %903 = vmatmul.mubr.bf16.gmra.mxu0 %v781
  %v904 = vpop.f32.mrf.mxu0
  %v905 = vadd.f32 0.0, %v904
  %v906 = vpop.f32.mrf.mxu0
  %v907 = vpop.f32.mrf.mxu0
  %v908 = vadd.f32 0.0, %v907
  %v909 = vpop.f32.mrf.mxu0
  %910 = vmatprep.mubr.bf16.mxu0 0
  %911 = vmatmul.mubr.bf16.gmra.mxu0 %v783
  %v912 = vpop.f32.mrf.mxu0
  %v913 = vadd.f32 0.0, %v912
  %v914 = vpop.f32.mrf.mxu0
  %v915 = vpop.f32.mrf.mxu0
  %v916 = vadd.f32 0.0, %v915
  %v917 = vpop.f32.mrf.mxu0
  %918 = vmatprep.mubr.bf16.mxu0 0
  %919 = vmatmul.mubr.bf16.gmra.mxu0 %v785
  %v920 = vpop.f32.mrf.mxu0
  %v921 = vadd.f32 0.0, %v920
  %v922 = vpop.f32.mrf.mxu0
  %v923 = vpop.f32.mrf.mxu0
  %v924 = vadd.f32 0.0, %v923
  %v925 = vpop.f32.mrf.mxu0
  %926 = vmatprep.mubr.bf16.mxu0 0
  %927 = vmatmul.mubr.bf16.gmra.mxu0 %v787
  %v928 = vpop.f32.mrf.mxu0
  %v929 = vadd.f32 0.0, %v928
  %v930 = vpop.f32.mrf.mxu0
  %v931 = vpop.f32.mrf.mxu0
  %v932 = vadd.f32 0.0, %v931
  %v933 = vpop.f32.mrf.mxu0
  %934 = vmatprep.mubr.bf16.mxu0 0
  %935 = vmatmul.mubr.bf16.gmra.mxu0 %v789
  %v936 = vpop.f32.mrf.mxu0
  %v937 = vadd.f32 0.0, %v936
  %v938 = vpop.f32.mrf.mxu0
  %v939 = vpop.f32.mrf.mxu0
  %v940 = vadd.f32 0.0, %v939
  %v941 = vpop.f32.mrf.mxu0
  %942 = vdwg.mxu0
  %v943 = vadd.f32 %v739, %v881
  %v944 = vadd.f32 %v740, %v884
  %v945 = vadd.f32 %v741, %v889
  %v946 = vadd.f32 %v742, %v892
  %v947 = vadd.f32 %v743, %v897
  %v948 = vadd.f32 %v744, %v900
  %v949 = vadd.f32 %v745, %v905
  %v950 = vadd.f32 %v746, %v908
  %v951 = vadd.f32 %v747, %v913
  %v952 = vadd.f32 %v748, %v916
  %v953 = vadd.f32 %v749, %v921
  %v954 = vadd.f32 %v750, %v924
  %v955 = vadd.f32 %v751, %v929
  %v956 = vadd.f32 %v752, %v932
  %v957 = vadd.f32 %v753, %v937
  %v958 = vadd.f32 %v754, %v940
  %s959 = scalar_lea.vmem %s2, 256
  %v960 = vld [vmem:[%s959] sm:$0xf]
  %v961 = vld [vmem:[%s959 + $0x4] sm:$0xf]
  %v962 = vld [vmem:[%s959 + $0x8] sm:$0xf]
  %v963 = vld [vmem:[%s959 + $0xc] sm:$0xf]
  %v964 = vld [vmem:[%s959 + $0x10] sm:$0xf]
  %v965 = vld [vmem:[%s959 + $0x14] sm:$0xf]
  %v966 = vld [vmem:[%s959 + $0x18] sm:$0xf]
  %v967 = vld [vmem:[%s959 + $0x1c] sm:$0xf]
  %v968 = vld [vmem:[%s959 + $0x20] sm:$0xf]
  %v969 = vld [vmem:[%s959 + $0x24] sm:$0xf]
  %v970 = vld [vmem:[%s959 + $0x28] sm:$0xf]
  %v971 = vld [vmem:[%s959 + $0x2c] sm:$0xf]
  %v972 = vld [vmem:[%s959 + $0x30] sm:$0xf]
  %v973 = vld [vmem:[%s959 + $0x34] sm:$0xf]
  %v974 = vld [vmem:[%s959 + $0x38] sm:$0xf]
  %v975 = vld [vmem:[%s959 + $0x3c] sm:$0xf]
  %vm976 = vsmask.f32 5376
  %v977 = vrot.slane %v177, 2
  %v978 = vrot.slane %v179, 3
  %v979 = vor.u32 %v977, %v978
  %v980 = vrot.slane %v188, 2
  %v981 = vrot.slane %v184, 3
  %v982 = vor.u32 %v980, %v981
  %v983 = vsel %vm976, %v979, %v982
  %v984 = vrot.slane %v196, 2
  %v985 = vrot.slane %v192, 3
  %v986 = vor.u32 %v984, %v985
  %v987 = vsel %vm976, %v982, %v986
  %v988 = vrot.slane %v204, 2
  %v989 = vrot.slane %v200, 3
  %v990 = vor.u32 %v988, %v989
  %v991 = vsel %vm976, %v986, %v990
  %v992 = vrot.slane %v212, 2
  %v993 = vrot.slane %v208, 3
  %v994 = vor.u32 %v992, %v993
  %v995 = vsel %vm976, %v990, %v994
  %v996 = vrot.slane %v220, 2
  %v997 = vrot.slane %v216, 3
  %v998 = vor.u32 %v996, %v997
  %v999 = vsel %vm976, %v994, %v998
  %v1000 = vrot.slane %v228, 2
  %v1001 = vrot.slane %v224, 3
  %v1002 = vor.u32 %v1000, %v1001
  %v1003 = vsel %vm976, %v998, %v1002
  %v1004 = vrot.slane %v236, 2
  %v1005 = vrot.slane %v232, 3
  %v1006 = vor.u32 %v1004, %v1005
  %v1007 = vsel %vm976, %v1002, %v1006
  %v1008 = vshrl.u32 %v157, 16
  %v1010 = vrot.slane %v1008, 2
  %v1011 = vrot.slane %v240, 3
  %v1012 = vor.u32 %v1010, %v1011
  %v1013 = vsel %vm976, %v1006, %v1012
  %v1038 = vunpack.c.l.b16 %v960
  %v1039 = vunpack.c.l.b16 %v961
  %v1040 = vunpack.c.l.b16 %v962
  %v1041 = vunpack.c.l.b16 %v963
  %v1042 = vunpack.c.l.b16 %v964
  %v1043 = vunpack.c.l.b16 %v965
  %v1044 = vunpack.c.l.b16 %v966
  %v1045 = vunpack.c.l.b16 %v967
  %v1046 = vunpack.c.l.b16 %v968
  %v1047 = vunpack.c.l.b16 %v969
  %v1048 = vunpack.c.l.b16 %v970
  %v1049 = vunpack.c.l.b16 %v971
  %v1050 = vunpack.c.l.b16 %v972
  %v1051 = vunpack.c.l.b16 %v973
  %v1052 = vunpack.c.l.b16 %v974
  %v1053 = vunpack.c.l.b16 %v975
  %v1054 = vpack.c.b16 %v1039, %v1038
  %v1055 = vpack.c.b16 %v1041, %v1040
  %v1056 = vpack.c.b16 %v1043, %v1042
  %v1057 = vpack.c.b16 %v1045, %v1044
  %v1058 = vpack.c.b16 %v1047, %v1046
  %v1059 = vpack.c.b16 %v1049, %v1048
  %v1060 = vpack.c.b16 %v1051, %v1050
  %v1061 = vpack.c.b16 %v1053, %v1052
  %1070 = vmatprep.subr.bf16.mxu0 0
  %1071 = vmatpush1.bf16.msra.mxu0 %v1061
  %1072 = vmatprep.subr.bf16.mxu0 0
  %1073 = vmatpush1.bf16.msra.mxu0 %v1060
  %1074 = vmatprep.subr.bf16.mxu0 0
  %1075 = vmatpush1.bf16.msra.mxu0 %v1059
  %1076 = vmatprep.subr.bf16.mxu0 0
  %1077 = vmatpush1.bf16.msra.mxu0 %v1058
  %1078 = vmatprep.subr.bf16.mxu0 0
  %1079 = vmatpush1.bf16.msra.mxu0 %v1057
  %1080 = vmatprep.subr.bf16.mxu0 0
  %1081 = vmatpush1.bf16.msra.mxu0 %v1056
  %1082 = vmatprep.subr.bf16.mxu0 0
  %1083 = vmatpush1.bf16.msra.mxu0 %v1055
  %1084 = vmatprep.subr.bf16.mxu0 0
  %1085 = vmatpush1.bf16.msra.mxu0 %v1054
  %1086 = vmatprep.subr.bf16.mxu0 0
  %1087 = vmatpush2.bf16.msra.mxu0 0
  %1088 = vmatprep.subr.bf16.mxu0 0
  %1089 = vmatpush2.bf16.msra.mxu0 0
  %1090 = vmatprep.subr.bf16.mxu0 0
  %1091 = vmatpush2.bf16.msra.mxu0 0
  %1092 = vmatprep.subr.bf16.mxu0 0
  %1093 = vmatpush2.bf16.msra.mxu0 0
  %1094 = vmatprep.subr.bf16.mxu0 0
  %1095 = vmatpush2.bf16.msra.mxu0 0
  %1096 = vmatprep.subr.bf16.mxu0 0
  %1097 = vmatpush2.bf16.msra.mxu0 0
  %1098 = vmatprep.subr.bf16.mxu0 0
  %1099 = vmatpush2.bf16.msra.mxu0 0
  %1100 = vmatprep.subr.bf16.mxu0 0
  %1101 = vmatpush2.bf16.msra.mxu0 0
  %1102 = vmatprep.mubr.bf16.mxu0 0
  %1103 = vmatmul.mubr.bf16.gmra.mxu0 %v983
  %v1104 = vpop.f32.mrf.mxu0
  %v1105 = vadd.f32 0.0, %v1104
  %v1106 = vpop.f32.mrf.mxu0
  %v1107 = vpop.f32.mrf.mxu0
  %v1108 = vadd.f32 0.0, %v1107
  %v1109 = vpop.f32.mrf.mxu0
  %1110 = vmatprep.mubr.bf16.mxu0 0
  %1111 = vmatmul.mubr.bf16.gmra.mxu0 %v987
  %v1112 = vpop.f32.mrf.mxu0
  %v1113 = vadd.f32 0.0, %v1112
  %v1114 = vpop.f32.mrf.mxu0
  %v1115 = vpop.f32.mrf.mxu0
  %v1116 = vadd.f32 0.0, %v1115
  %v1117 = vpop.f32.mrf.mxu0
  %1118 = vmatprep.mubr.bf16.mxu0 0
  %1119 = vmatmul.mubr.bf16.gmra.mxu0 %v991
  %v1120 = vpop.f32.mrf.mxu0
  %v1121 = vadd.f32 0.0, %v1120
  %v1122 = vpop.f32.mrf.mxu0
  %v1123 = vpop.f32.mrf.mxu0
  %v1124 = vadd.f32 0.0, %v1123
  %v1125 = vpop.f32.mrf.mxu0
  %1126 = vmatprep.mubr.bf16.mxu0 0
  %1127 = vmatmul.mubr.bf16.gmra.mxu0 %v995
  %v1128 = vpop.f32.mrf.mxu0
  %v1129 = vadd.f32 0.0, %v1128
  %v1130 = vpop.f32.mrf.mxu0
  %v1131 = vpop.f32.mrf.mxu0
  %v1132 = vadd.f32 0.0, %v1131
  %v1133 = vpop.f32.mrf.mxu0
  %1134 = vmatprep.mubr.bf16.mxu0 0
  %1135 = vmatmul.mubr.bf16.gmra.mxu0 %v999
  %v1136 = vpop.f32.mrf.mxu0
  %v1137 = vadd.f32 0.0, %v1136
  %v1138 = vpop.f32.mrf.mxu0
  %v1139 = vpop.f32.mrf.mxu0
  %v1140 = vadd.f32 0.0, %v1139
  %v1141 = vpop.f32.mrf.mxu0
  %1142 = vmatprep.mubr.bf16.mxu0 0
  %1143 = vmatmul.mubr.bf16.gmra.mxu0 %v1003
  %v1144 = vpop.f32.mrf.mxu0
  %v1145 = vadd.f32 0.0, %v1144
  %v1146 = vpop.f32.mrf.mxu0
  %v1147 = vpop.f32.mrf.mxu0
  %v1148 = vadd.f32 0.0, %v1147
  %v1149 = vpop.f32.mrf.mxu0
  %1150 = vmatprep.mubr.bf16.mxu0 0
  %1151 = vmatmul.mubr.bf16.gmra.mxu0 %v1007
  %v1152 = vpop.f32.mrf.mxu0
  %v1153 = vadd.f32 0.0, %v1152
  %v1154 = vpop.f32.mrf.mxu0
  %v1155 = vpop.f32.mrf.mxu0
  %v1156 = vadd.f32 0.0, %v1155
  %v1157 = vpop.f32.mrf.mxu0
  %1158 = vmatprep.mubr.bf16.mxu0 0
  %1159 = vmatmul.mubr.bf16.gmra.mxu0 %v1013
  %v1160 = vpop.f32.mrf.mxu0
  %v1161 = vadd.f32 0.0, %v1160
  %v1162 = vpop.f32.mrf.mxu0
  %v1163 = vpop.f32.mrf.mxu0
  %v1164 = vadd.f32 0.0, %v1163
  %v1165 = vpop.f32.mrf.mxu0
  %1166 = vdwg.mxu0
  %v1167 = vadd.f32 %v943, %v1105
  %v1168 = vadd.f32 %v944, %v1108
  %v1169 = vadd.f32 %v945, %v1113
  %v1170 = vadd.f32 %v946, %v1116
  %v1171 = vadd.f32 %v947, %v1121
  %v1172 = vadd.f32 %v948, %v1124
  %v1173 = vadd.f32 %v949, %v1129
  %v1174 = vadd.f32 %v950, %v1132
  %v1175 = vadd.f32 %v951, %v1137
  %v1176 = vadd.f32 %v952, %v1140
  %v1177 = vadd.f32 %v953, %v1145
  %v1178 = vadd.f32 %v954, %v1148
  %v1179 = vadd.f32 %v955, %v1153
  %v1180 = vadd.f32 %v956, %v1156
  %v1181 = vadd.f32 %v957, %v1161
  %v1182 = vadd.f32 %v958, %v1164
  %s1183 = scalar_lea.vmem %s2, 320
  %v1184 = vld [vmem:[%s1183] sm:$0xf]
  %v1185 = vld [vmem:[%s1183 + $0x4] sm:$0xf]
  %v1186 = vld [vmem:[%s1183 + $0x8] sm:$0xf]
  %v1187 = vld [vmem:[%s1183 + $0xc] sm:$0xf]
  %v1188 = vld [vmem:[%s1183 + $0x10] sm:$0xf]
  %v1189 = vld [vmem:[%s1183 + $0x14] sm:$0xf]
  %v1190 = vld [vmem:[%s1183 + $0x18] sm:$0xf]
  %v1191 = vld [vmem:[%s1183 + $0x1c] sm:$0xf]
  %v1192 = vld [vmem:[%s1183 + $0x20] sm:$0xf]
  %v1193 = vld [vmem:[%s1183 + $0x24] sm:$0xf]
  %v1194 = vld [vmem:[%s1183 + $0x28] sm:$0xf]
  %v1195 = vld [vmem:[%s1183 + $0x2c] sm:$0xf]
  %v1196 = vld [vmem:[%s1183 + $0x30] sm:$0xf]
  %v1197 = vld [vmem:[%s1183 + $0x34] sm:$0xf]
  %v1198 = vld [vmem:[%s1183 + $0x38] sm:$0xf]
  %v1199 = vld [vmem:[%s1183 + $0x3c] sm:$0xf]
  %vm1200 = vcmask 1044480
  %v1201 = vrot.slane %v133, 3
  %v1202 = vrot.slane %v134, 3
  %v1203 = vsel %vm1200, %v1201, %v1202
  %v1204 = vrot.slane %v135, 3
  %v1205 = vsel %vm1200, %v1202, %v1204
  %v1206 = vrot.slane %v136, 3
  %v1207 = vsel %vm1200, %v1204, %v1206
  %v1208 = vrot.slane %v137, 3
  %v1209 = vsel %vm1200, %v1206, %v1208
  %v1210 = vrot.slane %v138, 3
  %v1211 = vsel %vm1200, %v1208, %v1210
  %v1212 = vrot.slane %v139, 3
  %v1213 = vsel %vm1200, %v1210, %v1212
  %v1214 = vrot.slane %v140, 3
  %v1215 = vsel %vm1200, %v1212, %v1214
  %v1216 = vrot.slane %v157, 3
  %v1217 = vsel %vm1200, %v1214, %v1216
  %v1242 = vunpack.c.l.b16 %v1184
  %v1243 = vunpack.c.l.b16 %v1185
  %v1244 = vunpack.c.l.b16 %v1186
  %v1245 = vunpack.c.l.b16 %v1187
  %v1246 = vunpack.c.l.b16 %v1188
  %v1247 = vunpack.c.l.b16 %v1189
  %v1248 = vunpack.c.l.b16 %v1190
  %v1249 = vunpack.c.l.b16 %v1191
  %v1250 = vunpack.c.l.b16 %v1192
  %v1251 = vunpack.c.l.b16 %v1193
  %v1252 = vunpack.c.l.b16 %v1194
  %v1253 = vunpack.c.l.b16 %v1195
  %v1254 = vunpack.c.l.b16 %v1196
  %v1255 = vunpack.c.l.b16 %v1197
  %v1256 = vunpack.c.l.b16 %v1198
  %v1257 = vunpack.c.l.b16 %v1199
  %v1258 = vpack.c.b16 %v1243, %v1242
  %v1259 = vpack.c.b16 %v1245, %v1244
  %v1260 = vpack.c.b16 %v1247, %v1246
  %v1261 = vpack.c.b16 %v1249, %v1248
  %v1262 = vpack.c.b16 %v1251, %v1250
  %v1263 = vpack.c.b16 %v1253, %v1252
  %v1264 = vpack.c.b16 %v1255, %v1254
  %v1265 = vpack.c.b16 %v1257, %v1256
  %1274 = vmatprep.subr.bf16.mxu0 0
  %1275 = vmatpush1.bf16.msra.mxu0 %v1265
  %1276 = vmatprep.subr.bf16.mxu0 0
  %1277 = vmatpush1.bf16.msra.mxu0 %v1264
  %1278 = vmatprep.subr.bf16.mxu0 0
  %1279 = vmatpush1.bf16.msra.mxu0 %v1263
  %1280 = vmatprep.subr.bf16.mxu0 0
  %1281 = vmatpush1.bf16.msra.mxu0 %v1262
  %1282 = vmatprep.subr.bf16.mxu0 0
  %1283 = vmatpush1.bf16.msra.mxu0 %v1261
  %1284 = vmatprep.subr.bf16.mxu0 0
  %1285 = vmatpush1.bf16.msra.mxu0 %v1260
  %1286 = vmatprep.subr.bf16.mxu0 0
  %1287 = vmatpush1.bf16.msra.mxu0 %v1259
  %1288 = vmatprep.subr.bf16.mxu0 0
  %1289 = vmatpush1.bf16.msra.mxu0 %v1258
  %1290 = vmatprep.subr.bf16.mxu0 0
  %1291 = vmatpush2.bf16.msra.mxu0 0
  %1292 = vmatprep.subr.bf16.mxu0 0
  %1293 = vmatpush2.bf16.msra.mxu0 0
  %1294 = vmatprep.subr.bf16.mxu0 0
  %1295 = vmatpush2.bf16.msra.mxu0 0
  %1296 = vmatprep.subr.bf16.mxu0 0
  %1297 = vmatpush2.bf16.msra.mxu0 0
  %1298 = vmatprep.subr.bf16.mxu0 0
  %1299 = vmatpush2.bf16.msra.mxu0 0
  %1300 = vmatprep.subr.bf16.mxu0 0
  %1301 = vmatpush2.bf16.msra.mxu0 0
  %1302 = vmatprep.subr.bf16.mxu0 0
  %1303 = vmatpush2.bf16.msra.mxu0 0
  %1304 = vmatprep.subr.bf16.mxu0 0
  %1305 = vmatpush2.bf16.msra.mxu0 0
  %1306 = vmatprep.mubr.bf16.mxu0 0
  %1307 = vmatmul.mubr.bf16.gmra.mxu0 %v1203
  %v1308 = vpop.f32.mrf.mxu0
  %v1309 = vadd.f32 0.0, %v1308
  %v1310 = vpop.f32.mrf.mxu0
  %v1311 = vpop.f32.mrf.mxu0
  %v1312 = vadd.f32 0.0, %v1311
  %v1313 = vpop.f32.mrf.mxu0
  %1314 = vmatprep.mubr.bf16.mxu0 0
  %1315 = vmatmul.mubr.bf16.gmra.mxu0 %v1205
  %v1316 = vpop.f32.mrf.mxu0
  %v1317 = vadd.f32 0.0, %v1316
  %v1318 = vpop.f32.mrf.mxu0
  %v1319 = vpop.f32.mrf.mxu0
  %v1320 = vadd.f32 0.0, %v1319
  %v1321 = vpop.f32.mrf.mxu0
  %1322 = vmatprep.mubr.bf16.mxu0 0
  %1323 = vmatmul.mubr.bf16.gmra.mxu0 %v1207
  %v1324 = vpop.f32.mrf.mxu0
  %v1325 = vadd.f32 0.0, %v1324
  %v1326 = vpop.f32.mrf.mxu0
  %v1327 = vpop.f32.mrf.mxu0
  %v1328 = vadd.f32 0.0, %v1327
  %v1329 = vpop.f32.mrf.mxu0
  %1330 = vmatprep.mubr.bf16.mxu0 0
  %1331 = vmatmul.mubr.bf16.gmra.mxu0 %v1209
  %v1332 = vpop.f32.mrf.mxu0
  %v1333 = vadd.f32 0.0, %v1332
  %v1334 = vpop.f32.mrf.mxu0
  %v1335 = vpop.f32.mrf.mxu0
  %v1336 = vadd.f32 0.0, %v1335
  %v1337 = vpop.f32.mrf.mxu0
  %1338 = vmatprep.mubr.bf16.mxu0 0
  %1339 = vmatmul.mubr.bf16.gmra.mxu0 %v1211
  %v1340 = vpop.f32.mrf.mxu0
  %v1341 = vadd.f32 0.0, %v1340
  %v1342 = vpop.f32.mrf.mxu0
  %v1343 = vpop.f32.mrf.mxu0
  %v1344 = vadd.f32 0.0, %v1343
  %v1345 = vpop.f32.mrf.mxu0
  %1346 = vmatprep.mubr.bf16.mxu0 0
  %1347 = vmatmul.mubr.bf16.gmra.mxu0 %v1213
  %v1348 = vpop.f32.mrf.mxu0
  %v1349 = vadd.f32 0.0, %v1348
  %v1350 = vpop.f32.mrf.mxu0
  %v1351 = vpop.f32.mrf.mxu0
  %v1352 = vadd.f32 0.0, %v1351
  %v1353 = vpop.f32.mrf.mxu0
  %1354 = vmatprep.mubr.bf16.mxu0 0
  %1355 = vmatmul.mubr.bf16.gmra.mxu0 %v1215
  %v1356 = vpop.f32.mrf.mxu0
  %v1357 = vadd.f32 0.0, %v1356
  %v1358 = vpop.f32.mrf.mxu0
  %v1359 = vpop.f32.mrf.mxu0
  %v1360 = vadd.f32 0.0, %v1359
  %v1361 = vpop.f32.mrf.mxu0
  %1362 = vmatprep.mubr.bf16.mxu0 0
  %1363 = vmatmul.mubr.bf16.gmra.mxu0 %v1217
  %v1364 = vpop.f32.mrf.mxu0
  %v1365 = vadd.f32 0.0, %v1364
  %v1366 = vpop.f32.mrf.mxu0
  %v1367 = vpop.f32.mrf.mxu0
  %v1368 = vadd.f32 0.0, %v1367
  %v1369 = vpop.f32.mrf.mxu0
  %1370 = vdwg.mxu0
  %v1371 = vadd.f32 %v1167, %v1309
  %v1372 = vadd.f32 %v1168, %v1312
  %v1373 = vadd.f32 %v1169, %v1317
  %v1374 = vadd.f32 %v1170, %v1320
  %v1375 = vadd.f32 %v1171, %v1325
  %v1376 = vadd.f32 %v1172, %v1328
  %v1377 = vadd.f32 %v1173, %v1333
  %v1378 = vadd.f32 %v1174, %v1336
  %v1379 = vadd.f32 %v1175, %v1341
  %v1380 = vadd.f32 %v1176, %v1344
  %v1381 = vadd.f32 %v1177, %v1349
  %v1382 = vadd.f32 %v1178, %v1352
  %v1383 = vadd.f32 %v1179, %v1357
  %v1384 = vadd.f32 %v1180, %v1360
  %v1385 = vadd.f32 %v1181, %v1365
  %v1386 = vadd.f32 %v1182, %v1368
  %v1387 = vpack.c.bf16 %v117, %v116
  %v1388 = vpack.c.bf16 %v119, %v118
  %v1389 = vpack.c.bf16 %v121, %v120
  %v1390 = vpack.c.bf16 %v123, %v122
  %v1391 = vpack.c.bf16 %v125, %v124
  %v1392 = vpack.c.bf16 %v127, %v126
  %v1393 = vpack.c.bf16 %v129, %v128
  %v1394 = vpack.c.bf16 %v131, %v130
  %s1395 = scalar_lea.vmem %s2, 384
  %v1396 = vld [vmem:[%s1395] sm:$0xf]
  %v1397 = vld [vmem:[%s1395 + $0x4] sm:$0xf]
  %v1398 = vld [vmem:[%s1395 + $0x8] sm:$0xf]
  %v1399 = vld [vmem:[%s1395 + $0xc] sm:$0xf]
  %v1400 = vld [vmem:[%s1395 + $0x10] sm:$0xf]
  %v1401 = vld [vmem:[%s1395 + $0x14] sm:$0xf]
  %v1402 = vld [vmem:[%s1395 + $0x18] sm:$0xf]
  %v1403 = vld [vmem:[%s1395 + $0x1c] sm:$0xf]
  %v1404 = vld [vmem:[%s1395 + $0x20] sm:$0xf]
  %v1405 = vld [vmem:[%s1395 + $0x24] sm:$0xf]
  %v1406 = vld [vmem:[%s1395 + $0x28] sm:$0xf]
  %v1407 = vld [vmem:[%s1395 + $0x2c] sm:$0xf]
  %v1408 = vld [vmem:[%s1395 + $0x30] sm:$0xf]
  %v1409 = vld [vmem:[%s1395 + $0x34] sm:$0xf]
  %v1410 = vld [vmem:[%s1395 + $0x38] sm:$0xf]
  %v1411 = vld [vmem:[%s1395 + $0x3c] sm:$0xf]
  %v1428 = vunpack.c.l.b16 %v1396
  %v1429 = vunpack.c.l.b16 %v1397
  %v1430 = vunpack.c.l.b16 %v1398
  %v1431 = vunpack.c.l.b16 %v1399
  %v1432 = vunpack.c.l.b16 %v1400
  %v1433 = vunpack.c.l.b16 %v1401
  %v1434 = vunpack.c.l.b16 %v1402
  %v1435 = vunpack.c.l.b16 %v1403
  %v1436 = vunpack.c.l.b16 %v1404
  %v1437 = vunpack.c.l.b16 %v1405
  %v1438 = vunpack.c.l.b16 %v1406
  %v1439 = vunpack.c.l.b16 %v1407
  %v1440 = vunpack.c.l.b16 %v1408
  %v1441 = vunpack.c.l.b16 %v1409
  %v1442 = vunpack.c.l.b16 %v1410
  %v1443 = vunpack.c.l.b16 %v1411
  %v1444 = vpack.c.b16 %v1429, %v1428
  %v1445 = vpack.c.b16 %v1431, %v1430
  %v1446 = vpack.c.b16 %v1433, %v1432
  %v1447 = vpack.c.b16 %v1435, %v1434
  %v1448 = vpack.c.b16 %v1437, %v1436
  %v1449 = vpack.c.b16 %v1439, %v1438
  %v1450 = vpack.c.b16 %v1441, %v1440
  %v1451 = vpack.c.b16 %v1443, %v1442
  %1460 = vmatprep.subr.bf16.mxu0 0
  %1461 = vmatpush1.bf16.msra.mxu0 %v1451
  %1462 = vmatprep.subr.bf16.mxu0 0
  %1463 = vmatpush1.bf16.msra.mxu0 %v1450
  %1464 = vmatprep.subr.bf16.mxu0 0
  %1465 = vmatpush1.bf16.msra.mxu0 %v1449
  %1466 = vmatprep.subr.bf16.mxu0 0
  %1467 = vmatpush1.bf16.msra.mxu0 %v1448
  %1468 = vmatprep.subr.bf16.mxu0 0
  %1469 = vmatpush1.bf16.msra.mxu0 %v1447
  %1470 = vmatprep.subr.bf16.mxu0 0
  %1471 = vmatpush1.bf16.msra.mxu0 %v1446
  %1472 = vmatprep.subr.bf16.mxu0 0
  %1473 = vmatpush1.bf16.msra.mxu0 %v1445
  %1474 = vmatprep.subr.bf16.mxu0 0
  %1475 = vmatpush1.bf16.msra.mxu0 %v1444
  %1476 = vmatprep.subr.bf16.mxu0 0
  %1477 = vmatpush2.bf16.msra.mxu0 0
  %1478 = vmatprep.subr.bf16.mxu0 0
  %1479 = vmatpush2.bf16.msra.mxu0 0
  %1480 = vmatprep.subr.bf16.mxu0 0
  %1481 = vmatpush2.bf16.msra.mxu0 0
  %1482 = vmatprep.subr.bf16.mxu0 0
  %1483 = vmatpush2.bf16.msra.mxu0 0
  %1484 = vmatprep.subr.bf16.mxu0 0
  %1485 = vmatpush2.bf16.msra.mxu0 0
  %1486 = vmatprep.subr.bf16.mxu0 0
  %1487 = vmatpush2.bf16.msra.mxu0 0
  %1488 = vmatprep.subr.bf16.mxu0 0
  %1489 = vmatpush2.bf16.msra.mxu0 0
  %1490 = vmatprep.subr.bf16.mxu0 0
  %1491 = vmatpush2.bf16.msra.mxu0 0
  %1492 = vmatprep.mubr.bf16.mxu0 0
  %1493 = vmatmul.mubr.bf16.gmra.mxu0 %v1387
  %v1494 = vpop.f32.mrf.mxu0
  %v1495 = vadd.f32 0.0, %v1494
  %v1496 = vpop.f32.mrf.mxu0
  %v1497 = vpop.f32.mrf.mxu0
  %v1498 = vadd.f32 0.0, %v1497
  %v1499 = vpop.f32.mrf.mxu0
  %1500 = vmatprep.mubr.bf16.mxu0 0
  %1501 = vmatmul.mubr.bf16.gmra.mxu0 %v1388
  %v1502 = vpop.f32.mrf.mxu0
  %v1503 = vadd.f32 0.0, %v1502
  %v1504 = vpop.f32.mrf.mxu0
  %v1505 = vpop.f32.mrf.mxu0
  %v1506 = vadd.f32 0.0, %v1505
  %v1507 = vpop.f32.mrf.mxu0
  %1508 = vmatprep.mubr.bf16.mxu0 0
  %1509 = vmatmul.mubr.bf16.gmra.mxu0 %v1389
  %v1510 = vpop.f32.mrf.mxu0
  %v1511 = vadd.f32 0.0, %v1510
  %v1512 = vpop.f32.mrf.mxu0
  %v1513 = vpop.f32.mrf.mxu0
  %v1514 = vadd.f32 0.0, %v1513
  %v1515 = vpop.f32.mrf.mxu0
  %1516 = vmatprep.mubr.bf16.mxu0 0
  %1517 = vmatmul.mubr.bf16.gmra.mxu0 %v1390
  %v1518 = vpop.f32.mrf.mxu0
  %v1519 = vadd.f32 0.0, %v1518
  %v1520 = vpop.f32.mrf.mxu0
  %v1521 = vpop.f32.mrf.mxu0
  %v1522 = vadd.f32 0.0, %v1521
  %v1523 = vpop.f32.mrf.mxu0
  %1524 = vmatprep.mubr.bf16.mxu0 0
  %1525 = vmatmul.mubr.bf16.gmra.mxu0 %v1391
  %v1526 = vpop.f32.mrf.mxu0
  %v1527 = vadd.f32 0.0, %v1526
  %v1528 = vpop.f32.mrf.mxu0
  %v1529 = vpop.f32.mrf.mxu0
  %v1530 = vadd.f32 0.0, %v1529
  %v1531 = vpop.f32.mrf.mxu0
  %1532 = vmatprep.mubr.bf16.mxu0 0
  %1533 = vmatmul.mubr.bf16.gmra.mxu0 %v1392
  %v1534 = vpop.f32.mrf.mxu0
  %v1535 = vadd.f32 0.0, %v1534
  %v1536 = vpop.f32.mrf.mxu0
  %v1537 = vpop.f32.mrf.mxu0
  %v1538 = vadd.f32 0.0, %v1537
  %v1539 = vpop.f32.mrf.mxu0
  %1540 = vmatprep.mubr.bf16.mxu0 0
  %1541 = vmatmul.mubr.bf16.gmra.mxu0 %v1393
  %v1542 = vpop.f32.mrf.mxu0
  %v1543 = vadd.f32 0.0, %v1542
  %v1544 = vpop.f32.mrf.mxu0
  %v1545 = vpop.f32.mrf.mxu0
  %v1546 = vadd.f32 0.0, %v1545
  %v1547 = vpop.f32.mrf.mxu0
  %1548 = vmatprep.mubr.bf16.mxu0 0
  %1549 = vmatmul.mubr.bf16.gmra.mxu0 %v1394
  %v1550 = vpop.f32.mrf.mxu0
  %v1551 = vadd.f32 0.0, %v1550
  %v1552 = vpop.f32.mrf.mxu0
  %v1553 = vpop.f32.mrf.mxu0
  %v1554 = vadd.f32 0.0, %v1553
  %v1555 = vpop.f32.mrf.mxu0
  %1556 = vdwg.mxu0
  %v1557 = vadd.f32 %v1371, %v1495
  %v1558 = vadd.f32 %v1372, %v1498
  %v1559 = vadd.f32 %v1373, %v1503
  %v1560 = vadd.f32 %v1374, %v1506
  %v1561 = vadd.f32 %v1375, %v1511
  %v1562 = vadd.f32 %v1376, %v1514
  %v1563 = vadd.f32 %v1377, %v1519
  %v1564 = vadd.f32 %v1378, %v1522
  %v1565 = vadd.f32 %v1379, %v1527
  %v1566 = vadd.f32 %v1380, %v1530
  %v1567 = vadd.f32 %v1381, %v1535
  %v1568 = vadd.f32 %v1382, %v1538
  %v1569 = vadd.f32 %v1383, %v1543
  %v1570 = vadd.f32 %v1384, %v1546
  %v1571 = vadd.f32 %v1385, %v1551
  %v1572 = vadd.f32 %v1386, %v1554
  %v1573 = vpack.c.bf16 %v132, %v132
  %s1574 = scalar_lea.vmem %s2, 448
  %v1575 = vld [vmem:[%s1574] sm:$0xf]
  %v1576 = vld [vmem:[%s1574 + $0x4] sm:$0xf]
  %v1577 = vld [vmem:[%s1574 + $0x8] sm:$0xf]
  %v1578 = vld [vmem:[%s1574 + $0xc] sm:$0xf]
  %v1579 = vld [vmem:[%s1574 + $0x10] sm:$0xf]
  %v1580 = vld [vmem:[%s1574 + $0x14] sm:$0xf]
  %v1581 = vld [vmem:[%s1574 + $0x18] sm:$0xf]
  %v1582 = vld [vmem:[%s1574 + $0x1c] sm:$0xf]
  %v1583 = vld [vmem:[%s1574 + $0x20] sm:$0xf]
  %v1584 = vld [vmem:[%s1574 + $0x24] sm:$0xf]
  %v1585 = vld [vmem:[%s1574 + $0x28] sm:$0xf]
  %v1586 = vld [vmem:[%s1574 + $0x2c] sm:$0xf]
  %v1587 = vld [vmem:[%s1574 + $0x30] sm:$0xf]
  %v1588 = vld [vmem:[%s1574 + $0x34] sm:$0xf]
  %v1589 = vld [vmem:[%s1574 + $0x38] sm:$0xf]
  %v1590 = vld [vmem:[%s1574 + $0x3c] sm:$0xf]
  %v1592 = vshrl.u32 %v1387, 16
  %v1594 = vshll.u32 %v1387, 16
  %v1596 = vrot.slane %v1594, 1
  %v1597 = vor.u32 %v1592, %v1596
  %v1599 = vshll.u32 %v1388, 16
  %v1601 = vrot.slane %v1599, 1
  %v1602 = vsel %vm175, %v1597, %v1601
  %v1603 = vshrl.u32 %v1388, 16
  %v1605 = vor.u32 %v1603, %v1601
  %v1607 = vshll.u32 %v1389, 16
  %v1609 = vrot.slane %v1607, 1
  %v1610 = vsel %vm175, %v1605, %v1609
  %v1611 = vshrl.u32 %v1389, 16
  %v1613 = vor.u32 %v1611, %v1609
  %v1615 = vshll.u32 %v1390, 16
  %v1617 = vrot.slane %v1615, 1
  %v1618 = vsel %vm175, %v1613, %v1617
  %v1619 = vshrl.u32 %v1390, 16
  %v1621 = vor.u32 %v1619, %v1617
  %v1623 = vshll.u32 %v1391, 16
  %v1625 = vrot.slane %v1623, 1
  %v1626 = vsel %vm175, %v1621, %v1625
  %v1627 = vshrl.u32 %v1391, 16
  %v1629 = vor.u32 %v1627, %v1625
  %v1631 = vshll.u32 %v1392, 16
  %v1633 = vrot.slane %v1631, 1
  %v1634 = vsel %vm175, %v1629, %v1633
  %v1635 = vshrl.u32 %v1392, 16
  %v1637 = vor.u32 %v1635, %v1633
  %v1639 = vshll.u32 %v1393, 16
  %v1641 = vrot.slane %v1639, 1
  %v1642 = vsel %vm175, %v1637, %v1641
  %v1643 = vshrl.u32 %v1393, 16
  %v1645 = vor.u32 %v1643, %v1641
  %v1647 = vshll.u32 %v1394, 16
  %v1649 = vrot.slane %v1647, 1
  %v1650 = vsel %vm175, %v1645, %v1649
  %v1651 = vshrl.u32 %v1394, 16
  %v1653 = vor.u32 %v1651, %v1649
  %v1655 = vshll.u32 %v1573, 16
  %v1657 = vrot.slane %v1655, 1
  %v1658 = vsel %vm175, %v1653, %v1657
  %v1683 = vunpack.c.l.b16 %v1575
  %v1684 = vunpack.c.l.b16 %v1576
  %v1685 = vunpack.c.l.b16 %v1577
  %v1686 = vunpack.c.l.b16 %v1578
  %v1687 = vunpack.c.l.b16 %v1579
  %v1688 = vunpack.c.l.b16 %v1580
  %v1689 = vunpack.c.l.b16 %v1581
  %v1690 = vunpack.c.l.b16 %v1582
  %v1691 = vunpack.c.l.b16 %v1583
  %v1692 = vunpack.c.l.b16 %v1584
  %v1693 = vunpack.c.l.b16 %v1585
  %v1694 = vunpack.c.l.b16 %v1586
  %v1695 = vunpack.c.l.b16 %v1587
  %v1696 = vunpack.c.l.b16 %v1588
  %v1697 = vunpack.c.l.b16 %v1589
  %v1698 = vunpack.c.l.b16 %v1590
  %v1699 = vpack.c.b16 %v1684, %v1683
  %v1700 = vpack.c.b16 %v1686, %v1685
  %v1701 = vpack.c.b16 %v1688, %v1687
  %v1702 = vpack.c.b16 %v1690, %v1689
  %v1703 = vpack.c.b16 %v1692, %v1691
  %v1704 = vpack.c.b16 %v1694, %v1693
  %v1705 = vpack.c.b16 %v1696, %v1695
  %v1706 = vpack.c.b16 %v1698, %v1697
  %1715 = vmatprep.subr.bf16.mxu0 0
  %1716 = vmatpush1.bf16.msra.mxu0 %v1706
  %1717 = vmatprep.subr.bf16.mxu0 0
  %1718 = vmatpush1.bf16.msra.mxu0 %v1705
  %1719 = vmatprep.subr.bf16.mxu0 0
  %1720 = vmatpush1.bf16.msra.mxu0 %v1704
  %1721 = vmatprep.subr.bf16.mxu0 0
  %1722 = vmatpush1.bf16.msra.mxu0 %v1703
  %1723 = vmatprep.subr.bf16.mxu0 0
  %1724 = vmatpush1.bf16.msra.mxu0 %v1702
  %1725 = vmatprep.subr.bf16.mxu0 0
  %1726 = vmatpush1.bf16.msra.mxu0 %v1701
  %1727 = vmatprep.subr.bf16.mxu0 0
  %1728 = vmatpush1.bf16.msra.mxu0 %v1700
  %1729 = vmatprep.subr.bf16.mxu0 0
  %1730 = vmatpush1.bf16.msra.mxu0 %v1699
  %1731 = vmatprep.subr.bf16.mxu0 0
  %1732 = vmatpush2.bf16.msra.mxu0 0
  %1733 = vmatprep.subr.bf16.mxu0 0
  %1734 = vmatpush2.bf16.msra.mxu0 0
  %1735 = vmatprep.subr.bf16.mxu0 0
  %1736 = vmatpush2.bf16.msra.mxu0 0
  %1737 = vmatprep.subr.bf16.mxu0 0
  %1738 = vmatpush2.bf16.msra.mxu0 0
  %1739 = vmatprep.subr.bf16.mxu0 0
  %1740 = vmatpush2.bf16.msra.mxu0 0
  %1741 = vmatprep.subr.bf16.mxu0 0
  %1742 = vmatpush2.bf16.msra.mxu0 0
  %1743 = vmatprep.subr.bf16.mxu0 0
  %1744 = vmatpush2.bf16.msra.mxu0 0
  %1745 = vmatprep.subr.bf16.mxu0 0
  %1746 = vmatpush2.bf16.msra.mxu0 0
  %1747 = vmatprep.mubr.bf16.mxu0 0
  %1748 = vmatmul.mubr.bf16.gmra.mxu0 %v1602
  %v1749 = vpop.f32.mrf.mxu0
  %v1750 = vadd.f32 0.0, %v1749
  %v1751 = vpop.f32.mrf.mxu0
  %v1752 = vpop.f32.mrf.mxu0
  %v1753 = vadd.f32 0.0, %v1752
  %v1754 = vpop.f32.mrf.mxu0
  %1755 = vmatprep.mubr.bf16.mxu0 0
  %1756 = vmatmul.mubr.bf16.gmra.mxu0 %v1610
  %v1757 = vpop.f32.mrf.mxu0
  %v1758 = vadd.f32 0.0, %v1757
  %v1759 = vpop.f32.mrf.mxu0
  %v1760 = vpop.f32.mrf.mxu0
  %v1761 = vadd.f32 0.0, %v1760
  %v1762 = vpop.f32.mrf.mxu0
  %1763 = vmatprep.mubr.bf16.mxu0 0
  %1764 = vmatmul.mubr.bf16.gmra.mxu0 %v1618
  %v1765 = vpop.f32.mrf.mxu0
  %v1766 = vadd.f32 0.0, %v1765
  %v1767 = vpop.f32.mrf.mxu0
  %v1768 = vpop.f32.mrf.mxu0
  %v1769 = vadd.f32 0.0, %v1768
  %v1770 = vpop.f32.mrf.mxu0
  %1771 = vmatprep.mubr.bf16.mxu0 0
  %1772 = vmatmul.mubr.bf16.gmra.mxu0 %v1626
  %v1773 = vpop.f32.mrf.mxu0
  %v1774 = vadd.f32 0.0, %v1773
  %v1775 = vpop.f32.mrf.mxu0
  %v1776 = vpop.f32.mrf.mxu0
  %v1777 = vadd.f32 0.0, %v1776
  %v1778 = vpop.f32.mrf.mxu0
  %1779 = vmatprep.mubr.bf16.mxu0 0
  %1780 = vmatmul.mubr.bf16.gmra.mxu0 %v1634
  %v1781 = vpop.f32.mrf.mxu0
  %v1782 = vadd.f32 0.0, %v1781
  %v1783 = vpop.f32.mrf.mxu0
  %v1784 = vpop.f32.mrf.mxu0
  %v1785 = vadd.f32 0.0, %v1784
  %v1786 = vpop.f32.mrf.mxu0
  %1787 = vmatprep.mubr.bf16.mxu0 0
  %1788 = vmatmul.mubr.bf16.gmra.mxu0 %v1642
  %v1789 = vpop.f32.mrf.mxu0
  %v1790 = vadd.f32 0.0, %v1789
  %v1791 = vpop.f32.mrf.mxu0
  %v1792 = vpop.f32.mrf.mxu0
  %v1793 = vadd.f32 0.0, %v1792
  %v1794 = vpop.f32.mrf.mxu0
  %1795 = vmatprep.mubr.bf16.mxu0 0
  %1796 = vmatmul.mubr.bf16.gmra.mxu0 %v1650
  %v1797 = vpop.f32.mrf.mxu0
  %v1798 = vadd.f32 0.0, %v1797
  %v1799 = vpop.f32.mrf.mxu0
  %v1800 = vpop.f32.mrf.mxu0
  %v1801 = vadd.f32 0.0, %v1800
  %v1802 = vpop.f32.mrf.mxu0
  %1803 = vmatprep.mubr.bf16.mxu0 0
  %1804 = vmatmul.mubr.bf16.gmra.mxu0 %v1658
  %v1805 = vpop.f32.mrf.mxu0
  %v1806 = vadd.f32 0.0, %v1805
  %v1807 = vpop.f32.mrf.mxu0
  %v1808 = vpop.f32.mrf.mxu0
  %v1809 = vadd.f32 0.0, %v1808
  %v1810 = vpop.f32.mrf.mxu0
  %1811 = vdwg.mxu0
  %v1812 = vadd.f32 %v1557, %v1750
  %v1813 = vadd.f32 %v1558, %v1753
  %v1814 = vadd.f32 %v1559, %v1758
  %v1815 = vadd.f32 %v1560, %v1761
  %v1816 = vadd.f32 %v1561, %v1766
  %v1817 = vadd.f32 %v1562, %v1769
  %v1818 = vadd.f32 %v1563, %v1774
  %v1819 = vadd.f32 %v1564, %v1777
  %v1820 = vadd.f32 %v1565, %v1782
  %v1821 = vadd.f32 %v1566, %v1785
  %v1822 = vadd.f32 %v1567, %v1790
  %v1823 = vadd.f32 %v1568, %v1793
  %v1824 = vadd.f32 %v1569, %v1798
  %v1825 = vadd.f32 %v1570, %v1801
  %v1826 = vadd.f32 %v1571, %v1806
  %v1827 = vadd.f32 %v1572, %v1809
  %s1828 = scalar_lea.vmem %s2, 512
  %v1829 = vld [vmem:[%s1828] sm:$0xf]
  %v1830 = vld [vmem:[%s1828 + $0x4] sm:$0xf]
  %v1831 = vld [vmem:[%s1828 + $0x8] sm:$0xf]
  %v1832 = vld [vmem:[%s1828 + $0xc] sm:$0xf]
  %v1833 = vld [vmem:[%s1828 + $0x10] sm:$0xf]
  %v1834 = vld [vmem:[%s1828 + $0x14] sm:$0xf]
  %v1835 = vld [vmem:[%s1828 + $0x18] sm:$0xf]
  %v1836 = vld [vmem:[%s1828 + $0x1c] sm:$0xf]
  %v1837 = vld [vmem:[%s1828 + $0x20] sm:$0xf]
  %v1838 = vld [vmem:[%s1828 + $0x24] sm:$0xf]
  %v1839 = vld [vmem:[%s1828 + $0x28] sm:$0xf]
  %v1840 = vld [vmem:[%s1828 + $0x2c] sm:$0xf]
  %v1841 = vld [vmem:[%s1828 + $0x30] sm:$0xf]
  %v1842 = vld [vmem:[%s1828 + $0x34] sm:$0xf]
  %v1843 = vld [vmem:[%s1828 + $0x38] sm:$0xf]
  %v1844 = vld [vmem:[%s1828 + $0x3c] sm:$0xf]
  %v1854 = vrot.slane %v1387, 1
  %v1855 = vrot.slane %v1388, 1
  %v1856 = vsel %vm568, %v1854, %v1855
  %v1857 = vrot.slane %v1389, 1
  %v1858 = vsel %vm568, %v1855, %v1857
  %v1859 = vrot.slane %v1390, 1
  %v1860 = vsel %vm568, %v1857, %v1859
  %v1861 = vrot.slane %v1391, 1
  %v1862 = vsel %vm568, %v1859, %v1861
  %v1863 = vrot.slane %v1392, 1
  %v1864 = vsel %vm568, %v1861, %v1863
  %v1865 = vrot.slane %v1393, 1
  %v1866 = vsel %vm568, %v1863, %v1865
  %v1867 = vrot.slane %v1394, 1
  %v1868 = vsel %vm568, %v1865, %v1867
  %v1869 = vrot.slane %v1573, 1
  %v1870 = vsel %vm568, %v1867, %v1869
  %v1895 = vunpack.c.l.b16 %v1829
  %v1896 = vunpack.c.l.b16 %v1830
  %v1897 = vunpack.c.l.b16 %v1831
  %v1898 = vunpack.c.l.b16 %v1832
  %v1899 = vunpack.c.l.b16 %v1833
  %v1900 = vunpack.c.l.b16 %v1834
  %v1901 = vunpack.c.l.b16 %v1835
  %v1902 = vunpack.c.l.b16 %v1836
  %v1903 = vunpack.c.l.b16 %v1837
  %v1904 = vunpack.c.l.b16 %v1838
  %v1905 = vunpack.c.l.b16 %v1839
  %v1906 = vunpack.c.l.b16 %v1840
  %v1907 = vunpack.c.l.b16 %v1841
  %v1908 = vunpack.c.l.b16 %v1842
  %v1909 = vunpack.c.l.b16 %v1843
  %v1910 = vunpack.c.l.b16 %v1844
  %v1911 = vpack.c.b16 %v1896, %v1895
  %v1912 = vpack.c.b16 %v1898, %v1897
  %v1913 = vpack.c.b16 %v1900, %v1899
  %v1914 = vpack.c.b16 %v1902, %v1901
  %v1915 = vpack.c.b16 %v1904, %v1903
  %v1916 = vpack.c.b16 %v1906, %v1905
  %v1917 = vpack.c.b16 %v1908, %v1907
  %v1918 = vpack.c.b16 %v1910, %v1909
  %1927 = vmatprep.subr.bf16.mxu0 0
  %1928 = vmatpush1.bf16.msra.mxu0 %v1918
  %1929 = vmatprep.subr.bf16.mxu0 0
  %1930 = vmatpush1.bf16.msra.mxu0 %v1917
  %1931 = vmatprep.subr.bf16.mxu0 0
  %1932 = vmatpush1.bf16.msra.mxu0 %v1916
  %1933 = vmatprep.subr.bf16.mxu0 0
  %1934 = vmatpush1.bf16.msra.mxu0 %v1915
  %1935 = vmatprep.subr.bf16.mxu0 0
  %1936 = vmatpush1.bf16.msra.mxu0 %v1914
  %1937 = vmatprep.subr.bf16.mxu0 0
  %1938 = vmatpush1.bf16.msra.mxu0 %v1913
  %1939 = vmatprep.subr.bf16.mxu0 0
  %1940 = vmatpush1.bf16.msra.mxu0 %v1912
  %1941 = vmatprep.subr.bf16.mxu0 0
  %1942 = vmatpush1.bf16.msra.mxu0 %v1911
  %1943 = vmatprep.subr.bf16.mxu0 0
  %1944 = vmatpush2.bf16.msra.mxu0 0
  %1945 = vmatprep.subr.bf16.mxu0 0
  %1946 = vmatpush2.bf16.msra.mxu0 0
  %1947 = vmatprep.subr.bf16.mxu0 0
  %1948 = vmatpush2.bf16.msra.mxu0 0
  %1949 = vmatprep.subr.bf16.mxu0 0
  %1950 = vmatpush2.bf16.msra.mxu0 0
  %1951 = vmatprep.subr.bf16.mxu0 0
  %1952 = vmatpush2.bf16.msra.mxu0 0
  %1953 = vmatprep.subr.bf16.mxu0 0
  %1954 = vmatpush2.bf16.msra.mxu0 0
  %1955 = vmatprep.subr.bf16.mxu0 0
  %1956 = vmatpush2.bf16.msra.mxu0 0
  %1957 = vmatprep.subr.bf16.mxu0 0
  %1958 = vmatpush2.bf16.msra.mxu0 0
  %1959 = vmatprep.mubr.bf16.mxu0 0
  %1960 = vmatmul.mubr.bf16.gmra.mxu0 %v1856
  %v1961 = vpop.f32.mrf.mxu0
  %v1962 = vadd.f32 0.0, %v1961
  %v1963 = vpop.f32.mrf.mxu0
  %v1964 = vpop.f32.mrf.mxu0
  %v1965 = vadd.f32 0.0, %v1964
  %v1966 = vpop.f32.mrf.mxu0
  %1967 = vmatprep.mubr.bf16.mxu0 0
  %1968 = vmatmul.mubr.bf16.gmra.mxu0 %v1858
  %v1969 = vpop.f32.mrf.mxu0
  %v1970 = vadd.f32 0.0, %v1969
  %v1971 = vpop.f32.mrf.mxu0
  %v1972 = vpop.f32.mrf.mxu0
  %v1973 = vadd.f32 0.0, %v1972
  %v1974 = vpop.f32.mrf.mxu0
  %1975 = vmatprep.mubr.bf16.mxu0 0
  %1976 = vmatmul.mubr.bf16.gmra.mxu0 %v1860
  %v1977 = vpop.f32.mrf.mxu0
  %v1978 = vadd.f32 0.0, %v1977
  %v1979 = vpop.f32.mrf.mxu0
  %v1980 = vpop.f32.mrf.mxu0
  %v1981 = vadd.f32 0.0, %v1980
  %v1982 = vpop.f32.mrf.mxu0
  %1983 = vmatprep.mubr.bf16.mxu0 0
  %1984 = vmatmul.mubr.bf16.gmra.mxu0 %v1862
  %v1985 = vpop.f32.mrf.mxu0
  %v1986 = vadd.f32 0.0, %v1985
  %v1987 = vpop.f32.mrf.mxu0
  %v1988 = vpop.f32.mrf.mxu0
  %v1989 = vadd.f32 0.0, %v1988
  %v1990 = vpop.f32.mrf.mxu0
  %1991 = vmatprep.mubr.bf16.mxu0 0
  %1992 = vmatmul.mubr.bf16.gmra.mxu0 %v1864
  %v1993 = vpop.f32.mrf.mxu0
  %v1994 = vadd.f32 0.0, %v1993
  %v1995 = vpop.f32.mrf.mxu0
  %v1996 = vpop.f32.mrf.mxu0
  %v1997 = vadd.f32 0.0, %v1996
  %v1998 = vpop.f32.mrf.mxu0
  %1999 = vmatprep.mubr.bf16.mxu0 0
  %2000 = vmatmul.mubr.bf16.gmra.mxu0 %v1866
  %v2001 = vpop.f32.mrf.mxu0
  %v2002 = vadd.f32 0.0, %v2001
  %v2003 = vpop.f32.mrf.mxu0
  %v2004 = vpop.f32.mrf.mxu0
  %v2005 = vadd.f32 0.0, %v2004
  %v2006 = vpop.f32.mrf.mxu0
  %2007 = vmatprep.mubr.bf16.mxu0 0
  %2008 = vmatmul.mubr.bf16.gmra.mxu0 %v1868
  %v2009 = vpop.f32.mrf.mxu0
  %v2010 = vadd.f32 0.0, %v2009
  %v2011 = vpop.f32.mrf.mxu0
  %v2012 = vpop.f32.mrf.mxu0
  %v2013 = vadd.f32 0.0, %v2012
  %v2014 = vpop.f32.mrf.mxu0
  %2015 = vmatprep.mubr.bf16.mxu0 0
  %2016 = vmatmul.mubr.bf16.gmra.mxu0 %v1870
  %v2017 = vpop.f32.mrf.mxu0
  %v2018 = vadd.f32 0.0, %v2017
  %v2019 = vpop.f32.mrf.mxu0
  %v2020 = vpop.f32.mrf.mxu0
  %v2021 = vadd.f32 0.0, %v2020
  %v2022 = vpop.f32.mrf.mxu0
  %2023 = vdwg.mxu0
  %v2024 = vadd.f32 %v1812, %v1962
  %v2025 = vadd.f32 %v1813, %v1965
  %v2026 = vadd.f32 %v1814, %v1970
  %v2027 = vadd.f32 %v1815, %v1973
  %v2028 = vadd.f32 %v1816, %v1978
  %v2029 = vadd.f32 %v1817, %v1981
  %v2030 = vadd.f32 %v1818, %v1986
  %v2031 = vadd.f32 %v1819, %v1989
  %v2032 = vadd.f32 %v1820, %v1994
  %v2033 = vadd.f32 %v1821, %v1997
  %v2034 = vadd.f32 %v1822, %v2002
  %v2035 = vadd.f32 %v1823, %v2005
  %v2036 = vadd.f32 %v1824, %v2010
  %v2037 = vadd.f32 %v1825, %v2013
  %v2038 = vadd.f32 %v1826, %v2018
  %v2039 = vadd.f32 %v1827, %v2021
  %v2040 = vld [vmem:[%s3] sm:$0x1]
  %v2042 = vlaneseq
  %v2043 = vshrl.u32 %v2042, 7
  %v2044 = vsub.s32 0, %v2043
  %v2045 = vrot.slane %v2040, %v2044
  %v2047 = vmul.f32 %v2024, %v2045
  %v2048 = vmul.f32 %v2025, %v2045
  %v2049 = vmul.f32 %v2026, %v2045
  %v2050 = vmul.f32 %v2027, %v2045
  %v2051 = vmul.f32 %v2028, %v2045
  %v2052 = vmul.f32 %v2029, %v2045
  %v2053 = vmul.f32 %v2030, %v2045
  %v2054 = vmul.f32 %v2031, %v2045
  %v2055 = vmul.f32 %v2032, %v2045
  %v2056 = vmul.f32 %v2033, %v2045
  %v2057 = vmul.f32 %v2034, %v2045
  %v2058 = vmul.f32 %v2035, %v2045
  %v2059 = vmul.f32 %v2036, %v2045
  %v2060 = vmul.f32 %v2037, %v2045
  %v2061 = vmul.f32 %v2038, %v2045
  %v2062 = vmul.f32 %v2039, %v2045
  %v2063 = vld [vmem:[%s4] sm:$0x1]
  %v2065 = vlaneseq
  %v2066 = vshrl.u32 %v2065, 7
  %v2067 = vsub.s32 0, %v2066
  %v2068 = vrot.slane %v2063, %v2067
  %v2070 = vadd.f32 %v2047, %v2068
  %v2071 = vadd.f32 %v2048, %v2068
  %v2072 = vadd.f32 %v2049, %v2068
  %v2073 = vadd.f32 %v2050, %v2068
  %v2074 = vadd.f32 %v2051, %v2068
  %v2075 = vadd.f32 %v2052, %v2068
  %v2076 = vadd.f32 %v2053, %v2068
  %v2077 = vadd.f32 %v2054, %v2068
  %v2078 = vadd.f32 %v2055, %v2068
  %v2079 = vadd.f32 %v2056, %v2068
  %v2080 = vadd.f32 %v2057, %v2068
  %v2081 = vadd.f32 %v2058, %v2068
  %v2082 = vadd.f32 %v2059, %v2068
  %v2083 = vadd.f32 %v2060, %v2068
  %v2084 = vadd.f32 %v2061, %v2068
  %v2085 = vadd.f32 %v2062, %v2068
  %v2086 = vmax.f32 %v2070, 0.0
  %v2087 = vmax.f32 %v2071, 0.0
  %v2088 = vmax.f32 %v2072, 0.0
  %v2089 = vmax.f32 %v2073, 0.0
  %v2090 = vmax.f32 %v2074, 0.0
  %v2091 = vmax.f32 %v2075, 0.0
  %v2092 = vmax.f32 %v2076, 0.0
  %v2093 = vmax.f32 %v2077, 0.0
  %v2094 = vmax.f32 %v2078, 0.0
  %v2095 = vmax.f32 %v2079, 0.0
  %v2096 = vmax.f32 %v2080, 0.0
  %v2097 = vmax.f32 %v2081, 0.0
  %v2098 = vmax.f32 %v2082, 0.0
  %v2099 = vmax.f32 %v2083, 0.0
  %v2100 = vmax.f32 %v2084, 0.0
  %v2101 = vmax.f32 %v2085, 0.0
  %v2102 = vpack.c.bf16 %v2087, %v2086
  %v2103 = vpack.c.bf16 %v2089, %v2088
  %v2104 = vpack.c.bf16 %v2091, %v2090
  %v2105 = vpack.c.bf16 %v2093, %v2092
  %v2106 = vpack.c.bf16 %v2095, %v2094
  %v2107 = vpack.c.bf16 %v2097, %v2096
  %v2108 = vpack.c.bf16 %v2099, %v2098
  %v2109 = vpack.c.bf16 %v2101, %v2100
  %v2118 = vunpack.c.l.b16 %v2102
  %v2119 = vunpack.c.h.b16 %v2102
  %v2120 = vunpack.c.l.b16 %v2103
  %v2121 = vunpack.c.h.b16 %v2103
  %v2122 = vunpack.c.l.b16 %v2104
  %v2123 = vunpack.c.h.b16 %v2104
  %v2124 = vunpack.c.l.b16 %v2105
  %v2125 = vunpack.c.h.b16 %v2105
  %v2126 = vunpack.c.l.b16 %v2106
  %v2127 = vunpack.c.h.b16 %v2106
  %v2128 = vunpack.c.l.b16 %v2107
  %v2129 = vunpack.c.h.b16 %v2107
  %v2130 = vunpack.c.l.b16 %v2108
  %v2131 = vunpack.c.h.b16 %v2108
  %v2132 = vunpack.c.l.b16 %v2109
  %v2133 = vunpack.c.h.b16 %v2109
  %v2134 = vpack.c.b16 %v2118, %v2118
  %v2135 = vpack.c.b16 %v2119, %v2119
  %v2136 = vpack.c.b16 %v2120, %v2120
  %v2137 = vpack.c.b16 %v2121, %v2121
  %v2138 = vpack.c.b16 %v2122, %v2122
  %v2139 = vpack.c.b16 %v2123, %v2123
  %v2140 = vpack.c.b16 %v2124, %v2124
  %v2141 = vpack.c.b16 %v2125, %v2125
  %v2142 = vpack.c.b16 %v2126, %v2126
  %v2143 = vpack.c.b16 %v2127, %v2127
  %v2144 = vpack.c.b16 %v2128, %v2128
  %v2145 = vpack.c.b16 %v2129, %v2129
  %v2146 = vpack.c.b16 %v2130, %v2130
  %v2147 = vpack.c.b16 %v2131, %v2131
  %v2148 = vpack.c.b16 %v2132, %v2132
  %v2149 = vpack.c.b16 %v2133, %v2133
  %2166 = vst [vmem:[%s5] sm:$0xf] %v2134
  %2167 = vst [vmem:[%s5 + $0x4] sm:$0xf] %v2135
  %2168 = vst [vmem:[%s5 + $0x8] sm:$0xf] %v2136
  %2169 = vst [vmem:[%s5 + $0xc] sm:$0xf] %v2137
  %2170 = vst [vmem:[%s5 + $0x10] sm:$0xf] %v2138
  %2171 = vst [vmem:[%s5 + $0x14] sm:$0xf] %v2139
  %2172 = vst [vmem:[%s5 + $0x18] sm:$0xf] %v2140
  %2173 = vst [vmem:[%s5 + $0x1c] sm:$0xf] %v2141
  %2174 = vst [vmem:[%s5 + $0x20] sm:$0xf] %v2142
  %2175 = vst [vmem:[%s5 + $0x24] sm:$0xf] %v2143
  %2176 = vst [vmem:[%s5 + $0x28] sm:$0xf] %v2144
  %2177 = vst [vmem:[%s5 + $0x2c] sm:$0xf] %v2145
  %2178 = vst [vmem:[%s5 + $0x30] sm:$0xf] %v2146
  %2179 = vst [vmem:[%s5 + $0x34] sm:$0xf] %v2147
  %2180 = vst [vmem:[%s5 + $0x38] sm:$0xf] %v2148
  %2181 = vst [vmem:[%s5 + $0x3c] sm:$0xf] %v2149
  // Predicated region
  $region22: #{resnet_forward.21} parent=0 // pred_check
    _
  $region23: #{resnet_forward.21} parent=0 // pred_check_branch
    %2183 = sbr.rel (0) target = $region25
  $region24: #{resnet_forward.21} parent=0 // pred_region
    _
  $region25: #{resnet_forward.21} parent=0 // pred_fallthru
    _
  // Predicated region
  $region26: #{resnet_forward.21} parent=0 // pred_check
    _
  $region27: #{resnet_forward.21} parent=0 // pred_check_branch
    %2185 = sbr.rel (0) target = $region29
  $region28: #{resnet_forward.21} parent=0 // pred_region
    _
  $region29: #{resnet_forward.21} parent=0 // pred_fallthru
    _

</llo_original>
